<compile_context>
chip_gen: v6e
topology: v6e:2x2x1
jax: 0.10.0
libtpu: 0.0.40
codegen_flags: <defaults>
</compile_context>

<pallas_src>
import functools

import jax
import jax.numpy as jnp
from jax.experimental import pallas as pl
from jax.experimental.pallas import tpu as pltpu


# ----------------------------- fused UNet kernel ----------------------------

def _unet_kernel(x_ref, w1_ref, b1_ref, w2_ref, b2_ref, w3_ref, b3_ref,
                 w4_ref, b4_ref, wt_ref, bt_ref, o_ref, ebuf, dbuf, *, H, W, C):
    # x_ref : (1, H, W, C)       input, channels zero-padded 3 -> C=64
    # wN_ref: (9*C, C)           conv weights, rows ordered (dy, dx, cin)
    # bN_ref: (1, C)
    # wt_ref: (C, 128)           ConvTranspose weight, cols (a, b, cout) zero-padded
    # bt_ref: (1, 128)
    # o_ref : (1, Ho*Wo, 128)    lane-dense output block
    # ebuf  : VMEM (H+2,  W+2,  C) f32  encoder halo scratch
    # dbuf  : VMEM (Ho+2, Wo+2, C) f32  decoder halo scratch
    Ho, Wo = H // 2, W // 2
    f32 = jnp.float32

    def zero_border(buf, h, w):
        # Interiors are fully overwritten every step; only the 1-px border must
        # be zero.  Done per grid step (megacore-safe), ~30 KiB of stores total.
        zrow = jnp.zeros((1, w + 2, C), f32)
        buf[pl.ds(0, 1), :, :] = zrow
        buf[pl.ds(h + 1, 1), :, :] = zrow
        zcol = jnp.zeros((h + 2, 1, C), f32)
        buf[:, pl.ds(0, 1), :] = zcol
        buf[:, pl.ds(w + 1, 1), :] = zcol

    def conv3x3_relu(buf, hc, wc, w_ref, b_ref):
        # 9 accumulating MXU matmuls (no im2col concat / patch materialization).
        acc = None
        for dy in range(3):
            for dx in range(3):
                tap = dy * 3 + dx
                win = buf[pl.ds(dy, hc), pl.ds(dx, wc), :]          # (hc, wc, C)
                p = jnp.dot(win.reshape(hc * wc, C),
                            w_ref[pl.ds(tap * C, C), :],
                            preferred_element_type=f32)             # (hc*wc, C)
                acc = p if acc is None else acc + p
        return jnp.maximum(acc + b_ref[...], 0.0)                   # (hc*wc, C)

    zero_border(ebuf, H, W)
    zero_border(dbuf, Ho, Wo)

    # ----- encoder -----
    ebuf[pl.ds(1, H), pl.ds(1, W), :] = x_ref[0].astype(f32)
    h = conv3x3_relu(ebuf, H, W, w1_ref, b1_ref)                    # (H*W, C)
    ebuf[pl.ds(1, H), pl.ds(1, W), :] = h.reshape(H, W, C)
    h = conv3x3_relu(ebuf, H, W, w2_ref, b2_ref)                    # (H*W, C)

    # 2x2 / stride-2 max-pool: pair H first (cheap major split), then W.
    h = h.reshape(Ho, 2, W, C)
    h = jnp.maximum(h[:, 0], h[:, 1])                               # (Ho, W, C)
    h = h.reshape(Ho, Wo, 2, C)
    h = jnp.maximum(h[:, :, 0], h[:, :, 1])                         # (Ho, Wo, C)

    # ----- decoder -----
    dbuf[pl.ds(1, Ho), pl.ds(1, Wo), :] = h
    h = conv3x3_relu(dbuf, Ho, Wo, w3_ref, b3_ref)                  # (Ho*Wo, C)
    dbuf[pl.ds(1, Ho), pl.ds(1, Wo), :] = h.reshape(Ho, Wo, C)
    h = conv3x3_relu(dbuf, Ho, Wo, w4_ref, b4_ref)                  # (Ho*Wo, C)

    # ConvTranspose2d(k=2, s=2): one (Ho*Wo, C) x (C, 128) matmul; the 4
    # sub-pixel planes live in the (zero-padded, lane-dense) last dim and are
    # interleaved in the wrapper together with the NHWC->NCHW transpose.
    y = jnp.dot(h, wt_ref[...], preferred_element_type=f32) + bt_ref[...]
    o_ref[0] = y.astype(o_ref.dtype)


# ----------------------------- wrapper ---------------------------------------

def unet_forward(params, x_nchw):
    N, cin, H, W = x_nchw.shape
    C = 64
    Ho, Wo = H // 2, W // 2
    cout = params["dect_w"].shape[1]
    OC = 128                           # lane-dense padded output column count

    # NCHW -> NHWC and zero-pad channels 3 -> 64 (one tiny fused XLA copy).
    x = jnp.transpose(x_nchw, (0, 2, 3, 1))
    x = jnp.pad(x, ((0, 0), (0, 0), (0, 0), (0, C - cin)))

    def conv_w(w):  # (cout, ci, 3, 3) -> (9*C, cout), cin zero-padded to C
        ci = w.shape[1]
        wk = jnp.transpose(w, (2, 3, 1, 0))                        # (3,3,ci,cout)
        wk = jnp.pad(wk, ((0, 0), (0, 0), (0, C - ci), (0, 0)))
        return wk.reshape(9 * C, w.shape[0])

    w1 = conv_w(params["enc_w1"]); b1 = params["enc_b1"].reshape(1, C)
    w2 = conv_w(params["enc_w2"]); b2 = params["enc_b2"].reshape(1, C)
    w3 = conv_w(params["dec_w1"]); b3 = params["dec_b1"].reshape(1, C)
    w4 = conv_w(params["dec_w2"]); b4 = params["dec_b2"].reshape(1, C)
    # ConvTranspose weight (cin, cout, 2, 2) -> (C, 4*cout), cols = (a, b, cout),
    # then zero-pad the columns to 128 for lane-dense output stores.
    wt = jnp.transpose(params["dect_w"], (0, 2, 3, 1)).reshape(C, 4 * cout)
    wt = jnp.pad(wt, ((0, 0), (0, OC - 4 * cout)))
    bt = jnp.pad(jnp.tile(params["dect_b"], 4), (0, OC - 4 * cout)).reshape(1, OC)

    kern = functools.partial(_unet_kernel, H=H, W=W, C=C)

    # Whole-array VMEM-resident (single-buffered, grid-invariant) weight refs.
    vspec = pl.BlockSpec(memory_space=pltpu.MemorySpace.VMEM)

    y = pl.pallas_call(
        kern,
        out_shape=jax.ShapeDtypeStruct((N, Ho * Wo, OC), x.dtype),
        grid_spec=pltpu.PrefetchScalarGridSpec(
            num_scalar_prefetch=0,
            grid=(N,),
            in_specs=[
                pl.BlockSpec((1, H, W, C), lambda n: (n, 0, 0, 0)),
                vspec, vspec,   # w1, b1
                vspec, vspec,   # w2, b2
                vspec, vspec,   # w3, b3
                vspec, vspec,   # w4, b4
                vspec, vspec,   # wt, bt
            ],
            out_specs=pl.BlockSpec((1, Ho * Wo, OC), lambda n: (n, 0, 0)),
            scratch_shapes=[
                pltpu.VMEM((H + 2, W + 2, C), jnp.float32),    # encoder halo
                pltpu.VMEM((Ho + 2, Wo + 2, C), jnp.float32),  # decoder halo
            ],
        ),
        compiler_params=pltpu.CompilerParams(
            dimension_semantics=("parallel",)),
    )(x, w1, b1, w2, b2, w3, b3, w4, b4, wt, bt)

    # Drop the zero padding, interleave the 4 ConvTranspose sub-pixel planes
    # and go NHWC->NCHW: one small fused XLA copy over ~6 KB.
    y = y[:, :, :4 * cout].reshape(N, Ho, Wo, 2, 2, cout)  # (n, i, j, a, b, d)
    y = jnp.transpose(y, (0, 5, 1, 3, 2, 4))               # (n, d, i, a, j, b)
    return y.reshape(N, cout, 2 * Ho, 2 * Wo)              # out[n, d, 2i+a, 2j+b]


# ----------------------------- params / reference ----------------------------

def init_params(key):
    ks = jax.random.split(key, 10)

    def u(k, shape, fan_in):
        bound = 1.0 / (fan_in ** 0.5)
        return jax.random.uniform(k, shape, jnp.float32, -bound, bound)

    return {
        "enc_w1": u(ks[0], (64, 3, 3, 3), 3 * 9),
        "enc_b1": u(ks[1], (64,), 3 * 9),
        "enc_w2": u(ks[2], (64, 64, 3, 3), 64 * 9),
        "enc_b2": u(ks[3], (64,), 64 * 9),
        "dec_w1": u(ks[4], (64, 64, 3, 3), 64 * 9),
        "dec_b1": u(ks[5], (64,), 64 * 9),
        "dec_w2": u(ks[6], (64, 64, 3, 3), 64 * 9),
        "dec_b2": u(ks[7], (64,), 64 * 9),
        "dect_w": u(ks[8], (64, 3, 2, 2), 3 * 4),   # (in, out, kH, kW)
        "dect_b": u(ks[9], (3,), 3 * 4),
    }


def ref_forward(params, x):
    # pure-JAX reference (NCHW, matches PyTorch semantics), full-f32 precision
    hp = jax.lax.Precision.HIGHEST

    def conv(h, w, b):
        y = jax.lax.conv_general_dilated(
            h, w, (1, 1), [(1, 1), (1, 1)],
            dimension_numbers=("NCHW", "OIHW", "NCHW"), precision=hp)
        return jnp.maximum(y + b[None, :, None, None], 0.0)

    h = conv(x, params["enc_w1"], params["enc_b1"])
    h = conv(h, params["enc_w2"], params["enc_b2"])
    h = jax.lax.reduce_window(h, -jnp.inf, jax.lax.max,
                              (1, 1, 2, 2), (1, 1, 2, 2), "VALID")
    h = conv(h, params["dec_w1"], params["dec_b1"])
    h = conv(h, params["dec_w2"], params["dec_b2"])
    N, _, Hp, Wp = h.shape
    w, b = params["dect_w"], params["dect_b"]
    y = jnp.einsum("ncij,cdab->ndiajb", h, w, precision=hp)
    y = y.reshape(N, w.shape[1], 2 * Hp, 2 * Wp) + b[None, :, None, None]
    return y


if __name__ == "__main__":
    key = jax.random.PRNGKey(0)
    pkey, xkey = jax.random.split(key)
    params = init_params(pkey)
    x = jax.random.normal(xkey, (2, 3, 16, 16), jnp.float32)   # NCHW like PyTorch

    fwd = jax.jit(functools.partial(unet_forward, params))
    out = jax.block_until_ready(fwd(x))

    ref = ref_forward(params, x)
    assert out.shape == (2, 3, 16, 16), out.shape
    max_err = float(jnp.max(jnp.abs(out - ref)))
    assert max_err < 2e-3, f"max abs err {max_err}"
    print("KERNEL_OK")
</pallas_src>

<mosaic_0001>
module attributes {stable_mosaic.version = 11 : i64} {
  func.func @_unet_kernel(%arg0: i32, %arg1: memref<1x16x16x64xf32, #tpu.memory_space<vmem>>, %arg2: memref<576x64xf32, #tpu.memory_space<vmem>>, %arg3: memref<1x64xf32, #tpu.memory_space<vmem>>, %arg4: memref<576x64xf32, #tpu.memory_space<vmem>>, %arg5: memref<1x64xf32, #tpu.memory_space<vmem>>, %arg6: memref<576x64xf32, #tpu.memory_space<vmem>>, %arg7: memref<1x64xf32, #tpu.memory_space<vmem>>, %arg8: memref<576x64xf32, #tpu.memory_space<vmem>>, %arg9: memref<1x64xf32, #tpu.memory_space<vmem>>, %arg10: memref<64x128xf32, #tpu.memory_space<vmem>>, %arg11: memref<1x128xf32, #tpu.memory_space<vmem>>, %arg12: memref<1x64x128xf32, #tpu.memory_space<vmem>>, %arg13: memref<18x18x64xf32, #tpu.memory_space<vmem>>, %arg14: memref<10x10x64xf32, #tpu.memory_space<vmem>>) attributes {dimension_semantics = [#tpu.dimension_semantics<parallel>], iteration_bounds = array<i64: 2>, scalar_prefetch = 0 : i64, scratch_operands = 2 : i64, tpu.core_type = #tpu.core_type<tc>, window_params = [{transform_indices = @transform_0, window_bounds = array<i64: 1, 16, 16, 64>}, {pipeline_mode = #tpu.pipeline_mode<synchronous>, transform_indices = @transform_1, window_bounds = array<i64: 576, 64>}, {pipeline_mode = #tpu.pipeline_mode<synchronous>, transform_indices = @transform_2, window_bounds = array<i64: 1, 64>}, {pipeline_mode = #tpu.pipeline_mode<synchronous>, transform_indices = @transform_3, window_bounds = array<i64: 576, 64>}, {pipeline_mode = #tpu.pipeline_mode<synchronous>, transform_indices = @transform_4, window_bounds = array<i64: 1, 64>}, {pipeline_mode = #tpu.pipeline_mode<synchronous>, transform_indices = @transform_5, window_bounds = array<i64: 576, 64>}, {pipeline_mode = #tpu.pipeline_mode<synchronous>, transform_indices = @transform_6, window_bounds = array<i64: 1, 64>}, {pipeline_mode = #tpu.pipeline_mode<synchronous>, transform_indices = @transform_7, window_bounds = array<i64: 576, 64>}, {pipeline_mode = #tpu.pipeline_mode<synchronous>, transform_indices = @transform_8, window_bounds = array<i64: 1, 64>}, {pipeline_mode = #tpu.pipeline_mode<synchronous>, transform_indices = @transform_9, window_bounds = array<i64: 64, 128>}, {pipeline_mode = #tpu.pipeline_mode<synchronous>, transform_indices = @transform_10, window_bounds = array<i64: 1, 128>}, {transform_indices = @transform_11, window_bounds = array<i64: 1, 64, 128>}]} {
    %cst = arith.constant 0.000000e+00 : f32
    %0 = vector.broadcast %cst : f32 to vector<1x18x64xf32>
    %c0 = arith.constant 0 : index
    %c0_0 = arith.constant 0 : index
    %c0_1 = arith.constant 0 : index
    %1 = vector.load %arg13[%c0, %c0_0, %c0_1] : memref<18x18x64xf32, #tpu.memory_space<vmem>>, vector<1x18x64xf32>
    tpu.vector_store %arg13[%c0, %c0_0, %c0_1], %0 {strides = array<i32>} : memref<18x18x64xf32, #tpu.memory_space<vmem>>, vector<1x18x64xf32>,
    %c17 = arith.constant 17 : index
    %c0_2 = arith.constant 0 : index
    %c0_3 = arith.constant 0 : index
    %2 = vector.load %arg13[%c17, %c0_2, %c0_3] : memref<18x18x64xf32, #tpu.memory_space<vmem>>, vector<1x18x64xf32>
    tpu.vector_store %arg13[%c17, %c0_2, %c0_3], %0 {strides = array<i32>} : memref<18x18x64xf32, #tpu.memory_space<vmem>>, vector<1x18x64xf32>,
    %cst_4 = arith.constant 0.000000e+00 : f32
    %3 = vector.broadcast %cst_4 : f32 to vector<18x1x64xf32>
    %c0_5 = arith.constant 0 : index
    %c0_6 = arith.constant 0 : index
    %c0_7 = arith.constant 0 : index
    %4 = vector.load %arg13[%c0_5, %c0_6, %c0_7] : memref<18x18x64xf32, #tpu.memory_space<vmem>>, vector<18x1x64xf32>
    tpu.vector_store %arg13[%c0_5, %c0_6, %c0_7], %3 {strides = array<i32>} : memref<18x18x64xf32, #tpu.memory_space<vmem>>, vector<18x1x64xf32>,
    %c0_8 = arith.constant 0 : index
    %c17_9 = arith.constant 17 : index
    %c0_10 = arith.constant 0 : index
    %5 = vector.load %arg13[%c0_8, %c17_9, %c0_10] : memref<18x18x64xf32, #tpu.memory_space<vmem>>, vector<18x1x64xf32>
    tpu.vector_store %arg13[%c0_8, %c17_9, %c0_10], %3 {strides = array<i32>} : memref<18x18x64xf32, #tpu.memory_space<vmem>>, vector<18x1x64xf32>,
    %cst_11 = arith.constant 0.000000e+00 : f32
    %6 = vector.broadcast %cst_11 : f32 to vector<1x10x64xf32>
    %c0_12 = arith.constant 0 : index
    %c0_13 = arith.constant 0 : index
    %c0_14 = arith.constant 0 : index
    %7 = vector.load %arg14[%c0_12, %c0_13, %c0_14] : memref<10x10x64xf32, #tpu.memory_space<vmem>>, vector<1x10x64xf32>
    tpu.vector_store %arg14[%c0_12, %c0_13, %c0_14], %6 {strides = array<i32>} : memref<10x10x64xf32, #tpu.memory_space<vmem>>, vector<1x10x64xf32>,
    %c9 = arith.constant 9 : index
    %c0_15 = arith.constant 0 : index
    %c0_16 = arith.constant 0 : index
    %8 = vector.load %arg14[%c9, %c0_15, %c0_16] : memref<10x10x64xf32, #tpu.memory_space<vmem>>, vector<1x10x64xf32>
    tpu.vector_store %arg14[%c9, %c0_15, %c0_16], %6 {strides = array<i32>} : memref<10x10x64xf32, #tpu.memory_space<vmem>>, vector<1x10x64xf32>,
    %cst_17 = arith.constant 0.000000e+00 : f32
    %9 = vector.broadcast %cst_17 : f32 to vector<10x1x64xf32>
    %c0_18 = arith.constant 0 : index
    %c0_19 = arith.constant 0 : index
    %c0_20 = arith.constant 0 : index
    %10 = vector.load %arg14[%c0_18, %c0_19, %c0_20] : memref<10x10x64xf32, #tpu.memory_space<vmem>>, vector<10x1x64xf32>
    tpu.vector_store %arg14[%c0_18, %c0_19, %c0_20], %9 {strides = array<i32>} : memref<10x10x64xf32, #tpu.memory_space<vmem>>, vector<10x1x64xf32>,
    %c0_21 = arith.constant 0 : index
    %c9_22 = arith.constant 9 : index
    %c0_23 = arith.constant 0 : index
    %11 = vector.load %arg14[%c0_21, %c9_22, %c0_23] : memref<10x10x64xf32, #tpu.memory_space<vmem>>, vector<10x1x64xf32>
    tpu.vector_store %arg14[%c0_21, %c9_22, %c0_23], %9 {strides = array<i32>} : memref<10x10x64xf32, #tpu.memory_space<vmem>>, vector<10x1x64xf32>,
    %c0_24 = arith.constant 0 : index
    %c0_25 = arith.constant 0 : index
    %c0_26 = arith.constant 0 : index
    %c0_27 = arith.constant 0 : index
    %12 = vector.load %arg1[%c0_24, %c0_25, %c0_26, %c0_27] : memref<1x16x16x64xf32, #tpu.memory_space<vmem>>, vector<1x16x16x64xf32>
    %13 = vector.shape_cast %12 : vector<1x16x16x64xf32> to vector<16x16x64xf32>
    %c1 = arith.constant 1 : index
    %c1_28 = arith.constant 1 : index
    %c0_29 = arith.constant 0 : index
    %14 = vector.load %arg13[%c1, %c1_28, %c0_29] : memref<18x18x64xf32, #tpu.memory_space<vmem>>, vector<16x16x64xf32>
    tpu.vector_store %arg13[%c1, %c1_28, %c0_29], %13 {strides = array<i32>} : memref<18x18x64xf32, #tpu.memory_space<vmem>>, vector<16x16x64xf32>,
    %c0_30 = arith.constant 0 : index
    %c0_31 = arith.constant 0 : index
    %c0_32 = arith.constant 0 : index
    %15 = vector.load %arg13[%c0_30, %c0_31, %c0_32] : memref<18x18x64xf32, #tpu.memory_space<vmem>>, vector<16x16x64xf32>
    %16 = vector.shape_cast %15 : vector<16x16x64xf32> to vector<256x64xf32>
    %c0_33 = arith.constant 0 : index
    %c0_34 = arith.constant 0 : index
    %17 = vector.load %arg2[%c0_33, %c0_34] : memref<576x64xf32, #tpu.memory_space<vmem>>, vector<64x64xf32>
    %cst_35 = arith.constant dense<0.000000e+00> : vector<256x64xf32>
    %18 = tpu.matmul %16, %17, %cst_35 {dimension_numbers = #tpu.dot_dimension_numbers<[1], [0], [0], [1], [0, 0, 1, 1], [], []>} : vector<256x64xf32>, vector<64x64xf32>, vector<256x64xf32> -> vector<256x64xf32>
    %c0_36 = arith.constant 0 : index
    %c1_37 = arith.constant 1 : index
    %c0_38 = arith.constant 0 : index
    %19 = vector.load %arg13[%c0_36, %c1_37, %c0_38] : memref<18x18x64xf32, #tpu.memory_space<vmem>>, vector<16x16x64xf32>
    %20 = vector.shape_cast %19 : vector<16x16x64xf32> to vector<256x64xf32>
    %c64 = arith.constant 64 : index
    %c0_39 = arith.constant 0 : index
    %21 = vector.load %arg2[%c64, %c0_39] : memref<576x64xf32, #tpu.memory_space<vmem>>, vector<64x64xf32>
    %cst_40 = arith.constant dense<0.000000e+00> : vector<256x64xf32>
    %22 = tpu.matmul %20, %21, %cst_40 {dimension_numbers = #tpu.dot_dimension_numbers<[1], [0], [0], [1], [0, 0, 1, 1], [], []>} : vector<256x64xf32>, vector<64x64xf32>, vector<256x64xf32> -> vector<256x64xf32>
    %23 = arith.addf %18, %22 : vector<256x64xf32>
    %c0_41 = arith.constant 0 : index
    %c2 = arith.constant 2 : index
    %c0_42 = arith.constant 0 : index
    %24 = vector.load %arg13[%c0_41, %c2, %c0_42] : memref<18x18x64xf32, #tpu.memory_space<vmem>>, vector<16x16x64xf32>
    %25 = vector.shape_cast %24 : vector<16x16x64xf32> to vector<256x64xf32>
    %c128 = arith.constant 128 : index
    %c0_43 = arith.constant 0 : index
    %26 = vector.load %arg2[%c128, %c0_43] : memref<576x64xf32, #tpu.memory_space<vmem>>, vector<64x64xf32>
    %cst_44 = arith.constant dense<0.000000e+00> : vector<256x64xf32>
    %27 = tpu.matmul %25, %26, %cst_44 {dimension_numbers = #tpu.dot_dimension_numbers<[1], [0], [0], [1], [0, 0, 1, 1], [], []>} : vector<256x64xf32>, vector<64x64xf32>, vector<256x64xf32> -> vector<256x64xf32>
    %28 = arith.addf %23, %27 : vector<256x64xf32>
    %c1_45 = arith.constant 1 : index
    %c0_46 = arith.constant 0 : index
    %c0_47 = arith.constant 0 : index
    %29 = vector.load %arg13[%c1_45, %c0_46, %c0_47] : memref<18x18x64xf32, #tpu.memory_space<vmem>>, vector<16x16x64xf32>
    %30 = vector.shape_cast %29 : vector<16x16x64xf32> to vector<256x64xf32>
    %c192 = arith.constant 192 : index
    %c0_48 = arith.constant 0 : index
    %31 = vector.load %arg2[%c192, %c0_48] : memref<576x64xf32, #tpu.memory_space<vmem>>, vector<64x64xf32>
    %cst_49 = arith.constant dense<0.000000e+00> : vector<256x64xf32>
    %32 = tpu.matmul %30, %31, %cst_49 {dimension_numbers = #tpu.dot_dimension_numbers<[1], [0], [0], [1], [0, 0, 1, 1], [], []>} : vector<256x64xf32>, vector<64x64xf32>, vector<256x64xf32> -> vector<256x64xf32>
    %33 = arith.addf %28, %32 : vector<256x64xf32>
    %c1_50 = arith.constant 1 : index
    %c1_51 = arith.constant 1 : index
    %c0_52 = arith.constant 0 : index
    %34 = vector.load %arg13[%c1_50, %c1_51, %c0_52] : memref<18x18x64xf32, #tpu.memory_space<vmem>>, vector<16x16x64xf32>
    %35 = vector.shape_cast %34 : vector<16x16x64xf32> to vector<256x64xf32>
    %c256 = arith.constant 256 : index
    %c0_53 = arith.constant 0 : index
    %36 = vector.load %arg2[%c256, %c0_53] : memref<576x64xf32, #tpu.memory_space<vmem>>, vector<64x64xf32>
    %cst_54 = arith.constant dense<0.000000e+00> : vector<256x64xf32>
    %37 = tpu.matmul %35, %36, %cst_54 {dimension_numbers = #tpu.dot_dimension_numbers<[1], [0], [0], [1], [0, 0, 1, 1], [], []>} : vector<256x64xf32>, vector<64x64xf32>, vector<256x64xf32> -> vector<256x64xf32>
    %38 = arith.addf %33, %37 : vector<256x64xf32>
    %c1_55 = arith.constant 1 : index
    %c2_56 = arith.constant 2 : index
    %c0_57 = arith.constant 0 : index
    %39 = vector.load %arg13[%c1_55, %c2_56, %c0_57] : memref<18x18x64xf32, #tpu.memory_space<vmem>>, vector<16x16x64xf32>
    %40 = vector.shape_cast %39 : vector<16x16x64xf32> to vector<256x64xf32>
    %c320 = arith.constant 320 : index
    %c0_58 = arith.constant 0 : index
    %41 = vector.load %arg2[%c320, %c0_58] : memref<576x64xf32, #tpu.memory_space<vmem>>, vector<64x64xf32>
    %cst_59 = arith.constant dense<0.000000e+00> : vector<256x64xf32>
    %42 = tpu.matmul %40, %41, %cst_59 {dimension_numbers = #tpu.dot_dimension_numbers<[1], [0], [0], [1], [0, 0, 1, 1], [], []>} : vector<256x64xf32>, vector<64x64xf32>, vector<256x64xf32> -> vector<256x64xf32>
    %43 = arith.addf %38, %42 : vector<256x64xf32>
    %c2_60 = arith.constant 2 : index
    %c0_61 = arith.constant 0 : index
    %c0_62 = arith.constant 0 : index
    %44 = vector.load %arg13[%c2_60, %c0_61, %c0_62] : memref<18x18x64xf32, #tpu.memory_space<vmem>>, vector<16x16x64xf32>
    %45 = vector.shape_cast %44 : vector<16x16x64xf32> to vector<256x64xf32>
    %c384 = arith.constant 384 : index
    %c0_63 = arith.constant 0 : index
    %46 = vector.load %arg2[%c384, %c0_63] : memref<576x64xf32, #tpu.memory_space<vmem>>, vector<64x64xf32>
    %cst_64 = arith.constant dense<0.000000e+00> : vector<256x64xf32>
    %47 = tpu.matmul %45, %46, %cst_64 {dimension_numbers = #tpu.dot_dimension_numbers<[1], [0], [0], [1], [0, 0, 1, 1], [], []>} : vector<256x64xf32>, vector<64x64xf32>, vector<256x64xf32> -> vector<256x64xf32>
    %48 = arith.addf %43, %47 : vector<256x64xf32>
    %c2_65 = arith.constant 2 : index
    %c1_66 = arith.constant 1 : index
    %c0_67 = arith.constant 0 : index
    %49 = vector.load %arg13[%c2_65, %c1_66, %c0_67] : memref<18x18x64xf32, #tpu.memory_space<vmem>>, vector<16x16x64xf32>
    %50 = vector.shape_cast %49 : vector<16x16x64xf32> to vector<256x64xf32>
    %c448 = arith.constant 448 : index
    %c0_68 = arith.constant 0 : index
    %51 = vector.load %arg2[%c448, %c0_68] : memref<576x64xf32, #tpu.memory_space<vmem>>, vector<64x64xf32>
    %cst_69 = arith.constant dense<0.000000e+00> : vector<256x64xf32>
    %52 = tpu.matmul %50, %51, %cst_69 {dimension_numbers = #tpu.dot_dimension_numbers<[1], [0], [0], [1], [0, 0, 1, 1], [], []>} : vector<256x64xf32>, vector<64x64xf32>, vector<256x64xf32> -> vector<256x64xf32>
    %53 = arith.addf %48, %52 : vector<256x64xf32>
    %c2_70 = arith.constant 2 : index
    %c2_71 = arith.constant 2 : index
    %c0_72 = arith.constant 0 : index
    %54 = vector.load %arg13[%c2_70, %c2_71, %c0_72] : memref<18x18x64xf32, #tpu.memory_space<vmem>>, vector<16x16x64xf32>
    %55 = vector.shape_cast %54 : vector<16x16x64xf32> to vector<256x64xf32>
    %c512 = arith.constant 512 : index
    %c0_73 = arith.constant 0 : index
    %56 = vector.load %arg2[%c512, %c0_73] : memref<576x64xf32, #tpu.memory_space<vmem>>, vector<64x64xf32>
    %cst_74 = arith.constant dense<0.000000e+00> : vector<256x64xf32>
    %57 = tpu.matmul %55, %56, %cst_74 {dimension_numbers = #tpu.dot_dimension_numbers<[1], [0], [0], [1], [0, 0, 1, 1], [], []>} : vector<256x64xf32>, vector<64x64xf32>, vector<256x64xf32> -> vector<256x64xf32>
    %58 = arith.addf %53, %57 : vector<256x64xf32>
    %c0_75 = arith.constant 0 : index
    %c0_76 = arith.constant 0 : index
    %59 = vector.load %arg3[%c0_75, %c0_76] : memref<1x64xf32, #tpu.memory_space<vmem>>, vector<1x64xf32>
    %60 = vector.broadcast %59 : vector<1x64xf32> to vector<256x64xf32>
    %61 = arith.addf %58, %60 : vector<256x64xf32>
    %cst_77 = arith.constant 0.000000e+00 : f32
    %62 = vector.broadcast %cst_77 : f32 to vector<256x64xf32>
    %63 = arith.maximumf %61, %62 : vector<256x64xf32>
    %64 = vector.shape_cast %63 : vector<256x64xf32> to vector<16x16x64xf32>
    %c1_78 = arith.constant 1 : index
    %c1_79 = arith.constant 1 : index
    %c0_80 = arith.constant 0 : index
    %65 = vector.load %arg13[%c1_78, %c1_79, %c0_80] : memref<18x18x64xf32, #tpu.memory_space<vmem>>, vector<16x16x64xf32>
    tpu.vector_store %arg13[%c1_78, %c1_79, %c0_80], %64 {strides = array<i32>} : memref<18x18x64xf32, #tpu.memory_space<vmem>>, vector<16x16x64xf32>,
    %c0_81 = arith.constant 0 : index
    %c0_82 = arith.constant 0 : index
    %c0_83 = arith.constant 0 : index
    %66 = vector.load %arg13[%c0_81, %c0_82, %c0_83] : memref<18x18x64xf32, #tpu.memory_space<vmem>>, vector<16x16x64xf32>
    %67 = vector.shape_cast %66 : vector<16x16x64xf32> to vector<256x64xf32>
    %c0_84 = arith.constant 0 : index
    %c0_85 = arith.constant 0 : index
    %68 = vector.load %arg4[%c0_84, %c0_85] : memref<576x64xf32, #tpu.memory_space<vmem>>, vector<64x64xf32>
    %cst_86 = arith.constant dense<0.000000e+00> : vector<256x64xf32>
    %69 = tpu.matmul %67, %68, %cst_86 {dimension_numbers = #tpu.dot_dimension_numbers<[1], [0], [0], [1], [0, 0, 1, 1], [], []>} : vector<256x64xf32>, vector<64x64xf32>, vector<256x64xf32> -> vector<256x64xf32>
    %c0_87 = arith.constant 0 : index
    %c1_88 = arith.constant 1 : index
    %c0_89 = arith.constant 0 : index
    %70 = vector.load %arg13[%c0_87, %c1_88, %c0_89] : memref<18x18x64xf32, #tpu.memory_space<vmem>>, vector<16x16x64xf32>
    %71 = vector.shape_cast %70 : vector<16x16x64xf32> to vector<256x64xf32>
    %c64_90 = arith.constant 64 : index
    %c0_91 = arith.constant 0 : index
    %72 = vector.load %arg4[%c64_90, %c0_91] : memref<576x64xf32, #tpu.memory_space<vmem>>, vector<64x64xf32>
    %cst_92 = arith.constant dense<0.000000e+00> : vector<256x64xf32>
    %73 = tpu.matmul %71, %72, %cst_92 {dimension_numbers = #tpu.dot_dimension_numbers<[1], [0], [0], [1], [0, 0, 1, 1], [], []>} : vector<256x64xf32>, vector<64x64xf32>, vector<256x64xf32> -> vector<256x64xf32>
    %74 = arith.addf %69, %73 : vector<256x64xf32>
    %c0_93 = arith.constant 0 : index
    %c2_94 = arith.constant 2 : index
    %c0_95 = arith.constant 0 : index
    %75 = vector.load %arg13[%c0_93, %c2_94, %c0_95] : memref<18x18x64xf32, #tpu.memory_space<vmem>>, vector<16x16x64xf32>
    %76 = vector.shape_cast %75 : vector<16x16x64xf32> to vector<256x64xf32>
    %c128_96 = arith.constant 128 : index
    %c0_97 = arith.constant 0 : index
    %77 = vector.load %arg4[%c128_96, %c0_97] : memref<576x64xf32, #tpu.memory_space<vmem>>, vector<64x64xf32>
    %cst_98 = arith.constant dense<0.000000e+00> : vector<256x64xf32>
    %78 = tpu.matmul %76, %77, %cst_98 {dimension_numbers = #tpu.dot_dimension_numbers<[1], [0], [0], [1], [0, 0, 1, 1], [], []>} : vector<256x64xf32>, vector<64x64xf32>, vector<256x64xf32> -> vector<256x64xf32>
    %79 = arith.addf %74, %78 : vector<256x64xf32>
    %c1_99 = arith.constant 1 : index
    %c0_100 = arith.constant 0 : index
    %c0_101 = arith.constant 0 : index
    %80 = vector.load %arg13[%c1_99, %c0_100, %c0_101] : memref<18x18x64xf32, #tpu.memory_space<vmem>>, vector<16x16x64xf32>
    %81 = vector.shape_cast %80 : vector<16x16x64xf32> to vector<256x64xf32>
    %c192_102 = arith.constant 192 : index
    %c0_103 = arith.constant 0 : index
    %82 = vector.load %arg4[%c192_102, %c0_103] : memref<576x64xf32, #tpu.memory_space<vmem>>, vector<64x64xf32>
    %cst_104 = arith.constant dense<0.000000e+00> : vector<256x64xf32>
    %83 = tpu.matmul %81, %82, %cst_104 {dimension_numbers = #tpu.dot_dimension_numbers<[1], [0], [0], [1], [0, 0, 1, 1], [], []>} : vector<256x64xf32>, vector<64x64xf32>, vector<256x64xf32> -> vector<256x64xf32>
    %84 = arith.addf %79, %83 : vector<256x64xf32>
    %c1_105 = arith.constant 1 : index
    %c1_106 = arith.constant 1 : index
    %c0_107 = arith.constant 0 : index
    %85 = vector.load %arg13[%c1_105, %c1_106, %c0_107] : memref<18x18x64xf32, #tpu.memory_space<vmem>>, vector<16x16x64xf32>
    %86 = vector.shape_cast %85 : vector<16x16x64xf32> to vector<256x64xf32>
    %c256_108 = arith.constant 256 : index
    %c0_109 = arith.constant 0 : index
    %87 = vector.load %arg4[%c256_108, %c0_109] : memref<576x64xf32, #tpu.memory_space<vmem>>, vector<64x64xf32>
    %cst_110 = arith.constant dense<0.000000e+00> : vector<256x64xf32>
    %88 = tpu.matmul %86, %87, %cst_110 {dimension_numbers = #tpu.dot_dimension_numbers<[1], [0], [0], [1], [0, 0, 1, 1], [], []>} : vector<256x64xf32>, vector<64x64xf32>, vector<256x64xf32> -> vector<256x64xf32>
    %89 = arith.addf %84, %88 : vector<256x64xf32>
    %c1_111 = arith.constant 1 : index
    %c2_112 = arith.constant 2 : index
    %c0_113 = arith.constant 0 : index
    %90 = vector.load %arg13[%c1_111, %c2_112, %c0_113] : memref<18x18x64xf32, #tpu.memory_space<vmem>>, vector<16x16x64xf32>
    %91 = vector.shape_cast %90 : vector<16x16x64xf32> to vector<256x64xf32>
    %c320_114 = arith.constant 320 : index
    %c0_115 = arith.constant 0 : index
    %92 = vector.load %arg4[%c320_114, %c0_115] : memref<576x64xf32, #tpu.memory_space<vmem>>, vector<64x64xf32>
    %cst_116 = arith.constant dense<0.000000e+00> : vector<256x64xf32>
    %93 = tpu.matmul %91, %92, %cst_116 {dimension_numbers = #tpu.dot_dimension_numbers<[1], [0], [0], [1], [0, 0, 1, 1], [], []>} : vector<256x64xf32>, vector<64x64xf32>, vector<256x64xf32> -> vector<256x64xf32>
    %94 = arith.addf %89, %93 : vector<256x64xf32>
    %c2_117 = arith.constant 2 : index
    %c0_118 = arith.constant 0 : index
    %c0_119 = arith.constant 0 : index
    %95 = vector.load %arg13[%c2_117, %c0_118, %c0_119] : memref<18x18x64xf32, #tpu.memory_space<vmem>>, vector<16x16x64xf32>
    %96 = vector.shape_cast %95 : vector<16x16x64xf32> to vector<256x64xf32>
    %c384_120 = arith.constant 384 : index
    %c0_121 = arith.constant 0 : index
    %97 = vector.load %arg4[%c384_120, %c0_121] : memref<576x64xf32, #tpu.memory_space<vmem>>, vector<64x64xf32>
    %cst_122 = arith.constant dense<0.000000e+00> : vector<256x64xf32>
    %98 = tpu.matmul %96, %97, %cst_122 {dimension_numbers = #tpu.dot_dimension_numbers<[1], [0], [0], [1], [0, 0, 1, 1], [], []>} : vector<256x64xf32>, vector<64x64xf32>, vector<256x64xf32> -> vector<256x64xf32>
    %99 = arith.addf %94, %98 : vector<256x64xf32>
    %c2_123 = arith.constant 2 : index
    %c1_124 = arith.constant 1 : index
    %c0_125 = arith.constant 0 : index
    %100 = vector.load %arg13[%c2_123, %c1_124, %c0_125] : memref<18x18x64xf32, #tpu.memory_space<vmem>>, vector<16x16x64xf32>
    %101 = vector.shape_cast %100 : vector<16x16x64xf32> to vector<256x64xf32>
    %c448_126 = arith.constant 448 : index
    %c0_127 = arith.constant 0 : index
    %102 = vector.load %arg4[%c448_126, %c0_127] : memref<576x64xf32, #tpu.memory_space<vmem>>, vector<64x64xf32>
    %cst_128 = arith.constant dense<0.000000e+00> : vector<256x64xf32>
    %103 = tpu.matmul %101, %102, %cst_128 {dimension_numbers = #tpu.dot_dimension_numbers<[1], [0], [0], [1], [0, 0, 1, 1], [], []>} : vector<256x64xf32>, vector<64x64xf32>, vector<256x64xf32> -> vector<256x64xf32>
    %104 = arith.addf %99, %103 : vector<256x64xf32>
    %c2_129 = arith.constant 2 : index
    %c2_130 = arith.constant 2 : index
    %c0_131 = arith.constant 0 : index
    %105 = vector.load %arg13[%c2_129, %c2_130, %c0_131] : memref<18x18x64xf32, #tpu.memory_space<vmem>>, vector<16x16x64xf32>
    %106 = vector.shape_cast %105 : vector<16x16x64xf32> to vector<256x64xf32>
    %c512_132 = arith.constant 512 : index
    %c0_133 = arith.constant 0 : index
    %107 = vector.load %arg4[%c512_132, %c0_133] : memref<576x64xf32, #tpu.memory_space<vmem>>, vector<64x64xf32>
    %cst_134 = arith.constant dense<0.000000e+00> : vector<256x64xf32>
    %108 = tpu.matmul %106, %107, %cst_134 {dimension_numbers = #tpu.dot_dimension_numbers<[1], [0], [0], [1], [0, 0, 1, 1], [], []>} : vector<256x64xf32>, vector<64x64xf32>, vector<256x64xf32> -> vector<256x64xf32>
    %109 = arith.addf %104, %108 : vector<256x64xf32>
    %c0_135 = arith.constant 0 : index
    %c0_136 = arith.constant 0 : index
    %110 = vector.load %arg5[%c0_135, %c0_136] : memref<1x64xf32, #tpu.memory_space<vmem>>, vector<1x64xf32>
    %111 = vector.broadcast %110 : vector<1x64xf32> to vector<256x64xf32>
    %112 = arith.addf %109, %111 : vector<256x64xf32>
    %cst_137 = arith.constant 0.000000e+00 : f32
    %113 = vector.broadcast %cst_137 : f32 to vector<256x64xf32>
    %114 = arith.maximumf %112, %113 : vector<256x64xf32>
    %115 = vector.shape_cast %114 : vector<256x64xf32> to vector<8x2x16x64xf32>
    %116 = vector.extract_strided_slice %115 {offsets = [0, 0, 0, 0], sizes = [8, 1, 16, 64], strides = [1, 1, 1, 1]} : vector<8x2x16x64xf32> to vector<8x1x16x64xf32>
    %117 = vector.shape_cast %116 : vector<8x1x16x64xf32> to vector<8x16x64xf32>
    %118 = vector.extract_strided_slice %115 {offsets = [0, 1, 0, 0], sizes = [8, 1, 16, 64], strides = [1, 1, 1, 1]} : vector<8x2x16x64xf32> to vector<8x1x16x64xf32>
    %119 = vector.shape_cast %118 : vector<8x1x16x64xf32> to vector<8x16x64xf32>
    %120 = arith.maximumf %117, %119 : vector<8x16x64xf32>
    %121 = vector.shape_cast %120 : vector<8x16x64xf32> to vector<8x8x2x64xf32>
    %122 = vector.extract_strided_slice %121 {offsets = [0, 0, 0, 0], sizes = [8, 8, 1, 64], strides = [1, 1, 1, 1]} : vector<8x8x2x64xf32> to vector<8x8x1x64xf32>
    %123 = vector.shape_cast %122 : vector<8x8x1x64xf32> to vector<8x8x64xf32>
    %124 = vector.extract_strided_slice %121 {offsets = [0, 0, 1, 0], sizes = [8, 8, 1, 64], strides = [1, 1, 1, 1]} : vector<8x8x2x64xf32> to vector<8x8x1x64xf32>
    %125 = vector.shape_cast %124 : vector<8x8x1x64xf32> to vector<8x8x64xf32>
    %126 = arith.maximumf %123, %125 : vector<8x8x64xf32>
    %c1_138 = arith.constant 1 : index
    %c1_139 = arith.constant 1 : index
    %c0_140 = arith.constant 0 : index
    %127 = vector.load %arg14[%c1_138, %c1_139, %c0_140] : memref<10x10x64xf32, #tpu.memory_space<vmem>>, vector<8x8x64xf32>
    tpu.vector_store %arg14[%c1_138, %c1_139, %c0_140], %126 {strides = array<i32>} : memref<10x10x64xf32, #tpu.memory_space<vmem>>, vector<8x8x64xf32>,
    %c0_141 = arith.constant 0 : index
    %c0_142 = arith.constant 0 : index
    %c0_143 = arith.constant 0 : index
    %128 = vector.load %arg14[%c0_141, %c0_142, %c0_143] : memref<10x10x64xf32, #tpu.memory_space<vmem>>, vector<8x8x64xf32>
    %129 = vector.shape_cast %128 : vector<8x8x64xf32> to vector<64x64xf32>
    %c0_144 = arith.constant 0 : index
    %c0_145 = arith.constant 0 : index
    %130 = vector.load %arg6[%c0_144, %c0_145] : memref<576x64xf32, #tpu.memory_space<vmem>>, vector<64x64xf32>
    %cst_146 = arith.constant dense<0.000000e+00> : vector<64x64xf32>
    %131 = tpu.matmul %129, %130, %cst_146 {dimension_numbers = #tpu.dot_dimension_numbers<[1], [0], [0], [1], [0, 0, 1, 1], [], []>} : vector<64x64xf32>, vector<64x64xf32>, vector<64x64xf32> -> vector<64x64xf32>
    %c0_147 = arith.constant 0 : index
    %c1_148 = arith.constant 1 : index
    %c0_149 = arith.constant 0 : index
    %132 = vector.load %arg14[%c0_147, %c1_148, %c0_149] : memref<10x10x64xf32, #tpu.memory_space<vmem>>, vector<8x8x64xf32>
    %133 = vector.shape_cast %132 : vector<8x8x64xf32> to vector<64x64xf32>
    %c64_150 = arith.constant 64 : index
    %c0_151 = arith.constant 0 : index
    %134 = vector.load %arg6[%c64_150, %c0_151] : memref<576x64xf32, #tpu.memory_space<vmem>>, vector<64x64xf32>
    %cst_152 = arith.constant dense<0.000000e+00> : vector<64x64xf32>
    %135 = tpu.matmul %133, %134, %cst_152 {dimension_numbers = #tpu.dot_dimension_numbers<[1], [0], [0], [1], [0, 0, 1, 1], [], []>} : vector<64x64xf32>, vector<64x64xf32>, vector<64x64xf32> -> vector<64x64xf32>
    %136 = arith.addf %131, %135 : vector<64x64xf32>
    %c0_153 = arith.constant 0 : index
    %c2_154 = arith.constant 2 : index
    %c0_155 = arith.constant 0 : index
    %137 = vector.load %arg14[%c0_153, %c2_154, %c0_155] : memref<10x10x64xf32, #tpu.memory_space<vmem>>, vector<8x8x64xf32>
    %138 = vector.shape_cast %137 : vector<8x8x64xf32> to vector<64x64xf32>
    %c128_156 = arith.constant 128 : index
    %c0_157 = arith.constant 0 : index
    %139 = vector.load %arg6[%c128_156, %c0_157] : memref<576x64xf32, #tpu.memory_space<vmem>>, vector<64x64xf32>
    %cst_158 = arith.constant dense<0.000000e+00> : vector<64x64xf32>
    %140 = tpu.matmul %138, %139, %cst_158 {dimension_numbers = #tpu.dot_dimension_numbers<[1], [0], [0], [1], [0, 0, 1, 1], [], []>} : vector<64x64xf32>, vector<64x64xf32>, vector<64x64xf32> -> vector<64x64xf32>
    %141 = arith.addf %136, %140 : vector<64x64xf32>
    %c1_159 = arith.constant 1 : index
    %c0_160 = arith.constant 0 : index
    %c0_161 = arith.constant 0 : index
    %142 = vector.load %arg14[%c1_159, %c0_160, %c0_161] : memref<10x10x64xf32, #tpu.memory_space<vmem>>, vector<8x8x64xf32>
    %143 = vector.shape_cast %142 : vector<8x8x64xf32> to vector<64x64xf32>
    %c192_162 = arith.constant 192 : index
    %c0_163 = arith.constant 0 : index
    %144 = vector.load %arg6[%c192_162, %c0_163] : memref<576x64xf32, #tpu.memory_space<vmem>>, vector<64x64xf32>
    %cst_164 = arith.constant dense<0.000000e+00> : vector<64x64xf32>
    %145 = tpu.matmul %143, %144, %cst_164 {dimension_numbers = #tpu.dot_dimension_numbers<[1], [0], [0], [1], [0, 0, 1, 1], [], []>} : vector<64x64xf32>, vector<64x64xf32>, vector<64x64xf32> -> vector<64x64xf32>
    %146 = arith.addf %141, %145 : vector<64x64xf32>
    %c1_165 = arith.constant 1 : index
    %c1_166 = arith.constant 1 : index
    %c0_167 = arith.constant 0 : index
    %147 = vector.load %arg14[%c1_165, %c1_166, %c0_167] : memref<10x10x64xf32, #tpu.memory_space<vmem>>, vector<8x8x64xf32>
    %148 = vector.shape_cast %147 : vector<8x8x64xf32> to vector<64x64xf32>
    %c256_168 = arith.constant 256 : index
    %c0_169 = arith.constant 0 : index
    %149 = vector.load %arg6[%c256_168, %c0_169] : memref<576x64xf32, #tpu.memory_space<vmem>>, vector<64x64xf32>
    %cst_170 = arith.constant dense<0.000000e+00> : vector<64x64xf32>
    %150 = tpu.matmul %148, %149, %cst_170 {dimension_numbers = #tpu.dot_dimension_numbers<[1], [0], [0], [1], [0, 0, 1, 1], [], []>} : vector<64x64xf32>, vector<64x64xf32>, vector<64x64xf32> -> vector<64x64xf32>
    %151 = arith.addf %146, %150 : vector<64x64xf32>
    %c1_171 = arith.constant 1 : index
    %c2_172 = arith.constant 2 : index
    %c0_173 = arith.constant 0 : index
    %152 = vector.load %arg14[%c1_171, %c2_172, %c0_173] : memref<10x10x64xf32, #tpu.memory_space<vmem>>, vector<8x8x64xf32>
    %153 = vector.shape_cast %152 : vector<8x8x64xf32> to vector<64x64xf32>
    %c320_174 = arith.constant 320 : index
    %c0_175 = arith.constant 0 : index
    %154 = vector.load %arg6[%c320_174, %c0_175] : memref<576x64xf32, #tpu.memory_space<vmem>>, vector<64x64xf32>
    %cst_176 = arith.constant dense<0.000000e+00> : vector<64x64xf32>
    %155 = tpu.matmul %153, %154, %cst_176 {dimension_numbers = #tpu.dot_dimension_numbers<[1], [0], [0], [1], [0, 0, 1, 1], [], []>} : vector<64x64xf32>, vector<64x64xf32>, vector<64x64xf32> -> vector<64x64xf32>
    %156 = arith.addf %151, %155 : vector<64x64xf32>
    %c2_177 = arith.constant 2 : index
    %c0_178 = arith.constant 0 : index
    %c0_179 = arith.constant 0 : index
    %157 = vector.load %arg14[%c2_177, %c0_178, %c0_179] : memref<10x10x64xf32, #tpu.memory_space<vmem>>, vector<8x8x64xf32>
    %158 = vector.shape_cast %157 : vector<8x8x64xf32> to vector<64x64xf32>
    %c384_180 = arith.constant 384 : index
    %c0_181 = arith.constant 0 : index
    %159 = vector.load %arg6[%c384_180, %c0_181] : memref<576x64xf32, #tpu.memory_space<vmem>>, vector<64x64xf32>
    %cst_182 = arith.constant dense<0.000000e+00> : vector<64x64xf32>
    %160 = tpu.matmul %158, %159, %cst_182 {dimension_numbers = #tpu.dot_dimension_numbers<[1], [0], [0], [1], [0, 0, 1, 1], [], []>} : vector<64x64xf32>, vector<64x64xf32>, vector<64x64xf32> -> vector<64x64xf32>
    %161 = arith.addf %156, %160 : vector<64x64xf32>
    %c2_183 = arith.constant 2 : index
    %c1_184 = arith.constant 1 : index
    %c0_185 = arith.constant 0 : index
    %162 = vector.load %arg14[%c2_183, %c1_184, %c0_185] : memref<10x10x64xf32, #tpu.memory_space<vmem>>, vector<8x8x64xf32>
    %163 = vector.shape_cast %162 : vector<8x8x64xf32> to vector<64x64xf32>
    %c448_186 = arith.constant 448 : index
    %c0_187 = arith.constant 0 : index
    %164 = vector.load %arg6[%c448_186, %c0_187] : memref<576x64xf32, #tpu.memory_space<vmem>>, vector<64x64xf32>
    %cst_188 = arith.constant dense<0.000000e+00> : vector<64x64xf32>
    %165 = tpu.matmul %163, %164, %cst_188 {dimension_numbers = #tpu.dot_dimension_numbers<[1], [0], [0], [1], [0, 0, 1, 1], [], []>} : vector<64x64xf32>, vector<64x64xf32>, vector<64x64xf32> -> vector<64x64xf32>
    %166 = arith.addf %161, %165 : vector<64x64xf32>
    %c2_189 = arith.constant 2 : index
    %c2_190 = arith.constant 2 : index
    %c0_191 = arith.constant 0 : index
    %167 = vector.load %arg14[%c2_189, %c2_190, %c0_191] : memref<10x10x64xf32, #tpu.memory_space<vmem>>, vector<8x8x64xf32>
    %168 = vector.shape_cast %167 : vector<8x8x64xf32> to vector<64x64xf32>
    %c512_192 = arith.constant 512 : index
    %c0_193 = arith.constant 0 : index
    %169 = vector.load %arg6[%c512_192, %c0_193] : memref<576x64xf32, #tpu.memory_space<vmem>>, vector<64x64xf32>
    %cst_194 = arith.constant dense<0.000000e+00> : vector<64x64xf32>
    %170 = tpu.matmul %168, %169, %cst_194 {dimension_numbers = #tpu.dot_dimension_numbers<[1], [0], [0], [1], [0, 0, 1, 1], [], []>} : vector<64x64xf32>, vector<64x64xf32>, vector<64x64xf32> -> vector<64x64xf32>
    %171 = arith.addf %166, %170 : vector<64x64xf32>
    %c0_195 = arith.constant 0 : index
    %c0_196 = arith.constant 0 : index
    %172 = vector.load %arg7[%c0_195, %c0_196] : memref<1x64xf32, #tpu.memory_space<vmem>>, vector<1x64xf32>
    %173 = vector.broadcast %172 : vector<1x64xf32> to vector<64x64xf32>
    %174 = arith.addf %171, %173 : vector<64x64xf32>
    %cst_197 = arith.constant 0.000000e+00 : f32
    %175 = vector.broadcast %cst_197 : f32 to vector<64x64xf32>
    %176 = arith.maximumf %174, %175 : vector<64x64xf32>
    %177 = vector.shape_cast %176 : vector<64x64xf32> to vector<8x8x64xf32>
    %c1_198 = arith.constant 1 : index
    %c1_199 = arith.constant 1 : index
    %c0_200 = arith.constant 0 : index
    %178 = vector.load %arg14[%c1_198, %c1_199, %c0_200] : memref<10x10x64xf32, #tpu.memory_space<vmem>>, vector<8x8x64xf32>
    tpu.vector_store %arg14[%c1_198, %c1_199, %c0_200], %177 {strides = array<i32>} : memref<10x10x64xf32, #tpu.memory_space<vmem>>, vector<8x8x64xf32>,
    %c0_201 = arith.constant 0 : index
    %c0_202 = arith.constant 0 : index
    %c0_203 = arith.constant 0 : index
    %179 = vector.load %arg14[%c0_201, %c0_202, %c0_203] : memref<10x10x64xf32, #tpu.memory_space<vmem>>, vector<8x8x64xf32>
    %180 = vector.shape_cast %179 : vector<8x8x64xf32> to vector<64x64xf32>
    %c0_204 = arith.constant 0 : index
    %c0_205 = arith.constant 0 : index
    %181 = vector.load %arg8[%c0_204, %c0_205] : memref<576x64xf32, #tpu.memory_space<vmem>>, vector<64x64xf32>
    %cst_206 = arith.constant dense<0.000000e+00> : vector<64x64xf32>
    %182 = tpu.matmul %180, %181, %cst_206 {dimension_numbers = #tpu.dot_dimension_numbers<[1], [0], [0], [1], [0, 0, 1, 1], [], []>} : vector<64x64xf32>, vector<64x64xf32>, vector<64x64xf32> -> vector<64x64xf32>
    %c0_207 = arith.constant 0 : index
    %c1_208 = arith.constant 1 : index
    %c0_209 = arith.constant 0 : index
    %183 = vector.load %arg14[%c0_207, %c1_208, %c0_209] : memref<10x10x64xf32, #tpu.memory_space<vmem>>, vector<8x8x64xf32>
    %184 = vector.shape_cast %183 : vector<8x8x64xf32> to vector<64x64xf32>
    %c64_210 = arith.constant 64 : index
    %c0_211 = arith.constant 0 : index
    %185 = vector.load %arg8[%c64_210, %c0_211] : memref<576x64xf32, #tpu.memory_space<vmem>>, vector<64x64xf32>
    %cst_212 = arith.constant dense<0.000000e+00> : vector<64x64xf32>
    %186 = tpu.matmul %184, %185, %cst_212 {dimension_numbers = #tpu.dot_dimension_numbers<[1], [0], [0], [1], [0, 0, 1, 1], [], []>} : vector<64x64xf32>, vector<64x64xf32>, vector<64x64xf32> -> vector<64x64xf32>
    %187 = arith.addf %182, %186 : vector<64x64xf32>
    %c0_213 = arith.constant 0 : index
    %c2_214 = arith.constant 2 : index
    %c0_215 = arith.constant 0 : index
    %188 = vector.load %arg14[%c0_213, %c2_214, %c0_215] : memref<10x10x64xf32, #tpu.memory_space<vmem>>, vector<8x8x64xf32>
    %189 = vector.shape_cast %188 : vector<8x8x64xf32> to vector<64x64xf32>
    %c128_216 = arith.constant 128 : index
    %c0_217 = arith.constant 0 : index
    %190 = vector.load %arg8[%c128_216, %c0_217] : memref<576x64xf32, #tpu.memory_space<vmem>>, vector<64x64xf32>
    %cst_218 = arith.constant dense<0.000000e+00> : vector<64x64xf32>
    %191 = tpu.matmul %189, %190, %cst_218 {dimension_numbers = #tpu.dot_dimension_numbers<[1], [0], [0], [1], [0, 0, 1, 1], [], []>} : vector<64x64xf32>, vector<64x64xf32>, vector<64x64xf32> -> vector<64x64xf32>
    %192 = arith.addf %187, %191 : vector<64x64xf32>
    %c1_219 = arith.constant 1 : index
    %c0_220 = arith.constant 0 : index
    %c0_221 = arith.constant 0 : index
    %193 = vector.load %arg14[%c1_219, %c0_220, %c0_221] : memref<10x10x64xf32, #tpu.memory_space<vmem>>, vector<8x8x64xf32>
    %194 = vector.shape_cast %193 : vector<8x8x64xf32> to vector<64x64xf32>
    %c192_222 = arith.constant 192 : index
    %c0_223 = arith.constant 0 : index
    %195 = vector.load %arg8[%c192_222, %c0_223] : memref<576x64xf32, #tpu.memory_space<vmem>>, vector<64x64xf32>
    %cst_224 = arith.constant dense<0.000000e+00> : vector<64x64xf32>
    %196 = tpu.matmul %194, %195, %cst_224 {dimension_numbers = #tpu.dot_dimension_numbers<[1], [0], [0], [1], [0, 0, 1, 1], [], []>} : vector<64x64xf32>, vector<64x64xf32>, vector<64x64xf32> -> vector<64x64xf32>
    %197 = arith.addf %192, %196 : vector<64x64xf32>
    %c1_225 = arith.constant 1 : index
    %c1_226 = arith.constant 1 : index
    %c0_227 = arith.constant 0 : index
    %198 = vector.load %arg14[%c1_225, %c1_226, %c0_227] : memref<10x10x64xf32, #tpu.memory_space<vmem>>, vector<8x8x64xf32>
    %199 = vector.shape_cast %198 : vector<8x8x64xf32> to vector<64x64xf32>
    %c256_228 = arith.constant 256 : index
    %c0_229 = arith.constant 0 : index
    %200 = vector.load %arg8[%c256_228, %c0_229] : memref<576x64xf32, #tpu.memory_space<vmem>>, vector<64x64xf32>
    %cst_230 = arith.constant dense<0.000000e+00> : vector<64x64xf32>
    %201 = tpu.matmul %199, %200, %cst_230 {dimension_numbers = #tpu.dot_dimension_numbers<[1], [0], [0], [1], [0, 0, 1, 1], [], []>} : vector<64x64xf32>, vector<64x64xf32>, vector<64x64xf32> -> vector<64x64xf32>
    %202 = arith.addf %197, %201 : vector<64x64xf32>
    %c1_231 = arith.constant 1 : index
    %c2_232 = arith.constant 2 : index
    %c0_233 = arith.constant 0 : index
    %203 = vector.load %arg14[%c1_231, %c2_232, %c0_233] : memref<10x10x64xf32, #tpu.memory_space<vmem>>, vector<8x8x64xf32>
    %204 = vector.shape_cast %203 : vector<8x8x64xf32> to vector<64x64xf32>
    %c320_234 = arith.constant 320 : index
    %c0_235 = arith.constant 0 : index
    %205 = vector.load %arg8[%c320_234, %c0_235] : memref<576x64xf32, #tpu.memory_space<vmem>>, vector<64x64xf32>
    %cst_236 = arith.constant dense<0.000000e+00> : vector<64x64xf32>
    %206 = tpu.matmul %204, %205, %cst_236 {dimension_numbers = #tpu.dot_dimension_numbers<[1], [0], [0], [1], [0, 0, 1, 1], [], []>} : vector<64x64xf32>, vector<64x64xf32>, vector<64x64xf32> -> vector<64x64xf32>
    %207 = arith.addf %202, %206 : vector<64x64xf32>
    %c2_237 = arith.constant 2 : index
    %c0_238 = arith.constant 0 : index
    %c0_239 = arith.constant 0 : index
    %208 = vector.load %arg14[%c2_237, %c0_238, %c0_239] : memref<10x10x64xf32, #tpu.memory_space<vmem>>, vector<8x8x64xf32>
    %209 = vector.shape_cast %208 : vector<8x8x64xf32> to vector<64x64xf32>
    %c384_240 = arith.constant 384 : index
    %c0_241 = arith.constant 0 : index
    %210 = vector.load %arg8[%c384_240, %c0_241] : memref<576x64xf32, #tpu.memory_space<vmem>>, vector<64x64xf32>
    %cst_242 = arith.constant dense<0.000000e+00> : vector<64x64xf32>
    %211 = tpu.matmul %209, %210, %cst_242 {dimension_numbers = #tpu.dot_dimension_numbers<[1], [0], [0], [1], [0, 0, 1, 1], [], []>} : vector<64x64xf32>, vector<64x64xf32>, vector<64x64xf32> -> vector<64x64xf32>
    %212 = arith.addf %207, %211 : vector<64x64xf32>
    %c2_243 = arith.constant 2 : index
    %c1_244 = arith.constant 1 : index
    %c0_245 = arith.constant 0 : index
    %213 = vector.load %arg14[%c2_243, %c1_244, %c0_245] : memref<10x10x64xf32, #tpu.memory_space<vmem>>, vector<8x8x64xf32>
    %214 = vector.shape_cast %213 : vector<8x8x64xf32> to vector<64x64xf32>
    %c448_246 = arith.constant 448 : index
    %c0_247 = arith.constant 0 : index
    %215 = vector.load %arg8[%c448_246, %c0_247] : memref<576x64xf32, #tpu.memory_space<vmem>>, vector<64x64xf32>
    %cst_248 = arith.constant dense<0.000000e+00> : vector<64x64xf32>
    %216 = tpu.matmul %214, %215, %cst_248 {dimension_numbers = #tpu.dot_dimension_numbers<[1], [0], [0], [1], [0, 0, 1, 1], [], []>} : vector<64x64xf32>, vector<64x64xf32>, vector<64x64xf32> -> vector<64x64xf32>
    %217 = arith.addf %212, %216 : vector<64x64xf32>
    %c2_249 = arith.constant 2 : index
    %c2_250 = arith.constant 2 : index
    %c0_251 = arith.constant 0 : index
    %218 = vector.load %arg14[%c2_249, %c2_250, %c0_251] : memref<10x10x64xf32, #tpu.memory_space<vmem>>, vector<8x8x64xf32>
    %219 = vector.shape_cast %218 : vector<8x8x64xf32> to vector<64x64xf32>
    %c512_252 = arith.constant 512 : index
    %c0_253 = arith.constant 0 : index
    %220 = vector.load %arg8[%c512_252, %c0_253] : memref<576x64xf32, #tpu.memory_space<vmem>>, vector<64x64xf32>
    %cst_254 = arith.constant dense<0.000000e+00> : vector<64x64xf32>
    %221 = tpu.matmul %219, %220, %cst_254 {dimension_numbers = #tpu.dot_dimension_numbers<[1], [0], [0], [1], [0, 0, 1, 1], [], []>} : vector<64x64xf32>, vector<64x64xf32>, vector<64x64xf32> -> vector<64x64xf32>
    %222 = arith.addf %217, %221 : vector<64x64xf32>
    %c0_255 = arith.constant 0 : index
    %c0_256 = arith.constant 0 : index
    %223 = vector.load %arg9[%c0_255, %c0_256] : memref<1x64xf32, #tpu.memory_space<vmem>>, vector<1x64xf32>
    %224 = vector.broadcast %223 : vector<1x64xf32> to vector<64x64xf32>
    %225 = arith.addf %222, %224 : vector<64x64xf32>
    %cst_257 = arith.constant 0.000000e+00 : f32
    %226 = vector.broadcast %cst_257 : f32 to vector<64x64xf32>
    %227 = arith.maximumf %225, %226 : vector<64x64xf32>
    %c0_258 = arith.constant 0 : index
    %c0_259 = arith.constant 0 : index
    %228 = vector.load %arg10[%c0_258, %c0_259] : memref<64x128xf32, #tpu.memory_space<vmem>>, vector<64x128xf32>
    %cst_260 = arith.constant dense<0.000000e+00> : vector<64x128xf32>
    %229 = tpu.matmul %227, %228, %cst_260 {dimension_numbers = #tpu.dot_dimension_numbers<[1], [0], [0], [1], [0, 0, 1, 1], [], []>} : vector<64x64xf32>, vector<64x128xf32>, vector<64x128xf32> -> vector<64x128xf32>
    %c0_261 = arith.constant 0 : index
    %c0_262 = arith.constant 0 : index
    %230 = vector.load %arg11[%c0_261, %c0_262] : memref<1x128xf32, #tpu.memory_space<vmem>>, vector<1x128xf32>
    %231 = vector.broadcast %230 : vector<1x128xf32> to vector<64x128xf32>
    %232 = arith.addf %229, %231 : vector<64x128xf32>
    %c0_263 = arith.constant 0 : index
    %c0_264 = arith.constant 0 : index
    %c0_265 = arith.constant 0 : index
    %233 = vector.load %arg12[%c0_263, %c0_264, %c0_265] : memref<1x64x128xf32, #tpu.memory_space<vmem>>, vector<1x64x128xf32>
    %234 = vector.shape_cast %233 : vector<1x64x128xf32> to vector<64x128xf32>
    %235 = vector.shape_cast %232 : vector<64x128xf32> to vector<1x64x128xf32>
    tpu.vector_store %arg12[%c0_263, %c0_264, %c0_265], %235 {strides = array<i32>} : memref<1x64x128xf32, #tpu.memory_space<vmem>>, vector<1x64x128xf32>,
    return
  }
  func.func @transform_0(%arg0: i32) -> (i32, i32, i32, i32) {
    %c0_i32 = arith.constant 0 : i32
    %c0_i32_0 = arith.constant 0 : i32
    %c0_i32_1 = arith.constant 0 : i32
    %c0_i32_2 = arith.constant 0 : i32
    return %arg0, %c0_i32, %c0_i32_0, %c0_i32_1 : i32, i32, i32, i32
  }
  func.func @transform_1(%arg0: i32) -> (i32, i32) {
    %c0_i32 = arith.constant 0 : i32
    %c0_i32_0 = arith.constant 0 : i32
    %c0_i32_1 = arith.constant 0 : i32
    return %c0_i32, %c0_i32_0 : i32, i32
  }
  func.func @transform_2(%arg0: i32) -> (i32, i32) {
    %c0_i32 = arith.constant 0 : i32
    %c0_i32_0 = arith.constant 0 : i32
    %c0_i32_1 = arith.constant 0 : i32
    return %c0_i32, %c0_i32_0 : i32, i32
  }
  func.func @transform_3(%arg0: i32) -> (i32, i32) {
    %c0_i32 = arith.constant 0 : i32
    %c0_i32_0 = arith.constant 0 : i32
    %c0_i32_1 = arith.constant 0 : i32
    return %c0_i32, %c0_i32_0 : i32, i32
  }
  func.func @transform_4(%arg0: i32) -> (i32, i32) {
    %c0_i32 = arith.constant 0 : i32
    %c0_i32_0 = arith.constant 0 : i32
    %c0_i32_1 = arith.constant 0 : i32
    return %c0_i32, %c0_i32_0 : i32, i32
  }
  func.func @transform_5(%arg0: i32) -> (i32, i32) {
    %c0_i32 = arith.constant 0 : i32
    %c0_i32_0 = arith.constant 0 : i32
    %c0_i32_1 = arith.constant 0 : i32
    return %c0_i32, %c0_i32_0 : i32, i32
  }
  func.func @transform_6(%arg0: i32) -> (i32, i32) {
    %c0_i32 = arith.constant 0 : i32
    %c0_i32_0 = arith.constant 0 : i32
    %c0_i32_1 = arith.constant 0 : i32
    return %c0_i32, %c0_i32_0 : i32, i32
  }
  func.func @transform_7(%arg0: i32) -> (i32, i32) {
    %c0_i32 = arith.constant 0 : i32
    %c0_i32_0 = arith.constant 0 : i32
    %c0_i32_1 = arith.constant 0 : i32
    return %c0_i32, %c0_i32_0 : i32, i32
  }
  func.func @transform_8(%arg0: i32) -> (i32, i32) {
    %c0_i32 = arith.constant 0 : i32
    %c0_i32_0 = arith.constant 0 : i32
    %c0_i32_1 = arith.constant 0 : i32
    return %c0_i32, %c0_i32_0 : i32, i32
  }
  func.func @transform_9(%arg0: i32) -> (i32, i32) {
    %c0_i32 = arith.constant 0 : i32
    %c0_i32_0 = arith.constant 0 : i32
    %c0_i32_1 = arith.constant 0 : i32
    return %c0_i32, %c0_i32_0 : i32, i32
  }
  func.func @transform_10(%arg0: i32) -> (i32, i32) {
    %c0_i32 = arith.constant 0 : i32
    %c0_i32_0 = arith.constant 0 : i32
    %c0_i32_1 = arith.constant 0 : i32
    return %c0_i32, %c0_i32_0 : i32, i32
  }
  func.func @transform_11(%arg0: i32) -> (i32, i32, i32) {
    %c0_i32 = arith.constant 0 : i32
    %c0_i32_0 = arith.constant 0 : i32
    %c0_i32_1 = arith.constant 0 : i32
    return %arg0, %c0_i32, %c0_i32_0 : i32, i32, i32
  }
}

</mosaic_0001>

<llo_original>
// kernel: tile.6
$region0: #{tile.6}
  #allocation0 [shape = 's32[1]{0}', space=sflag, size = 0x4, scoped, tag = 'scoped memory for tile.6']
  %s0 = inlined_call_operand.vmem [shape: f32[3], index: 0, kind: input, shape index: {}]
  %s1 = inlined_call_operand.vmem [shape: f32[4,3], index: 1, kind: output, shape index: {}]
  // Predicated region
  $region2: #{tile.6} parent=0 // pred_check
    _
  $region3: #{tile.6} parent=0 // pred_check_branch
    %3 = sbr.rel (0) target = $region5
  $region4: #{tile.6} parent=0 // pred_region
    _
  $region5: #{tile.6} parent=0 // pred_fallthru
    _
  %v4 = vld [vmem:[%s0] ss:$0 sm:$0xff]
  %5 = vst [vmem:[%s1] sm:$0xf] %v4

// kernel: tile.7
$region0: #{tile.7}
  %s0 = inlined_call_operand.vmem [shape: f32[4,3], index: 0, kind: input, shape index: {}]
  %s1 = inlined_call_operand.vmem [shape: f32[12], index: 1, kind: output, shape index: {}]
  $region1: #{tile.7} parent=0
    #allocation0 [shape = 'u8[4096]{0}', space=vmem, size = 0x1000, scoped, tag = 'scoped mem for output reshape']
    #allocation1 [shape = 'u8[4096]{0}', space=vmem, size = 0x1000, scoped, tag = 'scoped mem for input reshape']
    %s3 = sshll.u32 1, 4
    %s4 = ssub.s32 %s3, 1
    %v5 = vld [vmem:[%s0] sm:%s4]
    %6 = vst [vmem:[#allocation1] sm:%s4] %v5
    %v7 = vld [vmem:[#allocation1] sm:$0x1]
    %vm8 = vcmask 23552
    %9 = vst.msk [vmem:[#allocation0] sm:$0x1] %vm8, %v7
    %s10 = scalar_lea.vmem [#allocation1], 3
    %v11 = vld [vmem:[%s10] sm:$0x1]
    %12 = vrot.lane.b32.xlu0 %v11, 9
    %v13 = vpop.permute.xlu0 %12
    %vm14 = vcmask 97352
    %15 = vst.msk [vmem:[#allocation0] sm:$0x1] %vm14, %v13
    %s16 = scalar_lea.vmem [#allocation1], 2
    %v17 = vld [vmem:[%s16] sm:$0x1]
    %18 = vrot.lane.b32.xlu0 %v17, 6
    %v19 = vpop.permute.xlu0 %18
    %vm20 = vcmask 72752
    %21 = vst.msk [vmem:[#allocation0] sm:$0x1] %vm20, %v19
    %s22 = scalar_lea.vmem [#allocation1], 1
    %v23 = vld [vmem:[%s22] sm:$0x1]
    %24 = vrot.lane.b32.xlu0 %v23, 3
    %v25 = vpop.permute.xlu0 %24
    %vm26 = vcmask 48152
    %27 = vst.msk [vmem:[#allocation0] sm:$0x1] %vm26, %v25
    %s29 = sshll.u32 1, 1
    %s30 = ssub.s32 %s29, 1
    %v32 = vld [vmem:[#allocation0] sm:%s30]
    %s33 = sshll.u32 1, 1
    %s34 = ssub.s32 %s33, 1
    %35 = vst [vmem:[%s1] sm:%s34] %v32

// kernel: unet_forward.1
$region0: #{unet_forward.1}
  #allocation0 [shape = 'u32[]', space=smem, size = 0x4, offset = 0x4, fixed_abs, tag = 'smem constant byte address 0x4 - core index']
  #allocation1 [shape = 'u32[144,128]{1,0:T(1,128)}', space=vmem, size = 0x12000, scoped, tag = 'internal scratch']
  #allocation2 [shape = 'f32[18,18,64]{2,1,0:T(8,128)}', space=vmem, size = 0x36000, scoped, tag = 'scratch operand']
  #allocation3 [shape = 'f32[10,10,64]{2,1,0:T(8,128)}', space=vmem, size = 0x14000, scoped, tag = 'scratch operand']
  %s0 = inlined_call_operand.vmem [shape: f32[2,16,16,64], index: 0, kind: input, shape index: {}]
  %s1 = inlined_call_operand.vmem [shape: f32[576,64], index: 1, kind: input, shape index: {}]
  %s2 = inlined_call_operand.vmem [shape: f32[1,64], index: 2, kind: input, shape index: {}]
  %s3 = inlined_call_operand.vmem [shape: f32[576,64], index: 3, kind: input, shape index: {}]
  %s4 = inlined_call_operand.vmem [shape: f32[1,64], index: 4, kind: input, shape index: {}]
  %s5 = inlined_call_operand.hbm [shape: f32[576,64], index: 5, kind: input, shape index: {}]
  %s6 = inlined_call_operand.vmem [shape: f32[1,64], index: 6, kind: input, shape index: {}]
  %s7 = inlined_call_operand.hbm [shape: f32[576,64], index: 7, kind: input, shape index: {}]
  %s8 = inlined_call_operand.vmem [shape: f32[1,64], index: 8, kind: input, shape index: {}]
  %s9 = inlined_call_operand.vmem [shape: f32[64,128], index: 9, kind: input, shape index: {}]
  %s10 = inlined_call_operand.vmem [shape: f32[1,128], index: 10, kind: input, shape index: {}]
  %s11 = inlined_call_operand.vmem [shape: f32[2,64,128], index: 11, kind: output, shape index: {}]
  %s12 = sld [smem:[#allocation0]]
  $region85: #{unet_forward.1} parent=0
    _
  %s14 = ssub.s32 1, %s12
  %s15 = scalar_select 0, %s14, %s12
  $region1: #{unet_forward.1} parent=0
    #allocation4 [shape = 'u8[294912]{0}', space=vmem, size = 0x48000, scoped, tag = 'input window, operand 5, single buffered']
    #allocation5 [shape = 's32[2]{0}', space=sflag, size = 0x8, scoped, tag = 'scoped memory for unet_forward.1']
    #allocation6 [shape = 'u8[294912]{0}', space=vmem, size = 0x48000, scoped, tag = 'input window, operand 7, single buffered']
    #allocation7 [shape = 's32[1]{0}', space=sflag, size = 0x4, scoped, tag = 'scoped memory for unet_forward.1']
    %16 = vsyncpa [#allocation5], 0
    %17 = vsyncpa [#allocation7], 0
    loop: start=0, step=1, limit=4
    $region2: #{unet_forward.1} parent=1 // loop_pre_header
      _
    $region3: #{unet_forward.1} parent=1 // loop_header
      %s19 = sphi 0, %s23
      %p20 = scmp.ge.s32.totalorder %s19, 4
      %s29 = sphi 0, %s31
      %s32 = sphi 0, %s29
      %s33 = sphi 0, %s32
      %s49 = sphi 0, %s33
      %s53 = sphi 0, %s53
      %s55 = sphi 0, %s53
      %s56 = sphi 0, %s55
      %s70 = sphi 0, %s56
      %s74 = sphi 0, %s74
      %s76 = sphi 0, %s74
      %s77 = sphi 0, %s76
      %s91 = sphi 0, %s77
      %s95 = sphi 0, %s95
      %s97 = sphi 0, %s95
      %s98 = sphi 0, %s97
      %s112 = sphi 0, %s98
      %s116 = sphi 0, %s116
      %s118 = sphi 0, %s116
      %s119 = sphi 0, %s118
      %s133 = sphi 0, %s119
      %s137 = sphi 0, %s137
      %s139 = sphi 0, %s137
      %s140 = sphi 0, %s139
      %s154 = sphi 0, %s140
      %s158 = sphi 0, %s158
      %s160 = sphi 0, %s158
      %s161 = sphi 0, %s160
      %s175 = sphi 0, %s161
      %s179 = sphi 0, %s179
      %s181 = sphi 0, %s179
      %s182 = sphi 0, %s181
      %s196 = sphi 0, %s182
      %s200 = sphi 0, %s200
      %s202 = sphi 0, %s200
      %s203 = sphi 0, %s202
      %s217 = sphi 0, %s203
      %s221 = sphi 0, %s221
      %s223 = sphi 0, %s221
      %s224 = sphi 0, %s223
      %s238 = sphi 0, %s224
      %s242 = sphi 0, %s242
      %s244 = sphi 0, %s242
      %s245 = sphi 0, %s244
      %s259 = sphi 0, %s245
      %s265 = sphi 0, %s267
      %s268 = sphi 0, %s265
      %s269 = sphi 0, %s268
      %s285 = sphi 0, %s269
    $region4: #{unet_forward.1} parent=1 // loop_header_branch
      %22 = sbr.rel (%p20) target = $region8
    $region5: #{unet_forward.1} parent=1 // loop_body
      %s24 = ssub.s32 %s19, 1
      %s25 = ssub.s32 %s19, 2
      %s26 = sadd.s32 %s19, 1
      %s27 = ssub.s32 %s19, %s26
      %p28 = scmp.eq.s32.totalorder %s27, 0
      %s30 = sadd.s32 %s29, 1
      %s31 = scalar_select %p28, %s29, %s30
      %p34 = pneg %p28
      %p35 = scmp.eq.s32.totalorder %s19, 1
      %p36 = por %p34, %p35
      %p37 = scmp.ne.s32.totalorder %s29, %s32
      %p38 = scmp.eq.s32.totalorder %s19, 0
      %p39 = por %p37, %p38
      %p40 = scmp.ne.s32.totalorder %s29, %s32
      %p41 = scmp.eq.s32.totalorder %s24, 1
      %p42 = por %p40, %p41
      %p43 = scmp.ne.s32.totalorder %s32, %s33
      %p44 = scmp.eq.s32.totalorder %s24, 0
      %p45 = por %p43, %p44
      %p46 = scmp.ne.s32.totalorder %s32, %s33
      %p47 = scmp.eq.s32.totalorder %s25, 1
      %p48 = por %p46, %p47
      %p50 = scmp.ne.s32.totalorder %s33, %s49
      %p51 = scmp.eq.s32.totalorder %s25, 0
      %p52 = por %p50, %p51
      %s54 = sadd.s32 %s53, 1
      %p57 = scmp.eq.s32.totalorder %s19, 1
      %p58 = scmp.ne.s32.totalorder %s53, %s55
      %p59 = scmp.eq.s32.totalorder %s19, 0
      %p60 = por %p58, %p59
      %p61 = scmp.ne.s32.totalorder %s53, %s55
      %p62 = scmp.eq.s32.totalorder %s24, 1
      %p63 = por %p61, %p62
      %p64 = scmp.ne.s32.totalorder %s55, %s56
      %p65 = scmp.eq.s32.totalorder %s24, 0
      %p66 = por %p64, %p65
      %p67 = scmp.ne.s32.totalorder %s55, %s56
      %p68 = scmp.eq.s32.totalorder %s25, 1
      %p69 = por %p67, %p68
      %p71 = scmp.ne.s32.totalorder %s56, %s70
      %p72 = scmp.eq.s32.totalorder %s25, 0
      %p73 = por %p71, %p72
      %s75 = sadd.s32 %s74, 1
      %p78 = scmp.eq.s32.totalorder %s19, 1
      %p79 = scmp.ne.s32.totalorder %s74, %s76
      %p80 = scmp.eq.s32.totalorder %s19, 0
      %p81 = por %p79, %p80
      %p82 = scmp.ne.s32.totalorder %s74, %s76
      %p83 = scmp.eq.s32.totalorder %s24, 1
      %p84 = por %p82, %p83
      %p85 = scmp.ne.s32.totalorder %s76, %s77
      %p86 = scmp.eq.s32.totalorder %s24, 0
      %p87 = por %p85, %p86
      %p88 = scmp.ne.s32.totalorder %s76, %s77
      %p89 = scmp.eq.s32.totalorder %s25, 1
      %p90 = por %p88, %p89
      %p92 = scmp.ne.s32.totalorder %s77, %s91
      %p93 = scmp.eq.s32.totalorder %s25, 0
      %p94 = por %p92, %p93
      %s96 = sadd.s32 %s95, 1
      %p99 = scmp.eq.s32.totalorder %s19, 1
      %p100 = scmp.ne.s32.totalorder %s95, %s97
      %p101 = scmp.eq.s32.totalorder %s19, 0
      %p102 = por %p100, %p101
      %p103 = scmp.ne.s32.totalorder %s95, %s97
      %p104 = scmp.eq.s32.totalorder %s24, 1
      %p105 = por %p103, %p104
      %p106 = scmp.ne.s32.totalorder %s97, %s98
      %p107 = scmp.eq.s32.totalorder %s24, 0
      %p108 = por %p106, %p107
      %p109 = scmp.ne.s32.totalorder %s97, %s98
      %p110 = scmp.eq.s32.totalorder %s25, 1
      %p111 = por %p109, %p110
      %p113 = scmp.ne.s32.totalorder %s98, %s112
      %p114 = scmp.eq.s32.totalorder %s25, 0
      %p115 = por %p113, %p114
      %s117 = sadd.s32 %s116, 1
      %p120 = scmp.eq.s32.totalorder %s19, 1
      %p121 = scmp.ne.s32.totalorder %s116, %s118
      %p122 = scmp.eq.s32.totalorder %s19, 0
      %p123 = por %p121, %p122
      %p124 = scmp.ne.s32.totalorder %s116, %s118
      %p125 = scmp.eq.s32.totalorder %s24, 1
      %p126 = por %p124, %p125
      %p127 = scmp.ne.s32.totalorder %s118, %s119
      %p128 = scmp.eq.s32.totalorder %s24, 0
      %p129 = por %p127, %p128
      %p130 = scmp.ne.s32.totalorder %s118, %s119
      %p131 = scmp.eq.s32.totalorder %s25, 1
      %p132 = por %p130, %p131
      %p134 = scmp.ne.s32.totalorder %s119, %s133
      %p135 = scmp.eq.s32.totalorder %s25, 0
      %p136 = por %p134, %p135
      %s138 = sadd.s32 %s137, 1
      %p141 = scmp.eq.s32.totalorder %s19, 1
      %p142 = scmp.ne.s32.totalorder %s137, %s139
      %p143 = scmp.eq.s32.totalorder %s19, 0
      %p144 = por %p142, %p143
      %p145 = scmp.ne.s32.totalorder %s137, %s139
      %p146 = scmp.eq.s32.totalorder %s24, 1
      %p147 = por %p145, %p146
      %p148 = scmp.ne.s32.totalorder %s139, %s140
      %p149 = scmp.eq.s32.totalorder %s24, 0
      %p150 = por %p148, %p149
      %p151 = scmp.ne.s32.totalorder %s139, %s140
      %p152 = scmp.eq.s32.totalorder %s25, 1
      %p153 = por %p151, %p152
      %p155 = scmp.ne.s32.totalorder %s140, %s154
      %p156 = scmp.eq.s32.totalorder %s25, 0
      %p157 = por %p155, %p156
      %s159 = sadd.s32 %s158, 1
      %p162 = scmp.eq.s32.totalorder %s19, 1
      %p163 = scmp.ne.s32.totalorder %s158, %s160
      %p164 = scmp.eq.s32.totalorder %s19, 0
      %p165 = por %p163, %p164
      %p166 = scmp.ne.s32.totalorder %s158, %s160
      %p167 = scmp.eq.s32.totalorder %s24, 1
      %p168 = por %p166, %p167
      %p169 = scmp.ne.s32.totalorder %s160, %s161
      %p170 = scmp.eq.s32.totalorder %s24, 0
      %p171 = por %p169, %p170
      %p172 = scmp.ne.s32.totalorder %s160, %s161
      %p173 = scmp.eq.s32.totalorder %s25, 1
      %p174 = por %p172, %p173
      %p176 = scmp.ne.s32.totalorder %s161, %s175
      %p177 = scmp.eq.s32.totalorder %s25, 0
      %p178 = por %p176, %p177
      %s180 = sadd.s32 %s179, 1
      %p183 = scmp.eq.s32.totalorder %s19, 1
      %p184 = scmp.ne.s32.totalorder %s179, %s181
      %p185 = scmp.eq.s32.totalorder %s19, 0
      %p186 = por %p184, %p185
      %p187 = scmp.ne.s32.totalorder %s179, %s181
      %p188 = scmp.eq.s32.totalorder %s24, 1
      %p189 = por %p187, %p188
      %p190 = scmp.ne.s32.totalorder %s181, %s182
      %p191 = scmp.eq.s32.totalorder %s24, 0
      %p192 = por %p190, %p191
      %p193 = scmp.ne.s32.totalorder %s181, %s182
      %p194 = scmp.eq.s32.totalorder %s25, 1
      %p195 = por %p193, %p194
      %p197 = scmp.ne.s32.totalorder %s182, %s196
      %p198 = scmp.eq.s32.totalorder %s25, 0
      %p199 = por %p197, %p198
      %s201 = sadd.s32 %s200, 1
      %p204 = scmp.eq.s32.totalorder %s19, 1
      %p205 = scmp.ne.s32.totalorder %s200, %s202
      %p206 = scmp.eq.s32.totalorder %s19, 0
      %p207 = por %p205, %p206
      %p208 = scmp.ne.s32.totalorder %s200, %s202
      %p209 = scmp.eq.s32.totalorder %s24, 1
      %p210 = por %p208, %p209
      %p211 = scmp.ne.s32.totalorder %s202, %s203
      %p212 = scmp.eq.s32.totalorder %s24, 0
      %p213 = por %p211, %p212
      %p214 = scmp.ne.s32.totalorder %s202, %s203
      %p215 = scmp.eq.s32.totalorder %s25, 1
      %p216 = por %p214, %p215
      %p218 = scmp.ne.s32.totalorder %s203, %s217
      %p219 = scmp.eq.s32.totalorder %s25, 0
      %p220 = por %p218, %p219
      %s222 = sadd.s32 %s221, 1
      %p225 = scmp.eq.s32.totalorder %s19, 1
      %p226 = scmp.ne.s32.totalorder %s221, %s223
      %p227 = scmp.eq.s32.totalorder %s19, 0
      %p228 = por %p226, %p227
      %p229 = scmp.ne.s32.totalorder %s221, %s223
      %p230 = scmp.eq.s32.totalorder %s24, 1
      %p231 = por %p229, %p230
      %p232 = scmp.ne.s32.totalorder %s223, %s224
      %p233 = scmp.eq.s32.totalorder %s24, 0
      %p234 = por %p232, %p233
      %p235 = scmp.ne.s32.totalorder %s223, %s224
      %p236 = scmp.eq.s32.totalorder %s25, 1
      %p237 = por %p235, %p236
      %p239 = scmp.ne.s32.totalorder %s224, %s238
      %p240 = scmp.eq.s32.totalorder %s25, 0
      %p241 = por %p239, %p240
      %s243 = sadd.s32 %s242, 1
      %p246 = scmp.eq.s32.totalorder %s19, 1
      %p247 = scmp.ne.s32.totalorder %s242, %s244
      %p248 = scmp.eq.s32.totalorder %s19, 0
      %p249 = por %p247, %p248
      %p250 = scmp.ne.s32.totalorder %s242, %s244
      %p251 = scmp.eq.s32.totalorder %s24, 1
      %p252 = por %p250, %p251
      %p253 = scmp.ne.s32.totalorder %s244, %s245
      %p254 = scmp.eq.s32.totalorder %s24, 0
      %p255 = por %p253, %p254
      %p256 = scmp.ne.s32.totalorder %s244, %s245
      %p257 = scmp.eq.s32.totalorder %s25, 1
      %p258 = por %p256, %p257
      %p260 = scmp.ne.s32.totalorder %s245, %s259
      %p261 = scmp.eq.s32.totalorder %s25, 0
      %p262 = por %p260, %p261
      %s263 = ssub.s32 %s19, %s26
      %p264 = scmp.eq.s32.totalorder %s263, 0
      %s266 = sadd.s32 %s265, 1
      %s267 = scalar_select %p264, %s265, %s266
      %p270 = pneg %p264
      %p271 = scmp.eq.s32.totalorder %s19, 1
      %p272 = por %p270, %p271
      %p273 = scmp.ne.s32.totalorder %s265, %s268
      %p274 = scmp.eq.s32.totalorder %s19, 0
      %p275 = por %p273, %p274
      %p276 = scmp.ne.s32.totalorder %s265, %s268
      %p277 = scmp.eq.s32.totalorder %s24, 1
      %p278 = por %p276, %p277
      %p279 = scmp.ne.s32.totalorder %s268, %s269
      %p280 = scmp.eq.s32.totalorder %s24, 0
      %p281 = por %p279, %p280
      %p282 = scmp.ne.s32.totalorder %s268, %s269
      %p283 = scmp.eq.s32.totalorder %s25, 1
      %p284 = por %p282, %p283
      %p286 = scmp.ne.s32.totalorder %s269, %s285
      %p287 = scmp.eq.s32.totalorder %s25, 0
      %p288 = por %p286, %p287
      %p289 = scmp.le.s32.totalorder 1, %s19
      %p290 = scmp.lt.s32.totalorder %s19, 3
      %p291 = pnand %p289, %p290
      %p292 = pneg %p291
      // Predicated region
      $region9: #{unet_forward.1} parent=5 // pred_check
        _
      $region10: #{unet_forward.1} parent=5 // pred_check_branch
        %294 = sbr.rel (%p291) target = $region12
      $region11: #{unet_forward.1} parent=5 // pred_region
        %s295 = ssub.s32 %s19, 1
        // Predicated region
        $region13: #{unet_forward.1} parent=11 // pred_check
          %p296 = pneg %p66
        $region14: #{unet_forward.1} parent=11 // pred_check_branch
          %298 = sbr.rel (%p296) target = $region16
        $region15: #{unet_forward.1} parent=11 // pred_region
          _
        $region16: #{unet_forward.1} parent=11 // pred_fallthru
          _
        // Predicated region
        $region17: #{unet_forward.1} parent=11 // pred_check
          %p299 = pneg %p87
        $region18: #{unet_forward.1} parent=11 // pred_check_branch
          %301 = sbr.rel (%p299) target = $region20
        $region19: #{unet_forward.1} parent=11 // pred_region
          _
        $region20: #{unet_forward.1} parent=11 // pred_fallthru
          _
        // Predicated region
        $region21: #{unet_forward.1} parent=11 // pred_check
          %p302 = pneg %p108
        $region22: #{unet_forward.1} parent=11 // pred_check_branch
          %304 = sbr.rel (%p302) target = $region24
        $region23: #{unet_forward.1} parent=11 // pred_region
          _
        $region24: #{unet_forward.1} parent=11 // pred_fallthru
          _
        // Predicated region
        $region25: #{unet_forward.1} parent=11 // pred_check
          %p305 = pneg %p129
        $region26: #{unet_forward.1} parent=11 // pred_check_branch
          %307 = sbr.rel (%p305) target = $region28
        $region27: #{unet_forward.1} parent=11 // pred_region
          _
        $region28: #{unet_forward.1} parent=11 // pred_fallthru
          _
        // Predicated region
        $region29: #{unet_forward.1} parent=11 // pred_check
          %p308 = pneg %p150
        $region30: #{unet_forward.1} parent=11 // pred_check_branch
          %310 = sbr.rel (%p308) target = $region32
        $region31: #{unet_forward.1} parent=11 // pred_region
          %s312 = ssub.s32 9216, 9216
          %313 = vsyncadd [#allocation5], %s312
          %s314 = sshll.u32 [#allocation4], 4
          %s315 = int_to_ptr.vmem [resolvable:$true] %s314
          %320 = dma.hbm_to_vmem [thread:$0]  %s5, 9216, %s315, [#allocation5], 128, 128, 8
        $region32: #{unet_forward.1} parent=11 // pred_fallthru
          _
        // Predicated region
        $region33: #{unet_forward.1} parent=11 // pred_check
          %p321 = pneg %p171
        $region34: #{unet_forward.1} parent=11 // pred_check_branch
          %323 = sbr.rel (%p321) target = $region36
        $region35: #{unet_forward.1} parent=11 // pred_region
          _
        $region36: #{unet_forward.1} parent=11 // pred_fallthru
          _
        // Predicated region
        $region37: #{unet_forward.1} parent=11 // pred_check
          %p324 = pneg %p192
        $region38: #{unet_forward.1} parent=11 // pred_check_branch
          %326 = sbr.rel (%p324) target = $region40
        $region39: #{unet_forward.1} parent=11 // pred_region
          %s328 = ssub.s32 9216, 9216
          %329 = vsyncadd [#allocation7], %s328
          %s330 = sshll.u32 [#allocation6], 4
          %s331 = int_to_ptr.vmem [resolvable:$true] %s330
          %336 = dma.hbm_to_vmem [thread:$0]  %s7, 9216, %s331, [#allocation7], 128, 128, 8
        $region40: #{unet_forward.1} parent=11 // pred_fallthru
          _
        // Predicated region
        $region41: #{unet_forward.1} parent=11 // pred_check
          %p337 = pneg %p213
        $region42: #{unet_forward.1} parent=11 // pred_check_branch
          %339 = sbr.rel (%p337) target = $region44
        $region43: #{unet_forward.1} parent=11 // pred_region
          _
        $region44: #{unet_forward.1} parent=11 // pred_fallthru
          _
        // Predicated region
        $region45: #{unet_forward.1} parent=11 // pred_check
          %p340 = pneg %p234
        $region46: #{unet_forward.1} parent=11 // pred_check_branch
          %342 = sbr.rel (%p340) target = $region48
        $region47: #{unet_forward.1} parent=11 // pred_region
          _
        $region48: #{unet_forward.1} parent=11 // pred_fallthru
          _
        // Predicated region
        $region49: #{unet_forward.1} parent=11 // pred_check
          %p343 = pneg %p255
        $region50: #{unet_forward.1} parent=11 // pred_check_branch
          %345 = sbr.rel (%p343) target = $region52
        $region51: #{unet_forward.1} parent=11 // pred_region
          _
        $region52: #{unet_forward.1} parent=11 // pred_fallthru
          _
      $region12: #{unet_forward.1} parent=5 // pred_fallthru
        _
      %p346 = scmp.lt.s32.totalorder %s19, 2
      // Predicated region
      $region53: #{unet_forward.1} parent=5 // pred_check
        %p347 = pneg %p346
      $region54: #{unet_forward.1} parent=5 // pred_check_branch
        %349 = sbr.rel (%p347) target = $region56
      $region55: #{unet_forward.1} parent=5 // pred_region
        // Predicated region
        $region57: #{unet_forward.1} parent=55 // pred_check
          %p350 = pneg %p39
        $region58: #{unet_forward.1} parent=55 // pred_check_branch
          %352 = sbr.rel (%p350) target = $region60
        $region59: #{unet_forward.1} parent=55 // pred_region
          %p353 = scmp.lt.s32.totalorder %s19, 1
          %s354 = scalar_select %p353, %s19, 1
          %s355 = smul.addr %s354, 32
          %s356 = smul.addr %s355, 8
          %s357 = scalar_lea.vmem %s0, %s356
        $region60: #{unet_forward.1} parent=55 // pred_fallthru
          _
      $region56: #{unet_forward.1} parent=5 // pred_fallthru
        _
      %p358 = scmp.le.s32.totalorder 1, %s19
      %p359 = scmp.lt.s32.totalorder %s19, 3
      %p360 = pnand %p358, %p359
      %p361 = pneg %p360
      // Predicated region
      $region61: #{unet_forward.1} parent=5 // pred_check
        _
      $region62: #{unet_forward.1} parent=5 // pred_check_branch
        %363 = sbr.rel (%p360) target = $region64
      $region63: #{unet_forward.1} parent=5 // pred_region
        %s364 = ssub.s32 %s19, 1
        // Predicated region
        $region65: #{unet_forward.1} parent=63 // pred_check
          %p365 = pneg %p150
        $region66: #{unet_forward.1} parent=63 // pred_check_branch
          %367 = sbr.rel (%p365) target = $region68
        $region67: #{unet_forward.1} parent=63 // pred_region
          %368 = dma.done [#allocation5], 9216
        $region68: #{unet_forward.1} parent=63 // pred_fallthru
          _
        // Predicated region
        $region69: #{unet_forward.1} parent=63 // pred_check
          %p369 = pneg %p192
        $region70: #{unet_forward.1} parent=63 // pred_check_branch
          %371 = sbr.rel (%p369) target = $region72
        $region71: #{unet_forward.1} parent=63 // pred_region
          %372 = dma.done [#allocation7], 9216
        $region72: #{unet_forward.1} parent=63 // pred_fallthru
          _
        %p373 = scmp.lt.s32.totalorder %s24, 1
        %s374 = scalar_select %p373, %s24, 1
        %s375 = smul.addr %s374, 32
        %s376 = smul.addr %s375, 8
        %s377 = scalar_lea.vmem %s0, %s376
        %p378 = pneg %p45
        %p379 = pneg %p42
        %p380 = pneg %p66
        %p381 = pneg %p63
        %p382 = pneg %p87
        %p383 = pneg %p84
        %p384 = pneg %p108
        %p385 = pneg %p105
        %p386 = pneg %p129
        %p387 = pneg %p126
        %p388 = pneg %p150
        %p389 = pneg %p147
        %p390 = pneg %p171
        %p391 = pneg %p168
        %p392 = pneg %p192
        %p393 = pneg %p189
        %p394 = pneg %p213
        %p395 = pneg %p210
        %p396 = pneg %p234
        %p397 = pneg %p231
        %p398 = pneg %p255
        %p399 = pneg %p252
        %p400 = pneg %p281
        %p401 = pneg %p278
        %p402 = scmp.lt.s32.totalorder %s24, 1
        %s403 = scalar_select %p402, %s24, 1
        %s404 = smul.addr %s403, 8
        %s405 = smul.addr %s404, 8
        %s406 = scalar_lea.vmem %s11, %s405
        %p407 = scmp.lt.s32.totalorder %s24, 1
        %s408 = scalar_select %p407, %s24, 1
        %s409 = smul.addr %s408, 32
        %s410 = smul.addr %s409, 8
        %s411 = scalar_lea.vmem %s0, %s410
        %p412 = scmp.lt.s32.totalorder %s24, 1
        %s413 = scalar_select %p412, %s24, 1
        %s414 = smul.addr %s413, 8
        %s415 = smul.addr %s414, 8
        %s416 = scalar_lea.vmem %s11, %s415
        %vm417 = vcmask 523264
        %418 = vst.msk [vmem:[#allocation2] sm:$0xff] %vm417, 0.0
        %419 = vst.msk [vmem:[#allocation2 + $0x8] sm:$0xff] %vm417, 0.0
        %vm420 = vcmask 517120
        %421 = vst.msk [vmem:[#allocation2 + $0x10] sm:$0x3] %vm420, 0.0
        %s422 = scalar_lea.vmem [#allocation2], 408
        %423 = vst.msk [vmem:[%s422] sm:$0xff] %vm417, 0.0
        %424 = vst.msk [vmem:[%s422 + $0x8] sm:$0xff] %vm417, 0.0
        %425 = vst.msk [vmem:[%s422 + $0x10] sm:$0x3] %vm420, 0.0
        %vm426 = vcmask 516096
        %427 = vst.msk [vmem:[#allocation2] sm:$0x1] %vm426, 0.0
        %428 = vst.msk [vmem:[#allocation2 + $0x18] sm:$0x1] %vm426, 0.0
        %429 = vst.msk [vmem:[#allocation2 + $0x30] sm:$0x1] %vm426, 0.0
        %430 = vst.msk [vmem:[#allocation2 + $0x48] sm:$0x1] %vm426, 0.0
        %431 = vst.msk [vmem:[#allocation2 + $0x60] sm:$0x1] %vm426, 0.0
        %432 = vst.msk [vmem:[#allocation2 + $0x78] sm:$0x1] %vm426, 0.0
        %433 = vst.msk [vmem:[#allocation2 + $0x90] sm:$0x1] %vm426, 0.0
        %434 = vst.msk [vmem:[#allocation2 + $0xa8] sm:$0x1] %vm426, 0.0
        %435 = vst.msk [vmem:[#allocation2 + $0xc0] sm:$0x1] %vm426, 0.0
        %436 = vst.msk [vmem:[#allocation2 + $0xd8] sm:$0x1] %vm426, 0.0
        %437 = vst.msk [vmem:[#allocation2 + $0xf0] sm:$0x1] %vm426, 0.0
        %438 = vst.msk [vmem:[#allocation2 + $0x108] sm:$0x1] %vm426, 0.0
        %439 = vst.msk [vmem:[#allocation2 + $0x120] sm:$0x1] %vm426, 0.0
        %440 = vst.msk [vmem:[#allocation2 + $0x138] sm:$0x1] %vm426, 0.0
        %441 = vst.msk [vmem:[#allocation2 + $0x150] sm:$0x1] %vm426, 0.0
        %442 = vst.msk [vmem:[#allocation2 + $0x168] sm:$0x1] %vm426, 0.0
        %443 = vst.msk [vmem:[#allocation2 + $0x180] sm:$0x1] %vm426, 0.0
        %444 = vst.msk [vmem:[#allocation2 + $0x198] sm:$0x1] %vm426, 0.0
        %445 = vst.msk [vmem:[#allocation2 + $0x11] sm:$0x1] %vm426, 0.0
        %446 = vst.msk [vmem:[#allocation2 + $0x29] sm:$0x1] %vm426, 0.0
        %447 = vst.msk [vmem:[#allocation2 + $0x41] sm:$0x1] %vm426, 0.0
        %448 = vst.msk [vmem:[#allocation2 + $0x59] sm:$0x1] %vm426, 0.0
        %449 = vst.msk [vmem:[#allocation2 + $0x71] sm:$0x1] %vm426, 0.0
        %450 = vst.msk [vmem:[#allocation2 + $0x89] sm:$0x1] %vm426, 0.0
        %451 = vst.msk [vmem:[#allocation2 + $0xa1] sm:$0x1] %vm426, 0.0
        %452 = vst.msk [vmem:[#allocation2 + $0xb9] sm:$0x1] %vm426, 0.0
        %453 = vst.msk [vmem:[#allocation2 + $0xd1] sm:$0x1] %vm426, 0.0
        %454 = vst.msk [vmem:[#allocation2 + $0xe9] sm:$0x1] %vm426, 0.0
        %455 = vst.msk [vmem:[#allocation2 + $0x101] sm:$0x1] %vm426, 0.0
        %456 = vst.msk [vmem:[#allocation2 + $0x119] sm:$0x1] %vm426, 0.0
        %457 = vst.msk [vmem:[#allocation2 + $0x131] sm:$0x1] %vm426, 0.0
        %458 = vst.msk [vmem:[#allocation2 + $0x149] sm:$0x1] %vm426, 0.0
        %459 = vst.msk [vmem:[#allocation2 + $0x161] sm:$0x1] %vm426, 0.0
        %460 = vst.msk [vmem:[#allocation2 + $0x179] sm:$0x1] %vm426, 0.0
        %461 = vst.msk [vmem:[#allocation2 + $0x191] sm:$0x1] %vm426, 0.0
        %462 = vst.msk [vmem:[#allocation2 + $0x1a9] sm:$0x1] %vm426, 0.0
        %463 = vst.msk [vmem:[#allocation3] sm:$0xff] %vm417, 0.0
        %464 = vst.msk [vmem:[#allocation3 + $0x8] sm:$0x3] %vm420, 0.0
        %s465 = scalar_lea.vmem [#allocation3], 144
        %466 = vst.msk [vmem:[%s465] sm:$0xff] %vm417, 0.0
        %467 = vst.msk [vmem:[%s465 + $0x8] sm:$0x3] %vm420, 0.0
        %468 = vst.msk [vmem:[#allocation3] sm:$0x1] %vm426, 0.0
        %469 = vst.msk [vmem:[#allocation3 + $0x10] sm:$0x1] %vm426, 0.0
        %470 = vst.msk [vmem:[#allocation3 + $0x20] sm:$0x1] %vm426, 0.0
        %471 = vst.msk [vmem:[#allocation3 + $0x30] sm:$0x1] %vm426, 0.0
        %472 = vst.msk [vmem:[#allocation3 + $0x40] sm:$0x1] %vm426, 0.0
        %473 = vst.msk [vmem:[#allocation3 + $0x50] sm:$0x1] %vm426, 0.0
        %474 = vst.msk [vmem:[#allocation3 + $0x60] sm:$0x1] %vm426, 0.0
        %475 = vst.msk [vmem:[#allocation3 + $0x70] sm:$0x1] %vm426, 0.0
        %476 = vst.msk [vmem:[#allocation3 + $0x80] sm:$0x1] %vm426, 0.0
        %477 = vst.msk [vmem:[#allocation3 + $0x90] sm:$0x1] %vm426, 0.0
        %478 = vst.msk [vmem:[#allocation3 + $0x9] sm:$0x1] %vm426, 0.0
        %479 = vst.msk [vmem:[#allocation3 + $0x19] sm:$0x1] %vm426, 0.0
        %480 = vst.msk [vmem:[#allocation3 + $0x29] sm:$0x1] %vm426, 0.0
        %481 = vst.msk [vmem:[#allocation3 + $0x39] sm:$0x1] %vm426, 0.0
        %482 = vst.msk [vmem:[#allocation3 + $0x49] sm:$0x1] %vm426, 0.0
        %483 = vst.msk [vmem:[#allocation3 + $0x59] sm:$0x1] %vm426, 0.0
        %484 = vst.msk [vmem:[#allocation3 + $0x69] sm:$0x1] %vm426, 0.0
        %485 = vst.msk [vmem:[#allocation3 + $0x79] sm:$0x1] %vm426, 0.0
        %486 = vst.msk [vmem:[#allocation3 + $0x89] sm:$0x1] %vm426, 0.0
        %487 = vst.msk [vmem:[#allocation3 + $0x99] sm:$0x1] %vm426, 0.0
        %v488 = vld [vmem:[%s411] sm:$0xff]
        %v489 = vld [vmem:[%s411 + $0x8] sm:$0xff]
        %v490 = vld [vmem:[%s411 + $0x10] sm:$0xff]
        %v491 = vld [vmem:[%s411 + $0x18] sm:$0xff]
        %v492 = vld [vmem:[%s411 + $0x20] sm:$0xff]
        %v493 = vld [vmem:[%s411 + $0x28] sm:$0xff]
        %v494 = vld [vmem:[%s411 + $0x30] sm:$0xff]
        %v495 = vld [vmem:[%s411 + $0x38] sm:$0xff]
        %v496 = vld [vmem:[%s411 + $0x40] sm:$0xff]
        %v497 = vld [vmem:[%s411 + $0x48] sm:$0xff]
        %v498 = vld [vmem:[%s411 + $0x50] sm:$0xff]
        %v499 = vld [vmem:[%s411 + $0x58] sm:$0xff]
        %v500 = vld [vmem:[%s411 + $0x60] sm:$0xff]
        %v501 = vld [vmem:[%s411 + $0x68] sm:$0xff]
        %v502 = vld [vmem:[%s411 + $0x70] sm:$0xff]
        %v503 = vld [vmem:[%s411 + $0x78] sm:$0xff]
        %v504 = vld [vmem:[%s411 + $0x80] sm:$0xff]
        %v505 = vld [vmem:[%s411 + $0x88] sm:$0xff]
        %v506 = vld [vmem:[%s411 + $0x90] sm:$0xff]
        %v507 = vld [vmem:[%s411 + $0x98] sm:$0xff]
        %v508 = vld [vmem:[%s411 + $0xa0] sm:$0xff]
        %v509 = vld [vmem:[%s411 + $0xa8] sm:$0xff]
        %v510 = vld [vmem:[%s411 + $0xb0] sm:$0xff]
        %v511 = vld [vmem:[%s411 + $0xb8] sm:$0xff]
        %v512 = vld [vmem:[%s411 + $0xc0] sm:$0xff]
        %v513 = vld [vmem:[%s411 + $0xc8] sm:$0xff]
        %v514 = vld [vmem:[%s411 + $0xd0] sm:$0xff]
        %v515 = vld [vmem:[%s411 + $0xd8] sm:$0xff]
        %v516 = vld [vmem:[%s411 + $0xe0] sm:$0xff]
        %v517 = vld [vmem:[%s411 + $0xe8] sm:$0xff]
        %v518 = vld [vmem:[%s411 + $0xf0] sm:$0xff]
        %v519 = vld [vmem:[%s411 + $0xf8] sm:$0xff]
        %s520 = scalar_lea.vmem [#allocation2], 24
        %521 = vst.msk [vmem:[%s520 + $0x1] sm:$0xff] %vm417, %v488
        %522 = vst.msk [vmem:[%s520 + $0x9] sm:$0xff] %vm417, %v489
        %523 = vst.msk [vmem:[%s520 + $0x19] sm:$0xff] %vm417, %v490
        %524 = vst.msk [vmem:[%s520 + $0x21] sm:$0xff] %vm417, %v491
        %525 = vst.msk [vmem:[%s520 + $0x31] sm:$0xff] %vm417, %v492
        %526 = vst.msk [vmem:[%s520 + $0x39] sm:$0xff] %vm417, %v493
        %527 = vst.msk [vmem:[%s520 + $0x49] sm:$0xff] %vm417, %v494
        %528 = vst.msk [vmem:[%s520 + $0x51] sm:$0xff] %vm417, %v495
        %529 = vst.msk [vmem:[%s520 + $0x61] sm:$0xff] %vm417, %v496
        %530 = vst.msk [vmem:[%s520 + $0x69] sm:$0xff] %vm417, %v497
        %531 = vst.msk [vmem:[%s520 + $0x79] sm:$0xff] %vm417, %v498
        %532 = vst.msk [vmem:[%s520 + $0x81] sm:$0xff] %vm417, %v499
        %533 = vst.msk [vmem:[%s520 + $0x91] sm:$0xff] %vm417, %v500
        %534 = vst.msk [vmem:[%s520 + $0x99] sm:$0xff] %vm417, %v501
        %535 = vst.msk [vmem:[%s520 + $0xa9] sm:$0xff] %vm417, %v502
        %536 = vst.msk [vmem:[%s520 + $0xb1] sm:$0xff] %vm417, %v503
        %537 = vst.msk [vmem:[%s520 + $0xc1] sm:$0xff] %vm417, %v504
        %538 = vst.msk [vmem:[%s520 + $0xc9] sm:$0xff] %vm417, %v505
        %539 = vst.msk [vmem:[%s520 + $0xd9] sm:$0xff] %vm417, %v506
        %540 = vst.msk [vmem:[%s520 + $0xe1] sm:$0xff] %vm417, %v507
        %541 = vst.msk [vmem:[%s520 + $0xf1] sm:$0xff] %vm417, %v508
        %542 = vst.msk [vmem:[%s520 + $0xf9] sm:$0xff] %vm417, %v509
        %543 = vst.msk [vmem:[%s520 + $0x109] sm:$0xff] %vm417, %v510
        %544 = vst.msk [vmem:[%s520 + $0x111] sm:$0xff] %vm417, %v511
        %545 = vst.msk [vmem:[%s520 + $0x121] sm:$0xff] %vm417, %v512
        %546 = vst.msk [vmem:[%s520 + $0x129] sm:$0xff] %vm417, %v513
        %547 = vst.msk [vmem:[%s520 + $0x139] sm:$0xff] %vm417, %v514
        %548 = vst.msk [vmem:[%s520 + $0x141] sm:$0xff] %vm417, %v515
        %549 = vst.msk [vmem:[%s520 + $0x151] sm:$0xff] %vm417, %v516
        %550 = vst.msk [vmem:[%s520 + $0x159] sm:$0xff] %vm417, %v517
        %551 = vst.msk [vmem:[%s520 + $0x169] sm:$0xff] %vm417, %v518
        %552 = vst.msk [vmem:[%s520 + $0x171] sm:$0xff] %vm417, %v519
        %v553 = vld [vmem:[#allocation2] sm:$0xff]
        %v554 = vld [vmem:[#allocation2 + $0x8] sm:$0xff]
        %v555 = vld [vmem:[#allocation2 + $0x18] sm:$0xff]
        %v556 = vld [vmem:[#allocation2 + $0x20] sm:$0xff]
        %v557 = vld [vmem:[#allocation2 + $0x30] sm:$0xff]
        %v558 = vld [vmem:[#allocation2 + $0x38] sm:$0xff]
        %v559 = vld [vmem:[#allocation2 + $0x48] sm:$0xff]
        %v560 = vld [vmem:[#allocation2 + $0x50] sm:$0xff]
        %v561 = vld [vmem:[#allocation2 + $0x60] sm:$0xff]
        %v562 = vld [vmem:[#allocation2 + $0x68] sm:$0xff]
        %v563 = vld [vmem:[#allocation2 + $0x78] sm:$0xff]
        %v564 = vld [vmem:[#allocation2 + $0x80] sm:$0xff]
        %v565 = vld [vmem:[#allocation2 + $0x90] sm:$0xff]
        %v566 = vld [vmem:[#allocation2 + $0x98] sm:$0xff]
        %v567 = vld [vmem:[#allocation2 + $0xa8] sm:$0xff]
        %v568 = vld [vmem:[#allocation2 + $0xb0] sm:$0xff]
        %v569 = vld [vmem:[#allocation2 + $0xc0] sm:$0xff]
        %v570 = vld [vmem:[#allocation2 + $0xc8] sm:$0xff]
        %v571 = vld [vmem:[#allocation2 + $0xd8] sm:$0xff]
        %v572 = vld [vmem:[#allocation2 + $0xe0] sm:$0xff]
        %v573 = vld [vmem:[#allocation2 + $0xf0] sm:$0xff]
        %v574 = vld [vmem:[#allocation2 + $0xf8] sm:$0xff]
        %v575 = vld [vmem:[#allocation2 + $0x108] sm:$0xff]
        %v576 = vld [vmem:[#allocation2 + $0x110] sm:$0xff]
        %v577 = vld [vmem:[#allocation2 + $0x120] sm:$0xff]
        %v578 = vld [vmem:[#allocation2 + $0x128] sm:$0xff]
        %v579 = vld [vmem:[#allocation2 + $0x138] sm:$0xff]
        %v580 = vld [vmem:[#allocation2 + $0x140] sm:$0xff]
        %v581 = vld [vmem:[#allocation2 + $0x150] sm:$0xff]
        %v582 = vld [vmem:[#allocation2 + $0x158] sm:$0xff]
        %v583 = vld [vmem:[#allocation2 + $0x168] sm:$0xff]
        %v584 = vld [vmem:[#allocation2 + $0x170] sm:$0xff]
        %v585 = vld [vmem:[%s1] sm:$0xff]
        %v586 = vld [vmem:[%s1 + $0x8] sm:$0xff]
        %v587 = vld [vmem:[%s1 + $0x10] sm:$0xff]
        %v588 = vld [vmem:[%s1 + $0x18] sm:$0xff]
        %v589 = vld [vmem:[%s1 + $0x20] sm:$0xff]
        %v590 = vld [vmem:[%s1 + $0x28] sm:$0xff]
        %v591 = vld [vmem:[%s1 + $0x30] sm:$0xff]
        %v592 = vld [vmem:[%s1 + $0x38] sm:$0xff]
        %v593 = vld [vmem:[#allocation2 + $0x1] sm:$0xff]
        %v594 = vld [vmem:[#allocation2 + $0x9] sm:$0xff]
        %v595 = vld [vmem:[#allocation2 + $0x19] sm:$0xff]
        %v596 = vld [vmem:[#allocation2 + $0x21] sm:$0xff]
        %v597 = vld [vmem:[#allocation2 + $0x31] sm:$0xff]
        %v598 = vld [vmem:[#allocation2 + $0x39] sm:$0xff]
        %v599 = vld [vmem:[#allocation2 + $0x49] sm:$0xff]
        %v600 = vld [vmem:[#allocation2 + $0x51] sm:$0xff]
        %v601 = vld [vmem:[#allocation2 + $0x61] sm:$0xff]
        %v602 = vld [vmem:[#allocation2 + $0x69] sm:$0xff]
        %v603 = vld [vmem:[#allocation2 + $0x79] sm:$0xff]
        %v604 = vld [vmem:[#allocation2 + $0x81] sm:$0xff]
        %v605 = vld [vmem:[#allocation2 + $0x91] sm:$0xff]
        %v606 = vld [vmem:[#allocation2 + $0x99] sm:$0xff]
        %v607 = vld [vmem:[#allocation2 + $0xa9] sm:$0xff]
        %v608 = vld [vmem:[#allocation2 + $0xb1] sm:$0xff]
        %v609 = vld [vmem:[#allocation2 + $0xc1] sm:$0xff]
        %v610 = vld [vmem:[#allocation2 + $0xc9] sm:$0xff]
        %v611 = vld [vmem:[#allocation2 + $0xd9] sm:$0xff]
        %v612 = vld [vmem:[#allocation2 + $0xe1] sm:$0xff]
        %v613 = vld [vmem:[#allocation2 + $0xf1] sm:$0xff]
        %v614 = vld [vmem:[#allocation2 + $0xf9] sm:$0xff]
        %v615 = vld [vmem:[#allocation2 + $0x109] sm:$0xff]
        %v616 = vld [vmem:[#allocation2 + $0x111] sm:$0xff]
        %v617 = vld [vmem:[#allocation2 + $0x121] sm:$0xff]
        %v618 = vld [vmem:[#allocation2 + $0x129] sm:$0xff]
        %v619 = vld [vmem:[#allocation2 + $0x139] sm:$0xff]
        %v620 = vld [vmem:[#allocation2 + $0x141] sm:$0xff]
        %v621 = vld [vmem:[#allocation2 + $0x151] sm:$0xff]
        %v622 = vld [vmem:[#allocation2 + $0x159] sm:$0xff]
        %v623 = vld [vmem:[#allocation2 + $0x169] sm:$0xff]
        %v624 = vld [vmem:[#allocation2 + $0x171] sm:$0xff]
        %v625 = vld [vmem:[%s1 + $0x40] sm:$0xff]
        %v626 = vld [vmem:[%s1 + $0x48] sm:$0xff]
        %v627 = vld [vmem:[%s1 + $0x50] sm:$0xff]
        %v628 = vld [vmem:[%s1 + $0x58] sm:$0xff]
        %v629 = vld [vmem:[%s1 + $0x60] sm:$0xff]
        %v630 = vld [vmem:[%s1 + $0x68] sm:$0xff]
        %v631 = vld [vmem:[%s1 + $0x70] sm:$0xff]
        %v632 = vld [vmem:[%s1 + $0x78] sm:$0xff]
        %v634 = vsel %vm417, %v593, 0
        %v637 = vsel %vm417, %v594, 0
        %v640 = vsel %vm417, %v595, 0
        %v643 = vsel %vm417, %v596, 0
        %v646 = vsel %vm417, %v597, 0
        %v649 = vsel %vm417, %v598, 0
        %v652 = vsel %vm417, %v599, 0
        %v655 = vsel %vm417, %v600, 0
        %v658 = vsel %vm417, %v601, 0
        %v661 = vsel %vm417, %v602, 0
        %v664 = vsel %vm417, %v603, 0
        %v667 = vsel %vm417, %v604, 0
        %v670 = vsel %vm417, %v605, 0
        %v673 = vsel %vm417, %v606, 0
        %v676 = vsel %vm417, %v607, 0
        %v679 = vsel %vm417, %v608, 0
        %v682 = vsel %vm417, %v609, 0
        %v685 = vsel %vm417, %v610, 0
        %v688 = vsel %vm417, %v611, 0
        %v691 = vsel %vm417, %v612, 0
        %v694 = vsel %vm417, %v613, 0
        %v697 = vsel %vm417, %v614, 0
        %v700 = vsel %vm417, %v615, 0
        %v703 = vsel %vm417, %v616, 0
        %v706 = vsel %vm417, %v617, 0
        %v709 = vsel %vm417, %v618, 0
        %v712 = vsel %vm417, %v619, 0
        %v715 = vsel %vm417, %v620, 0
        %v718 = vsel %vm417, %v621, 0
        %v721 = vsel %vm417, %v622, 0
        %v724 = vsel %vm417, %v623, 0
        %v727 = vsel %vm417, %v624, 0
        %729 = vmatprep.subr.mxu0 0.0
        %730 = vmatpush1.msra.mxu0 0.0
        %731 = vmatprep.subr.mxu0 0.0
        %732 = vmatpush1.msra.mxu0 0.0
        %733 = vmatprep.subr.mxu0 0.0
        %734 = vmatpush1.msra.mxu0 0.0
        %735 = vmatprep.subr.mxu0 0.0
        %736 = vmatpush1.msra.mxu0 0.0
        %737 = vmatprep.subr.mxu0 0.0
        %738 = vmatpush1.msra.mxu0 0.0
        %739 = vmatprep.subr.mxu0 0.0
        %740 = vmatpush1.msra.mxu0 0.0
        %741 = vmatprep.subr.mxu0 0.0
        %742 = vmatpush1.msra.mxu0 0.0
        %743 = vmatprep.subr.mxu0 0.0
        %744 = vmatpush1.msra.mxu0 0.0
        %745 = vmatprep.subr.mxu0 0.0
        %746 = vmatpush1.msra.mxu0 %v632
        %747 = vmatprep.subr.mxu0 0.0
        %748 = vmatpush1.msra.mxu0 %v631
        %749 = vmatprep.subr.mxu0 0.0
        %750 = vmatpush1.msra.mxu0 %v630
        %751 = vmatprep.subr.mxu0 0.0
        %752 = vmatpush1.msra.mxu0 %v629
        %753 = vmatprep.subr.mxu0 0.0
        %754 = vmatpush1.msra.mxu0 %v628
        %755 = vmatprep.subr.mxu0 0.0
        %756 = vmatpush1.msra.mxu0 %v627
        %757 = vmatprep.subr.mxu0 0.0
        %758 = vmatpush1.msra.mxu0 %v626
        %759 = vmatprep.subr.mxu0 0.0
        %760 = vmatpush1.msra.mxu0 %v625
        %761 = vmatprep.subr.mxu0 0.0
        %762 = vmatpush2.msra.mxu0 0.0
        %763 = vmatprep.subr.mxu0 0.0
        %764 = vmatpush2.msra.mxu0 0.0
        %765 = vmatprep.subr.mxu0 0.0
        %766 = vmatpush2.msra.mxu0 0.0
        %767 = vmatprep.subr.mxu0 0.0
        %768 = vmatpush2.msra.mxu0 0.0
        %769 = vmatprep.subr.mxu0 0.0
        %770 = vmatpush2.msra.mxu0 0.0
        %771 = vmatprep.subr.mxu0 0.0
        %772 = vmatpush2.msra.mxu0 0.0
        %773 = vmatprep.subr.mxu0 0.0
        %774 = vmatpush2.msra.mxu0 0.0
        %775 = vmatprep.subr.mxu0 0.0
        %776 = vmatpush2.msra.mxu0 0.0
        %777 = vmatprep.subr.mxu0 0.0
        %778 = vmatpush2.msra.mxu0 0.0
        %779 = vmatprep.subr.mxu0 0.0
        %780 = vmatpush2.msra.mxu0 0.0
        %781 = vmatprep.subr.mxu0 0.0
        %782 = vmatpush2.msra.mxu0 0.0
        %783 = vmatprep.subr.mxu0 0.0
        %784 = vmatpush2.msra.mxu0 0.0
        %785 = vmatprep.subr.mxu0 0.0
        %786 = vmatpush2.msra.mxu0 0.0
        %787 = vmatprep.subr.mxu0 0.0
        %788 = vmatpush2.msra.mxu0 0.0
        %789 = vmatprep.subr.mxu0 0.0
        %790 = vmatpush2.msra.mxu0 0.0
        %791 = vmatprep.subr.mxu0 0.0
        %792 = vmatpush2.msra.mxu0 0.0
        %793 = vmatprep.mubr.f32.mxu0 0.0
        %794 = vmatmul.mubr.f32.gmra.mxu0 %v634
        %v795 = vpop.f32.mrf.mxu0
        %v796 = vadd.f32 0.0, %v795
        %v797 = vpop.f32.mrf.mxu0
        %798 = vmatprep.mubr.f32.mxu0 0.0
        %799 = vmatmul.mubr.f32.gmra.mxu0 %v637
        %v800 = vpop.f32.mrf.mxu0
        %v801 = vadd.f32 0.0, %v800
        %v802 = vpop.f32.mrf.mxu0
        %803 = vmatprep.mubr.f32.mxu0 0.0
        %804 = vmatmul.mubr.f32.gmra.mxu0 %v640
        %v805 = vpop.f32.mrf.mxu0
        %v806 = vadd.f32 0.0, %v805
        %v807 = vpop.f32.mrf.mxu0
        %808 = vmatprep.mubr.f32.mxu0 0.0
        %809 = vmatmul.mubr.f32.gmra.mxu0 %v643
        %v810 = vpop.f32.mrf.mxu0
        %v811 = vadd.f32 0.0, %v810
        %v812 = vpop.f32.mrf.mxu0
        %813 = vmatprep.mubr.f32.mxu0 0.0
        %814 = vmatmul.mubr.f32.gmra.mxu0 %v646
        %v815 = vpop.f32.mrf.mxu0
        %v816 = vadd.f32 0.0, %v815
        %v817 = vpop.f32.mrf.mxu0
        %818 = vmatprep.mubr.f32.mxu0 0.0
        %819 = vmatmul.mubr.f32.gmra.mxu0 %v649
        %v820 = vpop.f32.mrf.mxu0
        %v821 = vadd.f32 0.0, %v820
        %v822 = vpop.f32.mrf.mxu0
        %823 = vmatprep.mubr.f32.mxu0 0.0
        %824 = vmatmul.mubr.f32.gmra.mxu0 %v652
        %v825 = vpop.f32.mrf.mxu0
        %v826 = vadd.f32 0.0, %v825
        %v827 = vpop.f32.mrf.mxu0
        %828 = vmatprep.mubr.f32.mxu0 0.0
        %829 = vmatmul.mubr.f32.gmra.mxu0 %v655
        %v830 = vpop.f32.mrf.mxu0
        %v831 = vadd.f32 0.0, %v830
        %v832 = vpop.f32.mrf.mxu0
        %833 = vmatprep.mubr.f32.mxu0 0.0
        %834 = vmatmul.mubr.f32.gmra.mxu0 %v658
        %v835 = vpop.f32.mrf.mxu0
        %v836 = vadd.f32 0.0, %v835
        %v837 = vpop.f32.mrf.mxu0
        %838 = vmatprep.mubr.f32.mxu0 0.0
        %839 = vmatmul.mubr.f32.gmra.mxu0 %v661
        %v840 = vpop.f32.mrf.mxu0
        %v841 = vadd.f32 0.0, %v840
        %v842 = vpop.f32.mrf.mxu0
        %843 = vmatprep.mubr.f32.mxu0 0.0
        %844 = vmatmul.mubr.f32.gmra.mxu0 %v664
        %v845 = vpop.f32.mrf.mxu0
        %v846 = vadd.f32 0.0, %v845
        %v847 = vpop.f32.mrf.mxu0
        %848 = vmatprep.mubr.f32.mxu0 0.0
        %849 = vmatmul.mubr.f32.gmra.mxu0 %v667
        %v850 = vpop.f32.mrf.mxu0
        %v851 = vadd.f32 0.0, %v850
        %v852 = vpop.f32.mrf.mxu0
        %853 = vmatprep.mubr.f32.mxu0 0.0
        %854 = vmatmul.mubr.f32.gmra.mxu0 %v670
        %v855 = vpop.f32.mrf.mxu0
        %v856 = vadd.f32 0.0, %v855
        %v857 = vpop.f32.mrf.mxu0
        %858 = vmatprep.mubr.f32.mxu0 0.0
        %859 = vmatmul.mubr.f32.gmra.mxu0 %v673
        %v860 = vpop.f32.mrf.mxu0
        %v861 = vadd.f32 0.0, %v860
        %v862 = vpop.f32.mrf.mxu0
        %863 = vmatprep.mubr.f32.mxu0 0.0
        %864 = vmatmul.mubr.f32.gmra.mxu0 %v676
        %v865 = vpop.f32.mrf.mxu0
        %v866 = vadd.f32 0.0, %v865
        %v867 = vpop.f32.mrf.mxu0
        %868 = vmatprep.mubr.f32.mxu0 0.0
        %869 = vmatmul.mubr.f32.gmra.mxu0 %v679
        %v870 = vpop.f32.mrf.mxu0
        %v871 = vadd.f32 0.0, %v870
        %v872 = vpop.f32.mrf.mxu0
        %873 = vmatprep.mubr.f32.mxu0 0.0
        %874 = vmatmul.mubr.f32.gmra.mxu0 %v682
        %v875 = vpop.f32.mrf.mxu0
        %v876 = vadd.f32 0.0, %v875
        %v877 = vpop.f32.mrf.mxu0
        %878 = vmatprep.mubr.f32.mxu0 0.0
        %879 = vmatmul.mubr.f32.gmra.mxu0 %v685
        %v880 = vpop.f32.mrf.mxu0
        %v881 = vadd.f32 0.0, %v880
        %v882 = vpop.f32.mrf.mxu0
        %883 = vmatprep.mubr.f32.mxu0 0.0
        %884 = vmatmul.mubr.f32.gmra.mxu0 %v688
        %v885 = vpop.f32.mrf.mxu0
        %v886 = vadd.f32 0.0, %v885
        %v887 = vpop.f32.mrf.mxu0
        %888 = vmatprep.mubr.f32.mxu0 0.0
        %889 = vmatmul.mubr.f32.gmra.mxu0 %v691
        %v890 = vpop.f32.mrf.mxu0
        %v891 = vadd.f32 0.0, %v890
        %v892 = vpop.f32.mrf.mxu0
        %893 = vmatprep.mubr.f32.mxu0 0.0
        %894 = vmatmul.mubr.f32.gmra.mxu0 %v694
        %v895 = vpop.f32.mrf.mxu0
        %v896 = vadd.f32 0.0, %v895
        %v897 = vpop.f32.mrf.mxu0
        %898 = vmatprep.mubr.f32.mxu0 0.0
        %899 = vmatmul.mubr.f32.gmra.mxu0 %v697
        %v900 = vpop.f32.mrf.mxu0
        %v901 = vadd.f32 0.0, %v900
        %v902 = vpop.f32.mrf.mxu0
        %903 = vmatprep.mubr.f32.mxu0 0.0
        %904 = vmatmul.mubr.f32.gmra.mxu0 %v700
        %v905 = vpop.f32.mrf.mxu0
        %v906 = vadd.f32 0.0, %v905
        %v907 = vpop.f32.mrf.mxu0
        %908 = vmatprep.mubr.f32.mxu0 0.0
        %909 = vmatmul.mubr.f32.gmra.mxu0 %v703
        %v910 = vpop.f32.mrf.mxu0
        %v911 = vadd.f32 0.0, %v910
        %v912 = vpop.f32.mrf.mxu0
        %913 = vmatprep.mubr.f32.mxu0 0.0
        %914 = vmatmul.mubr.f32.gmra.mxu0 %v706
        %v915 = vpop.f32.mrf.mxu0
        %v916 = vadd.f32 0.0, %v915
        %v917 = vpop.f32.mrf.mxu0
        %918 = vmatprep.mubr.f32.mxu0 0.0
        %919 = vmatmul.mubr.f32.gmra.mxu0 %v709
        %v920 = vpop.f32.mrf.mxu0
        %v921 = vadd.f32 0.0, %v920
        %v922 = vpop.f32.mrf.mxu0
        %923 = vmatprep.mubr.f32.mxu0 0.0
        %924 = vmatmul.mubr.f32.gmra.mxu0 %v712
        %v925 = vpop.f32.mrf.mxu0
        %v926 = vadd.f32 0.0, %v925
        %v927 = vpop.f32.mrf.mxu0
        %928 = vmatprep.mubr.f32.mxu0 0.0
        %929 = vmatmul.mubr.f32.gmra.mxu0 %v715
        %v930 = vpop.f32.mrf.mxu0
        %v931 = vadd.f32 0.0, %v930
        %v932 = vpop.f32.mrf.mxu0
        %933 = vmatprep.mubr.f32.mxu0 0.0
        %934 = vmatmul.mubr.f32.gmra.mxu0 %v718
        %v935 = vpop.f32.mrf.mxu0
        %v936 = vadd.f32 0.0, %v935
        %v937 = vpop.f32.mrf.mxu0
        %938 = vmatprep.mubr.f32.mxu0 0.0
        %939 = vmatmul.mubr.f32.gmra.mxu0 %v721
        %v940 = vpop.f32.mrf.mxu0
        %v941 = vadd.f32 0.0, %v940
        %v942 = vpop.f32.mrf.mxu0
        %943 = vmatprep.mubr.f32.mxu0 0.0
        %944 = vmatmul.mubr.f32.gmra.mxu0 %v724
        %v945 = vpop.f32.mrf.mxu0
        %v946 = vadd.f32 0.0, %v945
        %v947 = vpop.f32.mrf.mxu0
        %948 = vmatprep.mubr.f32.mxu0 0.0
        %949 = vmatmul.mubr.f32.gmra.mxu0 %v727
        %v950 = vpop.f32.mrf.mxu0
        %v951 = vadd.f32 0.0, %v950
        %v952 = vpop.f32.mrf.mxu0
        %953 = vdwg.mxu0
        %v955 = vsel %vm417, %v553, 0
        %v958 = vsel %vm417, %v554, 0
        %v961 = vsel %vm417, %v555, 0
        %v964 = vsel %vm417, %v556, 0
        %v967 = vsel %vm417, %v557, 0
        %v970 = vsel %vm417, %v558, 0
        %v973 = vsel %vm417, %v559, 0
        %v976 = vsel %vm417, %v560, 0
        %v979 = vsel %vm417, %v561, 0
        %v982 = vsel %vm417, %v562, 0
        %v985 = vsel %vm417, %v563, 0
        %v988 = vsel %vm417, %v564, 0
        %v991 = vsel %vm417, %v565, 0
        %v994 = vsel %vm417, %v566, 0
        %v997 = vsel %vm417, %v567, 0
        %v1000 = vsel %vm417, %v568, 0
        %v1003 = vsel %vm417, %v569, 0
        %v1006 = vsel %vm417, %v570, 0
        %v1009 = vsel %vm417, %v571, 0
        %v1012 = vsel %vm417, %v572, 0
        %v1015 = vsel %vm417, %v573, 0
        %v1018 = vsel %vm417, %v574, 0
        %v1021 = vsel %vm417, %v575, 0
        %v1024 = vsel %vm417, %v576, 0
        %v1027 = vsel %vm417, %v577, 0
        %v1030 = vsel %vm417, %v578, 0
        %v1033 = vsel %vm417, %v579, 0
        %v1036 = vsel %vm417, %v580, 0
        %v1039 = vsel %vm417, %v581, 0
        %v1042 = vsel %vm417, %v582, 0
        %v1045 = vsel %vm417, %v583, 0
        %v1048 = vsel %vm417, %v584, 0
        %1050 = vmatprep.subr.mxu0 0.0
        %1051 = vmatpush1.msra.mxu0 0.0
        %1052 = vmatprep.subr.mxu0 0.0
        %1053 = vmatpush1.msra.mxu0 0.0
        %1054 = vmatprep.subr.mxu0 0.0
        %1055 = vmatpush1.msra.mxu0 0.0
        %1056 = vmatprep.subr.mxu0 0.0
        %1057 = vmatpush1.msra.mxu0 0.0
        %1058 = vmatprep.subr.mxu0 0.0
        %1059 = vmatpush1.msra.mxu0 0.0
        %1060 = vmatprep.subr.mxu0 0.0
        %1061 = vmatpush1.msra.mxu0 0.0
        %1062 = vmatprep.subr.mxu0 0.0
        %1063 = vmatpush1.msra.mxu0 0.0
        %1064 = vmatprep.subr.mxu0 0.0
        %1065 = vmatpush1.msra.mxu0 0.0
        %1066 = vmatprep.subr.mxu0 0.0
        %1067 = vmatpush1.msra.mxu0 %v592
        %1068 = vmatprep.subr.mxu0 0.0
        %1069 = vmatpush1.msra.mxu0 %v591
        %1070 = vmatprep.subr.mxu0 0.0
        %1071 = vmatpush1.msra.mxu0 %v590
        %1072 = vmatprep.subr.mxu0 0.0
        %1073 = vmatpush1.msra.mxu0 %v589
        %1074 = vmatprep.subr.mxu0 0.0
        %1075 = vmatpush1.msra.mxu0 %v588
        %1076 = vmatprep.subr.mxu0 0.0
        %1077 = vmatpush1.msra.mxu0 %v587
        %1078 = vmatprep.subr.mxu0 0.0
        %1079 = vmatpush1.msra.mxu0 %v586
        %1080 = vmatprep.subr.mxu0 0.0
        %1081 = vmatpush1.msra.mxu0 %v585
        %1082 = vmatprep.subr.mxu0 0.0
        %1083 = vmatpush2.msra.mxu0 0.0
        %1084 = vmatprep.subr.mxu0 0.0
        %1085 = vmatpush2.msra.mxu0 0.0
        %1086 = vmatprep.subr.mxu0 0.0
        %1087 = vmatpush2.msra.mxu0 0.0
        %1088 = vmatprep.subr.mxu0 0.0
        %1089 = vmatpush2.msra.mxu0 0.0
        %1090 = vmatprep.subr.mxu0 0.0
        %1091 = vmatpush2.msra.mxu0 0.0
        %1092 = vmatprep.subr.mxu0 0.0
        %1093 = vmatpush2.msra.mxu0 0.0
        %1094 = vmatprep.subr.mxu0 0.0
        %1095 = vmatpush2.msra.mxu0 0.0
        %1096 = vmatprep.subr.mxu0 0.0
        %1097 = vmatpush2.msra.mxu0 0.0
        %1098 = vmatprep.subr.mxu0 0.0
        %1099 = vmatpush2.msra.mxu0 0.0
        %1100 = vmatprep.subr.mxu0 0.0
        %1101 = vmatpush2.msra.mxu0 0.0
        %1102 = vmatprep.subr.mxu0 0.0
        %1103 = vmatpush2.msra.mxu0 0.0
        %1104 = vmatprep.subr.mxu0 0.0
        %1105 = vmatpush2.msra.mxu0 0.0
        %1106 = vmatprep.subr.mxu0 0.0
        %1107 = vmatpush2.msra.mxu0 0.0
        %1108 = vmatprep.subr.mxu0 0.0
        %1109 = vmatpush2.msra.mxu0 0.0
        %1110 = vmatprep.subr.mxu0 0.0
        %1111 = vmatpush2.msra.mxu0 0.0
        %1112 = vmatprep.subr.mxu0 0.0
        %1113 = vmatpush2.msra.mxu0 0.0
        %1114 = vmatprep.mubr.f32.mxu0 0.0
        %1115 = vmatmul.mubr.f32.gmra.mxu0 %v955
        %v1116 = vpop.f32.mrf.mxu0
        %v1117 = vadd.f32 %v796, %v1116
        %v1118 = vpop.f32.mrf.mxu0
        %1119 = vmatprep.mubr.f32.mxu0 0.0
        %1120 = vmatmul.mubr.f32.gmra.mxu0 %v958
        %v1121 = vpop.f32.mrf.mxu0
        %v1122 = vadd.f32 %v801, %v1121
        %v1123 = vpop.f32.mrf.mxu0
        %1124 = vmatprep.mubr.f32.mxu0 0.0
        %1125 = vmatmul.mubr.f32.gmra.mxu0 %v961
        %v1126 = vpop.f32.mrf.mxu0
        %v1127 = vadd.f32 %v806, %v1126
        %v1128 = vpop.f32.mrf.mxu0
        %1129 = vmatprep.mubr.f32.mxu0 0.0
        %1130 = vmatmul.mubr.f32.gmra.mxu0 %v964
        %v1131 = vpop.f32.mrf.mxu0
        %v1132 = vadd.f32 %v811, %v1131
        %v1133 = vpop.f32.mrf.mxu0
        %1134 = vmatprep.mubr.f32.mxu0 0.0
        %1135 = vmatmul.mubr.f32.gmra.mxu0 %v967
        %v1136 = vpop.f32.mrf.mxu0
        %v1137 = vadd.f32 %v816, %v1136
        %v1138 = vpop.f32.mrf.mxu0
        %1139 = vmatprep.mubr.f32.mxu0 0.0
        %1140 = vmatmul.mubr.f32.gmra.mxu0 %v970
        %v1141 = vpop.f32.mrf.mxu0
        %v1142 = vadd.f32 %v821, %v1141
        %v1143 = vpop.f32.mrf.mxu0
        %1144 = vmatprep.mubr.f32.mxu0 0.0
        %1145 = vmatmul.mubr.f32.gmra.mxu0 %v973
        %v1146 = vpop.f32.mrf.mxu0
        %v1147 = vadd.f32 %v826, %v1146
        %v1148 = vpop.f32.mrf.mxu0
        %1149 = vmatprep.mubr.f32.mxu0 0.0
        %1150 = vmatmul.mubr.f32.gmra.mxu0 %v976
        %v1151 = vpop.f32.mrf.mxu0
        %v1152 = vadd.f32 %v831, %v1151
        %v1153 = vpop.f32.mrf.mxu0
        %1154 = vmatprep.mubr.f32.mxu0 0.0
        %1155 = vmatmul.mubr.f32.gmra.mxu0 %v979
        %v1156 = vpop.f32.mrf.mxu0
        %v1157 = vadd.f32 %v836, %v1156
        %v1158 = vpop.f32.mrf.mxu0
        %1159 = vmatprep.mubr.f32.mxu0 0.0
        %1160 = vmatmul.mubr.f32.gmra.mxu0 %v982
        %v1161 = vpop.f32.mrf.mxu0
        %v1162 = vadd.f32 %v841, %v1161
        %v1163 = vpop.f32.mrf.mxu0
        %1164 = vmatprep.mubr.f32.mxu0 0.0
        %1165 = vmatmul.mubr.f32.gmra.mxu0 %v985
        %v1166 = vpop.f32.mrf.mxu0
        %v1167 = vadd.f32 %v846, %v1166
        %v1168 = vpop.f32.mrf.mxu0
        %1169 = vmatprep.mubr.f32.mxu0 0.0
        %1170 = vmatmul.mubr.f32.gmra.mxu0 %v988
        %v1171 = vpop.f32.mrf.mxu0
        %v1172 = vadd.f32 %v851, %v1171
        %v1173 = vpop.f32.mrf.mxu0
        %1174 = vmatprep.mubr.f32.mxu0 0.0
        %1175 = vmatmul.mubr.f32.gmra.mxu0 %v991
        %v1176 = vpop.f32.mrf.mxu0
        %v1177 = vadd.f32 %v856, %v1176
        %v1178 = vpop.f32.mrf.mxu0
        %1179 = vmatprep.mubr.f32.mxu0 0.0
        %1180 = vmatmul.mubr.f32.gmra.mxu0 %v994
        %v1181 = vpop.f32.mrf.mxu0
        %v1182 = vadd.f32 %v861, %v1181
        %v1183 = vpop.f32.mrf.mxu0
        %1184 = vmatprep.mubr.f32.mxu0 0.0
        %1185 = vmatmul.mubr.f32.gmra.mxu0 %v997
        %v1186 = vpop.f32.mrf.mxu0
        %v1187 = vadd.f32 %v866, %v1186
        %v1188 = vpop.f32.mrf.mxu0
        %1189 = vmatprep.mubr.f32.mxu0 0.0
        %1190 = vmatmul.mubr.f32.gmra.mxu0 %v1000
        %v1191 = vpop.f32.mrf.mxu0
        %v1192 = vadd.f32 %v871, %v1191
        %v1193 = vpop.f32.mrf.mxu0
        %1194 = vmatprep.mubr.f32.mxu0 0.0
        %1195 = vmatmul.mubr.f32.gmra.mxu0 %v1003
        %v1196 = vpop.f32.mrf.mxu0
        %v1197 = vadd.f32 %v876, %v1196
        %v1198 = vpop.f32.mrf.mxu0
        %1199 = vmatprep.mubr.f32.mxu0 0.0
        %1200 = vmatmul.mubr.f32.gmra.mxu0 %v1006
        %v1201 = vpop.f32.mrf.mxu0
        %v1202 = vadd.f32 %v881, %v1201
        %v1203 = vpop.f32.mrf.mxu0
        %1204 = vmatprep.mubr.f32.mxu0 0.0
        %1205 = vmatmul.mubr.f32.gmra.mxu0 %v1009
        %v1206 = vpop.f32.mrf.mxu0
        %v1207 = vadd.f32 %v886, %v1206
        %v1208 = vpop.f32.mrf.mxu0
        %1209 = vmatprep.mubr.f32.mxu0 0.0
        %1210 = vmatmul.mubr.f32.gmra.mxu0 %v1012
        %v1211 = vpop.f32.mrf.mxu0
        %v1212 = vadd.f32 %v891, %v1211
        %v1213 = vpop.f32.mrf.mxu0
        %1214 = vmatprep.mubr.f32.mxu0 0.0
        %1215 = vmatmul.mubr.f32.gmra.mxu0 %v1015
        %v1216 = vpop.f32.mrf.mxu0
        %v1217 = vadd.f32 %v896, %v1216
        %v1218 = vpop.f32.mrf.mxu0
        %1219 = vmatprep.mubr.f32.mxu0 0.0
        %1220 = vmatmul.mubr.f32.gmra.mxu0 %v1018
        %v1221 = vpop.f32.mrf.mxu0
        %v1222 = vadd.f32 %v901, %v1221
        %v1223 = vpop.f32.mrf.mxu0
        %1224 = vmatprep.mubr.f32.mxu0 0.0
        %1225 = vmatmul.mubr.f32.gmra.mxu0 %v1021
        %v1226 = vpop.f32.mrf.mxu0
        %v1227 = vadd.f32 %v906, %v1226
        %v1228 = vpop.f32.mrf.mxu0
        %1229 = vmatprep.mubr.f32.mxu0 0.0
        %1230 = vmatmul.mubr.f32.gmra.mxu0 %v1024
        %v1231 = vpop.f32.mrf.mxu0
        %v1232 = vadd.f32 %v911, %v1231
        %v1233 = vpop.f32.mrf.mxu0
        %1234 = vmatprep.mubr.f32.mxu0 0.0
        %1235 = vmatmul.mubr.f32.gmra.mxu0 %v1027
        %v1236 = vpop.f32.mrf.mxu0
        %v1237 = vadd.f32 %v916, %v1236
        %v1238 = vpop.f32.mrf.mxu0
        %1239 = vmatprep.mubr.f32.mxu0 0.0
        %1240 = vmatmul.mubr.f32.gmra.mxu0 %v1030
        %v1241 = vpop.f32.mrf.mxu0
        %v1242 = vadd.f32 %v921, %v1241
        %v1243 = vpop.f32.mrf.mxu0
        %1244 = vmatprep.mubr.f32.mxu0 0.0
        %1245 = vmatmul.mubr.f32.gmra.mxu0 %v1033
        %v1246 = vpop.f32.mrf.mxu0
        %v1247 = vadd.f32 %v926, %v1246
        %v1248 = vpop.f32.mrf.mxu0
        %1249 = vmatprep.mubr.f32.mxu0 0.0
        %1250 = vmatmul.mubr.f32.gmra.mxu0 %v1036
        %v1251 = vpop.f32.mrf.mxu0
        %v1252 = vadd.f32 %v931, %v1251
        %v1253 = vpop.f32.mrf.mxu0
        %1254 = vmatprep.mubr.f32.mxu0 0.0
        %1255 = vmatmul.mubr.f32.gmra.mxu0 %v1039
        %v1256 = vpop.f32.mrf.mxu0
        %v1257 = vadd.f32 %v936, %v1256
        %v1258 = vpop.f32.mrf.mxu0
        %1259 = vmatprep.mubr.f32.mxu0 0.0
        %1260 = vmatmul.mubr.f32.gmra.mxu0 %v1042
        %v1261 = vpop.f32.mrf.mxu0
        %v1262 = vadd.f32 %v941, %v1261
        %v1263 = vpop.f32.mrf.mxu0
        %1264 = vmatprep.mubr.f32.mxu0 0.0
        %1265 = vmatmul.mubr.f32.gmra.mxu0 %v1045
        %v1266 = vpop.f32.mrf.mxu0
        %v1267 = vadd.f32 %v946, %v1266
        %v1268 = vpop.f32.mrf.mxu0
        %1269 = vmatprep.mubr.f32.mxu0 0.0
        %1270 = vmatmul.mubr.f32.gmra.mxu0 %v1048
        %v1271 = vpop.f32.mrf.mxu0
        %v1272 = vadd.f32 %v951, %v1271
        %v1273 = vpop.f32.mrf.mxu0
        %1274 = vdwg.mxu0
        %v1275 = vld [vmem:[#allocation2 + $0x2] sm:$0xff]
        %v1276 = vld [vmem:[#allocation2 + $0xa] sm:$0xff]
        %v1277 = vld [vmem:[#allocation2 + $0x1a] sm:$0xff]
        %v1278 = vld [vmem:[#allocation2 + $0x22] sm:$0xff]
        %v1279 = vld [vmem:[#allocation2 + $0x32] sm:$0xff]
        %v1280 = vld [vmem:[#allocation2 + $0x3a] sm:$0xff]
        %v1281 = vld [vmem:[#allocation2 + $0x4a] sm:$0xff]
        %v1282 = vld [vmem:[#allocation2 + $0x52] sm:$0xff]
        %v1283 = vld [vmem:[#allocation2 + $0x62] sm:$0xff]
        %v1284 = vld [vmem:[#allocation2 + $0x6a] sm:$0xff]
        %v1285 = vld [vmem:[#allocation2 + $0x7a] sm:$0xff]
        %v1286 = vld [vmem:[#allocation2 + $0x82] sm:$0xff]
        %v1287 = vld [vmem:[#allocation2 + $0x92] sm:$0xff]
        %v1288 = vld [vmem:[#allocation2 + $0x9a] sm:$0xff]
        %v1289 = vld [vmem:[#allocation2 + $0xaa] sm:$0xff]
        %v1290 = vld [vmem:[#allocation2 + $0xb2] sm:$0xff]
        %v1291 = vld [vmem:[#allocation2 + $0xc2] sm:$0xff]
        %v1292 = vld [vmem:[#allocation2 + $0xca] sm:$0xff]
        %v1293 = vld [vmem:[#allocation2 + $0xda] sm:$0xff]
        %v1294 = vld [vmem:[#allocation2 + $0xe2] sm:$0xff]
        %v1295 = vld [vmem:[#allocation2 + $0xf2] sm:$0xff]
        %v1296 = vld [vmem:[#allocation2 + $0xfa] sm:$0xff]
        %v1297 = vld [vmem:[#allocation2 + $0x10a] sm:$0xff]
        %v1298 = vld [vmem:[#allocation2 + $0x112] sm:$0xff]
        %v1299 = vld [vmem:[#allocation2 + $0x122] sm:$0xff]
        %v1300 = vld [vmem:[#allocation2 + $0x12a] sm:$0xff]
        %v1301 = vld [vmem:[#allocation2 + $0x13a] sm:$0xff]
        %v1302 = vld [vmem:[#allocation2 + $0x142] sm:$0xff]
        %v1303 = vld [vmem:[#allocation2 + $0x152] sm:$0xff]
        %v1304 = vld [vmem:[#allocation2 + $0x15a] sm:$0xff]
        %v1305 = vld [vmem:[#allocation2 + $0x16a] sm:$0xff]
        %v1306 = vld [vmem:[#allocation2 + $0x172] sm:$0xff]
        %v1307 = vld [vmem:[%s1 + $0x80] sm:$0xff]
        %v1308 = vld [vmem:[%s1 + $0x88] sm:$0xff]
        %v1309 = vld [vmem:[%s1 + $0x90] sm:$0xff]
        %v1310 = vld [vmem:[%s1 + $0x98] sm:$0xff]
        %v1311 = vld [vmem:[%s1 + $0xa0] sm:$0xff]
        %v1312 = vld [vmem:[%s1 + $0xa8] sm:$0xff]
        %v1313 = vld [vmem:[%s1 + $0xb0] sm:$0xff]
        %v1314 = vld [vmem:[%s1 + $0xb8] sm:$0xff]
        %v1316 = vsel %vm417, %v1275, 0
        %v1319 = vsel %vm417, %v1276, 0
        %v1322 = vsel %vm417, %v1277, 0
        %v1325 = vsel %vm417, %v1278, 0
        %v1328 = vsel %vm417, %v1279, 0
        %v1331 = vsel %vm417, %v1280, 0
        %v1334 = vsel %vm417, %v1281, 0
        %v1337 = vsel %vm417, %v1282, 0
        %v1340 = vsel %vm417, %v1283, 0
        %v1343 = vsel %vm417, %v1284, 0
        %v1346 = vsel %vm417, %v1285, 0
        %v1349 = vsel %vm417, %v1286, 0
        %v1352 = vsel %vm417, %v1287, 0
        %v1355 = vsel %vm417, %v1288, 0
        %v1358 = vsel %vm417, %v1289, 0
        %v1361 = vsel %vm417, %v1290, 0
        %v1364 = vsel %vm417, %v1291, 0
        %v1367 = vsel %vm417, %v1292, 0
        %v1370 = vsel %vm417, %v1293, 0
        %v1373 = vsel %vm417, %v1294, 0
        %v1376 = vsel %vm417, %v1295, 0
        %v1379 = vsel %vm417, %v1296, 0
        %v1382 = vsel %vm417, %v1297, 0
        %v1385 = vsel %vm417, %v1298, 0
        %v1388 = vsel %vm417, %v1299, 0
        %v1391 = vsel %vm417, %v1300, 0
        %v1394 = vsel %vm417, %v1301, 0
        %v1397 = vsel %vm417, %v1302, 0
        %v1400 = vsel %vm417, %v1303, 0
        %v1403 = vsel %vm417, %v1304, 0
        %v1406 = vsel %vm417, %v1305, 0
        %v1409 = vsel %vm417, %v1306, 0
        %1411 = vmatprep.subr.mxu0 0.0
        %1412 = vmatpush1.msra.mxu0 0.0
        %1413 = vmatprep.subr.mxu0 0.0
        %1414 = vmatpush1.msra.mxu0 0.0
        %1415 = vmatprep.subr.mxu0 0.0
        %1416 = vmatpush1.msra.mxu0 0.0
        %1417 = vmatprep.subr.mxu0 0.0
        %1418 = vmatpush1.msra.mxu0 0.0
        %1419 = vmatprep.subr.mxu0 0.0
        %1420 = vmatpush1.msra.mxu0 0.0
        %1421 = vmatprep.subr.mxu0 0.0
        %1422 = vmatpush1.msra.mxu0 0.0
        %1423 = vmatprep.subr.mxu0 0.0
        %1424 = vmatpush1.msra.mxu0 0.0
        %1425 = vmatprep.subr.mxu0 0.0
        %1426 = vmatpush1.msra.mxu0 0.0
        %1427 = vmatprep.subr.mxu0 0.0
        %1428 = vmatpush1.msra.mxu0 %v1314
        %1429 = vmatprep.subr.mxu0 0.0
        %1430 = vmatpush1.msra.mxu0 %v1313
        %1431 = vmatprep.subr.mxu0 0.0
        %1432 = vmatpush1.msra.mxu0 %v1312
        %1433 = vmatprep.subr.mxu0 0.0
        %1434 = vmatpush1.msra.mxu0 %v1311
        %1435 = vmatprep.subr.mxu0 0.0
        %1436 = vmatpush1.msra.mxu0 %v1310
        %1437 = vmatprep.subr.mxu0 0.0
        %1438 = vmatpush1.msra.mxu0 %v1309
        %1439 = vmatprep.subr.mxu0 0.0
        %1440 = vmatpush1.msra.mxu0 %v1308
        %1441 = vmatprep.subr.mxu0 0.0
        %1442 = vmatpush1.msra.mxu0 %v1307
        %1443 = vmatprep.subr.mxu0 0.0
        %1444 = vmatpush2.msra.mxu0 0.0
        %1445 = vmatprep.subr.mxu0 0.0
        %1446 = vmatpush2.msra.mxu0 0.0
        %1447 = vmatprep.subr.mxu0 0.0
        %1448 = vmatpush2.msra.mxu0 0.0
        %1449 = vmatprep.subr.mxu0 0.0
        %1450 = vmatpush2.msra.mxu0 0.0
        %1451 = vmatprep.subr.mxu0 0.0
        %1452 = vmatpush2.msra.mxu0 0.0
        %1453 = vmatprep.subr.mxu0 0.0
        %1454 = vmatpush2.msra.mxu0 0.0
        %1455 = vmatprep.subr.mxu0 0.0
        %1456 = vmatpush2.msra.mxu0 0.0
        %1457 = vmatprep.subr.mxu0 0.0
        %1458 = vmatpush2.msra.mxu0 0.0
        %1459 = vmatprep.subr.mxu0 0.0
        %1460 = vmatpush2.msra.mxu0 0.0
        %1461 = vmatprep.subr.mxu0 0.0
        %1462 = vmatpush2.msra.mxu0 0.0
        %1463 = vmatprep.subr.mxu0 0.0
        %1464 = vmatpush2.msra.mxu0 0.0
        %1465 = vmatprep.subr.mxu0 0.0
        %1466 = vmatpush2.msra.mxu0 0.0
        %1467 = vmatprep.subr.mxu0 0.0
        %1468 = vmatpush2.msra.mxu0 0.0
        %1469 = vmatprep.subr.mxu0 0.0
        %1470 = vmatpush2.msra.mxu0 0.0
        %1471 = vmatprep.subr.mxu0 0.0
        %1472 = vmatpush2.msra.mxu0 0.0
        %1473 = vmatprep.subr.mxu0 0.0
        %1474 = vmatpush2.msra.mxu0 0.0
        %1475 = vmatprep.mubr.f32.mxu0 0.0
        %1476 = vmatmul.mubr.f32.gmra.mxu0 %v1316
        %v1477 = vpop.f32.mrf.mxu0
        %v1478 = vadd.f32 0.0, %v1477
        %v1479 = vpop.f32.mrf.mxu0
        %1480 = vmatprep.mubr.f32.mxu0 0.0
        %1481 = vmatmul.mubr.f32.gmra.mxu0 %v1319
        %v1482 = vpop.f32.mrf.mxu0
        %v1483 = vadd.f32 0.0, %v1482
        %v1484 = vpop.f32.mrf.mxu0
        %1485 = vmatprep.mubr.f32.mxu0 0.0
        %1486 = vmatmul.mubr.f32.gmra.mxu0 %v1322
        %v1487 = vpop.f32.mrf.mxu0
        %v1488 = vadd.f32 0.0, %v1487
        %v1489 = vpop.f32.mrf.mxu0
        %1490 = vmatprep.mubr.f32.mxu0 0.0
        %1491 = vmatmul.mubr.f32.gmra.mxu0 %v1325
        %v1492 = vpop.f32.mrf.mxu0
        %v1493 = vadd.f32 0.0, %v1492
        %v1494 = vpop.f32.mrf.mxu0
        %1495 = vmatprep.mubr.f32.mxu0 0.0
        %1496 = vmatmul.mubr.f32.gmra.mxu0 %v1328
        %v1497 = vpop.f32.mrf.mxu0
        %v1498 = vadd.f32 0.0, %v1497
        %v1499 = vpop.f32.mrf.mxu0
        %1500 = vmatprep.mubr.f32.mxu0 0.0
        %1501 = vmatmul.mubr.f32.gmra.mxu0 %v1331
        %v1502 = vpop.f32.mrf.mxu0
        %v1503 = vadd.f32 0.0, %v1502
        %v1504 = vpop.f32.mrf.mxu0
        %1505 = vmatprep.mubr.f32.mxu0 0.0
        %1506 = vmatmul.mubr.f32.gmra.mxu0 %v1334
        %v1507 = vpop.f32.mrf.mxu0
        %v1508 = vadd.f32 0.0, %v1507
        %v1509 = vpop.f32.mrf.mxu0
        %1510 = vmatprep.mubr.f32.mxu0 0.0
        %1511 = vmatmul.mubr.f32.gmra.mxu0 %v1337
        %v1512 = vpop.f32.mrf.mxu0
        %v1513 = vadd.f32 0.0, %v1512
        %v1514 = vpop.f32.mrf.mxu0
        %1515 = vmatprep.mubr.f32.mxu0 0.0
        %1516 = vmatmul.mubr.f32.gmra.mxu0 %v1340
        %v1517 = vpop.f32.mrf.mxu0
        %v1518 = vadd.f32 0.0, %v1517
        %v1519 = vpop.f32.mrf.mxu0
        %1520 = vmatprep.mubr.f32.mxu0 0.0
        %1521 = vmatmul.mubr.f32.gmra.mxu0 %v1343
        %v1522 = vpop.f32.mrf.mxu0
        %v1523 = vadd.f32 0.0, %v1522
        %v1524 = vpop.f32.mrf.mxu0
        %1525 = vmatprep.mubr.f32.mxu0 0.0
        %1526 = vmatmul.mubr.f32.gmra.mxu0 %v1346
        %v1527 = vpop.f32.mrf.mxu0
        %v1528 = vadd.f32 0.0, %v1527
        %v1529 = vpop.f32.mrf.mxu0
        %1530 = vmatprep.mubr.f32.mxu0 0.0
        %1531 = vmatmul.mubr.f32.gmra.mxu0 %v1349
        %v1532 = vpop.f32.mrf.mxu0
        %v1533 = vadd.f32 0.0, %v1532
        %v1534 = vpop.f32.mrf.mxu0
        %1535 = vmatprep.mubr.f32.mxu0 0.0
        %1536 = vmatmul.mubr.f32.gmra.mxu0 %v1352
        %v1537 = vpop.f32.mrf.mxu0
        %v1538 = vadd.f32 0.0, %v1537
        %v1539 = vpop.f32.mrf.mxu0
        %1540 = vmatprep.mubr.f32.mxu0 0.0
        %1541 = vmatmul.mubr.f32.gmra.mxu0 %v1355
        %v1542 = vpop.f32.mrf.mxu0
        %v1543 = vadd.f32 0.0, %v1542
        %v1544 = vpop.f32.mrf.mxu0
        %1545 = vmatprep.mubr.f32.mxu0 0.0
        %1546 = vmatmul.mubr.f32.gmra.mxu0 %v1358
        %v1547 = vpop.f32.mrf.mxu0
        %v1548 = vadd.f32 0.0, %v1547
        %v1549 = vpop.f32.mrf.mxu0
        %1550 = vmatprep.mubr.f32.mxu0 0.0
        %1551 = vmatmul.mubr.f32.gmra.mxu0 %v1361
        %v1552 = vpop.f32.mrf.mxu0
        %v1553 = vadd.f32 0.0, %v1552
        %v1554 = vpop.f32.mrf.mxu0
        %1555 = vmatprep.mubr.f32.mxu0 0.0
        %1556 = vmatmul.mubr.f32.gmra.mxu0 %v1364
        %v1557 = vpop.f32.mrf.mxu0
        %v1558 = vadd.f32 0.0, %v1557
        %v1559 = vpop.f32.mrf.mxu0
        %1560 = vmatprep.mubr.f32.mxu0 0.0
        %1561 = vmatmul.mubr.f32.gmra.mxu0 %v1367
        %v1562 = vpop.f32.mrf.mxu0
        %v1563 = vadd.f32 0.0, %v1562
        %v1564 = vpop.f32.mrf.mxu0
        %1565 = vmatprep.mubr.f32.mxu0 0.0
        %1566 = vmatmul.mubr.f32.gmra.mxu0 %v1370
        %v1567 = vpop.f32.mrf.mxu0
        %v1568 = vadd.f32 0.0, %v1567
        %v1569 = vpop.f32.mrf.mxu0
        %1570 = vmatprep.mubr.f32.mxu0 0.0
        %1571 = vmatmul.mubr.f32.gmra.mxu0 %v1373
        %v1572 = vpop.f32.mrf.mxu0
        %v1573 = vadd.f32 0.0, %v1572
        %v1574 = vpop.f32.mrf.mxu0
        %1575 = vmatprep.mubr.f32.mxu0 0.0
        %1576 = vmatmul.mubr.f32.gmra.mxu0 %v1376
        %v1577 = vpop.f32.mrf.mxu0
        %v1578 = vadd.f32 0.0, %v1577
        %v1579 = vpop.f32.mrf.mxu0
        %1580 = vmatprep.mubr.f32.mxu0 0.0
        %1581 = vmatmul.mubr.f32.gmra.mxu0 %v1379
        %v1582 = vpop.f32.mrf.mxu0
        %v1583 = vadd.f32 0.0, %v1582
        %v1584 = vpop.f32.mrf.mxu0
        %1585 = vmatprep.mubr.f32.mxu0 0.0
        %1586 = vmatmul.mubr.f32.gmra.mxu0 %v1382
        %v1587 = vpop.f32.mrf.mxu0
        %v1588 = vadd.f32 0.0, %v1587
        %v1589 = vpop.f32.mrf.mxu0
        %1590 = vmatprep.mubr.f32.mxu0 0.0
        %1591 = vmatmul.mubr.f32.gmra.mxu0 %v1385
        %v1592 = vpop.f32.mrf.mxu0
        %v1593 = vadd.f32 0.0, %v1592
        %v1594 = vpop.f32.mrf.mxu0
        %1595 = vmatprep.mubr.f32.mxu0 0.0
        %1596 = vmatmul.mubr.f32.gmra.mxu0 %v1388
        %v1597 = vpop.f32.mrf.mxu0
        %v1598 = vadd.f32 0.0, %v1597
        %v1599 = vpop.f32.mrf.mxu0
        %1600 = vmatprep.mubr.f32.mxu0 0.0
        %1601 = vmatmul.mubr.f32.gmra.mxu0 %v1391
        %v1602 = vpop.f32.mrf.mxu0
        %v1603 = vadd.f32 0.0, %v1602
        %v1604 = vpop.f32.mrf.mxu0
        %1605 = vmatprep.mubr.f32.mxu0 0.0
        %1606 = vmatmul.mubr.f32.gmra.mxu0 %v1394
        %v1607 = vpop.f32.mrf.mxu0
        %v1608 = vadd.f32 0.0, %v1607
        %v1609 = vpop.f32.mrf.mxu0
        %1610 = vmatprep.mubr.f32.mxu0 0.0
        %1611 = vmatmul.mubr.f32.gmra.mxu0 %v1397
        %v1612 = vpop.f32.mrf.mxu0
        %v1613 = vadd.f32 0.0, %v1612
        %v1614 = vpop.f32.mrf.mxu0
        %1615 = vmatprep.mubr.f32.mxu0 0.0
        %1616 = vmatmul.mubr.f32.gmra.mxu0 %v1400
        %v1617 = vpop.f32.mrf.mxu0
        %v1618 = vadd.f32 0.0, %v1617
        %v1619 = vpop.f32.mrf.mxu0
        %1620 = vmatprep.mubr.f32.mxu0 0.0
        %1621 = vmatmul.mubr.f32.gmra.mxu0 %v1403
        %v1622 = vpop.f32.mrf.mxu0
        %v1623 = vadd.f32 0.0, %v1622
        %v1624 = vpop.f32.mrf.mxu0
        %1625 = vmatprep.mubr.f32.mxu0 0.0
        %1626 = vmatmul.mubr.f32.gmra.mxu0 %v1406
        %v1627 = vpop.f32.mrf.mxu0
        %v1628 = vadd.f32 0.0, %v1627
        %v1629 = vpop.f32.mrf.mxu0
        %1630 = vmatprep.mubr.f32.mxu0 0.0
        %1631 = vmatmul.mubr.f32.gmra.mxu0 %v1409
        %v1632 = vpop.f32.mrf.mxu0
        %v1633 = vadd.f32 0.0, %v1632
        %v1634 = vpop.f32.mrf.mxu0
        %1635 = vdwg.mxu0
        %v1636 = vadd.f32 %v1117, %v1478
        %v1637 = vadd.f32 %v1122, %v1483
        %v1638 = vadd.f32 %v1127, %v1488
        %v1639 = vadd.f32 %v1132, %v1493
        %v1640 = vadd.f32 %v1137, %v1498
        %v1641 = vadd.f32 %v1142, %v1503
        %v1642 = vadd.f32 %v1147, %v1508
        %v1643 = vadd.f32 %v1152, %v1513
        %v1644 = vadd.f32 %v1157, %v1518
        %v1645 = vadd.f32 %v1162, %v1523
        %v1646 = vadd.f32 %v1167, %v1528
        %v1647 = vadd.f32 %v1172, %v1533
        %v1648 = vadd.f32 %v1177, %v1538
        %v1649 = vadd.f32 %v1182, %v1543
        %v1650 = vadd.f32 %v1187, %v1548
        %v1651 = vadd.f32 %v1192, %v1553
        %v1652 = vadd.f32 %v1197, %v1558
        %v1653 = vadd.f32 %v1202, %v1563
        %v1654 = vadd.f32 %v1207, %v1568
        %v1655 = vadd.f32 %v1212, %v1573
        %v1656 = vadd.f32 %v1217, %v1578
        %v1657 = vadd.f32 %v1222, %v1583
        %v1658 = vadd.f32 %v1227, %v1588
        %v1659 = vadd.f32 %v1232, %v1593
        %v1660 = vadd.f32 %v1237, %v1598
        %v1661 = vadd.f32 %v1242, %v1603
        %v1662 = vadd.f32 %v1247, %v1608
        %v1663 = vadd.f32 %v1252, %v1613
        %v1664 = vadd.f32 %v1257, %v1618
        %v1665 = vadd.f32 %v1262, %v1623
        %v1666 = vadd.f32 %v1267, %v1628
        %v1667 = vadd.f32 %v1272, %v1633
        %v1668 = vld [vmem:[%s520] sm:$0xff]
        %v1669 = vld [vmem:[%s520 + $0x8] sm:$0xff]
        %v1670 = vld [vmem:[%s520 + $0x18] sm:$0xff]
        %v1671 = vld [vmem:[%s520 + $0x20] sm:$0xff]
        %v1672 = vld [vmem:[%s520 + $0x30] sm:$0xff]
        %v1673 = vld [vmem:[%s520 + $0x38] sm:$0xff]
        %v1674 = vld [vmem:[%s520 + $0x48] sm:$0xff]
        %v1675 = vld [vmem:[%s520 + $0x50] sm:$0xff]
        %v1676 = vld [vmem:[%s520 + $0x60] sm:$0xff]
        %v1677 = vld [vmem:[%s520 + $0x68] sm:$0xff]
        %v1678 = vld [vmem:[%s520 + $0x78] sm:$0xff]
        %v1679 = vld [vmem:[%s520 + $0x80] sm:$0xff]
        %v1680 = vld [vmem:[%s520 + $0x90] sm:$0xff]
        %v1681 = vld [vmem:[%s520 + $0x98] sm:$0xff]
        %v1682 = vld [vmem:[%s520 + $0xa8] sm:$0xff]
        %v1683 = vld [vmem:[%s520 + $0xb0] sm:$0xff]
        %v1684 = vld [vmem:[%s520 + $0xc0] sm:$0xff]
        %v1685 = vld [vmem:[%s520 + $0xc8] sm:$0xff]
        %v1686 = vld [vmem:[%s520 + $0xd8] sm:$0xff]
        %v1687 = vld [vmem:[%s520 + $0xe0] sm:$0xff]
        %v1688 = vld [vmem:[%s520 + $0xf0] sm:$0xff]
        %v1689 = vld [vmem:[%s520 + $0xf8] sm:$0xff]
        %v1690 = vld [vmem:[%s520 + $0x108] sm:$0xff]
        %v1691 = vld [vmem:[%s520 + $0x110] sm:$0xff]
        %v1692 = vld [vmem:[%s520 + $0x120] sm:$0xff]
        %v1693 = vld [vmem:[%s520 + $0x128] sm:$0xff]
        %v1694 = vld [vmem:[%s520 + $0x138] sm:$0xff]
        %v1695 = vld [vmem:[%s520 + $0x140] sm:$0xff]
        %v1696 = vld [vmem:[%s520 + $0x150] sm:$0xff]
        %v1697 = vld [vmem:[%s520 + $0x158] sm:$0xff]
        %v1698 = vld [vmem:[%s520 + $0x168] sm:$0xff]
        %v1699 = vld [vmem:[%s520 + $0x170] sm:$0xff]
        %v1700 = vld [vmem:[%s1 + $0xc0] sm:$0xff]
        %v1701 = vld [vmem:[%s1 + $0xc8] sm:$0xff]
        %v1702 = vld [vmem:[%s1 + $0xd0] sm:$0xff]
        %v1703 = vld [vmem:[%s1 + $0xd8] sm:$0xff]
        %v1704 = vld [vmem:[%s1 + $0xe0] sm:$0xff]
        %v1705 = vld [vmem:[%s1 + $0xe8] sm:$0xff]
        %v1706 = vld [vmem:[%s1 + $0xf0] sm:$0xff]
        %v1707 = vld [vmem:[%s1 + $0xf8] sm:$0xff]
        %v1709 = vsel %vm417, %v1668, 0
        %v1712 = vsel %vm417, %v1669, 0
        %v1715 = vsel %vm417, %v1670, 0
        %v1718 = vsel %vm417, %v1671, 0
        %v1721 = vsel %vm417, %v1672, 0
        %v1724 = vsel %vm417, %v1673, 0
        %v1727 = vsel %vm417, %v1674, 0
        %v1730 = vsel %vm417, %v1675, 0
        %v1733 = vsel %vm417, %v1676, 0
        %v1736 = vsel %vm417, %v1677, 0
        %v1739 = vsel %vm417, %v1678, 0
        %v1742 = vsel %vm417, %v1679, 0
        %v1745 = vsel %vm417, %v1680, 0
        %v1748 = vsel %vm417, %v1681, 0
        %v1751 = vsel %vm417, %v1682, 0
        %v1754 = vsel %vm417, %v1683, 0
        %v1757 = vsel %vm417, %v1684, 0
        %v1760 = vsel %vm417, %v1685, 0
        %v1763 = vsel %vm417, %v1686, 0
        %v1766 = vsel %vm417, %v1687, 0
        %v1769 = vsel %vm417, %v1688, 0
        %v1772 = vsel %vm417, %v1689, 0
        %v1775 = vsel %vm417, %v1690, 0
        %v1778 = vsel %vm417, %v1691, 0
        %v1781 = vsel %vm417, %v1692, 0
        %v1784 = vsel %vm417, %v1693, 0
        %v1787 = vsel %vm417, %v1694, 0
        %v1790 = vsel %vm417, %v1695, 0
        %v1793 = vsel %vm417, %v1696, 0
        %v1796 = vsel %vm417, %v1697, 0
        %v1799 = vsel %vm417, %v1698, 0
        %v1802 = vsel %vm417, %v1699, 0
        %1804 = vmatprep.subr.mxu0 0.0
        %1805 = vmatpush1.msra.mxu0 0.0
        %1806 = vmatprep.subr.mxu0 0.0
        %1807 = vmatpush1.msra.mxu0 0.0
        %1808 = vmatprep.subr.mxu0 0.0
        %1809 = vmatpush1.msra.mxu0 0.0
        %1810 = vmatprep.subr.mxu0 0.0
        %1811 = vmatpush1.msra.mxu0 0.0
        %1812 = vmatprep.subr.mxu0 0.0
        %1813 = vmatpush1.msra.mxu0 0.0
        %1814 = vmatprep.subr.mxu0 0.0
        %1815 = vmatpush1.msra.mxu0 0.0
        %1816 = vmatprep.subr.mxu0 0.0
        %1817 = vmatpush1.msra.mxu0 0.0
        %1818 = vmatprep.subr.mxu0 0.0
        %1819 = vmatpush1.msra.mxu0 0.0
        %1820 = vmatprep.subr.mxu0 0.0
        %1821 = vmatpush1.msra.mxu0 %v1707
        %1822 = vmatprep.subr.mxu0 0.0
        %1823 = vmatpush1.msra.mxu0 %v1706
        %1824 = vmatprep.subr.mxu0 0.0
        %1825 = vmatpush1.msra.mxu0 %v1705
        %1826 = vmatprep.subr.mxu0 0.0
        %1827 = vmatpush1.msra.mxu0 %v1704
        %1828 = vmatprep.subr.mxu0 0.0
        %1829 = vmatpush1.msra.mxu0 %v1703
        %1830 = vmatprep.subr.mxu0 0.0
        %1831 = vmatpush1.msra.mxu0 %v1702
        %1832 = vmatprep.subr.mxu0 0.0
        %1833 = vmatpush1.msra.mxu0 %v1701
        %1834 = vmatprep.subr.mxu0 0.0
        %1835 = vmatpush1.msra.mxu0 %v1700
        %1836 = vmatprep.subr.mxu0 0.0
        %1837 = vmatpush2.msra.mxu0 0.0
        %1838 = vmatprep.subr.mxu0 0.0
        %1839 = vmatpush2.msra.mxu0 0.0
        %1840 = vmatprep.subr.mxu0 0.0
        %1841 = vmatpush2.msra.mxu0 0.0
        %1842 = vmatprep.subr.mxu0 0.0
        %1843 = vmatpush2.msra.mxu0 0.0
        %1844 = vmatprep.subr.mxu0 0.0
        %1845 = vmatpush2.msra.mxu0 0.0
        %1846 = vmatprep.subr.mxu0 0.0
        %1847 = vmatpush2.msra.mxu0 0.0
        %1848 = vmatprep.subr.mxu0 0.0
        %1849 = vmatpush2.msra.mxu0 0.0
        %1850 = vmatprep.subr.mxu0 0.0
        %1851 = vmatpush2.msra.mxu0 0.0
        %1852 = vmatprep.subr.mxu0 0.0
        %1853 = vmatpush2.msra.mxu0 0.0
        %1854 = vmatprep.subr.mxu0 0.0
        %1855 = vmatpush2.msra.mxu0 0.0
        %1856 = vmatprep.subr.mxu0 0.0
        %1857 = vmatpush2.msra.mxu0 0.0
        %1858 = vmatprep.subr.mxu0 0.0
        %1859 = vmatpush2.msra.mxu0 0.0
        %1860 = vmatprep.subr.mxu0 0.0
        %1861 = vmatpush2.msra.mxu0 0.0
        %1862 = vmatprep.subr.mxu0 0.0
        %1863 = vmatpush2.msra.mxu0 0.0
        %1864 = vmatprep.subr.mxu0 0.0
        %1865 = vmatpush2.msra.mxu0 0.0
        %1866 = vmatprep.subr.mxu0 0.0
        %1867 = vmatpush2.msra.mxu0 0.0
        %1868 = vmatprep.mubr.f32.mxu0 0.0
        %1869 = vmatmul.mubr.f32.gmra.mxu0 %v1709
        %v1870 = vpop.f32.mrf.mxu0
        %v1871 = vadd.f32 0.0, %v1870
        %v1872 = vpop.f32.mrf.mxu0
        %1873 = vmatprep.mubr.f32.mxu0 0.0
        %1874 = vmatmul.mubr.f32.gmra.mxu0 %v1712
        %v1875 = vpop.f32.mrf.mxu0
        %v1876 = vadd.f32 0.0, %v1875
        %v1877 = vpop.f32.mrf.mxu0
        %1878 = vmatprep.mubr.f32.mxu0 0.0
        %1879 = vmatmul.mubr.f32.gmra.mxu0 %v1715
        %v1880 = vpop.f32.mrf.mxu0
        %v1881 = vadd.f32 0.0, %v1880
        %v1882 = vpop.f32.mrf.mxu0
        %1883 = vmatprep.mubr.f32.mxu0 0.0
        %1884 = vmatmul.mubr.f32.gmra.mxu0 %v1718
        %v1885 = vpop.f32.mrf.mxu0
        %v1886 = vadd.f32 0.0, %v1885
        %v1887 = vpop.f32.mrf.mxu0
        %1888 = vmatprep.mubr.f32.mxu0 0.0
        %1889 = vmatmul.mubr.f32.gmra.mxu0 %v1721
        %v1890 = vpop.f32.mrf.mxu0
        %v1891 = vadd.f32 0.0, %v1890
        %v1892 = vpop.f32.mrf.mxu0
        %1893 = vmatprep.mubr.f32.mxu0 0.0
        %1894 = vmatmul.mubr.f32.gmra.mxu0 %v1724
        %v1895 = vpop.f32.mrf.mxu0
        %v1896 = vadd.f32 0.0, %v1895
        %v1897 = vpop.f32.mrf.mxu0
        %1898 = vmatprep.mubr.f32.mxu0 0.0
        %1899 = vmatmul.mubr.f32.gmra.mxu0 %v1727
        %v1900 = vpop.f32.mrf.mxu0
        %v1901 = vadd.f32 0.0, %v1900
        %v1902 = vpop.f32.mrf.mxu0
        %1903 = vmatprep.mubr.f32.mxu0 0.0
        %1904 = vmatmul.mubr.f32.gmra.mxu0 %v1730
        %v1905 = vpop.f32.mrf.mxu0
        %v1906 = vadd.f32 0.0, %v1905
        %v1907 = vpop.f32.mrf.mxu0
        %1908 = vmatprep.mubr.f32.mxu0 0.0
        %1909 = vmatmul.mubr.f32.gmra.mxu0 %v1733
        %v1910 = vpop.f32.mrf.mxu0
        %v1911 = vadd.f32 0.0, %v1910
        %v1912 = vpop.f32.mrf.mxu0
        %1913 = vmatprep.mubr.f32.mxu0 0.0
        %1914 = vmatmul.mubr.f32.gmra.mxu0 %v1736
        %v1915 = vpop.f32.mrf.mxu0
        %v1916 = vadd.f32 0.0, %v1915
        %v1917 = vpop.f32.mrf.mxu0
        %1918 = vmatprep.mubr.f32.mxu0 0.0
        %1919 = vmatmul.mubr.f32.gmra.mxu0 %v1739
        %v1920 = vpop.f32.mrf.mxu0
        %v1921 = vadd.f32 0.0, %v1920
        %v1922 = vpop.f32.mrf.mxu0
        %1923 = vmatprep.mubr.f32.mxu0 0.0
        %1924 = vmatmul.mubr.f32.gmra.mxu0 %v1742
        %v1925 = vpop.f32.mrf.mxu0
        %v1926 = vadd.f32 0.0, %v1925
        %v1927 = vpop.f32.mrf.mxu0
        %1928 = vmatprep.mubr.f32.mxu0 0.0
        %1929 = vmatmul.mubr.f32.gmra.mxu0 %v1745
        %v1930 = vpop.f32.mrf.mxu0
        %v1931 = vadd.f32 0.0, %v1930
        %v1932 = vpop.f32.mrf.mxu0
        %1933 = vmatprep.mubr.f32.mxu0 0.0
        %1934 = vmatmul.mubr.f32.gmra.mxu0 %v1748
        %v1935 = vpop.f32.mrf.mxu0
        %v1936 = vadd.f32 0.0, %v1935
        %v1937 = vpop.f32.mrf.mxu0
        %1938 = vmatprep.mubr.f32.mxu0 0.0
        %1939 = vmatmul.mubr.f32.gmra.mxu0 %v1751
        %v1940 = vpop.f32.mrf.mxu0
        %v1941 = vadd.f32 0.0, %v1940
        %v1942 = vpop.f32.mrf.mxu0
        %1943 = vmatprep.mubr.f32.mxu0 0.0
        %1944 = vmatmul.mubr.f32.gmra.mxu0 %v1754
        %v1945 = vpop.f32.mrf.mxu0
        %v1946 = vadd.f32 0.0, %v1945
        %v1947 = vpop.f32.mrf.mxu0
        %1948 = vmatprep.mubr.f32.mxu0 0.0
        %1949 = vmatmul.mubr.f32.gmra.mxu0 %v1757
        %v1950 = vpop.f32.mrf.mxu0
        %v1951 = vadd.f32 0.0, %v1950
        %v1952 = vpop.f32.mrf.mxu0
        %1953 = vmatprep.mubr.f32.mxu0 0.0
        %1954 = vmatmul.mubr.f32.gmra.mxu0 %v1760
        %v1955 = vpop.f32.mrf.mxu0
        %v1956 = vadd.f32 0.0, %v1955
        %v1957 = vpop.f32.mrf.mxu0
        %1958 = vmatprep.mubr.f32.mxu0 0.0
        %1959 = vmatmul.mubr.f32.gmra.mxu0 %v1763
        %v1960 = vpop.f32.mrf.mxu0
        %v1961 = vadd.f32 0.0, %v1960
        %v1962 = vpop.f32.mrf.mxu0
        %1963 = vmatprep.mubr.f32.mxu0 0.0
        %1964 = vmatmul.mubr.f32.gmra.mxu0 %v1766
        %v1965 = vpop.f32.mrf.mxu0
        %v1966 = vadd.f32 0.0, %v1965
        %v1967 = vpop.f32.mrf.mxu0
        %1968 = vmatprep.mubr.f32.mxu0 0.0
        %1969 = vmatmul.mubr.f32.gmra.mxu0 %v1769
        %v1970 = vpop.f32.mrf.mxu0
        %v1971 = vadd.f32 0.0, %v1970
        %v1972 = vpop.f32.mrf.mxu0
        %1973 = vmatprep.mubr.f32.mxu0 0.0
        %1974 = vmatmul.mubr.f32.gmra.mxu0 %v1772
        %v1975 = vpop.f32.mrf.mxu0
        %v1976 = vadd.f32 0.0, %v1975
        %v1977 = vpop.f32.mrf.mxu0
        %1978 = vmatprep.mubr.f32.mxu0 0.0
        %1979 = vmatmul.mubr.f32.gmra.mxu0 %v1775
        %v1980 = vpop.f32.mrf.mxu0
        %v1981 = vadd.f32 0.0, %v1980
        %v1982 = vpop.f32.mrf.mxu0
        %1983 = vmatprep.mubr.f32.mxu0 0.0
        %1984 = vmatmul.mubr.f32.gmra.mxu0 %v1778
        %v1985 = vpop.f32.mrf.mxu0
        %v1986 = vadd.f32 0.0, %v1985
        %v1987 = vpop.f32.mrf.mxu0
        %1988 = vmatprep.mubr.f32.mxu0 0.0
        %1989 = vmatmul.mubr.f32.gmra.mxu0 %v1781
        %v1990 = vpop.f32.mrf.mxu0
        %v1991 = vadd.f32 0.0, %v1990
        %v1992 = vpop.f32.mrf.mxu0
        %1993 = vmatprep.mubr.f32.mxu0 0.0
        %1994 = vmatmul.mubr.f32.gmra.mxu0 %v1784
        %v1995 = vpop.f32.mrf.mxu0
        %v1996 = vadd.f32 0.0, %v1995
        %v1997 = vpop.f32.mrf.mxu0
        %1998 = vmatprep.mubr.f32.mxu0 0.0
        %1999 = vmatmul.mubr.f32.gmra.mxu0 %v1787
        %v2000 = vpop.f32.mrf.mxu0
        %v2001 = vadd.f32 0.0, %v2000
        %v2002 = vpop.f32.mrf.mxu0
        %2003 = vmatprep.mubr.f32.mxu0 0.0
        %2004 = vmatmul.mubr.f32.gmra.mxu0 %v1790
        %v2005 = vpop.f32.mrf.mxu0
        %v2006 = vadd.f32 0.0, %v2005
        %v2007 = vpop.f32.mrf.mxu0
        %2008 = vmatprep.mubr.f32.mxu0 0.0
        %2009 = vmatmul.mubr.f32.gmra.mxu0 %v1793
        %v2010 = vpop.f32.mrf.mxu0
        %v2011 = vadd.f32 0.0, %v2010
        %v2012 = vpop.f32.mrf.mxu0
        %2013 = vmatprep.mubr.f32.mxu0 0.0
        %2014 = vmatmul.mubr.f32.gmra.mxu0 %v1796
        %v2015 = vpop.f32.mrf.mxu0
        %v2016 = vadd.f32 0.0, %v2015
        %v2017 = vpop.f32.mrf.mxu0
        %2018 = vmatprep.mubr.f32.mxu0 0.0
        %2019 = vmatmul.mubr.f32.gmra.mxu0 %v1799
        %v2020 = vpop.f32.mrf.mxu0
        %v2021 = vadd.f32 0.0, %v2020
        %v2022 = vpop.f32.mrf.mxu0
        %2023 = vmatprep.mubr.f32.mxu0 0.0
        %2024 = vmatmul.mubr.f32.gmra.mxu0 %v1802
        %v2025 = vpop.f32.mrf.mxu0
        %v2026 = vadd.f32 0.0, %v2025
        %v2027 = vpop.f32.mrf.mxu0
        %2028 = vdwg.mxu0
        %v2029 = vadd.f32 %v1636, %v1871
        %v2030 = vadd.f32 %v1637, %v1876
        %v2031 = vadd.f32 %v1638, %v1881
        %v2032 = vadd.f32 %v1639, %v1886
        %v2033 = vadd.f32 %v1640, %v1891
        %v2034 = vadd.f32 %v1641, %v1896
        %v2035 = vadd.f32 %v1642, %v1901
        %v2036 = vadd.f32 %v1643, %v1906
        %v2037 = vadd.f32 %v1644, %v1911
        %v2038 = vadd.f32 %v1645, %v1916
        %v2039 = vadd.f32 %v1646, %v1921
        %v2040 = vadd.f32 %v1647, %v1926
        %v2041 = vadd.f32 %v1648, %v1931
        %v2042 = vadd.f32 %v1649, %v1936
        %v2043 = vadd.f32 %v1650, %v1941
        %v2044 = vadd.f32 %v1651, %v1946
        %v2045 = vadd.f32 %v1652, %v1951
        %v2046 = vadd.f32 %v1653, %v1956
        %v2047 = vadd.f32 %v1654, %v1961
        %v2048 = vadd.f32 %v1655, %v1966
        %v2049 = vadd.f32 %v1656, %v1971
        %v2050 = vadd.f32 %v1657, %v1976
        %v2051 = vadd.f32 %v1658, %v1981
        %v2052 = vadd.f32 %v1659, %v1986
        %v2053 = vadd.f32 %v1660, %v1991
        %v2054 = vadd.f32 %v1661, %v1996
        %v2055 = vadd.f32 %v1662, %v2001
        %v2056 = vadd.f32 %v1663, %v2006
        %v2057 = vadd.f32 %v1664, %v2011
        %v2058 = vadd.f32 %v1665, %v2016
        %v2059 = vadd.f32 %v1666, %v2021
        %v2060 = vadd.f32 %v1667, %v2026
        %v2061 = vld [vmem:[%s520 + $0x1] sm:$0xff]
        %v2062 = vld [vmem:[%s520 + $0x9] sm:$0xff]
        %v2063 = vld [vmem:[%s520 + $0x19] sm:$0xff]
        %v2064 = vld [vmem:[%s520 + $0x21] sm:$0xff]
        %v2065 = vld [vmem:[%s520 + $0x31] sm:$0xff]
        %v2066 = vld [vmem:[%s520 + $0x39] sm:$0xff]
        %v2067 = vld [vmem:[%s520 + $0x49] sm:$0xff]
        %v2068 = vld [vmem:[%s520 + $0x51] sm:$0xff]
        %v2069 = vld [vmem:[%s520 + $0x61] sm:$0xff]
        %v2070 = vld [vmem:[%s520 + $0x69] sm:$0xff]
        %v2071 = vld [vmem:[%s520 + $0x79] sm:$0xff]
        %v2072 = vld [vmem:[%s520 + $0x81] sm:$0xff]
        %v2073 = vld [vmem:[%s520 + $0x91] sm:$0xff]
        %v2074 = vld [vmem:[%s520 + $0x99] sm:$0xff]
        %v2075 = vld [vmem:[%s520 + $0xa9] sm:$0xff]
        %v2076 = vld [vmem:[%s520 + $0xb1] sm:$0xff]
        %v2077 = vld [vmem:[%s520 + $0xc1] sm:$0xff]
        %v2078 = vld [vmem:[%s520 + $0xc9] sm:$0xff]
        %v2079 = vld [vmem:[%s520 + $0xd9] sm:$0xff]
        %v2080 = vld [vmem:[%s520 + $0xe1] sm:$0xff]
        %v2081 = vld [vmem:[%s520 + $0xf1] sm:$0xff]
        %v2082 = vld [vmem:[%s520 + $0xf9] sm:$0xff]
        %v2083 = vld [vmem:[%s520 + $0x109] sm:$0xff]
        %v2084 = vld [vmem:[%s520 + $0x111] sm:$0xff]
        %v2085 = vld [vmem:[%s520 + $0x121] sm:$0xff]
        %v2086 = vld [vmem:[%s520 + $0x129] sm:$0xff]
        %v2087 = vld [vmem:[%s520 + $0x139] sm:$0xff]
        %v2088 = vld [vmem:[%s520 + $0x141] sm:$0xff]
        %v2089 = vld [vmem:[%s520 + $0x151] sm:$0xff]
        %v2090 = vld [vmem:[%s520 + $0x159] sm:$0xff]
        %v2091 = vld [vmem:[%s520 + $0x169] sm:$0xff]
        %v2092 = vld [vmem:[%s520 + $0x171] sm:$0xff]
        %v2093 = vld [vmem:[%s1 + $0x100] sm:$0xff]
        %v2094 = vld [vmem:[%s1 + $0x108] sm:$0xff]
        %v2095 = vld [vmem:[%s1 + $0x110] sm:$0xff]
        %v2096 = vld [vmem:[%s1 + $0x118] sm:$0xff]
        %v2097 = vld [vmem:[%s1 + $0x120] sm:$0xff]
        %v2098 = vld [vmem:[%s1 + $0x128] sm:$0xff]
        %v2099 = vld [vmem:[%s1 + $0x130] sm:$0xff]
        %v2100 = vld [vmem:[%s1 + $0x138] sm:$0xff]
        %v2102 = vsel %vm417, %v2061, 0
        %v2105 = vsel %vm417, %v2062, 0
        %v2108 = vsel %vm417, %v2063, 0
        %v2111 = vsel %vm417, %v2064, 0
        %v2114 = vsel %vm417, %v2065, 0
        %v2117 = vsel %vm417, %v2066, 0
        %v2120 = vsel %vm417, %v2067, 0
        %v2123 = vsel %vm417, %v2068, 0
        %v2126 = vsel %vm417, %v2069, 0
        %v2129 = vsel %vm417, %v2070, 0
        %v2132 = vsel %vm417, %v2071, 0
        %v2135 = vsel %vm417, %v2072, 0
        %v2138 = vsel %vm417, %v2073, 0
        %v2141 = vsel %vm417, %v2074, 0
        %v2144 = vsel %vm417, %v2075, 0
        %v2147 = vsel %vm417, %v2076, 0
        %v2150 = vsel %vm417, %v2077, 0
        %v2153 = vsel %vm417, %v2078, 0
        %v2156 = vsel %vm417, %v2079, 0
        %v2159 = vsel %vm417, %v2080, 0
        %v2162 = vsel %vm417, %v2081, 0
        %v2165 = vsel %vm417, %v2082, 0
        %v2168 = vsel %vm417, %v2083, 0
        %v2171 = vsel %vm417, %v2084, 0
        %v2174 = vsel %vm417, %v2085, 0
        %v2177 = vsel %vm417, %v2086, 0
        %v2180 = vsel %vm417, %v2087, 0
        %v2183 = vsel %vm417, %v2088, 0
        %v2186 = vsel %vm417, %v2089, 0
        %v2189 = vsel %vm417, %v2090, 0
        %v2192 = vsel %vm417, %v2091, 0
        %v2195 = vsel %vm417, %v2092, 0
        %2197 = vmatprep.subr.mxu0 0.0
        %2198 = vmatpush1.msra.mxu0 0.0
        %2199 = vmatprep.subr.mxu0 0.0
        %2200 = vmatpush1.msra.mxu0 0.0
        %2201 = vmatprep.subr.mxu0 0.0
        %2202 = vmatpush1.msra.mxu0 0.0
        %2203 = vmatprep.subr.mxu0 0.0
        %2204 = vmatpush1.msra.mxu0 0.0
        %2205 = vmatprep.subr.mxu0 0.0
        %2206 = vmatpush1.msra.mxu0 0.0
        %2207 = vmatprep.subr.mxu0 0.0
        %2208 = vmatpush1.msra.mxu0 0.0
        %2209 = vmatprep.subr.mxu0 0.0
        %2210 = vmatpush1.msra.mxu0 0.0
        %2211 = vmatprep.subr.mxu0 0.0
        %2212 = vmatpush1.msra.mxu0 0.0
        %2213 = vmatprep.subr.mxu0 0.0
        %2214 = vmatpush1.msra.mxu0 %v2100
        %2215 = vmatprep.subr.mxu0 0.0
        %2216 = vmatpush1.msra.mxu0 %v2099
        %2217 = vmatprep.subr.mxu0 0.0
        %2218 = vmatpush1.msra.mxu0 %v2098
        %2219 = vmatprep.subr.mxu0 0.0
        %2220 = vmatpush1.msra.mxu0 %v2097
        %2221 = vmatprep.subr.mxu0 0.0
        %2222 = vmatpush1.msra.mxu0 %v2096
        %2223 = vmatprep.subr.mxu0 0.0
        %2224 = vmatpush1.msra.mxu0 %v2095
        %2225 = vmatprep.subr.mxu0 0.0
        %2226 = vmatpush1.msra.mxu0 %v2094
        %2227 = vmatprep.subr.mxu0 0.0
        %2228 = vmatpush1.msra.mxu0 %v2093
        %2229 = vmatprep.subr.mxu0 0.0
        %2230 = vmatpush2.msra.mxu0 0.0
        %2231 = vmatprep.subr.mxu0 0.0
        %2232 = vmatpush2.msra.mxu0 0.0
        %2233 = vmatprep.subr.mxu0 0.0
        %2234 = vmatpush2.msra.mxu0 0.0
        %2235 = vmatprep.subr.mxu0 0.0
        %2236 = vmatpush2.msra.mxu0 0.0
        %2237 = vmatprep.subr.mxu0 0.0
        %2238 = vmatpush2.msra.mxu0 0.0
        %2239 = vmatprep.subr.mxu0 0.0
        %2240 = vmatpush2.msra.mxu0 0.0
        %2241 = vmatprep.subr.mxu0 0.0
        %2242 = vmatpush2.msra.mxu0 0.0
        %2243 = vmatprep.subr.mxu0 0.0
        %2244 = vmatpush2.msra.mxu0 0.0
        %2245 = vmatprep.subr.mxu0 0.0
        %2246 = vmatpush2.msra.mxu0 0.0
        %2247 = vmatprep.subr.mxu0 0.0
        %2248 = vmatpush2.msra.mxu0 0.0
        %2249 = vmatprep.subr.mxu0 0.0
        %2250 = vmatpush2.msra.mxu0 0.0
        %2251 = vmatprep.subr.mxu0 0.0
        %2252 = vmatpush2.msra.mxu0 0.0
        %2253 = vmatprep.subr.mxu0 0.0
        %2254 = vmatpush2.msra.mxu0 0.0
        %2255 = vmatprep.subr.mxu0 0.0
        %2256 = vmatpush2.msra.mxu0 0.0
        %2257 = vmatprep.subr.mxu0 0.0
        %2258 = vmatpush2.msra.mxu0 0.0
        %2259 = vmatprep.subr.mxu0 0.0
        %2260 = vmatpush2.msra.mxu0 0.0
        %2261 = vmatprep.mubr.f32.mxu0 0.0
        %2262 = vmatmul.mubr.f32.gmra.mxu0 %v2102
        %v2263 = vpop.f32.mrf.mxu0
        %v2264 = vadd.f32 0.0, %v2263
        %v2265 = vpop.f32.mrf.mxu0
        %2266 = vmatprep.mubr.f32.mxu0 0.0
        %2267 = vmatmul.mubr.f32.gmra.mxu0 %v2105
        %v2268 = vpop.f32.mrf.mxu0
        %v2269 = vadd.f32 0.0, %v2268
        %v2270 = vpop.f32.mrf.mxu0
        %2271 = vmatprep.mubr.f32.mxu0 0.0
        %2272 = vmatmul.mubr.f32.gmra.mxu0 %v2108
        %v2273 = vpop.f32.mrf.mxu0
        %v2274 = vadd.f32 0.0, %v2273
        %v2275 = vpop.f32.mrf.mxu0
        %2276 = vmatprep.mubr.f32.mxu0 0.0
        %2277 = vmatmul.mubr.f32.gmra.mxu0 %v2111
        %v2278 = vpop.f32.mrf.mxu0
        %v2279 = vadd.f32 0.0, %v2278
        %v2280 = vpop.f32.mrf.mxu0
        %2281 = vmatprep.mubr.f32.mxu0 0.0
        %2282 = vmatmul.mubr.f32.gmra.mxu0 %v2114
        %v2283 = vpop.f32.mrf.mxu0
        %v2284 = vadd.f32 0.0, %v2283
        %v2285 = vpop.f32.mrf.mxu0
        %2286 = vmatprep.mubr.f32.mxu0 0.0
        %2287 = vmatmul.mubr.f32.gmra.mxu0 %v2117
        %v2288 = vpop.f32.mrf.mxu0
        %v2289 = vadd.f32 0.0, %v2288
        %v2290 = vpop.f32.mrf.mxu0
        %2291 = vmatprep.mubr.f32.mxu0 0.0
        %2292 = vmatmul.mubr.f32.gmra.mxu0 %v2120
        %v2293 = vpop.f32.mrf.mxu0
        %v2294 = vadd.f32 0.0, %v2293
        %v2295 = vpop.f32.mrf.mxu0
        %2296 = vmatprep.mubr.f32.mxu0 0.0
        %2297 = vmatmul.mubr.f32.gmra.mxu0 %v2123
        %v2298 = vpop.f32.mrf.mxu0
        %v2299 = vadd.f32 0.0, %v2298
        %v2300 = vpop.f32.mrf.mxu0
        %2301 = vmatprep.mubr.f32.mxu0 0.0
        %2302 = vmatmul.mubr.f32.gmra.mxu0 %v2126
        %v2303 = vpop.f32.mrf.mxu0
        %v2304 = vadd.f32 0.0, %v2303
        %v2305 = vpop.f32.mrf.mxu0
        %2306 = vmatprep.mubr.f32.mxu0 0.0
        %2307 = vmatmul.mubr.f32.gmra.mxu0 %v2129
        %v2308 = vpop.f32.mrf.mxu0
        %v2309 = vadd.f32 0.0, %v2308
        %v2310 = vpop.f32.mrf.mxu0
        %2311 = vmatprep.mubr.f32.mxu0 0.0
        %2312 = vmatmul.mubr.f32.gmra.mxu0 %v2132
        %v2313 = vpop.f32.mrf.mxu0
        %v2314 = vadd.f32 0.0, %v2313
        %v2315 = vpop.f32.mrf.mxu0
        %2316 = vmatprep.mubr.f32.mxu0 0.0
        %2317 = vmatmul.mubr.f32.gmra.mxu0 %v2135
        %v2318 = vpop.f32.mrf.mxu0
        %v2319 = vadd.f32 0.0, %v2318
        %v2320 = vpop.f32.mrf.mxu0
        %2321 = vmatprep.mubr.f32.mxu0 0.0
        %2322 = vmatmul.mubr.f32.gmra.mxu0 %v2138
        %v2323 = vpop.f32.mrf.mxu0
        %v2324 = vadd.f32 0.0, %v2323
        %v2325 = vpop.f32.mrf.mxu0
        %2326 = vmatprep.mubr.f32.mxu0 0.0
        %2327 = vmatmul.mubr.f32.gmra.mxu0 %v2141
        %v2328 = vpop.f32.mrf.mxu0
        %v2329 = vadd.f32 0.0, %v2328
        %v2330 = vpop.f32.mrf.mxu0
        %2331 = vmatprep.mubr.f32.mxu0 0.0
        %2332 = vmatmul.mubr.f32.gmra.mxu0 %v2144
        %v2333 = vpop.f32.mrf.mxu0
        %v2334 = vadd.f32 0.0, %v2333
        %v2335 = vpop.f32.mrf.mxu0
        %2336 = vmatprep.mubr.f32.mxu0 0.0
        %2337 = vmatmul.mubr.f32.gmra.mxu0 %v2147
        %v2338 = vpop.f32.mrf.mxu0
        %v2339 = vadd.f32 0.0, %v2338
        %v2340 = vpop.f32.mrf.mxu0
        %2341 = vmatprep.mubr.f32.mxu0 0.0
        %2342 = vmatmul.mubr.f32.gmra.mxu0 %v2150
        %v2343 = vpop.f32.mrf.mxu0
        %v2344 = vadd.f32 0.0, %v2343
        %v2345 = vpop.f32.mrf.mxu0
        %2346 = vmatprep.mubr.f32.mxu0 0.0
        %2347 = vmatmul.mubr.f32.gmra.mxu0 %v2153
        %v2348 = vpop.f32.mrf.mxu0
        %v2349 = vadd.f32 0.0, %v2348
        %v2350 = vpop.f32.mrf.mxu0
        %2351 = vmatprep.mubr.f32.mxu0 0.0
        %2352 = vmatmul.mubr.f32.gmra.mxu0 %v2156
        %v2353 = vpop.f32.mrf.mxu0
        %v2354 = vadd.f32 0.0, %v2353
        %v2355 = vpop.f32.mrf.mxu0
        %2356 = vmatprep.mubr.f32.mxu0 0.0
        %2357 = vmatmul.mubr.f32.gmra.mxu0 %v2159
        %v2358 = vpop.f32.mrf.mxu0
        %v2359 = vadd.f32 0.0, %v2358
        %v2360 = vpop.f32.mrf.mxu0
        %2361 = vmatprep.mubr.f32.mxu0 0.0
        %2362 = vmatmul.mubr.f32.gmra.mxu0 %v2162
        %v2363 = vpop.f32.mrf.mxu0
        %v2364 = vadd.f32 0.0, %v2363
        %v2365 = vpop.f32.mrf.mxu0
        %2366 = vmatprep.mubr.f32.mxu0 0.0
        %2367 = vmatmul.mubr.f32.gmra.mxu0 %v2165
        %v2368 = vpop.f32.mrf.mxu0
        %v2369 = vadd.f32 0.0, %v2368
        %v2370 = vpop.f32.mrf.mxu0
        %2371 = vmatprep.mubr.f32.mxu0 0.0
        %2372 = vmatmul.mubr.f32.gmra.mxu0 %v2168
        %v2373 = vpop.f32.mrf.mxu0
        %v2374 = vadd.f32 0.0, %v2373
        %v2375 = vpop.f32.mrf.mxu0
        %2376 = vmatprep.mubr.f32.mxu0 0.0
        %2377 = vmatmul.mubr.f32.gmra.mxu0 %v2171
        %v2378 = vpop.f32.mrf.mxu0
        %v2379 = vadd.f32 0.0, %v2378
        %v2380 = vpop.f32.mrf.mxu0
        %2381 = vmatprep.mubr.f32.mxu0 0.0
        %2382 = vmatmul.mubr.f32.gmra.mxu0 %v2174
        %v2383 = vpop.f32.mrf.mxu0
        %v2384 = vadd.f32 0.0, %v2383
        %v2385 = vpop.f32.mrf.mxu0
        %2386 = vmatprep.mubr.f32.mxu0 0.0
        %2387 = vmatmul.mubr.f32.gmra.mxu0 %v2177
        %v2388 = vpop.f32.mrf.mxu0
        %v2389 = vadd.f32 0.0, %v2388
        %v2390 = vpop.f32.mrf.mxu0
        %2391 = vmatprep.mubr.f32.mxu0 0.0
        %2392 = vmatmul.mubr.f32.gmra.mxu0 %v2180
        %v2393 = vpop.f32.mrf.mxu0
        %v2394 = vadd.f32 0.0, %v2393
        %v2395 = vpop.f32.mrf.mxu0
        %2396 = vmatprep.mubr.f32.mxu0 0.0
        %2397 = vmatmul.mubr.f32.gmra.mxu0 %v2183
        %v2398 = vpop.f32.mrf.mxu0
        %v2399 = vadd.f32 0.0, %v2398
        %v2400 = vpop.f32.mrf.mxu0
        %2401 = vmatprep.mubr.f32.mxu0 0.0
        %2402 = vmatmul.mubr.f32.gmra.mxu0 %v2186
        %v2403 = vpop.f32.mrf.mxu0
        %v2404 = vadd.f32 0.0, %v2403
        %v2405 = vpop.f32.mrf.mxu0
        %2406 = vmatprep.mubr.f32.mxu0 0.0
        %2407 = vmatmul.mubr.f32.gmra.mxu0 %v2189
        %v2408 = vpop.f32.mrf.mxu0
        %v2409 = vadd.f32 0.0, %v2408
        %v2410 = vpop.f32.mrf.mxu0
        %2411 = vmatprep.mubr.f32.mxu0 0.0
        %2412 = vmatmul.mubr.f32.gmra.mxu0 %v2192
        %v2413 = vpop.f32.mrf.mxu0
        %v2414 = vadd.f32 0.0, %v2413
        %v2415 = vpop.f32.mrf.mxu0
        %2416 = vmatprep.mubr.f32.mxu0 0.0
        %2417 = vmatmul.mubr.f32.gmra.mxu0 %v2195
        %v2418 = vpop.f32.mrf.mxu0
        %v2419 = vadd.f32 0.0, %v2418
        %v2420 = vpop.f32.mrf.mxu0
        %2421 = vdwg.mxu0
        %v2422 = vadd.f32 %v2029, %v2264
        %v2423 = vadd.f32 %v2030, %v2269
        %v2424 = vadd.f32 %v2031, %v2274
        %v2425 = vadd.f32 %v2032, %v2279
        %v2426 = vadd.f32 %v2033, %v2284
        %v2427 = vadd.f32 %v2034, %v2289
        %v2428 = vadd.f32 %v2035, %v2294
        %v2429 = vadd.f32 %v2036, %v2299
        %v2430 = vadd.f32 %v2037, %v2304
        %v2431 = vadd.f32 %v2038, %v2309
        %v2432 = vadd.f32 %v2039, %v2314
        %v2433 = vadd.f32 %v2040, %v2319
        %v2434 = vadd.f32 %v2041, %v2324
        %v2435 = vadd.f32 %v2042, %v2329
        %v2436 = vadd.f32 %v2043, %v2334
        %v2437 = vadd.f32 %v2044, %v2339
        %v2438 = vadd.f32 %v2045, %v2344
        %v2439 = vadd.f32 %v2046, %v2349
        %v2440 = vadd.f32 %v2047, %v2354
        %v2441 = vadd.f32 %v2048, %v2359
        %v2442 = vadd.f32 %v2049, %v2364
        %v2443 = vadd.f32 %v2050, %v2369
        %v2444 = vadd.f32 %v2051, %v2374
        %v2445 = vadd.f32 %v2052, %v2379
        %v2446 = vadd.f32 %v2053, %v2384
        %v2447 = vadd.f32 %v2054, %v2389
        %v2448 = vadd.f32 %v2055, %v2394
        %v2449 = vadd.f32 %v2056, %v2399
        %v2450 = vadd.f32 %v2057, %v2404
        %v2451 = vadd.f32 %v2058, %v2409
        %v2452 = vadd.f32 %v2059, %v2414
        %v2453 = vadd.f32 %v2060, %v2419
        %v2454 = vld [vmem:[%s520 + $0x2] sm:$0xff]
        %v2455 = vld [vmem:[%s520 + $0xa] sm:$0xff]
        %v2456 = vld [vmem:[%s520 + $0x1a] sm:$0xff]
        %v2457 = vld [vmem:[%s520 + $0x22] sm:$0xff]
        %v2458 = vld [vmem:[%s520 + $0x32] sm:$0xff]
        %v2459 = vld [vmem:[%s520 + $0x3a] sm:$0xff]
        %v2460 = vld [vmem:[%s520 + $0x4a] sm:$0xff]
        %v2461 = vld [vmem:[%s520 + $0x52] sm:$0xff]
        %v2462 = vld [vmem:[%s520 + $0x62] sm:$0xff]
        %v2463 = vld [vmem:[%s520 + $0x6a] sm:$0xff]
        %v2464 = vld [vmem:[%s520 + $0x7a] sm:$0xff]
        %v2465 = vld [vmem:[%s520 + $0x82] sm:$0xff]
        %v2466 = vld [vmem:[%s520 + $0x92] sm:$0xff]
        %v2467 = vld [vmem:[%s520 + $0x9a] sm:$0xff]
        %v2468 = vld [vmem:[%s520 + $0xaa] sm:$0xff]
        %v2469 = vld [vmem:[%s520 + $0xb2] sm:$0xff]
        %v2470 = vld [vmem:[%s520 + $0xc2] sm:$0xff]
        %v2471 = vld [vmem:[%s520 + $0xca] sm:$0xff]
        %v2472 = vld [vmem:[%s520 + $0xda] sm:$0xff]
        %v2473 = vld [vmem:[%s520 + $0xe2] sm:$0xff]
        %v2474 = vld [vmem:[%s520 + $0xf2] sm:$0xff]
        %v2475 = vld [vmem:[%s520 + $0xfa] sm:$0xff]
        %v2476 = vld [vmem:[%s520 + $0x10a] sm:$0xff]
        %v2477 = vld [vmem:[%s520 + $0x112] sm:$0xff]
        %v2478 = vld [vmem:[%s520 + $0x122] sm:$0xff]
        %v2479 = vld [vmem:[%s520 + $0x12a] sm:$0xff]
        %v2480 = vld [vmem:[%s520 + $0x13a] sm:$0xff]
        %v2481 = vld [vmem:[%s520 + $0x142] sm:$0xff]
        %v2482 = vld [vmem:[%s520 + $0x152] sm:$0xff]
        %v2483 = vld [vmem:[%s520 + $0x15a] sm:$0xff]
        %v2484 = vld [vmem:[%s520 + $0x16a] sm:$0xff]
        %v2485 = vld [vmem:[%s520 + $0x172] sm:$0xff]
        %v2486 = vld [vmem:[%s1 + $0x140] sm:$0xff]
        %v2487 = vld [vmem:[%s1 + $0x148] sm:$0xff]
        %v2488 = vld [vmem:[%s1 + $0x150] sm:$0xff]
        %v2489 = vld [vmem:[%s1 + $0x158] sm:$0xff]
        %v2490 = vld [vmem:[%s1 + $0x160] sm:$0xff]
        %v2491 = vld [vmem:[%s1 + $0x168] sm:$0xff]
        %v2492 = vld [vmem:[%s1 + $0x170] sm:$0xff]
        %v2493 = vld [vmem:[%s1 + $0x178] sm:$0xff]
        %v2495 = vsel %vm417, %v2454, 0
        %v2498 = vsel %vm417, %v2455, 0
        %v2501 = vsel %vm417, %v2456, 0
        %v2504 = vsel %vm417, %v2457, 0
        %v2507 = vsel %vm417, %v2458, 0
        %v2510 = vsel %vm417, %v2459, 0
        %v2513 = vsel %vm417, %v2460, 0
        %v2516 = vsel %vm417, %v2461, 0
        %v2519 = vsel %vm417, %v2462, 0
        %v2522 = vsel %vm417, %v2463, 0
        %v2525 = vsel %vm417, %v2464, 0
        %v2528 = vsel %vm417, %v2465, 0
        %v2531 = vsel %vm417, %v2466, 0
        %v2534 = vsel %vm417, %v2467, 0
        %v2537 = vsel %vm417, %v2468, 0
        %v2540 = vsel %vm417, %v2469, 0
        %v2543 = vsel %vm417, %v2470, 0
        %v2546 = vsel %vm417, %v2471, 0
        %v2549 = vsel %vm417, %v2472, 0
        %v2552 = vsel %vm417, %v2473, 0
        %v2555 = vsel %vm417, %v2474, 0
        %v2558 = vsel %vm417, %v2475, 0
        %v2561 = vsel %vm417, %v2476, 0
        %v2564 = vsel %vm417, %v2477, 0
        %v2567 = vsel %vm417, %v2478, 0
        %v2570 = vsel %vm417, %v2479, 0
        %v2573 = vsel %vm417, %v2480, 0
        %v2576 = vsel %vm417, %v2481, 0
        %v2579 = vsel %vm417, %v2482, 0
        %v2582 = vsel %vm417, %v2483, 0
        %v2585 = vsel %vm417, %v2484, 0
        %v2588 = vsel %vm417, %v2485, 0
        %2590 = vmatprep.subr.mxu0 0.0
        %2591 = vmatpush1.msra.mxu0 0.0
        %2592 = vmatprep.subr.mxu0 0.0
        %2593 = vmatpush1.msra.mxu0 0.0
        %2594 = vmatprep.subr.mxu0 0.0
        %2595 = vmatpush1.msra.mxu0 0.0
        %2596 = vmatprep.subr.mxu0 0.0
        %2597 = vmatpush1.msra.mxu0 0.0
        %2598 = vmatprep.subr.mxu0 0.0
        %2599 = vmatpush1.msra.mxu0 0.0
        %2600 = vmatprep.subr.mxu0 0.0
        %2601 = vmatpush1.msra.mxu0 0.0
        %2602 = vmatprep.subr.mxu0 0.0
        %2603 = vmatpush1.msra.mxu0 0.0
        %2604 = vmatprep.subr.mxu0 0.0
        %2605 = vmatpush1.msra.mxu0 0.0
        %2606 = vmatprep.subr.mxu0 0.0
        %2607 = vmatpush1.msra.mxu0 %v2493
        %2608 = vmatprep.subr.mxu0 0.0
        %2609 = vmatpush1.msra.mxu0 %v2492
        %2610 = vmatprep.subr.mxu0 0.0
        %2611 = vmatpush1.msra.mxu0 %v2491
        %2612 = vmatprep.subr.mxu0 0.0
        %2613 = vmatpush1.msra.mxu0 %v2490
        %2614 = vmatprep.subr.mxu0 0.0
        %2615 = vmatpush1.msra.mxu0 %v2489
        %2616 = vmatprep.subr.mxu0 0.0
        %2617 = vmatpush1.msra.mxu0 %v2488
        %2618 = vmatprep.subr.mxu0 0.0
        %2619 = vmatpush1.msra.mxu0 %v2487
        %2620 = vmatprep.subr.mxu0 0.0
        %2621 = vmatpush1.msra.mxu0 %v2486
        %2622 = vmatprep.subr.mxu0 0.0
        %2623 = vmatpush2.msra.mxu0 0.0
        %2624 = vmatprep.subr.mxu0 0.0
        %2625 = vmatpush2.msra.mxu0 0.0
        %2626 = vmatprep.subr.mxu0 0.0
        %2627 = vmatpush2.msra.mxu0 0.0
        %2628 = vmatprep.subr.mxu0 0.0
        %2629 = vmatpush2.msra.mxu0 0.0
        %2630 = vmatprep.subr.mxu0 0.0
        %2631 = vmatpush2.msra.mxu0 0.0
        %2632 = vmatprep.subr.mxu0 0.0
        %2633 = vmatpush2.msra.mxu0 0.0
        %2634 = vmatprep.subr.mxu0 0.0
        %2635 = vmatpush2.msra.mxu0 0.0
        %2636 = vmatprep.subr.mxu0 0.0
        %2637 = vmatpush2.msra.mxu0 0.0
        %2638 = vmatprep.subr.mxu0 0.0
        %2639 = vmatpush2.msra.mxu0 0.0
        %2640 = vmatprep.subr.mxu0 0.0
        %2641 = vmatpush2.msra.mxu0 0.0
        %2642 = vmatprep.subr.mxu0 0.0
        %2643 = vmatpush2.msra.mxu0 0.0
        %2644 = vmatprep.subr.mxu0 0.0
        %2645 = vmatpush2.msra.mxu0 0.0
        %2646 = vmatprep.subr.mxu0 0.0
        %2647 = vmatpush2.msra.mxu0 0.0
        %2648 = vmatprep.subr.mxu0 0.0
        %2649 = vmatpush2.msra.mxu0 0.0
        %2650 = vmatprep.subr.mxu0 0.0
        %2651 = vmatpush2.msra.mxu0 0.0
        %2652 = vmatprep.subr.mxu0 0.0
        %2653 = vmatpush2.msra.mxu0 0.0
        %2654 = vmatprep.mubr.f32.mxu0 0.0
        %2655 = vmatmul.mubr.f32.gmra.mxu0 %v2495
        %v2656 = vpop.f32.mrf.mxu0
        %v2657 = vadd.f32 0.0, %v2656
        %v2658 = vpop.f32.mrf.mxu0
        %2659 = vmatprep.mubr.f32.mxu0 0.0
        %2660 = vmatmul.mubr.f32.gmra.mxu0 %v2498
        %v2661 = vpop.f32.mrf.mxu0
        %v2662 = vadd.f32 0.0, %v2661
        %v2663 = vpop.f32.mrf.mxu0
        %2664 = vmatprep.mubr.f32.mxu0 0.0
        %2665 = vmatmul.mubr.f32.gmra.mxu0 %v2501
        %v2666 = vpop.f32.mrf.mxu0
        %v2667 = vadd.f32 0.0, %v2666
        %v2668 = vpop.f32.mrf.mxu0
        %2669 = vmatprep.mubr.f32.mxu0 0.0
        %2670 = vmatmul.mubr.f32.gmra.mxu0 %v2504
        %v2671 = vpop.f32.mrf.mxu0
        %v2672 = vadd.f32 0.0, %v2671
        %v2673 = vpop.f32.mrf.mxu0
        %2674 = vmatprep.mubr.f32.mxu0 0.0
        %2675 = vmatmul.mubr.f32.gmra.mxu0 %v2507
        %v2676 = vpop.f32.mrf.mxu0
        %v2677 = vadd.f32 0.0, %v2676
        %v2678 = vpop.f32.mrf.mxu0
        %2679 = vmatprep.mubr.f32.mxu0 0.0
        %2680 = vmatmul.mubr.f32.gmra.mxu0 %v2510
        %v2681 = vpop.f32.mrf.mxu0
        %v2682 = vadd.f32 0.0, %v2681
        %v2683 = vpop.f32.mrf.mxu0
        %2684 = vmatprep.mubr.f32.mxu0 0.0
        %2685 = vmatmul.mubr.f32.gmra.mxu0 %v2513
        %v2686 = vpop.f32.mrf.mxu0
        %v2687 = vadd.f32 0.0, %v2686
        %v2688 = vpop.f32.mrf.mxu0
        %2689 = vmatprep.mubr.f32.mxu0 0.0
        %2690 = vmatmul.mubr.f32.gmra.mxu0 %v2516
        %v2691 = vpop.f32.mrf.mxu0
        %v2692 = vadd.f32 0.0, %v2691
        %v2693 = vpop.f32.mrf.mxu0
        %2694 = vmatprep.mubr.f32.mxu0 0.0
        %2695 = vmatmul.mubr.f32.gmra.mxu0 %v2519
        %v2696 = vpop.f32.mrf.mxu0
        %v2697 = vadd.f32 0.0, %v2696
        %v2698 = vpop.f32.mrf.mxu0
        %2699 = vmatprep.mubr.f32.mxu0 0.0
        %2700 = vmatmul.mubr.f32.gmra.mxu0 %v2522
        %v2701 = vpop.f32.mrf.mxu0
        %v2702 = vadd.f32 0.0, %v2701
        %v2703 = vpop.f32.mrf.mxu0
        %2704 = vmatprep.mubr.f32.mxu0 0.0
        %2705 = vmatmul.mubr.f32.gmra.mxu0 %v2525
        %v2706 = vpop.f32.mrf.mxu0
        %v2707 = vadd.f32 0.0, %v2706
        %v2708 = vpop.f32.mrf.mxu0
        %2709 = vmatprep.mubr.f32.mxu0 0.0
        %2710 = vmatmul.mubr.f32.gmra.mxu0 %v2528
        %v2711 = vpop.f32.mrf.mxu0
        %v2712 = vadd.f32 0.0, %v2711
        %v2713 = vpop.f32.mrf.mxu0
        %2714 = vmatprep.mubr.f32.mxu0 0.0
        %2715 = vmatmul.mubr.f32.gmra.mxu0 %v2531
        %v2716 = vpop.f32.mrf.mxu0
        %v2717 = vadd.f32 0.0, %v2716
        %v2718 = vpop.f32.mrf.mxu0
        %2719 = vmatprep.mubr.f32.mxu0 0.0
        %2720 = vmatmul.mubr.f32.gmra.mxu0 %v2534
        %v2721 = vpop.f32.mrf.mxu0
        %v2722 = vadd.f32 0.0, %v2721
        %v2723 = vpop.f32.mrf.mxu0
        %2724 = vmatprep.mubr.f32.mxu0 0.0
        %2725 = vmatmul.mubr.f32.gmra.mxu0 %v2537
        %v2726 = vpop.f32.mrf.mxu0
        %v2727 = vadd.f32 0.0, %v2726
        %v2728 = vpop.f32.mrf.mxu0
        %2729 = vmatprep.mubr.f32.mxu0 0.0
        %2730 = vmatmul.mubr.f32.gmra.mxu0 %v2540
        %v2731 = vpop.f32.mrf.mxu0
        %v2732 = vadd.f32 0.0, %v2731
        %v2733 = vpop.f32.mrf.mxu0
        %2734 = vmatprep.mubr.f32.mxu0 0.0
        %2735 = vmatmul.mubr.f32.gmra.mxu0 %v2543
        %v2736 = vpop.f32.mrf.mxu0
        %v2737 = vadd.f32 0.0, %v2736
        %v2738 = vpop.f32.mrf.mxu0
        %2739 = vmatprep.mubr.f32.mxu0 0.0
        %2740 = vmatmul.mubr.f32.gmra.mxu0 %v2546
        %v2741 = vpop.f32.mrf.mxu0
        %v2742 = vadd.f32 0.0, %v2741
        %v2743 = vpop.f32.mrf.mxu0
        %2744 = vmatprep.mubr.f32.mxu0 0.0
        %2745 = vmatmul.mubr.f32.gmra.mxu0 %v2549
        %v2746 = vpop.f32.mrf.mxu0
        %v2747 = vadd.f32 0.0, %v2746
        %v2748 = vpop.f32.mrf.mxu0
        %2749 = vmatprep.mubr.f32.mxu0 0.0
        %2750 = vmatmul.mubr.f32.gmra.mxu0 %v2552
        %v2751 = vpop.f32.mrf.mxu0
        %v2752 = vadd.f32 0.0, %v2751
        %v2753 = vpop.f32.mrf.mxu0
        %2754 = vmatprep.mubr.f32.mxu0 0.0
        %2755 = vmatmul.mubr.f32.gmra.mxu0 %v2555
        %v2756 = vpop.f32.mrf.mxu0
        %v2757 = vadd.f32 0.0, %v2756
        %v2758 = vpop.f32.mrf.mxu0
        %2759 = vmatprep.mubr.f32.mxu0 0.0
        %2760 = vmatmul.mubr.f32.gmra.mxu0 %v2558
        %v2761 = vpop.f32.mrf.mxu0
        %v2762 = vadd.f32 0.0, %v2761
        %v2763 = vpop.f32.mrf.mxu0
        %2764 = vmatprep.mubr.f32.mxu0 0.0
        %2765 = vmatmul.mubr.f32.gmra.mxu0 %v2561
        %v2766 = vpop.f32.mrf.mxu0
        %v2767 = vadd.f32 0.0, %v2766
        %v2768 = vpop.f32.mrf.mxu0
        %2769 = vmatprep.mubr.f32.mxu0 0.0
        %2770 = vmatmul.mubr.f32.gmra.mxu0 %v2564
        %v2771 = vpop.f32.mrf.mxu0
        %v2772 = vadd.f32 0.0, %v2771
        %v2773 = vpop.f32.mrf.mxu0
        %2774 = vmatprep.mubr.f32.mxu0 0.0
        %2775 = vmatmul.mubr.f32.gmra.mxu0 %v2567
        %v2776 = vpop.f32.mrf.mxu0
        %v2777 = vadd.f32 0.0, %v2776
        %v2778 = vpop.f32.mrf.mxu0
        %2779 = vmatprep.mubr.f32.mxu0 0.0
        %2780 = vmatmul.mubr.f32.gmra.mxu0 %v2570
        %v2781 = vpop.f32.mrf.mxu0
        %v2782 = vadd.f32 0.0, %v2781
        %v2783 = vpop.f32.mrf.mxu0
        %2784 = vmatprep.mubr.f32.mxu0 0.0
        %2785 = vmatmul.mubr.f32.gmra.mxu0 %v2573
        %v2786 = vpop.f32.mrf.mxu0
        %v2787 = vadd.f32 0.0, %v2786
        %v2788 = vpop.f32.mrf.mxu0
        %2789 = vmatprep.mubr.f32.mxu0 0.0
        %2790 = vmatmul.mubr.f32.gmra.mxu0 %v2576
        %v2791 = vpop.f32.mrf.mxu0
        %v2792 = vadd.f32 0.0, %v2791
        %v2793 = vpop.f32.mrf.mxu0
        %2794 = vmatprep.mubr.f32.mxu0 0.0
        %2795 = vmatmul.mubr.f32.gmra.mxu0 %v2579
        %v2796 = vpop.f32.mrf.mxu0
        %v2797 = vadd.f32 0.0, %v2796
        %v2798 = vpop.f32.mrf.mxu0
        %2799 = vmatprep.mubr.f32.mxu0 0.0
        %2800 = vmatmul.mubr.f32.gmra.mxu0 %v2582
        %v2801 = vpop.f32.mrf.mxu0
        %v2802 = vadd.f32 0.0, %v2801
        %v2803 = vpop.f32.mrf.mxu0
        %2804 = vmatprep.mubr.f32.mxu0 0.0
        %2805 = vmatmul.mubr.f32.gmra.mxu0 %v2585
        %v2806 = vpop.f32.mrf.mxu0
        %v2807 = vadd.f32 0.0, %v2806
        %v2808 = vpop.f32.mrf.mxu0
        %2809 = vmatprep.mubr.f32.mxu0 0.0
        %2810 = vmatmul.mubr.f32.gmra.mxu0 %v2588
        %v2811 = vpop.f32.mrf.mxu0
        %v2812 = vadd.f32 0.0, %v2811
        %v2813 = vpop.f32.mrf.mxu0
        %2814 = vdwg.mxu0
        %v2815 = vadd.f32 %v2422, %v2657
        %v2816 = vadd.f32 %v2423, %v2662
        %v2817 = vadd.f32 %v2424, %v2667
        %v2818 = vadd.f32 %v2425, %v2672
        %v2819 = vadd.f32 %v2426, %v2677
        %v2820 = vadd.f32 %v2427, %v2682
        %v2821 = vadd.f32 %v2428, %v2687
        %v2822 = vadd.f32 %v2429, %v2692
        %v2823 = vadd.f32 %v2430, %v2697
        %v2824 = vadd.f32 %v2431, %v2702
        %v2825 = vadd.f32 %v2432, %v2707
        %v2826 = vadd.f32 %v2433, %v2712
        %v2827 = vadd.f32 %v2434, %v2717
        %v2828 = vadd.f32 %v2435, %v2722
        %v2829 = vadd.f32 %v2436, %v2727
        %v2830 = vadd.f32 %v2437, %v2732
        %v2831 = vadd.f32 %v2438, %v2737
        %v2832 = vadd.f32 %v2439, %v2742
        %v2833 = vadd.f32 %v2440, %v2747
        %v2834 = vadd.f32 %v2441, %v2752
        %v2835 = vadd.f32 %v2442, %v2757
        %v2836 = vadd.f32 %v2443, %v2762
        %v2837 = vadd.f32 %v2444, %v2767
        %v2838 = vadd.f32 %v2445, %v2772
        %v2839 = vadd.f32 %v2446, %v2777
        %v2840 = vadd.f32 %v2447, %v2782
        %v2841 = vadd.f32 %v2448, %v2787
        %v2842 = vadd.f32 %v2449, %v2792
        %v2843 = vadd.f32 %v2450, %v2797
        %v2844 = vadd.f32 %v2451, %v2802
        %v2845 = vadd.f32 %v2452, %v2807
        %v2846 = vadd.f32 %v2453, %v2812
        %s2847 = scalar_lea.vmem [#allocation2], 48
        %v2848 = vld [vmem:[%s2847] sm:$0xff]
        %v2849 = vld [vmem:[%s2847 + $0x8] sm:$0xff]
        %v2850 = vld [vmem:[%s2847 + $0x18] sm:$0xff]
        %v2851 = vld [vmem:[%s2847 + $0x20] sm:$0xff]
        %v2852 = vld [vmem:[%s2847 + $0x30] sm:$0xff]
        %v2853 = vld [vmem:[%s2847 + $0x38] sm:$0xff]
        %v2854 = vld [vmem:[%s2847 + $0x48] sm:$0xff]
        %v2855 = vld [vmem:[%s2847 + $0x50] sm:$0xff]
        %v2856 = vld [vmem:[%s2847 + $0x60] sm:$0xff]
        %v2857 = vld [vmem:[%s2847 + $0x68] sm:$0xff]
        %v2858 = vld [vmem:[%s2847 + $0x78] sm:$0xff]
        %v2859 = vld [vmem:[%s2847 + $0x80] sm:$0xff]
        %v2860 = vld [vmem:[%s2847 + $0x90] sm:$0xff]
        %v2861 = vld [vmem:[%s2847 + $0x98] sm:$0xff]
        %v2862 = vld [vmem:[%s2847 + $0xa8] sm:$0xff]
        %v2863 = vld [vmem:[%s2847 + $0xb0] sm:$0xff]
        %v2864 = vld [vmem:[%s2847 + $0xc0] sm:$0xff]
        %v2865 = vld [vmem:[%s2847 + $0xc8] sm:$0xff]
        %v2866 = vld [vmem:[%s2847 + $0xd8] sm:$0xff]
        %v2867 = vld [vmem:[%s2847 + $0xe0] sm:$0xff]
        %v2868 = vld [vmem:[%s2847 + $0xf0] sm:$0xff]
        %v2869 = vld [vmem:[%s2847 + $0xf8] sm:$0xff]
        %v2870 = vld [vmem:[%s2847 + $0x108] sm:$0xff]
        %v2871 = vld [vmem:[%s2847 + $0x110] sm:$0xff]
        %v2872 = vld [vmem:[%s2847 + $0x120] sm:$0xff]
        %v2873 = vld [vmem:[%s2847 + $0x128] sm:$0xff]
        %v2874 = vld [vmem:[%s2847 + $0x138] sm:$0xff]
        %v2875 = vld [vmem:[%s2847 + $0x140] sm:$0xff]
        %v2876 = vld [vmem:[%s2847 + $0x150] sm:$0xff]
        %v2877 = vld [vmem:[%s2847 + $0x158] sm:$0xff]
        %v2878 = vld [vmem:[%s2847 + $0x168] sm:$0xff]
        %v2879 = vld [vmem:[%s2847 + $0x170] sm:$0xff]
        %v2880 = vld [vmem:[%s1 + $0x180] sm:$0xff]
        %v2881 = vld [vmem:[%s1 + $0x188] sm:$0xff]
        %v2882 = vld [vmem:[%s1 + $0x190] sm:$0xff]
        %v2883 = vld [vmem:[%s1 + $0x198] sm:$0xff]
        %v2884 = vld [vmem:[%s1 + $0x1a0] sm:$0xff]
        %v2885 = vld [vmem:[%s1 + $0x1a8] sm:$0xff]
        %v2886 = vld [vmem:[%s1 + $0x1b0] sm:$0xff]
        %v2887 = vld [vmem:[%s1 + $0x1b8] sm:$0xff]
        %v2889 = vsel %vm417, %v2848, 0
        %v2892 = vsel %vm417, %v2849, 0
        %v2895 = vsel %vm417, %v2850, 0
        %v2898 = vsel %vm417, %v2851, 0
        %v2901 = vsel %vm417, %v2852, 0
        %v2904 = vsel %vm417, %v2853, 0
        %v2907 = vsel %vm417, %v2854, 0
        %v2910 = vsel %vm417, %v2855, 0
        %v2913 = vsel %vm417, %v2856, 0
        %v2916 = vsel %vm417, %v2857, 0
        %v2919 = vsel %vm417, %v2858, 0
        %v2922 = vsel %vm417, %v2859, 0
        %v2925 = vsel %vm417, %v2860, 0
        %v2928 = vsel %vm417, %v2861, 0
        %v2931 = vsel %vm417, %v2862, 0
        %v2934 = vsel %vm417, %v2863, 0
        %v2937 = vsel %vm417, %v2864, 0
        %v2940 = vsel %vm417, %v2865, 0
        %v2943 = vsel %vm417, %v2866, 0
        %v2946 = vsel %vm417, %v2867, 0
        %v2949 = vsel %vm417, %v2868, 0
        %v2952 = vsel %vm417, %v2869, 0
        %v2955 = vsel %vm417, %v2870, 0
        %v2958 = vsel %vm417, %v2871, 0
        %v2961 = vsel %vm417, %v2872, 0
        %v2964 = vsel %vm417, %v2873, 0
        %v2967 = vsel %vm417, %v2874, 0
        %v2970 = vsel %vm417, %v2875, 0
        %v2973 = vsel %vm417, %v2876, 0
        %v2976 = vsel %vm417, %v2877, 0
        %v2979 = vsel %vm417, %v2878, 0
        %v2982 = vsel %vm417, %v2879, 0
        %2984 = vmatprep.subr.mxu0 0.0
        %2985 = vmatpush1.msra.mxu0 0.0
        %2986 = vmatprep.subr.mxu0 0.0
        %2987 = vmatpush1.msra.mxu0 0.0
        %2988 = vmatprep.subr.mxu0 0.0
        %2989 = vmatpush1.msra.mxu0 0.0
        %2990 = vmatprep.subr.mxu0 0.0
        %2991 = vmatpush1.msra.mxu0 0.0
        %2992 = vmatprep.subr.mxu0 0.0
        %2993 = vmatpush1.msra.mxu0 0.0
        %2994 = vmatprep.subr.mxu0 0.0
        %2995 = vmatpush1.msra.mxu0 0.0
        %2996 = vmatprep.subr.mxu0 0.0
        %2997 = vmatpush1.msra.mxu0 0.0
        %2998 = vmatprep.subr.mxu0 0.0
        %2999 = vmatpush1.msra.mxu0 0.0
        %3000 = vmatprep.subr.mxu0 0.0
        %3001 = vmatpush1.msra.mxu0 %v2887
        %3002 = vmatprep.subr.mxu0 0.0
        %3003 = vmatpush1.msra.mxu0 %v2886
        %3004 = vmatprep.subr.mxu0 0.0
        %3005 = vmatpush1.msra.mxu0 %v2885
        %3006 = vmatprep.subr.mxu0 0.0
        %3007 = vmatpush1.msra.mxu0 %v2884
        %3008 = vmatprep.subr.mxu0 0.0
        %3009 = vmatpush1.msra.mxu0 %v2883
        %3010 = vmatprep.subr.mxu0 0.0
        %3011 = vmatpush1.msra.mxu0 %v2882
        %3012 = vmatprep.subr.mxu0 0.0
        %3013 = vmatpush1.msra.mxu0 %v2881
        %3014 = vmatprep.subr.mxu0 0.0
        %3015 = vmatpush1.msra.mxu0 %v2880
        %3016 = vmatprep.subr.mxu0 0.0
        %3017 = vmatpush2.msra.mxu0 0.0
        %3018 = vmatprep.subr.mxu0 0.0
        %3019 = vmatpush2.msra.mxu0 0.0
        %3020 = vmatprep.subr.mxu0 0.0
        %3021 = vmatpush2.msra.mxu0 0.0
        %3022 = vmatprep.subr.mxu0 0.0
        %3023 = vmatpush2.msra.mxu0 0.0
        %3024 = vmatprep.subr.mxu0 0.0
        %3025 = vmatpush2.msra.mxu0 0.0
        %3026 = vmatprep.subr.mxu0 0.0
        %3027 = vmatpush2.msra.mxu0 0.0
        %3028 = vmatprep.subr.mxu0 0.0
        %3029 = vmatpush2.msra.mxu0 0.0
        %3030 = vmatprep.subr.mxu0 0.0
        %3031 = vmatpush2.msra.mxu0 0.0
        %3032 = vmatprep.subr.mxu0 0.0
        %3033 = vmatpush2.msra.mxu0 0.0
        %3034 = vmatprep.subr.mxu0 0.0
        %3035 = vmatpush2.msra.mxu0 0.0
        %3036 = vmatprep.subr.mxu0 0.0
        %3037 = vmatpush2.msra.mxu0 0.0
        %3038 = vmatprep.subr.mxu0 0.0
        %3039 = vmatpush2.msra.mxu0 0.0
        %3040 = vmatprep.subr.mxu0 0.0
        %3041 = vmatpush2.msra.mxu0 0.0
        %3042 = vmatprep.subr.mxu0 0.0
        %3043 = vmatpush2.msra.mxu0 0.0
        %3044 = vmatprep.subr.mxu0 0.0
        %3045 = vmatpush2.msra.mxu0 0.0
        %3046 = vmatprep.subr.mxu0 0.0
        %3047 = vmatpush2.msra.mxu0 0.0
        %3048 = vmatprep.mubr.f32.mxu0 0.0
        %3049 = vmatmul.mubr.f32.gmra.mxu0 %v2889
        %v3050 = vpop.f32.mrf.mxu0
        %v3051 = vadd.f32 0.0, %v3050
        %v3052 = vpop.f32.mrf.mxu0
        %3053 = vmatprep.mubr.f32.mxu0 0.0
        %3054 = vmatmul.mubr.f32.gmra.mxu0 %v2892
        %v3055 = vpop.f32.mrf.mxu0
        %v3056 = vadd.f32 0.0, %v3055
        %v3057 = vpop.f32.mrf.mxu0
        %3058 = vmatprep.mubr.f32.mxu0 0.0
        %3059 = vmatmul.mubr.f32.gmra.mxu0 %v2895
        %v3060 = vpop.f32.mrf.mxu0
        %v3061 = vadd.f32 0.0, %v3060
        %v3062 = vpop.f32.mrf.mxu0
        %3063 = vmatprep.mubr.f32.mxu0 0.0
        %3064 = vmatmul.mubr.f32.gmra.mxu0 %v2898
        %v3065 = vpop.f32.mrf.mxu0
        %v3066 = vadd.f32 0.0, %v3065
        %v3067 = vpop.f32.mrf.mxu0
        %3068 = vmatprep.mubr.f32.mxu0 0.0
        %3069 = vmatmul.mubr.f32.gmra.mxu0 %v2901
        %v3070 = vpop.f32.mrf.mxu0
        %v3071 = vadd.f32 0.0, %v3070
        %v3072 = vpop.f32.mrf.mxu0
        %3073 = vmatprep.mubr.f32.mxu0 0.0
        %3074 = vmatmul.mubr.f32.gmra.mxu0 %v2904
        %v3075 = vpop.f32.mrf.mxu0
        %v3076 = vadd.f32 0.0, %v3075
        %v3077 = vpop.f32.mrf.mxu0
        %3078 = vmatprep.mubr.f32.mxu0 0.0
        %3079 = vmatmul.mubr.f32.gmra.mxu0 %v2907
        %v3080 = vpop.f32.mrf.mxu0
        %v3081 = vadd.f32 0.0, %v3080
        %v3082 = vpop.f32.mrf.mxu0
        %3083 = vmatprep.mubr.f32.mxu0 0.0
        %3084 = vmatmul.mubr.f32.gmra.mxu0 %v2910
        %v3085 = vpop.f32.mrf.mxu0
        %v3086 = vadd.f32 0.0, %v3085
        %v3087 = vpop.f32.mrf.mxu0
        %3088 = vmatprep.mubr.f32.mxu0 0.0
        %3089 = vmatmul.mubr.f32.gmra.mxu0 %v2913
        %v3090 = vpop.f32.mrf.mxu0
        %v3091 = vadd.f32 0.0, %v3090
        %v3092 = vpop.f32.mrf.mxu0
        %3093 = vmatprep.mubr.f32.mxu0 0.0
        %3094 = vmatmul.mubr.f32.gmra.mxu0 %v2916
        %v3095 = vpop.f32.mrf.mxu0
        %v3096 = vadd.f32 0.0, %v3095
        %v3097 = vpop.f32.mrf.mxu0
        %3098 = vmatprep.mubr.f32.mxu0 0.0
        %3099 = vmatmul.mubr.f32.gmra.mxu0 %v2919
        %v3100 = vpop.f32.mrf.mxu0
        %v3101 = vadd.f32 0.0, %v3100
        %v3102 = vpop.f32.mrf.mxu0
        %3103 = vmatprep.mubr.f32.mxu0 0.0
        %3104 = vmatmul.mubr.f32.gmra.mxu0 %v2922
        %v3105 = vpop.f32.mrf.mxu0
        %v3106 = vadd.f32 0.0, %v3105
        %v3107 = vpop.f32.mrf.mxu0
        %3108 = vmatprep.mubr.f32.mxu0 0.0
        %3109 = vmatmul.mubr.f32.gmra.mxu0 %v2925
        %v3110 = vpop.f32.mrf.mxu0
        %v3111 = vadd.f32 0.0, %v3110
        %v3112 = vpop.f32.mrf.mxu0
        %3113 = vmatprep.mubr.f32.mxu0 0.0
        %3114 = vmatmul.mubr.f32.gmra.mxu0 %v2928
        %v3115 = vpop.f32.mrf.mxu0
        %v3116 = vadd.f32 0.0, %v3115
        %v3117 = vpop.f32.mrf.mxu0
        %3118 = vmatprep.mubr.f32.mxu0 0.0
        %3119 = vmatmul.mubr.f32.gmra.mxu0 %v2931
        %v3120 = vpop.f32.mrf.mxu0
        %v3121 = vadd.f32 0.0, %v3120
        %v3122 = vpop.f32.mrf.mxu0
        %3123 = vmatprep.mubr.f32.mxu0 0.0
        %3124 = vmatmul.mubr.f32.gmra.mxu0 %v2934
        %v3125 = vpop.f32.mrf.mxu0
        %v3126 = vadd.f32 0.0, %v3125
        %v3127 = vpop.f32.mrf.mxu0
        %3128 = vmatprep.mubr.f32.mxu0 0.0
        %3129 = vmatmul.mubr.f32.gmra.mxu0 %v2937
        %v3130 = vpop.f32.mrf.mxu0
        %v3131 = vadd.f32 0.0, %v3130
        %v3132 = vpop.f32.mrf.mxu0
        %3133 = vmatprep.mubr.f32.mxu0 0.0
        %3134 = vmatmul.mubr.f32.gmra.mxu0 %v2940
        %v3135 = vpop.f32.mrf.mxu0
        %v3136 = vadd.f32 0.0, %v3135
        %v3137 = vpop.f32.mrf.mxu0
        %3138 = vmatprep.mubr.f32.mxu0 0.0
        %3139 = vmatmul.mubr.f32.gmra.mxu0 %v2943
        %v3140 = vpop.f32.mrf.mxu0
        %v3141 = vadd.f32 0.0, %v3140
        %v3142 = vpop.f32.mrf.mxu0
        %3143 = vmatprep.mubr.f32.mxu0 0.0
        %3144 = vmatmul.mubr.f32.gmra.mxu0 %v2946
        %v3145 = vpop.f32.mrf.mxu0
        %v3146 = vadd.f32 0.0, %v3145
        %v3147 = vpop.f32.mrf.mxu0
        %3148 = vmatprep.mubr.f32.mxu0 0.0
        %3149 = vmatmul.mubr.f32.gmra.mxu0 %v2949
        %v3150 = vpop.f32.mrf.mxu0
        %v3151 = vadd.f32 0.0, %v3150
        %v3152 = vpop.f32.mrf.mxu0
        %3153 = vmatprep.mubr.f32.mxu0 0.0
        %3154 = vmatmul.mubr.f32.gmra.mxu0 %v2952
        %v3155 = vpop.f32.mrf.mxu0
        %v3156 = vadd.f32 0.0, %v3155
        %v3157 = vpop.f32.mrf.mxu0
        %3158 = vmatprep.mubr.f32.mxu0 0.0
        %3159 = vmatmul.mubr.f32.gmra.mxu0 %v2955
        %v3160 = vpop.f32.mrf.mxu0
        %v3161 = vadd.f32 0.0, %v3160
        %v3162 = vpop.f32.mrf.mxu0
        %3163 = vmatprep.mubr.f32.mxu0 0.0
        %3164 = vmatmul.mubr.f32.gmra.mxu0 %v2958
        %v3165 = vpop.f32.mrf.mxu0
        %v3166 = vadd.f32 0.0, %v3165
        %v3167 = vpop.f32.mrf.mxu0
        %3168 = vmatprep.mubr.f32.mxu0 0.0
        %3169 = vmatmul.mubr.f32.gmra.mxu0 %v2961
        %v3170 = vpop.f32.mrf.mxu0
        %v3171 = vadd.f32 0.0, %v3170
        %v3172 = vpop.f32.mrf.mxu0
        %3173 = vmatprep.mubr.f32.mxu0 0.0
        %3174 = vmatmul.mubr.f32.gmra.mxu0 %v2964
        %v3175 = vpop.f32.mrf.mxu0
        %v3176 = vadd.f32 0.0, %v3175
        %v3177 = vpop.f32.mrf.mxu0
        %3178 = vmatprep.mubr.f32.mxu0 0.0
        %3179 = vmatmul.mubr.f32.gmra.mxu0 %v2967
        %v3180 = vpop.f32.mrf.mxu0
        %v3181 = vadd.f32 0.0, %v3180
        %v3182 = vpop.f32.mrf.mxu0
        %3183 = vmatprep.mubr.f32.mxu0 0.0
        %3184 = vmatmul.mubr.f32.gmra.mxu0 %v2970
        %v3185 = vpop.f32.mrf.mxu0
        %v3186 = vadd.f32 0.0, %v3185
        %v3187 = vpop.f32.mrf.mxu0
        %3188 = vmatprep.mubr.f32.mxu0 0.0
        %3189 = vmatmul.mubr.f32.gmra.mxu0 %v2973
        %v3190 = vpop.f32.mrf.mxu0
        %v3191 = vadd.f32 0.0, %v3190
        %v3192 = vpop.f32.mrf.mxu0
        %3193 = vmatprep.mubr.f32.mxu0 0.0
        %3194 = vmatmul.mubr.f32.gmra.mxu0 %v2976
        %v3195 = vpop.f32.mrf.mxu0
        %v3196 = vadd.f32 0.0, %v3195
        %v3197 = vpop.f32.mrf.mxu0
        %3198 = vmatprep.mubr.f32.mxu0 0.0
        %3199 = vmatmul.mubr.f32.gmra.mxu0 %v2979
        %v3200 = vpop.f32.mrf.mxu0
        %v3201 = vadd.f32 0.0, %v3200
        %v3202 = vpop.f32.mrf.mxu0
        %3203 = vmatprep.mubr.f32.mxu0 0.0
        %3204 = vmatmul.mubr.f32.gmra.mxu0 %v2982
        %v3205 = vpop.f32.mrf.mxu0
        %v3206 = vadd.f32 0.0, %v3205
        %v3207 = vpop.f32.mrf.mxu0
        %3208 = vdwg.mxu0
        %v3209 = vadd.f32 %v2815, %v3051
        %v3210 = vadd.f32 %v2816, %v3056
        %v3211 = vadd.f32 %v2817, %v3061
        %v3212 = vadd.f32 %v2818, %v3066
        %v3213 = vadd.f32 %v2819, %v3071
        %v3214 = vadd.f32 %v2820, %v3076
        %v3215 = vadd.f32 %v2821, %v3081
        %v3216 = vadd.f32 %v2822, %v3086
        %v3217 = vadd.f32 %v2823, %v3091
        %v3218 = vadd.f32 %v2824, %v3096
        %v3219 = vadd.f32 %v2825, %v3101
        %v3220 = vadd.f32 %v2826, %v3106
        %v3221 = vadd.f32 %v2827, %v3111
        %v3222 = vadd.f32 %v2828, %v3116
        %v3223 = vadd.f32 %v2829, %v3121
        %v3224 = vadd.f32 %v2830, %v3126
        %v3225 = vadd.f32 %v2831, %v3131
        %v3226 = vadd.f32 %v2832, %v3136
        %v3227 = vadd.f32 %v2833, %v3141
        %v3228 = vadd.f32 %v2834, %v3146
        %v3229 = vadd.f32 %v2835, %v3151
        %v3230 = vadd.f32 %v2836, %v3156
        %v3231 = vadd.f32 %v2837, %v3161
        %v3232 = vadd.f32 %v2838, %v3166
        %v3233 = vadd.f32 %v2839, %v3171
        %v3234 = vadd.f32 %v2840, %v3176
        %v3235 = vadd.f32 %v2841, %v3181
        %v3236 = vadd.f32 %v2842, %v3186
        %v3237 = vadd.f32 %v2843, %v3191
        %v3238 = vadd.f32 %v2844, %v3196
        %v3239 = vadd.f32 %v2845, %v3201
        %v3240 = vadd.f32 %v2846, %v3206
        %v3241 = vld [vmem:[%s2847 + $0x1] sm:$0xff]
        %v3242 = vld [vmem:[%s2847 + $0x9] sm:$0xff]
        %v3243 = vld [vmem:[%s2847 + $0x19] sm:$0xff]
        %v3244 = vld [vmem:[%s2847 + $0x21] sm:$0xff]
        %v3245 = vld [vmem:[%s2847 + $0x31] sm:$0xff]
        %v3246 = vld [vmem:[%s2847 + $0x39] sm:$0xff]
        %v3247 = vld [vmem:[%s2847 + $0x49] sm:$0xff]
        %v3248 = vld [vmem:[%s2847 + $0x51] sm:$0xff]
        %v3249 = vld [vmem:[%s2847 + $0x61] sm:$0xff]
        %v3250 = vld [vmem:[%s2847 + $0x69] sm:$0xff]
        %v3251 = vld [vmem:[%s2847 + $0x79] sm:$0xff]
        %v3252 = vld [vmem:[%s2847 + $0x81] sm:$0xff]
        %v3253 = vld [vmem:[%s2847 + $0x91] sm:$0xff]
        %v3254 = vld [vmem:[%s2847 + $0x99] sm:$0xff]
        %v3255 = vld [vmem:[%s2847 + $0xa9] sm:$0xff]
        %v3256 = vld [vmem:[%s2847 + $0xb1] sm:$0xff]
        %v3257 = vld [vmem:[%s2847 + $0xc1] sm:$0xff]
        %v3258 = vld [vmem:[%s2847 + $0xc9] sm:$0xff]
        %v3259 = vld [vmem:[%s2847 + $0xd9] sm:$0xff]
        %v3260 = vld [vmem:[%s2847 + $0xe1] sm:$0xff]
        %v3261 = vld [vmem:[%s2847 + $0xf1] sm:$0xff]
        %v3262 = vld [vmem:[%s2847 + $0xf9] sm:$0xff]
        %v3263 = vld [vmem:[%s2847 + $0x109] sm:$0xff]
        %v3264 = vld [vmem:[%s2847 + $0x111] sm:$0xff]
        %v3265 = vld [vmem:[%s2847 + $0x121] sm:$0xff]
        %v3266 = vld [vmem:[%s2847 + $0x129] sm:$0xff]
        %v3267 = vld [vmem:[%s2847 + $0x139] sm:$0xff]
        %v3268 = vld [vmem:[%s2847 + $0x141] sm:$0xff]
        %v3269 = vld [vmem:[%s2847 + $0x151] sm:$0xff]
        %v3270 = vld [vmem:[%s2847 + $0x159] sm:$0xff]
        %v3271 = vld [vmem:[%s2847 + $0x169] sm:$0xff]
        %v3272 = vld [vmem:[%s2847 + $0x171] sm:$0xff]
        %v3273 = vld [vmem:[%s1 + $0x1c0] sm:$0xff]
        %v3274 = vld [vmem:[%s1 + $0x1c8] sm:$0xff]
        %v3275 = vld [vmem:[%s1 + $0x1d0] sm:$0xff]
        %v3276 = vld [vmem:[%s1 + $0x1d8] sm:$0xff]
        %v3277 = vld [vmem:[%s1 + $0x1e0] sm:$0xff]
        %v3278 = vld [vmem:[%s1 + $0x1e8] sm:$0xff]
        %v3279 = vld [vmem:[%s1 + $0x1f0] sm:$0xff]
        %v3280 = vld [vmem:[%s1 + $0x1f8] sm:$0xff]
        %v3282 = vsel %vm417, %v3241, 0
        %v3285 = vsel %vm417, %v3242, 0
        %v3288 = vsel %vm417, %v3243, 0
        %v3291 = vsel %vm417, %v3244, 0
        %v3294 = vsel %vm417, %v3245, 0
        %v3297 = vsel %vm417, %v3246, 0
        %v3300 = vsel %vm417, %v3247, 0
        %v3303 = vsel %vm417, %v3248, 0
        %v3306 = vsel %vm417, %v3249, 0
        %v3309 = vsel %vm417, %v3250, 0
        %v3312 = vsel %vm417, %v3251, 0
        %v3315 = vsel %vm417, %v3252, 0
        %v3318 = vsel %vm417, %v3253, 0
        %v3321 = vsel %vm417, %v3254, 0
        %v3324 = vsel %vm417, %v3255, 0
        %v3327 = vsel %vm417, %v3256, 0
        %v3330 = vsel %vm417, %v3257, 0
        %v3333 = vsel %vm417, %v3258, 0
        %v3336 = vsel %vm417, %v3259, 0
        %v3339 = vsel %vm417, %v3260, 0
        %v3342 = vsel %vm417, %v3261, 0
        %v3345 = vsel %vm417, %v3262, 0
        %v3348 = vsel %vm417, %v3263, 0
        %v3351 = vsel %vm417, %v3264, 0
        %v3354 = vsel %vm417, %v3265, 0
        %v3357 = vsel %vm417, %v3266, 0
        %v3360 = vsel %vm417, %v3267, 0
        %v3363 = vsel %vm417, %v3268, 0
        %v3366 = vsel %vm417, %v3269, 0
        %v3369 = vsel %vm417, %v3270, 0
        %v3372 = vsel %vm417, %v3271, 0
        %v3375 = vsel %vm417, %v3272, 0
        %3377 = vmatprep.subr.mxu0 0.0
        %3378 = vmatpush1.msra.mxu0 0.0
        %3379 = vmatprep.subr.mxu0 0.0
        %3380 = vmatpush1.msra.mxu0 0.0
        %3381 = vmatprep.subr.mxu0 0.0
        %3382 = vmatpush1.msra.mxu0 0.0
        %3383 = vmatprep.subr.mxu0 0.0
        %3384 = vmatpush1.msra.mxu0 0.0
        %3385 = vmatprep.subr.mxu0 0.0
        %3386 = vmatpush1.msra.mxu0 0.0
        %3387 = vmatprep.subr.mxu0 0.0
        %3388 = vmatpush1.msra.mxu0 0.0
        %3389 = vmatprep.subr.mxu0 0.0
        %3390 = vmatpush1.msra.mxu0 0.0
        %3391 = vmatprep.subr.mxu0 0.0
        %3392 = vmatpush1.msra.mxu0 0.0
        %3393 = vmatprep.subr.mxu0 0.0
        %3394 = vmatpush1.msra.mxu0 %v3280
        %3395 = vmatprep.subr.mxu0 0.0
        %3396 = vmatpush1.msra.mxu0 %v3279
        %3397 = vmatprep.subr.mxu0 0.0
        %3398 = vmatpush1.msra.mxu0 %v3278
        %3399 = vmatprep.subr.mxu0 0.0
        %3400 = vmatpush1.msra.mxu0 %v3277
        %3401 = vmatprep.subr.mxu0 0.0
        %3402 = vmatpush1.msra.mxu0 %v3276
        %3403 = vmatprep.subr.mxu0 0.0
        %3404 = vmatpush1.msra.mxu0 %v3275
        %3405 = vmatprep.subr.mxu0 0.0
        %3406 = vmatpush1.msra.mxu0 %v3274
        %3407 = vmatprep.subr.mxu0 0.0
        %3408 = vmatpush1.msra.mxu0 %v3273
        %3409 = vmatprep.subr.mxu0 0.0
        %3410 = vmatpush2.msra.mxu0 0.0
        %3411 = vmatprep.subr.mxu0 0.0
        %3412 = vmatpush2.msra.mxu0 0.0
        %3413 = vmatprep.subr.mxu0 0.0
        %3414 = vmatpush2.msra.mxu0 0.0
        %3415 = vmatprep.subr.mxu0 0.0
        %3416 = vmatpush2.msra.mxu0 0.0
        %3417 = vmatprep.subr.mxu0 0.0
        %3418 = vmatpush2.msra.mxu0 0.0
        %3419 = vmatprep.subr.mxu0 0.0
        %3420 = vmatpush2.msra.mxu0 0.0
        %3421 = vmatprep.subr.mxu0 0.0
        %3422 = vmatpush2.msra.mxu0 0.0
        %3423 = vmatprep.subr.mxu0 0.0
        %3424 = vmatpush2.msra.mxu0 0.0
        %3425 = vmatprep.subr.mxu0 0.0
        %3426 = vmatpush2.msra.mxu0 0.0
        %3427 = vmatprep.subr.mxu0 0.0
        %3428 = vmatpush2.msra.mxu0 0.0
        %3429 = vmatprep.subr.mxu0 0.0
        %3430 = vmatpush2.msra.mxu0 0.0
        %3431 = vmatprep.subr.mxu0 0.0
        %3432 = vmatpush2.msra.mxu0 0.0
        %3433 = vmatprep.subr.mxu0 0.0
        %3434 = vmatpush2.msra.mxu0 0.0
        %3435 = vmatprep.subr.mxu0 0.0
        %3436 = vmatpush2.msra.mxu0 0.0
        %3437 = vmatprep.subr.mxu0 0.0
        %3438 = vmatpush2.msra.mxu0 0.0
        %3439 = vmatprep.subr.mxu0 0.0
        %3440 = vmatpush2.msra.mxu0 0.0
        %3441 = vmatprep.mubr.f32.mxu0 0.0
        %3442 = vmatmul.mubr.f32.gmra.mxu0 %v3282
        %v3443 = vpop.f32.mrf.mxu0
        %v3444 = vadd.f32 0.0, %v3443
        %v3445 = vpop.f32.mrf.mxu0
        %3446 = vmatprep.mubr.f32.mxu0 0.0
        %3447 = vmatmul.mubr.f32.gmra.mxu0 %v3285
        %v3448 = vpop.f32.mrf.mxu0
        %v3449 = vadd.f32 0.0, %v3448
        %v3450 = vpop.f32.mrf.mxu0
        %3451 = vmatprep.mubr.f32.mxu0 0.0
        %3452 = vmatmul.mubr.f32.gmra.mxu0 %v3288
        %v3453 = vpop.f32.mrf.mxu0
        %v3454 = vadd.f32 0.0, %v3453
        %v3455 = vpop.f32.mrf.mxu0
        %3456 = vmatprep.mubr.f32.mxu0 0.0
        %3457 = vmatmul.mubr.f32.gmra.mxu0 %v3291
        %v3458 = vpop.f32.mrf.mxu0
        %v3459 = vadd.f32 0.0, %v3458
        %v3460 = vpop.f32.mrf.mxu0
        %3461 = vmatprep.mubr.f32.mxu0 0.0
        %3462 = vmatmul.mubr.f32.gmra.mxu0 %v3294
        %v3463 = vpop.f32.mrf.mxu0
        %v3464 = vadd.f32 0.0, %v3463
        %v3465 = vpop.f32.mrf.mxu0
        %3466 = vmatprep.mubr.f32.mxu0 0.0
        %3467 = vmatmul.mubr.f32.gmra.mxu0 %v3297
        %v3468 = vpop.f32.mrf.mxu0
        %v3469 = vadd.f32 0.0, %v3468
        %v3470 = vpop.f32.mrf.mxu0
        %3471 = vmatprep.mubr.f32.mxu0 0.0
        %3472 = vmatmul.mubr.f32.gmra.mxu0 %v3300
        %v3473 = vpop.f32.mrf.mxu0
        %v3474 = vadd.f32 0.0, %v3473
        %v3475 = vpop.f32.mrf.mxu0
        %3476 = vmatprep.mubr.f32.mxu0 0.0
        %3477 = vmatmul.mubr.f32.gmra.mxu0 %v3303
        %v3478 = vpop.f32.mrf.mxu0
        %v3479 = vadd.f32 0.0, %v3478
        %v3480 = vpop.f32.mrf.mxu0
        %3481 = vmatprep.mubr.f32.mxu0 0.0
        %3482 = vmatmul.mubr.f32.gmra.mxu0 %v3306
        %v3483 = vpop.f32.mrf.mxu0
        %v3484 = vadd.f32 0.0, %v3483
        %v3485 = vpop.f32.mrf.mxu0
        %3486 = vmatprep.mubr.f32.mxu0 0.0
        %3487 = vmatmul.mubr.f32.gmra.mxu0 %v3309
        %v3488 = vpop.f32.mrf.mxu0
        %v3489 = vadd.f32 0.0, %v3488
        %v3490 = vpop.f32.mrf.mxu0
        %3491 = vmatprep.mubr.f32.mxu0 0.0
        %3492 = vmatmul.mubr.f32.gmra.mxu0 %v3312
        %v3493 = vpop.f32.mrf.mxu0
        %v3494 = vadd.f32 0.0, %v3493
        %v3495 = vpop.f32.mrf.mxu0
        %3496 = vmatprep.mubr.f32.mxu0 0.0
        %3497 = vmatmul.mubr.f32.gmra.mxu0 %v3315
        %v3498 = vpop.f32.mrf.mxu0
        %v3499 = vadd.f32 0.0, %v3498
        %v3500 = vpop.f32.mrf.mxu0
        %3501 = vmatprep.mubr.f32.mxu0 0.0
        %3502 = vmatmul.mubr.f32.gmra.mxu0 %v3318
        %v3503 = vpop.f32.mrf.mxu0
        %v3504 = vadd.f32 0.0, %v3503
        %v3505 = vpop.f32.mrf.mxu0
        %3506 = vmatprep.mubr.f32.mxu0 0.0
        %3507 = vmatmul.mubr.f32.gmra.mxu0 %v3321
        %v3508 = vpop.f32.mrf.mxu0
        %v3509 = vadd.f32 0.0, %v3508
        %v3510 = vpop.f32.mrf.mxu0
        %3511 = vmatprep.mubr.f32.mxu0 0.0
        %3512 = vmatmul.mubr.f32.gmra.mxu0 %v3324
        %v3513 = vpop.f32.mrf.mxu0
        %v3514 = vadd.f32 0.0, %v3513
        %v3515 = vpop.f32.mrf.mxu0
        %3516 = vmatprep.mubr.f32.mxu0 0.0
        %3517 = vmatmul.mubr.f32.gmra.mxu0 %v3327
        %v3518 = vpop.f32.mrf.mxu0
        %v3519 = vadd.f32 0.0, %v3518
        %v3520 = vpop.f32.mrf.mxu0
        %3521 = vmatprep.mubr.f32.mxu0 0.0
        %3522 = vmatmul.mubr.f32.gmra.mxu0 %v3330
        %v3523 = vpop.f32.mrf.mxu0
        %v3524 = vadd.f32 0.0, %v3523
        %v3525 = vpop.f32.mrf.mxu0
        %3526 = vmatprep.mubr.f32.mxu0 0.0
        %3527 = vmatmul.mubr.f32.gmra.mxu0 %v3333
        %v3528 = vpop.f32.mrf.mxu0
        %v3529 = vadd.f32 0.0, %v3528
        %v3530 = vpop.f32.mrf.mxu0
        %3531 = vmatprep.mubr.f32.mxu0 0.0
        %3532 = vmatmul.mubr.f32.gmra.mxu0 %v3336
        %v3533 = vpop.f32.mrf.mxu0
        %v3534 = vadd.f32 0.0, %v3533
        %v3535 = vpop.f32.mrf.mxu0
        %3536 = vmatprep.mubr.f32.mxu0 0.0
        %3537 = vmatmul.mubr.f32.gmra.mxu0 %v3339
        %v3538 = vpop.f32.mrf.mxu0
        %v3539 = vadd.f32 0.0, %v3538
        %v3540 = vpop.f32.mrf.mxu0
        %3541 = vmatprep.mubr.f32.mxu0 0.0
        %3542 = vmatmul.mubr.f32.gmra.mxu0 %v3342
        %v3543 = vpop.f32.mrf.mxu0
        %v3544 = vadd.f32 0.0, %v3543
        %v3545 = vpop.f32.mrf.mxu0
        %3546 = vmatprep.mubr.f32.mxu0 0.0
        %3547 = vmatmul.mubr.f32.gmra.mxu0 %v3345
        %v3548 = vpop.f32.mrf.mxu0
        %v3549 = vadd.f32 0.0, %v3548
        %v3550 = vpop.f32.mrf.mxu0
        %3551 = vmatprep.mubr.f32.mxu0 0.0
        %3552 = vmatmul.mubr.f32.gmra.mxu0 %v3348
        %v3553 = vpop.f32.mrf.mxu0
        %v3554 = vadd.f32 0.0, %v3553
        %v3555 = vpop.f32.mrf.mxu0
        %3556 = vmatprep.mubr.f32.mxu0 0.0
        %3557 = vmatmul.mubr.f32.gmra.mxu0 %v3351
        %v3558 = vpop.f32.mrf.mxu0
        %v3559 = vadd.f32 0.0, %v3558
        %v3560 = vpop.f32.mrf.mxu0
        %3561 = vmatprep.mubr.f32.mxu0 0.0
        %3562 = vmatmul.mubr.f32.gmra.mxu0 %v3354
        %v3563 = vpop.f32.mrf.mxu0
        %v3564 = vadd.f32 0.0, %v3563
        %v3565 = vpop.f32.mrf.mxu0
        %3566 = vmatprep.mubr.f32.mxu0 0.0
        %3567 = vmatmul.mubr.f32.gmra.mxu0 %v3357
        %v3568 = vpop.f32.mrf.mxu0
        %v3569 = vadd.f32 0.0, %v3568
        %v3570 = vpop.f32.mrf.mxu0
        %3571 = vmatprep.mubr.f32.mxu0 0.0
        %3572 = vmatmul.mubr.f32.gmra.mxu0 %v3360
        %v3573 = vpop.f32.mrf.mxu0
        %v3574 = vadd.f32 0.0, %v3573
        %v3575 = vpop.f32.mrf.mxu0
        %3576 = vmatprep.mubr.f32.mxu0 0.0
        %3577 = vmatmul.mubr.f32.gmra.mxu0 %v3363
        %v3578 = vpop.f32.mrf.mxu0
        %v3579 = vadd.f32 0.0, %v3578
        %v3580 = vpop.f32.mrf.mxu0
        %3581 = vmatprep.mubr.f32.mxu0 0.0
        %3582 = vmatmul.mubr.f32.gmra.mxu0 %v3366
        %v3583 = vpop.f32.mrf.mxu0
        %v3584 = vadd.f32 0.0, %v3583
        %v3585 = vpop.f32.mrf.mxu0
        %3586 = vmatprep.mubr.f32.mxu0 0.0
        %3587 = vmatmul.mubr.f32.gmra.mxu0 %v3369
        %v3588 = vpop.f32.mrf.mxu0
        %v3589 = vadd.f32 0.0, %v3588
        %v3590 = vpop.f32.mrf.mxu0
        %3591 = vmatprep.mubr.f32.mxu0 0.0
        %3592 = vmatmul.mubr.f32.gmra.mxu0 %v3372
        %v3593 = vpop.f32.mrf.mxu0
        %v3594 = vadd.f32 0.0, %v3593
        %v3595 = vpop.f32.mrf.mxu0
        %3596 = vmatprep.mubr.f32.mxu0 0.0
        %3597 = vmatmul.mubr.f32.gmra.mxu0 %v3375
        %v3598 = vpop.f32.mrf.mxu0
        %v3599 = vadd.f32 0.0, %v3598
        %v3600 = vpop.f32.mrf.mxu0
        %3601 = vdwg.mxu0
        %v3602 = vadd.f32 %v3209, %v3444
        %v3603 = vadd.f32 %v3210, %v3449
        %v3604 = vadd.f32 %v3211, %v3454
        %v3605 = vadd.f32 %v3212, %v3459
        %v3606 = vadd.f32 %v3213, %v3464
        %v3607 = vadd.f32 %v3214, %v3469
        %v3608 = vadd.f32 %v3215, %v3474
        %v3609 = vadd.f32 %v3216, %v3479
        %v3610 = vadd.f32 %v3217, %v3484
        %v3611 = vadd.f32 %v3218, %v3489
        %v3612 = vadd.f32 %v3219, %v3494
        %v3613 = vadd.f32 %v3220, %v3499
        %v3614 = vadd.f32 %v3221, %v3504
        %v3615 = vadd.f32 %v3222, %v3509
        %v3616 = vadd.f32 %v3223, %v3514
        %v3617 = vadd.f32 %v3224, %v3519
        %v3618 = vadd.f32 %v3225, %v3524
        %v3619 = vadd.f32 %v3226, %v3529
        %v3620 = vadd.f32 %v3227, %v3534
        %v3621 = vadd.f32 %v3228, %v3539
        %v3622 = vadd.f32 %v3229, %v3544
        %v3623 = vadd.f32 %v3230, %v3549
        %v3624 = vadd.f32 %v3231, %v3554
        %v3625 = vadd.f32 %v3232, %v3559
        %v3626 = vadd.f32 %v3233, %v3564
        %v3627 = vadd.f32 %v3234, %v3569
        %v3628 = vadd.f32 %v3235, %v3574
        %v3629 = vadd.f32 %v3236, %v3579
        %v3630 = vadd.f32 %v3237, %v3584
        %v3631 = vadd.f32 %v3238, %v3589
        %v3632 = vadd.f32 %v3239, %v3594
        %v3633 = vadd.f32 %v3240, %v3599
        %v3634 = vld [vmem:[%s2847 + $0x2] sm:$0xff]
        %v3635 = vld [vmem:[%s2847 + $0xa] sm:$0xff]
        %v3636 = vld [vmem:[%s2847 + $0x1a] sm:$0xff]
        %v3637 = vld [vmem:[%s2847 + $0x22] sm:$0xff]
        %v3638 = vld [vmem:[%s2847 + $0x32] sm:$0xff]
        %v3639 = vld [vmem:[%s2847 + $0x3a] sm:$0xff]
        %v3640 = vld [vmem:[%s2847 + $0x4a] sm:$0xff]
        %v3641 = vld [vmem:[%s2847 + $0x52] sm:$0xff]
        %v3642 = vld [vmem:[%s2847 + $0x62] sm:$0xff]
        %v3643 = vld [vmem:[%s2847 + $0x6a] sm:$0xff]
        %v3644 = vld [vmem:[%s2847 + $0x7a] sm:$0xff]
        %v3645 = vld [vmem:[%s2847 + $0x82] sm:$0xff]
        %v3646 = vld [vmem:[%s2847 + $0x92] sm:$0xff]
        %v3647 = vld [vmem:[%s2847 + $0x9a] sm:$0xff]
        %v3648 = vld [vmem:[%s2847 + $0xaa] sm:$0xff]
        %v3649 = vld [vmem:[%s2847 + $0xb2] sm:$0xff]
        %v3650 = vld [vmem:[%s2847 + $0xc2] sm:$0xff]
        %v3651 = vld [vmem:[%s2847 + $0xca] sm:$0xff]
        %v3652 = vld [vmem:[%s2847 + $0xda] sm:$0xff]
        %v3653 = vld [vmem:[%s2847 + $0xe2] sm:$0xff]
        %v3654 = vld [vmem:[%s2847 + $0xf2] sm:$0xff]
        %v3655 = vld [vmem:[%s2847 + $0xfa] sm:$0xff]
        %v3656 = vld [vmem:[%s2847 + $0x10a] sm:$0xff]
        %v3657 = vld [vmem:[%s2847 + $0x112] sm:$0xff]
        %v3658 = vld [vmem:[%s2847 + $0x122] sm:$0xff]
        %v3659 = vld [vmem:[%s2847 + $0x12a] sm:$0xff]
        %v3660 = vld [vmem:[%s2847 + $0x13a] sm:$0xff]
        %v3661 = vld [vmem:[%s2847 + $0x142] sm:$0xff]
        %v3662 = vld [vmem:[%s2847 + $0x152] sm:$0xff]
        %v3663 = vld [vmem:[%s2847 + $0x15a] sm:$0xff]
        %v3664 = vld [vmem:[%s2847 + $0x16a] sm:$0xff]
        %v3665 = vld [vmem:[%s2847 + $0x172] sm:$0xff]
        %v3666 = vld [vmem:[%s1 + $0x200] sm:$0xff]
        %v3667 = vld [vmem:[%s1 + $0x208] sm:$0xff]
        %v3668 = vld [vmem:[%s1 + $0x210] sm:$0xff]
        %v3669 = vld [vmem:[%s1 + $0x218] sm:$0xff]
        %v3670 = vld [vmem:[%s1 + $0x220] sm:$0xff]
        %v3671 = vld [vmem:[%s1 + $0x228] sm:$0xff]
        %v3672 = vld [vmem:[%s1 + $0x230] sm:$0xff]
        %v3673 = vld [vmem:[%s1 + $0x238] sm:$0xff]
        %v3675 = vsel %vm417, %v3634, 0
        %v3678 = vsel %vm417, %v3635, 0
        %v3681 = vsel %vm417, %v3636, 0
        %v3684 = vsel %vm417, %v3637, 0
        %v3687 = vsel %vm417, %v3638, 0
        %v3690 = vsel %vm417, %v3639, 0
        %v3693 = vsel %vm417, %v3640, 0
        %v3696 = vsel %vm417, %v3641, 0
        %v3699 = vsel %vm417, %v3642, 0
        %v3702 = vsel %vm417, %v3643, 0
        %v3705 = vsel %vm417, %v3644, 0
        %v3708 = vsel %vm417, %v3645, 0
        %v3711 = vsel %vm417, %v3646, 0
        %v3714 = vsel %vm417, %v3647, 0
        %v3717 = vsel %vm417, %v3648, 0
        %v3720 = vsel %vm417, %v3649, 0
        %v3723 = vsel %vm417, %v3650, 0
        %v3726 = vsel %vm417, %v3651, 0
        %v3729 = vsel %vm417, %v3652, 0
        %v3732 = vsel %vm417, %v3653, 0
        %v3735 = vsel %vm417, %v3654, 0
        %v3738 = vsel %vm417, %v3655, 0
        %v3741 = vsel %vm417, %v3656, 0
        %v3744 = vsel %vm417, %v3657, 0
        %v3747 = vsel %vm417, %v3658, 0
        %v3750 = vsel %vm417, %v3659, 0
        %v3753 = vsel %vm417, %v3660, 0
        %v3756 = vsel %vm417, %v3661, 0
        %v3759 = vsel %vm417, %v3662, 0
        %v3762 = vsel %vm417, %v3663, 0
        %v3765 = vsel %vm417, %v3664, 0
        %v3768 = vsel %vm417, %v3665, 0
        %3770 = vmatprep.subr.mxu0 0.0
        %3771 = vmatpush1.msra.mxu0 0.0
        %3772 = vmatprep.subr.mxu0 0.0
        %3773 = vmatpush1.msra.mxu0 0.0
        %3774 = vmatprep.subr.mxu0 0.0
        %3775 = vmatpush1.msra.mxu0 0.0
        %3776 = vmatprep.subr.mxu0 0.0
        %3777 = vmatpush1.msra.mxu0 0.0
        %3778 = vmatprep.subr.mxu0 0.0
        %3779 = vmatpush1.msra.mxu0 0.0
        %3780 = vmatprep.subr.mxu0 0.0
        %3781 = vmatpush1.msra.mxu0 0.0
        %3782 = vmatprep.subr.mxu0 0.0
        %3783 = vmatpush1.msra.mxu0 0.0
        %3784 = vmatprep.subr.mxu0 0.0
        %3785 = vmatpush1.msra.mxu0 0.0
        %3786 = vmatprep.subr.mxu0 0.0
        %3787 = vmatpush1.msra.mxu0 %v3673
        %3788 = vmatprep.subr.mxu0 0.0
        %3789 = vmatpush1.msra.mxu0 %v3672
        %3790 = vmatprep.subr.mxu0 0.0
        %3791 = vmatpush1.msra.mxu0 %v3671
        %3792 = vmatprep.subr.mxu0 0.0
        %3793 = vmatpush1.msra.mxu0 %v3670
        %3794 = vmatprep.subr.mxu0 0.0
        %3795 = vmatpush1.msra.mxu0 %v3669
        %3796 = vmatprep.subr.mxu0 0.0
        %3797 = vmatpush1.msra.mxu0 %v3668
        %3798 = vmatprep.subr.mxu0 0.0
        %3799 = vmatpush1.msra.mxu0 %v3667
        %3800 = vmatprep.subr.mxu0 0.0
        %3801 = vmatpush1.msra.mxu0 %v3666
        %3802 = vmatprep.subr.mxu0 0.0
        %3803 = vmatpush2.msra.mxu0 0.0
        %3804 = vmatprep.subr.mxu0 0.0
        %3805 = vmatpush2.msra.mxu0 0.0
        %3806 = vmatprep.subr.mxu0 0.0
        %3807 = vmatpush2.msra.mxu0 0.0
        %3808 = vmatprep.subr.mxu0 0.0
        %3809 = vmatpush2.msra.mxu0 0.0
        %3810 = vmatprep.subr.mxu0 0.0
        %3811 = vmatpush2.msra.mxu0 0.0
        %3812 = vmatprep.subr.mxu0 0.0
        %3813 = vmatpush2.msra.mxu0 0.0
        %3814 = vmatprep.subr.mxu0 0.0
        %3815 = vmatpush2.msra.mxu0 0.0
        %3816 = vmatprep.subr.mxu0 0.0
        %3817 = vmatpush2.msra.mxu0 0.0
        %3818 = vmatprep.subr.mxu0 0.0
        %3819 = vmatpush2.msra.mxu0 0.0
        %3820 = vmatprep.subr.mxu0 0.0
        %3821 = vmatpush2.msra.mxu0 0.0
        %3822 = vmatprep.subr.mxu0 0.0
        %3823 = vmatpush2.msra.mxu0 0.0
        %3824 = vmatprep.subr.mxu0 0.0
        %3825 = vmatpush2.msra.mxu0 0.0
        %3826 = vmatprep.subr.mxu0 0.0
        %3827 = vmatpush2.msra.mxu0 0.0
        %3828 = vmatprep.subr.mxu0 0.0
        %3829 = vmatpush2.msra.mxu0 0.0
        %3830 = vmatprep.subr.mxu0 0.0
        %3831 = vmatpush2.msra.mxu0 0.0
        %3832 = vmatprep.subr.mxu0 0.0
        %3833 = vmatpush2.msra.mxu0 0.0
        %3834 = vmatprep.mubr.f32.mxu0 0.0
        %3835 = vmatmul.mubr.f32.gmra.mxu0 %v3675
        %v3836 = vpop.f32.mrf.mxu0
        %v3837 = vadd.f32 0.0, %v3836
        %v3838 = vpop.f32.mrf.mxu0
        %3839 = vmatprep.mubr.f32.mxu0 0.0
        %3840 = vmatmul.mubr.f32.gmra.mxu0 %v3678
        %v3841 = vpop.f32.mrf.mxu0
        %v3842 = vadd.f32 0.0, %v3841
        %v3843 = vpop.f32.mrf.mxu0
        %3844 = vmatprep.mubr.f32.mxu0 0.0
        %3845 = vmatmul.mubr.f32.gmra.mxu0 %v3681
        %v3846 = vpop.f32.mrf.mxu0
        %v3847 = vadd.f32 0.0, %v3846
        %v3848 = vpop.f32.mrf.mxu0
        %3849 = vmatprep.mubr.f32.mxu0 0.0
        %3850 = vmatmul.mubr.f32.gmra.mxu0 %v3684
        %v3851 = vpop.f32.mrf.mxu0
        %v3852 = vadd.f32 0.0, %v3851
        %v3853 = vpop.f32.mrf.mxu0
        %3854 = vmatprep.mubr.f32.mxu0 0.0
        %3855 = vmatmul.mubr.f32.gmra.mxu0 %v3687
        %v3856 = vpop.f32.mrf.mxu0
        %v3857 = vadd.f32 0.0, %v3856
        %v3858 = vpop.f32.mrf.mxu0
        %3859 = vmatprep.mubr.f32.mxu0 0.0
        %3860 = vmatmul.mubr.f32.gmra.mxu0 %v3690
        %v3861 = vpop.f32.mrf.mxu0
        %v3862 = vadd.f32 0.0, %v3861
        %v3863 = vpop.f32.mrf.mxu0
        %3864 = vmatprep.mubr.f32.mxu0 0.0
        %3865 = vmatmul.mubr.f32.gmra.mxu0 %v3693
        %v3866 = vpop.f32.mrf.mxu0
        %v3867 = vadd.f32 0.0, %v3866
        %v3868 = vpop.f32.mrf.mxu0
        %3869 = vmatprep.mubr.f32.mxu0 0.0
        %3870 = vmatmul.mubr.f32.gmra.mxu0 %v3696
        %v3871 = vpop.f32.mrf.mxu0
        %v3872 = vadd.f32 0.0, %v3871
        %v3873 = vpop.f32.mrf.mxu0
        %3874 = vmatprep.mubr.f32.mxu0 0.0
        %3875 = vmatmul.mubr.f32.gmra.mxu0 %v3699
        %v3876 = vpop.f32.mrf.mxu0
        %v3877 = vadd.f32 0.0, %v3876
        %v3878 = vpop.f32.mrf.mxu0
        %3879 = vmatprep.mubr.f32.mxu0 0.0
        %3880 = vmatmul.mubr.f32.gmra.mxu0 %v3702
        %v3881 = vpop.f32.mrf.mxu0
        %v3882 = vadd.f32 0.0, %v3881
        %v3883 = vpop.f32.mrf.mxu0
        %3884 = vmatprep.mubr.f32.mxu0 0.0
        %3885 = vmatmul.mubr.f32.gmra.mxu0 %v3705
        %v3886 = vpop.f32.mrf.mxu0
        %v3887 = vadd.f32 0.0, %v3886
        %v3888 = vpop.f32.mrf.mxu0
        %3889 = vmatprep.mubr.f32.mxu0 0.0
        %3890 = vmatmul.mubr.f32.gmra.mxu0 %v3708
        %v3891 = vpop.f32.mrf.mxu0
        %v3892 = vadd.f32 0.0, %v3891
        %v3893 = vpop.f32.mrf.mxu0
        %3894 = vmatprep.mubr.f32.mxu0 0.0
        %3895 = vmatmul.mubr.f32.gmra.mxu0 %v3711
        %v3896 = vpop.f32.mrf.mxu0
        %v3897 = vadd.f32 0.0, %v3896
        %v3898 = vpop.f32.mrf.mxu0
        %3899 = vmatprep.mubr.f32.mxu0 0.0
        %3900 = vmatmul.mubr.f32.gmra.mxu0 %v3714
        %v3901 = vpop.f32.mrf.mxu0
        %v3902 = vadd.f32 0.0, %v3901
        %v3903 = vpop.f32.mrf.mxu0
        %3904 = vmatprep.mubr.f32.mxu0 0.0
        %3905 = vmatmul.mubr.f32.gmra.mxu0 %v3717
        %v3906 = vpop.f32.mrf.mxu0
        %v3907 = vadd.f32 0.0, %v3906
        %v3908 = vpop.f32.mrf.mxu0
        %3909 = vmatprep.mubr.f32.mxu0 0.0
        %3910 = vmatmul.mubr.f32.gmra.mxu0 %v3720
        %v3911 = vpop.f32.mrf.mxu0
        %v3912 = vadd.f32 0.0, %v3911
        %v3913 = vpop.f32.mrf.mxu0
        %3914 = vmatprep.mubr.f32.mxu0 0.0
        %3915 = vmatmul.mubr.f32.gmra.mxu0 %v3723
        %v3916 = vpop.f32.mrf.mxu0
        %v3917 = vadd.f32 0.0, %v3916
        %v3918 = vpop.f32.mrf.mxu0
        %3919 = vmatprep.mubr.f32.mxu0 0.0
        %3920 = vmatmul.mubr.f32.gmra.mxu0 %v3726
        %v3921 = vpop.f32.mrf.mxu0
        %v3922 = vadd.f32 0.0, %v3921
        %v3923 = vpop.f32.mrf.mxu0
        %3924 = vmatprep.mubr.f32.mxu0 0.0
        %3925 = vmatmul.mubr.f32.gmra.mxu0 %v3729
        %v3926 = vpop.f32.mrf.mxu0
        %v3927 = vadd.f32 0.0, %v3926
        %v3928 = vpop.f32.mrf.mxu0
        %3929 = vmatprep.mubr.f32.mxu0 0.0
        %3930 = vmatmul.mubr.f32.gmra.mxu0 %v3732
        %v3931 = vpop.f32.mrf.mxu0
        %v3932 = vadd.f32 0.0, %v3931
        %v3933 = vpop.f32.mrf.mxu0
        %3934 = vmatprep.mubr.f32.mxu0 0.0
        %3935 = vmatmul.mubr.f32.gmra.mxu0 %v3735
        %v3936 = vpop.f32.mrf.mxu0
        %v3937 = vadd.f32 0.0, %v3936
        %v3938 = vpop.f32.mrf.mxu0
        %3939 = vmatprep.mubr.f32.mxu0 0.0
        %3940 = vmatmul.mubr.f32.gmra.mxu0 %v3738
        %v3941 = vpop.f32.mrf.mxu0
        %v3942 = vadd.f32 0.0, %v3941
        %v3943 = vpop.f32.mrf.mxu0
        %3944 = vmatprep.mubr.f32.mxu0 0.0
        %3945 = vmatmul.mubr.f32.gmra.mxu0 %v3741
        %v3946 = vpop.f32.mrf.mxu0
        %v3947 = vadd.f32 0.0, %v3946
        %v3948 = vpop.f32.mrf.mxu0
        %3949 = vmatprep.mubr.f32.mxu0 0.0
        %3950 = vmatmul.mubr.f32.gmra.mxu0 %v3744
        %v3951 = vpop.f32.mrf.mxu0
        %v3952 = vadd.f32 0.0, %v3951
        %v3953 = vpop.f32.mrf.mxu0
        %3954 = vmatprep.mubr.f32.mxu0 0.0
        %3955 = vmatmul.mubr.f32.gmra.mxu0 %v3747
        %v3956 = vpop.f32.mrf.mxu0
        %v3957 = vadd.f32 0.0, %v3956
        %v3958 = vpop.f32.mrf.mxu0
        %3959 = vmatprep.mubr.f32.mxu0 0.0
        %3960 = vmatmul.mubr.f32.gmra.mxu0 %v3750
        %v3961 = vpop.f32.mrf.mxu0
        %v3962 = vadd.f32 0.0, %v3961
        %v3963 = vpop.f32.mrf.mxu0
        %3964 = vmatprep.mubr.f32.mxu0 0.0
        %3965 = vmatmul.mubr.f32.gmra.mxu0 %v3753
        %v3966 = vpop.f32.mrf.mxu0
        %v3967 = vadd.f32 0.0, %v3966
        %v3968 = vpop.f32.mrf.mxu0
        %3969 = vmatprep.mubr.f32.mxu0 0.0
        %3970 = vmatmul.mubr.f32.gmra.mxu0 %v3756
        %v3971 = vpop.f32.mrf.mxu0
        %v3972 = vadd.f32 0.0, %v3971
        %v3973 = vpop.f32.mrf.mxu0
        %3974 = vmatprep.mubr.f32.mxu0 0.0
        %3975 = vmatmul.mubr.f32.gmra.mxu0 %v3759
        %v3976 = vpop.f32.mrf.mxu0
        %v3977 = vadd.f32 0.0, %v3976
        %v3978 = vpop.f32.mrf.mxu0
        %3979 = vmatprep.mubr.f32.mxu0 0.0
        %3980 = vmatmul.mubr.f32.gmra.mxu0 %v3762
        %v3981 = vpop.f32.mrf.mxu0
        %v3982 = vadd.f32 0.0, %v3981
        %v3983 = vpop.f32.mrf.mxu0
        %3984 = vmatprep.mubr.f32.mxu0 0.0
        %3985 = vmatmul.mubr.f32.gmra.mxu0 %v3765
        %v3986 = vpop.f32.mrf.mxu0
        %v3987 = vadd.f32 0.0, %v3986
        %v3988 = vpop.f32.mrf.mxu0
        %3989 = vmatprep.mubr.f32.mxu0 0.0
        %3990 = vmatmul.mubr.f32.gmra.mxu0 %v3768
        %v3991 = vpop.f32.mrf.mxu0
        %v3992 = vadd.f32 0.0, %v3991
        %v3993 = vpop.f32.mrf.mxu0
        %3994 = vdwg.mxu0
        %v3995 = vadd.f32 %v3602, %v3837
        %v3996 = vadd.f32 %v3603, %v3842
        %v3997 = vadd.f32 %v3604, %v3847
        %v3998 = vadd.f32 %v3605, %v3852
        %v3999 = vadd.f32 %v3606, %v3857
        %v4000 = vadd.f32 %v3607, %v3862
        %v4001 = vadd.f32 %v3608, %v3867
        %v4002 = vadd.f32 %v3609, %v3872
        %v4003 = vadd.f32 %v3610, %v3877
        %v4004 = vadd.f32 %v3611, %v3882
        %v4005 = vadd.f32 %v3612, %v3887
        %v4006 = vadd.f32 %v3613, %v3892
        %v4007 = vadd.f32 %v3614, %v3897
        %v4008 = vadd.f32 %v3615, %v3902
        %v4009 = vadd.f32 %v3616, %v3907
        %v4010 = vadd.f32 %v3617, %v3912
        %v4011 = vadd.f32 %v3618, %v3917
        %v4012 = vadd.f32 %v3619, %v3922
        %v4013 = vadd.f32 %v3620, %v3927
        %v4014 = vadd.f32 %v3621, %v3932
        %v4015 = vadd.f32 %v3622, %v3937
        %v4016 = vadd.f32 %v3623, %v3942
        %v4017 = vadd.f32 %v3624, %v3947
        %v4018 = vadd.f32 %v3625, %v3952
        %v4019 = vadd.f32 %v3626, %v3957
        %v4020 = vadd.f32 %v3627, %v3962
        %v4021 = vadd.f32 %v3628, %v3967
        %v4022 = vadd.f32 %v3629, %v3972
        %v4023 = vadd.f32 %v3630, %v3977
        %v4024 = vadd.f32 %v3631, %v3982
        %v4025 = vadd.f32 %v3632, %v3987
        %v4026 = vadd.f32 %v3633, %v3992
        %v4027 = vld [vmem:[%s2] sm:$0x1]
        %v4029 = vlaneseq
        %v4030 = vshrl.u32 %v4029, 7
        %v4031 = vsub.s32 0, %v4030
        %v4032 = vrot.slane %v4027, %v4031
        %v4034 = vadd.f32 %v3995, %v4032
        %v4035 = vadd.f32 %v3996, %v4032
        %v4036 = vadd.f32 %v3997, %v4032
        %v4037 = vadd.f32 %v3998, %v4032
        %v4038 = vadd.f32 %v3999, %v4032
        %v4039 = vadd.f32 %v4000, %v4032
        %v4040 = vadd.f32 %v4001, %v4032
        %v4041 = vadd.f32 %v4002, %v4032
        %v4042 = vadd.f32 %v4003, %v4032
        %v4043 = vadd.f32 %v4004, %v4032
        %v4044 = vadd.f32 %v4005, %v4032
        %v4045 = vadd.f32 %v4006, %v4032
        %v4046 = vadd.f32 %v4007, %v4032
        %v4047 = vadd.f32 %v4008, %v4032
        %v4048 = vadd.f32 %v4009, %v4032
        %v4049 = vadd.f32 %v4010, %v4032
        %v4050 = vadd.f32 %v4011, %v4032
        %v4051 = vadd.f32 %v4012, %v4032
        %v4052 = vadd.f32 %v4013, %v4032
        %v4053 = vadd.f32 %v4014, %v4032
        %v4054 = vadd.f32 %v4015, %v4032
        %v4055 = vadd.f32 %v4016, %v4032
        %v4056 = vadd.f32 %v4017, %v4032
        %v4057 = vadd.f32 %v4018, %v4032
        %v4058 = vadd.f32 %v4019, %v4032
        %v4059 = vadd.f32 %v4020, %v4032
        %v4060 = vadd.f32 %v4021, %v4032
        %v4061 = vadd.f32 %v4022, %v4032
        %v4062 = vadd.f32 %v4023, %v4032
        %v4063 = vadd.f32 %v4024, %v4032
        %v4064 = vadd.f32 %v4025, %v4032
        %v4065 = vadd.f32 %v4026, %v4032
        %v4066 = vmax.f32 %v4034, 0.0
        %v4067 = vmax.f32 %v4035, 0.0
        %v4068 = vmax.f32 %v4036, 0.0
        %v4069 = vmax.f32 %v4037, 0.0
        %v4070 = vmax.f32 %v4038, 0.0
        %v4071 = vmax.f32 %v4039, 0.0
        %v4072 = vmax.f32 %v4040, 0.0
        %v4073 = vmax.f32 %v4041, 0.0
        %v4074 = vmax.f32 %v4042, 0.0
        %v4075 = vmax.f32 %v4043, 0.0
        %v4076 = vmax.f32 %v4044, 0.0
        %v4077 = vmax.f32 %v4045, 0.0
        %v4078 = vmax.f32 %v4046, 0.0
        %v4079 = vmax.f32 %v4047, 0.0
        %v4080 = vmax.f32 %v4048, 0.0
        %v4081 = vmax.f32 %v4049, 0.0
        %v4082 = vmax.f32 %v4050, 0.0
        %v4083 = vmax.f32 %v4051, 0.0
        %v4084 = vmax.f32 %v4052, 0.0
        %v4085 = vmax.f32 %v4053, 0.0
        %v4086 = vmax.f32 %v4054, 0.0
        %v4087 = vmax.f32 %v4055, 0.0
        %v4088 = vmax.f32 %v4056, 0.0
        %v4089 = vmax.f32 %v4057, 0.0
        %v4090 = vmax.f32 %v4058, 0.0
        %v4091 = vmax.f32 %v4059, 0.0
        %v4092 = vmax.f32 %v4060, 0.0
        %v4093 = vmax.f32 %v4061, 0.0
        %v4094 = vmax.f32 %v4062, 0.0
        %v4095 = vmax.f32 %v4063, 0.0
        %v4096 = vmax.f32 %v4064, 0.0
        %v4097 = vmax.f32 %v4065, 0.0
        %4098 = vst.msk [vmem:[%s520 + $0x1] sm:$0xff] %vm417, %v4066
        %4099 = vst.msk [vmem:[%s520 + $0x9] sm:$0xff] %vm417, %v4067
        %4100 = vst.msk [vmem:[%s520 + $0x19] sm:$0xff] %vm417, %v4068
        %4101 = vst.msk [vmem:[%s520 + $0x21] sm:$0xff] %vm417, %v4069
        %4102 = vst.msk [vmem:[%s520 + $0x31] sm:$0xff] %vm417, %v4070
        %4103 = vst.msk [vmem:[%s520 + $0x39] sm:$0xff] %vm417, %v4071
        %4104 = vst.msk [vmem:[%s520 + $0x49] sm:$0xff] %vm417, %v4072
        %4105 = vst.msk [vmem:[%s520 + $0x51] sm:$0xff] %vm417, %v4073
        %4106 = vst.msk [vmem:[%s520 + $0x61] sm:$0xff] %vm417, %v4074
        %4107 = vst.msk [vmem:[%s520 + $0x69] sm:$0xff] %vm417, %v4075
        %4108 = vst.msk [vmem:[%s520 + $0x79] sm:$0xff] %vm417, %v4076
        %4109 = vst.msk [vmem:[%s520 + $0x81] sm:$0xff] %vm417, %v4077
        %4110 = vst.msk [vmem:[%s520 + $0x91] sm:$0xff] %vm417, %v4078
        %4111 = vst.msk [vmem:[%s520 + $0x99] sm:$0xff] %vm417, %v4079
        %4112 = vst.msk [vmem:[%s520 + $0xa9] sm:$0xff] %vm417, %v4080
        %4113 = vst.msk [vmem:[%s520 + $0xb1] sm:$0xff] %vm417, %v4081
        %4114 = vst.msk [vmem:[%s520 + $0xc1] sm:$0xff] %vm417, %v4082
        %4115 = vst.msk [vmem:[%s520 + $0xc9] sm:$0xff] %vm417, %v4083
        %4116 = vst.msk [vmem:[%s520 + $0xd9] sm:$0xff] %vm417, %v4084
        %4117 = vst.msk [vmem:[%s520 + $0xe1] sm:$0xff] %vm417, %v4085
        %4118 = vst.msk [vmem:[%s520 + $0xf1] sm:$0xff] %vm417, %v4086
        %4119 = vst.msk [vmem:[%s520 + $0xf9] sm:$0xff] %vm417, %v4087
        %4120 = vst.msk [vmem:[%s520 + $0x109] sm:$0xff] %vm417, %v4088
        %4121 = vst.msk [vmem:[%s520 + $0x111] sm:$0xff] %vm417, %v4089
        %4122 = vst.msk [vmem:[%s520 + $0x121] sm:$0xff] %vm417, %v4090
        %4123 = vst.msk [vmem:[%s520 + $0x129] sm:$0xff] %vm417, %v4091
        %4124 = vst.msk [vmem:[%s520 + $0x139] sm:$0xff] %vm417, %v4092
        %4125 = vst.msk [vmem:[%s520 + $0x141] sm:$0xff] %vm417, %v4093
        %4126 = vst.msk [vmem:[%s520 + $0x151] sm:$0xff] %vm417, %v4094
        %4127 = vst.msk [vmem:[%s520 + $0x159] sm:$0xff] %vm417, %v4095
        %4128 = vst.msk [vmem:[%s520 + $0x169] sm:$0xff] %vm417, %v4096
        %4129 = vst.msk [vmem:[%s520 + $0x171] sm:$0xff] %vm417, %v4097
        %v4130 = vld [vmem:[#allocation2] sm:$0xff]
        %v4131 = vld [vmem:[#allocation2 + $0x8] sm:$0xff]
        %v4132 = vld [vmem:[#allocation2 + $0x18] sm:$0xff]
        %v4133 = vld [vmem:[#allocation2 + $0x20] sm:$0xff]
        %v4134 = vld [vmem:[#allocation2 + $0x30] sm:$0xff]
        %v4135 = vld [vmem:[#allocation2 + $0x38] sm:$0xff]
        %v4136 = vld [vmem:[#allocation2 + $0x48] sm:$0xff]
        %v4137 = vld [vmem:[#allocation2 + $0x50] sm:$0xff]
        %v4138 = vld [vmem:[#allocation2 + $0x60] sm:$0xff]
        %v4139 = vld [vmem:[#allocation2 + $0x68] sm:$0xff]
        %v4140 = vld [vmem:[#allocation2 + $0x78] sm:$0xff]
        %v4141 = vld [vmem:[#allocation2 + $0x80] sm:$0xff]
        %v4142 = vld [vmem:[#allocation2 + $0x90] sm:$0xff]
        %v4143 = vld [vmem:[#allocation2 + $0x98] sm:$0xff]
        %v4144 = vld [vmem:[#allocation2 + $0xa8] sm:$0xff]
        %v4145 = vld [vmem:[#allocation2 + $0xb0] sm:$0xff]
        %v4146 = vld [vmem:[#allocation2 + $0xc0] sm:$0xff]
        %v4147 = vld [vmem:[#allocation2 + $0xc8] sm:$0xff]
        %v4148 = vld [vmem:[#allocation2 + $0xd8] sm:$0xff]
        %v4149 = vld [vmem:[#allocation2 + $0xe0] sm:$0xff]
        %v4150 = vld [vmem:[#allocation2 + $0xf0] sm:$0xff]
        %v4151 = vld [vmem:[#allocation2 + $0xf8] sm:$0xff]
        %v4152 = vld [vmem:[#allocation2 + $0x108] sm:$0xff]
        %v4153 = vld [vmem:[#allocation2 + $0x110] sm:$0xff]
        %v4154 = vld [vmem:[#allocation2 + $0x120] sm:$0xff]
        %v4155 = vld [vmem:[#allocation2 + $0x128] sm:$0xff]
        %v4156 = vld [vmem:[#allocation2 + $0x138] sm:$0xff]
        %v4157 = vld [vmem:[#allocation2 + $0x140] sm:$0xff]
        %v4158 = vld [vmem:[#allocation2 + $0x150] sm:$0xff]
        %v4159 = vld [vmem:[#allocation2 + $0x158] sm:$0xff]
        %v4160 = vld [vmem:[#allocation2 + $0x168] sm:$0xff]
        %v4161 = vld [vmem:[#allocation2 + $0x170] sm:$0xff]
        %v4162 = vld [vmem:[%s3] sm:$0xff]
        %v4163 = vld [vmem:[%s3 + $0x8] sm:$0xff]
        %v4164 = vld [vmem:[%s3 + $0x10] sm:$0xff]
        %v4165 = vld [vmem:[%s3 + $0x18] sm:$0xff]
        %v4166 = vld [vmem:[%s3 + $0x20] sm:$0xff]
        %v4167 = vld [vmem:[%s3 + $0x28] sm:$0xff]
        %v4168 = vld [vmem:[%s3 + $0x30] sm:$0xff]
        %v4169 = vld [vmem:[%s3 + $0x38] sm:$0xff]
        %v4170 = vld [vmem:[#allocation2 + $0x1] sm:$0xff]
        %v4171 = vld [vmem:[#allocation2 + $0x9] sm:$0xff]
        %v4172 = vld [vmem:[#allocation2 + $0x19] sm:$0xff]
        %v4173 = vld [vmem:[#allocation2 + $0x21] sm:$0xff]
        %v4174 = vld [vmem:[#allocation2 + $0x31] sm:$0xff]
        %v4175 = vld [vmem:[#allocation2 + $0x39] sm:$0xff]
        %v4176 = vld [vmem:[#allocation2 + $0x49] sm:$0xff]
        %v4177 = vld [vmem:[#allocation2 + $0x51] sm:$0xff]
        %v4178 = vld [vmem:[#allocation2 + $0x61] sm:$0xff]
        %v4179 = vld [vmem:[#allocation2 + $0x69] sm:$0xff]
        %v4180 = vld [vmem:[#allocation2 + $0x79] sm:$0xff]
        %v4181 = vld [vmem:[#allocation2 + $0x81] sm:$0xff]
        %v4182 = vld [vmem:[#allocation2 + $0x91] sm:$0xff]
        %v4183 = vld [vmem:[#allocation2 + $0x99] sm:$0xff]
        %v4184 = vld [vmem:[#allocation2 + $0xa9] sm:$0xff]
        %v4185 = vld [vmem:[#allocation2 + $0xb1] sm:$0xff]
        %v4186 = vld [vmem:[#allocation2 + $0xc1] sm:$0xff]
        %v4187 = vld [vmem:[#allocation2 + $0xc9] sm:$0xff]
        %v4188 = vld [vmem:[#allocation2 + $0xd9] sm:$0xff]
        %v4189 = vld [vmem:[#allocation2 + $0xe1] sm:$0xff]
        %v4190 = vld [vmem:[#allocation2 + $0xf1] sm:$0xff]
        %v4191 = vld [vmem:[#allocation2 + $0xf9] sm:$0xff]
        %v4192 = vld [vmem:[#allocation2 + $0x109] sm:$0xff]
        %v4193 = vld [vmem:[#allocation2 + $0x111] sm:$0xff]
        %v4194 = vld [vmem:[#allocation2 + $0x121] sm:$0xff]
        %v4195 = vld [vmem:[#allocation2 + $0x129] sm:$0xff]
        %v4196 = vld [vmem:[#allocation2 + $0x139] sm:$0xff]
        %v4197 = vld [vmem:[#allocation2 + $0x141] sm:$0xff]
        %v4198 = vld [vmem:[#allocation2 + $0x151] sm:$0xff]
        %v4199 = vld [vmem:[#allocation2 + $0x159] sm:$0xff]
        %v4200 = vld [vmem:[#allocation2 + $0x169] sm:$0xff]
        %v4201 = vld [vmem:[#allocation2 + $0x171] sm:$0xff]
        %v4202 = vld [vmem:[%s3 + $0x40] sm:$0xff]
        %v4203 = vld [vmem:[%s3 + $0x48] sm:$0xff]
        %v4204 = vld [vmem:[%s3 + $0x50] sm:$0xff]
        %v4205 = vld [vmem:[%s3 + $0x58] sm:$0xff]
        %v4206 = vld [vmem:[%s3 + $0x60] sm:$0xff]
        %v4207 = vld [vmem:[%s3 + $0x68] sm:$0xff]
        %v4208 = vld [vmem:[%s3 + $0x70] sm:$0xff]
        %v4209 = vld [vmem:[%s3 + $0x78] sm:$0xff]
        %v4211 = vsel %vm417, %v4170, 0
        %v4214 = vsel %vm417, %v4171, 0
        %v4217 = vsel %vm417, %v4172, 0
        %v4220 = vsel %vm417, %v4173, 0
        %v4223 = vsel %vm417, %v4174, 0
        %v4226 = vsel %vm417, %v4175, 0
        %v4229 = vsel %vm417, %v4176, 0
        %v4232 = vsel %vm417, %v4177, 0
        %v4235 = vsel %vm417, %v4178, 0
        %v4238 = vsel %vm417, %v4179, 0
        %v4241 = vsel %vm417, %v4180, 0
        %v4244 = vsel %vm417, %v4181, 0
        %v4247 = vsel %vm417, %v4182, 0
        %v4250 = vsel %vm417, %v4183, 0
        %v4253 = vsel %vm417, %v4184, 0
        %v4256 = vsel %vm417, %v4185, 0
        %v4259 = vsel %vm417, %v4186, 0
        %v4262 = vsel %vm417, %v4187, 0
        %v4265 = vsel %vm417, %v4188, 0
        %v4268 = vsel %vm417, %v4189, 0
        %v4271 = vsel %vm417, %v4190, 0
        %v4274 = vsel %vm417, %v4191, 0
        %v4277 = vsel %vm417, %v4192, 0
        %v4280 = vsel %vm417, %v4193, 0
        %v4283 = vsel %vm417, %v4194, 0
        %v4286 = vsel %vm417, %v4195, 0
        %v4289 = vsel %vm417, %v4196, 0
        %v4292 = vsel %vm417, %v4197, 0
        %v4295 = vsel %vm417, %v4198, 0
        %v4298 = vsel %vm417, %v4199, 0
        %v4301 = vsel %vm417, %v4200, 0
        %v4304 = vsel %vm417, %v4201, 0
        %4306 = vmatprep.subr.mxu0 0.0
        %4307 = vmatpush1.msra.mxu0 0.0
        %4308 = vmatprep.subr.mxu0 0.0
        %4309 = vmatpush1.msra.mxu0 0.0
        %4310 = vmatprep.subr.mxu0 0.0
        %4311 = vmatpush1.msra.mxu0 0.0
        %4312 = vmatprep.subr.mxu0 0.0
        %4313 = vmatpush1.msra.mxu0 0.0
        %4314 = vmatprep.subr.mxu0 0.0
        %4315 = vmatpush1.msra.mxu0 0.0
        %4316 = vmatprep.subr.mxu0 0.0
        %4317 = vmatpush1.msra.mxu0 0.0
        %4318 = vmatprep.subr.mxu0 0.0
        %4319 = vmatpush1.msra.mxu0 0.0
        %4320 = vmatprep.subr.mxu0 0.0
        %4321 = vmatpush1.msra.mxu0 0.0
        %4322 = vmatprep.subr.mxu0 0.0
        %4323 = vmatpush1.msra.mxu0 %v4209
        %4324 = vmatprep.subr.mxu0 0.0
        %4325 = vmatpush1.msra.mxu0 %v4208
        %4326 = vmatprep.subr.mxu0 0.0
        %4327 = vmatpush1.msra.mxu0 %v4207
        %4328 = vmatprep.subr.mxu0 0.0
        %4329 = vmatpush1.msra.mxu0 %v4206
        %4330 = vmatprep.subr.mxu0 0.0
        %4331 = vmatpush1.msra.mxu0 %v4205
        %4332 = vmatprep.subr.mxu0 0.0
        %4333 = vmatpush1.msra.mxu0 %v4204
        %4334 = vmatprep.subr.mxu0 0.0
        %4335 = vmatpush1.msra.mxu0 %v4203
        %4336 = vmatprep.subr.mxu0 0.0
        %4337 = vmatpush1.msra.mxu0 %v4202
        %4338 = vmatprep.subr.mxu0 0.0
        %4339 = vmatpush2.msra.mxu0 0.0
        %4340 = vmatprep.subr.mxu0 0.0
        %4341 = vmatpush2.msra.mxu0 0.0
        %4342 = vmatprep.subr.mxu0 0.0
        %4343 = vmatpush2.msra.mxu0 0.0
        %4344 = vmatprep.subr.mxu0 0.0
        %4345 = vmatpush2.msra.mxu0 0.0
        %4346 = vmatprep.subr.mxu0 0.0
        %4347 = vmatpush2.msra.mxu0 0.0
        %4348 = vmatprep.subr.mxu0 0.0
        %4349 = vmatpush2.msra.mxu0 0.0
        %4350 = vmatprep.subr.mxu0 0.0
        %4351 = vmatpush2.msra.mxu0 0.0
        %4352 = vmatprep.subr.mxu0 0.0
        %4353 = vmatpush2.msra.mxu0 0.0
        %4354 = vmatprep.subr.mxu0 0.0
        %4355 = vmatpush2.msra.mxu0 0.0
        %4356 = vmatprep.subr.mxu0 0.0
        %4357 = vmatpush2.msra.mxu0 0.0
        %4358 = vmatprep.subr.mxu0 0.0
        %4359 = vmatpush2.msra.mxu0 0.0
        %4360 = vmatprep.subr.mxu0 0.0
        %4361 = vmatpush2.msra.mxu0 0.0
        %4362 = vmatprep.subr.mxu0 0.0
        %4363 = vmatpush2.msra.mxu0 0.0
        %4364 = vmatprep.subr.mxu0 0.0
        %4365 = vmatpush2.msra.mxu0 0.0
        %4366 = vmatprep.subr.mxu0 0.0
        %4367 = vmatpush2.msra.mxu0 0.0
        %4368 = vmatprep.subr.mxu0 0.0
        %4369 = vmatpush2.msra.mxu0 0.0
        %4370 = vmatprep.mubr.f32.mxu0 0.0
        %4371 = vmatmul.mubr.f32.gmra.mxu0 %v4211
        %v4372 = vpop.f32.mrf.mxu0
        %v4373 = vadd.f32 0.0, %v4372
        %v4374 = vpop.f32.mrf.mxu0
        %4375 = vmatprep.mubr.f32.mxu0 0.0
        %4376 = vmatmul.mubr.f32.gmra.mxu0 %v4214
        %v4377 = vpop.f32.mrf.mxu0
        %v4378 = vadd.f32 0.0, %v4377
        %v4379 = vpop.f32.mrf.mxu0
        %4380 = vmatprep.mubr.f32.mxu0 0.0
        %4381 = vmatmul.mubr.f32.gmra.mxu0 %v4217
        %v4382 = vpop.f32.mrf.mxu0
        %v4383 = vadd.f32 0.0, %v4382
        %v4384 = vpop.f32.mrf.mxu0
        %4385 = vmatprep.mubr.f32.mxu0 0.0
        %4386 = vmatmul.mubr.f32.gmra.mxu0 %v4220
        %v4387 = vpop.f32.mrf.mxu0
        %v4388 = vadd.f32 0.0, %v4387
        %v4389 = vpop.f32.mrf.mxu0
        %4390 = vmatprep.mubr.f32.mxu0 0.0
        %4391 = vmatmul.mubr.f32.gmra.mxu0 %v4223
        %v4392 = vpop.f32.mrf.mxu0
        %v4393 = vadd.f32 0.0, %v4392
        %v4394 = vpop.f32.mrf.mxu0
        %4395 = vmatprep.mubr.f32.mxu0 0.0
        %4396 = vmatmul.mubr.f32.gmra.mxu0 %v4226
        %v4397 = vpop.f32.mrf.mxu0
        %v4398 = vadd.f32 0.0, %v4397
        %v4399 = vpop.f32.mrf.mxu0
        %4400 = vmatprep.mubr.f32.mxu0 0.0
        %4401 = vmatmul.mubr.f32.gmra.mxu0 %v4229
        %v4402 = vpop.f32.mrf.mxu0
        %v4403 = vadd.f32 0.0, %v4402
        %v4404 = vpop.f32.mrf.mxu0
        %4405 = vmatprep.mubr.f32.mxu0 0.0
        %4406 = vmatmul.mubr.f32.gmra.mxu0 %v4232
        %v4407 = vpop.f32.mrf.mxu0
        %v4408 = vadd.f32 0.0, %v4407
        %v4409 = vpop.f32.mrf.mxu0
        %4410 = vmatprep.mubr.f32.mxu0 0.0
        %4411 = vmatmul.mubr.f32.gmra.mxu0 %v4235
        %v4412 = vpop.f32.mrf.mxu0
        %v4413 = vadd.f32 0.0, %v4412
        %v4414 = vpop.f32.mrf.mxu0
        %4415 = vmatprep.mubr.f32.mxu0 0.0
        %4416 = vmatmul.mubr.f32.gmra.mxu0 %v4238
        %v4417 = vpop.f32.mrf.mxu0
        %v4418 = vadd.f32 0.0, %v4417
        %v4419 = vpop.f32.mrf.mxu0
        %4420 = vmatprep.mubr.f32.mxu0 0.0
        %4421 = vmatmul.mubr.f32.gmra.mxu0 %v4241
        %v4422 = vpop.f32.mrf.mxu0
        %v4423 = vadd.f32 0.0, %v4422
        %v4424 = vpop.f32.mrf.mxu0
        %4425 = vmatprep.mubr.f32.mxu0 0.0
        %4426 = vmatmul.mubr.f32.gmra.mxu0 %v4244
        %v4427 = vpop.f32.mrf.mxu0
        %v4428 = vadd.f32 0.0, %v4427
        %v4429 = vpop.f32.mrf.mxu0
        %4430 = vmatprep.mubr.f32.mxu0 0.0
        %4431 = vmatmul.mubr.f32.gmra.mxu0 %v4247
        %v4432 = vpop.f32.mrf.mxu0
        %v4433 = vadd.f32 0.0, %v4432
        %v4434 = vpop.f32.mrf.mxu0
        %4435 = vmatprep.mubr.f32.mxu0 0.0
        %4436 = vmatmul.mubr.f32.gmra.mxu0 %v4250
        %v4437 = vpop.f32.mrf.mxu0
        %v4438 = vadd.f32 0.0, %v4437
        %v4439 = vpop.f32.mrf.mxu0
        %4440 = vmatprep.mubr.f32.mxu0 0.0
        %4441 = vmatmul.mubr.f32.gmra.mxu0 %v4253
        %v4442 = vpop.f32.mrf.mxu0
        %v4443 = vadd.f32 0.0, %v4442
        %v4444 = vpop.f32.mrf.mxu0
        %4445 = vmatprep.mubr.f32.mxu0 0.0
        %4446 = vmatmul.mubr.f32.gmra.mxu0 %v4256
        %v4447 = vpop.f32.mrf.mxu0
        %v4448 = vadd.f32 0.0, %v4447
        %v4449 = vpop.f32.mrf.mxu0
        %4450 = vmatprep.mubr.f32.mxu0 0.0
        %4451 = vmatmul.mubr.f32.gmra.mxu0 %v4259
        %v4452 = vpop.f32.mrf.mxu0
        %v4453 = vadd.f32 0.0, %v4452
        %v4454 = vpop.f32.mrf.mxu0
        %4455 = vmatprep.mubr.f32.mxu0 0.0
        %4456 = vmatmul.mubr.f32.gmra.mxu0 %v4262
        %v4457 = vpop.f32.mrf.mxu0
        %v4458 = vadd.f32 0.0, %v4457
        %v4459 = vpop.f32.mrf.mxu0
        %4460 = vmatprep.mubr.f32.mxu0 0.0
        %4461 = vmatmul.mubr.f32.gmra.mxu0 %v4265
        %v4462 = vpop.f32.mrf.mxu0
        %v4463 = vadd.f32 0.0, %v4462
        %v4464 = vpop.f32.mrf.mxu0
        %4465 = vmatprep.mubr.f32.mxu0 0.0
        %4466 = vmatmul.mubr.f32.gmra.mxu0 %v4268
        %v4467 = vpop.f32.mrf.mxu0
        %v4468 = vadd.f32 0.0, %v4467
        %v4469 = vpop.f32.mrf.mxu0
        %4470 = vmatprep.mubr.f32.mxu0 0.0
        %4471 = vmatmul.mubr.f32.gmra.mxu0 %v4271
        %v4472 = vpop.f32.mrf.mxu0
        %v4473 = vadd.f32 0.0, %v4472
        %v4474 = vpop.f32.mrf.mxu0
        %4475 = vmatprep.mubr.f32.mxu0 0.0
        %4476 = vmatmul.mubr.f32.gmra.mxu0 %v4274
        %v4477 = vpop.f32.mrf.mxu0
        %v4478 = vadd.f32 0.0, %v4477
        %v4479 = vpop.f32.mrf.mxu0
        %4480 = vmatprep.mubr.f32.mxu0 0.0
        %4481 = vmatmul.mubr.f32.gmra.mxu0 %v4277
        %v4482 = vpop.f32.mrf.mxu0
        %v4483 = vadd.f32 0.0, %v4482
        %v4484 = vpop.f32.mrf.mxu0
        %4485 = vmatprep.mubr.f32.mxu0 0.0
        %4486 = vmatmul.mubr.f32.gmra.mxu0 %v4280
        %v4487 = vpop.f32.mrf.mxu0
        %v4488 = vadd.f32 0.0, %v4487
        %v4489 = vpop.f32.mrf.mxu0
        %4490 = vmatprep.mubr.f32.mxu0 0.0
        %4491 = vmatmul.mubr.f32.gmra.mxu0 %v4283
        %v4492 = vpop.f32.mrf.mxu0
        %v4493 = vadd.f32 0.0, %v4492
        %v4494 = vpop.f32.mrf.mxu0
        %4495 = vmatprep.mubr.f32.mxu0 0.0
        %4496 = vmatmul.mubr.f32.gmra.mxu0 %v4286
        %v4497 = vpop.f32.mrf.mxu0
        %v4498 = vadd.f32 0.0, %v4497
        %v4499 = vpop.f32.mrf.mxu0
        %4500 = vmatprep.mubr.f32.mxu0 0.0
        %4501 = vmatmul.mubr.f32.gmra.mxu0 %v4289
        %v4502 = vpop.f32.mrf.mxu0
        %v4503 = vadd.f32 0.0, %v4502
        %v4504 = vpop.f32.mrf.mxu0
        %4505 = vmatprep.mubr.f32.mxu0 0.0
        %4506 = vmatmul.mubr.f32.gmra.mxu0 %v4292
        %v4507 = vpop.f32.mrf.mxu0
        %v4508 = vadd.f32 0.0, %v4507
        %v4509 = vpop.f32.mrf.mxu0
        %4510 = vmatprep.mubr.f32.mxu0 0.0
        %4511 = vmatmul.mubr.f32.gmra.mxu0 %v4295
        %v4512 = vpop.f32.mrf.mxu0
        %v4513 = vadd.f32 0.0, %v4512
        %v4514 = vpop.f32.mrf.mxu0
        %4515 = vmatprep.mubr.f32.mxu0 0.0
        %4516 = vmatmul.mubr.f32.gmra.mxu0 %v4298
        %v4517 = vpop.f32.mrf.mxu0
        %v4518 = vadd.f32 0.0, %v4517
        %v4519 = vpop.f32.mrf.mxu0
        %4520 = vmatprep.mubr.f32.mxu0 0.0
        %4521 = vmatmul.mubr.f32.gmra.mxu0 %v4301
        %v4522 = vpop.f32.mrf.mxu0
        %v4523 = vadd.f32 0.0, %v4522
        %v4524 = vpop.f32.mrf.mxu0
        %4525 = vmatprep.mubr.f32.mxu0 0.0
        %4526 = vmatmul.mubr.f32.gmra.mxu0 %v4304
        %v4527 = vpop.f32.mrf.mxu0
        %v4528 = vadd.f32 0.0, %v4527
        %v4529 = vpop.f32.mrf.mxu0
        %4530 = vdwg.mxu0
        %v4532 = vsel %vm417, %v4130, 0
        %v4535 = vsel %vm417, %v4131, 0
        %v4538 = vsel %vm417, %v4132, 0
        %v4541 = vsel %vm417, %v4133, 0
        %v4544 = vsel %vm417, %v4134, 0
        %v4547 = vsel %vm417, %v4135, 0
        %v4550 = vsel %vm417, %v4136, 0
        %v4553 = vsel %vm417, %v4137, 0
        %v4556 = vsel %vm417, %v4138, 0
        %v4559 = vsel %vm417, %v4139, 0
        %v4562 = vsel %vm417, %v4140, 0
        %v4565 = vsel %vm417, %v4141, 0
        %v4568 = vsel %vm417, %v4142, 0
        %v4571 = vsel %vm417, %v4143, 0
        %v4574 = vsel %vm417, %v4144, 0
        %v4577 = vsel %vm417, %v4145, 0
        %v4580 = vsel %vm417, %v4146, 0
        %v4583 = vsel %vm417, %v4147, 0
        %v4586 = vsel %vm417, %v4148, 0
        %v4589 = vsel %vm417, %v4149, 0
        %v4592 = vsel %vm417, %v4150, 0
        %v4595 = vsel %vm417, %v4151, 0
        %v4598 = vsel %vm417, %v4152, 0
        %v4601 = vsel %vm417, %v4153, 0
        %v4604 = vsel %vm417, %v4154, 0
        %v4607 = vsel %vm417, %v4155, 0
        %v4610 = vsel %vm417, %v4156, 0
        %v4613 = vsel %vm417, %v4157, 0
        %v4616 = vsel %vm417, %v4158, 0
        %v4619 = vsel %vm417, %v4159, 0
        %v4622 = vsel %vm417, %v4160, 0
        %v4625 = vsel %vm417, %v4161, 0
        %4627 = vmatprep.subr.mxu0 0.0
        %4628 = vmatpush1.msra.mxu0 0.0
        %4629 = vmatprep.subr.mxu0 0.0
        %4630 = vmatpush1.msra.mxu0 0.0
        %4631 = vmatprep.subr.mxu0 0.0
        %4632 = vmatpush1.msra.mxu0 0.0
        %4633 = vmatprep.subr.mxu0 0.0
        %4634 = vmatpush1.msra.mxu0 0.0
        %4635 = vmatprep.subr.mxu0 0.0
        %4636 = vmatpush1.msra.mxu0 0.0
        %4637 = vmatprep.subr.mxu0 0.0
        %4638 = vmatpush1.msra.mxu0 0.0
        %4639 = vmatprep.subr.mxu0 0.0
        %4640 = vmatpush1.msra.mxu0 0.0
        %4641 = vmatprep.subr.mxu0 0.0
        %4642 = vmatpush1.msra.mxu0 0.0
        %4643 = vmatprep.subr.mxu0 0.0
        %4644 = vmatpush1.msra.mxu0 %v4169
        %4645 = vmatprep.subr.mxu0 0.0
        %4646 = vmatpush1.msra.mxu0 %v4168
        %4647 = vmatprep.subr.mxu0 0.0
        %4648 = vmatpush1.msra.mxu0 %v4167
        %4649 = vmatprep.subr.mxu0 0.0
        %4650 = vmatpush1.msra.mxu0 %v4166
        %4651 = vmatprep.subr.mxu0 0.0
        %4652 = vmatpush1.msra.mxu0 %v4165
        %4653 = vmatprep.subr.mxu0 0.0
        %4654 = vmatpush1.msra.mxu0 %v4164
        %4655 = vmatprep.subr.mxu0 0.0
        %4656 = vmatpush1.msra.mxu0 %v4163
        %4657 = vmatprep.subr.mxu0 0.0
        %4658 = vmatpush1.msra.mxu0 %v4162
        %4659 = vmatprep.subr.mxu0 0.0
        %4660 = vmatpush2.msra.mxu0 0.0
        %4661 = vmatprep.subr.mxu0 0.0
        %4662 = vmatpush2.msra.mxu0 0.0
        %4663 = vmatprep.subr.mxu0 0.0
        %4664 = vmatpush2.msra.mxu0 0.0
        %4665 = vmatprep.subr.mxu0 0.0
        %4666 = vmatpush2.msra.mxu0 0.0
        %4667 = vmatprep.subr.mxu0 0.0
        %4668 = vmatpush2.msra.mxu0 0.0
        %4669 = vmatprep.subr.mxu0 0.0
        %4670 = vmatpush2.msra.mxu0 0.0
        %4671 = vmatprep.subr.mxu0 0.0
        %4672 = vmatpush2.msra.mxu0 0.0
        %4673 = vmatprep.subr.mxu0 0.0
        %4674 = vmatpush2.msra.mxu0 0.0
        %4675 = vmatprep.subr.mxu0 0.0
        %4676 = vmatpush2.msra.mxu0 0.0
        %4677 = vmatprep.subr.mxu0 0.0
        %4678 = vmatpush2.msra.mxu0 0.0
        %4679 = vmatprep.subr.mxu0 0.0
        %4680 = vmatpush2.msra.mxu0 0.0
        %4681 = vmatprep.subr.mxu0 0.0
        %4682 = vmatpush2.msra.mxu0 0.0
        %4683 = vmatprep.subr.mxu0 0.0
        %4684 = vmatpush2.msra.mxu0 0.0
        %4685 = vmatprep.subr.mxu0 0.0
        %4686 = vmatpush2.msra.mxu0 0.0
        %4687 = vmatprep.subr.mxu0 0.0
        %4688 = vmatpush2.msra.mxu0 0.0
        %4689 = vmatprep.subr.mxu0 0.0
        %4690 = vmatpush2.msra.mxu0 0.0
        %4691 = vmatprep.mubr.f32.mxu0 0.0
        %4692 = vmatmul.mubr.f32.gmra.mxu0 %v4532
        %v4693 = vpop.f32.mrf.mxu0
        %v4694 = vadd.f32 %v4373, %v4693
        %v4695 = vpop.f32.mrf.mxu0
        %4696 = vmatprep.mubr.f32.mxu0 0.0
        %4697 = vmatmul.mubr.f32.gmra.mxu0 %v4535
        %v4698 = vpop.f32.mrf.mxu0
        %v4699 = vadd.f32 %v4378, %v4698
        %v4700 = vpop.f32.mrf.mxu0
        %4701 = vmatprep.mubr.f32.mxu0 0.0
        %4702 = vmatmul.mubr.f32.gmra.mxu0 %v4538
        %v4703 = vpop.f32.mrf.mxu0
        %v4704 = vadd.f32 %v4383, %v4703
        %v4705 = vpop.f32.mrf.mxu0
        %4706 = vmatprep.mubr.f32.mxu0 0.0
        %4707 = vmatmul.mubr.f32.gmra.mxu0 %v4541
        %v4708 = vpop.f32.mrf.mxu0
        %v4709 = vadd.f32 %v4388, %v4708
        %v4710 = vpop.f32.mrf.mxu0
        %4711 = vmatprep.mubr.f32.mxu0 0.0
        %4712 = vmatmul.mubr.f32.gmra.mxu0 %v4544
        %v4713 = vpop.f32.mrf.mxu0
        %v4714 = vadd.f32 %v4393, %v4713
        %v4715 = vpop.f32.mrf.mxu0
        %4716 = vmatprep.mubr.f32.mxu0 0.0
        %4717 = vmatmul.mubr.f32.gmra.mxu0 %v4547
        %v4718 = vpop.f32.mrf.mxu0
        %v4719 = vadd.f32 %v4398, %v4718
        %v4720 = vpop.f32.mrf.mxu0
        %4721 = vmatprep.mubr.f32.mxu0 0.0
        %4722 = vmatmul.mubr.f32.gmra.mxu0 %v4550
        %v4723 = vpop.f32.mrf.mxu0
        %v4724 = vadd.f32 %v4403, %v4723
        %v4725 = vpop.f32.mrf.mxu0
        %4726 = vmatprep.mubr.f32.mxu0 0.0
        %4727 = vmatmul.mubr.f32.gmra.mxu0 %v4553
        %v4728 = vpop.f32.mrf.mxu0
        %v4729 = vadd.f32 %v4408, %v4728
        %v4730 = vpop.f32.mrf.mxu0
        %4731 = vmatprep.mubr.f32.mxu0 0.0
        %4732 = vmatmul.mubr.f32.gmra.mxu0 %v4556
        %v4733 = vpop.f32.mrf.mxu0
        %v4734 = vadd.f32 %v4413, %v4733
        %v4735 = vpop.f32.mrf.mxu0
        %4736 = vmatprep.mubr.f32.mxu0 0.0
        %4737 = vmatmul.mubr.f32.gmra.mxu0 %v4559
        %v4738 = vpop.f32.mrf.mxu0
        %v4739 = vadd.f32 %v4418, %v4738
        %v4740 = vpop.f32.mrf.mxu0
        %4741 = vmatprep.mubr.f32.mxu0 0.0
        %4742 = vmatmul.mubr.f32.gmra.mxu0 %v4562
        %v4743 = vpop.f32.mrf.mxu0
        %v4744 = vadd.f32 %v4423, %v4743
        %v4745 = vpop.f32.mrf.mxu0
        %4746 = vmatprep.mubr.f32.mxu0 0.0
        %4747 = vmatmul.mubr.f32.gmra.mxu0 %v4565
        %v4748 = vpop.f32.mrf.mxu0
        %v4749 = vadd.f32 %v4428, %v4748
        %v4750 = vpop.f32.mrf.mxu0
        %4751 = vmatprep.mubr.f32.mxu0 0.0
        %4752 = vmatmul.mubr.f32.gmra.mxu0 %v4568
        %v4753 = vpop.f32.mrf.mxu0
        %v4754 = vadd.f32 %v4433, %v4753
        %v4755 = vpop.f32.mrf.mxu0
        %4756 = vmatprep.mubr.f32.mxu0 0.0
        %4757 = vmatmul.mubr.f32.gmra.mxu0 %v4571
        %v4758 = vpop.f32.mrf.mxu0
        %v4759 = vadd.f32 %v4438, %v4758
        %v4760 = vpop.f32.mrf.mxu0
        %4761 = vmatprep.mubr.f32.mxu0 0.0
        %4762 = vmatmul.mubr.f32.gmra.mxu0 %v4574
        %v4763 = vpop.f32.mrf.mxu0
        %v4764 = vadd.f32 %v4443, %v4763
        %v4765 = vpop.f32.mrf.mxu0
        %4766 = vmatprep.mubr.f32.mxu0 0.0
        %4767 = vmatmul.mubr.f32.gmra.mxu0 %v4577
        %v4768 = vpop.f32.mrf.mxu0
        %v4769 = vadd.f32 %v4448, %v4768
        %v4770 = vpop.f32.mrf.mxu0
        %4771 = vmatprep.mubr.f32.mxu0 0.0
        %4772 = vmatmul.mubr.f32.gmra.mxu0 %v4580
        %v4773 = vpop.f32.mrf.mxu0
        %v4774 = vadd.f32 %v4453, %v4773
        %v4775 = vpop.f32.mrf.mxu0
        %4776 = vmatprep.mubr.f32.mxu0 0.0
        %4777 = vmatmul.mubr.f32.gmra.mxu0 %v4583
        %v4778 = vpop.f32.mrf.mxu0
        %v4779 = vadd.f32 %v4458, %v4778
        %v4780 = vpop.f32.mrf.mxu0
        %4781 = vmatprep.mubr.f32.mxu0 0.0
        %4782 = vmatmul.mubr.f32.gmra.mxu0 %v4586
        %v4783 = vpop.f32.mrf.mxu0
        %v4784 = vadd.f32 %v4463, %v4783
        %v4785 = vpop.f32.mrf.mxu0
        %4786 = vmatprep.mubr.f32.mxu0 0.0
        %4787 = vmatmul.mubr.f32.gmra.mxu0 %v4589
        %v4788 = vpop.f32.mrf.mxu0
        %v4789 = vadd.f32 %v4468, %v4788
        %v4790 = vpop.f32.mrf.mxu0
        %4791 = vmatprep.mubr.f32.mxu0 0.0
        %4792 = vmatmul.mubr.f32.gmra.mxu0 %v4592
        %v4793 = vpop.f32.mrf.mxu0
        %v4794 = vadd.f32 %v4473, %v4793
        %v4795 = vpop.f32.mrf.mxu0
        %4796 = vmatprep.mubr.f32.mxu0 0.0
        %4797 = vmatmul.mubr.f32.gmra.mxu0 %v4595
        %v4798 = vpop.f32.mrf.mxu0
        %v4799 = vadd.f32 %v4478, %v4798
        %v4800 = vpop.f32.mrf.mxu0
        %4801 = vmatprep.mubr.f32.mxu0 0.0
        %4802 = vmatmul.mubr.f32.gmra.mxu0 %v4598
        %v4803 = vpop.f32.mrf.mxu0
        %v4804 = vadd.f32 %v4483, %v4803
        %v4805 = vpop.f32.mrf.mxu0
        %4806 = vmatprep.mubr.f32.mxu0 0.0
        %4807 = vmatmul.mubr.f32.gmra.mxu0 %v4601
        %v4808 = vpop.f32.mrf.mxu0
        %v4809 = vadd.f32 %v4488, %v4808
        %v4810 = vpop.f32.mrf.mxu0
        %4811 = vmatprep.mubr.f32.mxu0 0.0
        %4812 = vmatmul.mubr.f32.gmra.mxu0 %v4604
        %v4813 = vpop.f32.mrf.mxu0
        %v4814 = vadd.f32 %v4493, %v4813
        %v4815 = vpop.f32.mrf.mxu0
        %4816 = vmatprep.mubr.f32.mxu0 0.0
        %4817 = vmatmul.mubr.f32.gmra.mxu0 %v4607
        %v4818 = vpop.f32.mrf.mxu0
        %v4819 = vadd.f32 %v4498, %v4818
        %v4820 = vpop.f32.mrf.mxu0
        %4821 = vmatprep.mubr.f32.mxu0 0.0
        %4822 = vmatmul.mubr.f32.gmra.mxu0 %v4610
        %v4823 = vpop.f32.mrf.mxu0
        %v4824 = vadd.f32 %v4503, %v4823
        %v4825 = vpop.f32.mrf.mxu0
        %4826 = vmatprep.mubr.f32.mxu0 0.0
        %4827 = vmatmul.mubr.f32.gmra.mxu0 %v4613
        %v4828 = vpop.f32.mrf.mxu0
        %v4829 = vadd.f32 %v4508, %v4828
        %v4830 = vpop.f32.mrf.mxu0
        %4831 = vmatprep.mubr.f32.mxu0 0.0
        %4832 = vmatmul.mubr.f32.gmra.mxu0 %v4616
        %v4833 = vpop.f32.mrf.mxu0
        %v4834 = vadd.f32 %v4513, %v4833
        %v4835 = vpop.f32.mrf.mxu0
        %4836 = vmatprep.mubr.f32.mxu0 0.0
        %4837 = vmatmul.mubr.f32.gmra.mxu0 %v4619
        %v4838 = vpop.f32.mrf.mxu0
        %v4839 = vadd.f32 %v4518, %v4838
        %v4840 = vpop.f32.mrf.mxu0
        %4841 = vmatprep.mubr.f32.mxu0 0.0
        %4842 = vmatmul.mubr.f32.gmra.mxu0 %v4622
        %v4843 = vpop.f32.mrf.mxu0
        %v4844 = vadd.f32 %v4523, %v4843
        %v4845 = vpop.f32.mrf.mxu0
        %4846 = vmatprep.mubr.f32.mxu0 0.0
        %4847 = vmatmul.mubr.f32.gmra.mxu0 %v4625
        %v4848 = vpop.f32.mrf.mxu0
        %v4849 = vadd.f32 %v4528, %v4848
        %v4850 = vpop.f32.mrf.mxu0
        %4851 = vdwg.mxu0
        %v4852 = vld [vmem:[#allocation2 + $0x2] sm:$0xff]
        %v4853 = vld [vmem:[#allocation2 + $0xa] sm:$0xff]
        %v4854 = vld [vmem:[#allocation2 + $0x1a] sm:$0xff]
        %v4855 = vld [vmem:[#allocation2 + $0x22] sm:$0xff]
        %v4856 = vld [vmem:[#allocation2 + $0x32] sm:$0xff]
        %v4857 = vld [vmem:[#allocation2 + $0x3a] sm:$0xff]
        %v4858 = vld [vmem:[#allocation2 + $0x4a] sm:$0xff]
        %v4859 = vld [vmem:[#allocation2 + $0x52] sm:$0xff]
        %v4860 = vld [vmem:[#allocation2 + $0x62] sm:$0xff]
        %v4861 = vld [vmem:[#allocation2 + $0x6a] sm:$0xff]
        %v4862 = vld [vmem:[#allocation2 + $0x7a] sm:$0xff]
        %v4863 = vld [vmem:[#allocation2 + $0x82] sm:$0xff]
        %v4864 = vld [vmem:[#allocation2 + $0x92] sm:$0xff]
        %v4865 = vld [vmem:[#allocation2 + $0x9a] sm:$0xff]
        %v4866 = vld [vmem:[#allocation2 + $0xaa] sm:$0xff]
        %v4867 = vld [vmem:[#allocation2 + $0xb2] sm:$0xff]
        %v4868 = vld [vmem:[#allocation2 + $0xc2] sm:$0xff]
        %v4869 = vld [vmem:[#allocation2 + $0xca] sm:$0xff]
        %v4870 = vld [vmem:[#allocation2 + $0xda] sm:$0xff]
        %v4871 = vld [vmem:[#allocation2 + $0xe2] sm:$0xff]
        %v4872 = vld [vmem:[#allocation2 + $0xf2] sm:$0xff]
        %v4873 = vld [vmem:[#allocation2 + $0xfa] sm:$0xff]
        %v4874 = vld [vmem:[#allocation2 + $0x10a] sm:$0xff]
        %v4875 = vld [vmem:[#allocation2 + $0x112] sm:$0xff]
        %v4876 = vld [vmem:[#allocation2 + $0x122] sm:$0xff]
        %v4877 = vld [vmem:[#allocation2 + $0x12a] sm:$0xff]
        %v4878 = vld [vmem:[#allocation2 + $0x13a] sm:$0xff]
        %v4879 = vld [vmem:[#allocation2 + $0x142] sm:$0xff]
        %v4880 = vld [vmem:[#allocation2 + $0x152] sm:$0xff]
        %v4881 = vld [vmem:[#allocation2 + $0x15a] sm:$0xff]
        %v4882 = vld [vmem:[#allocation2 + $0x16a] sm:$0xff]
        %v4883 = vld [vmem:[#allocation2 + $0x172] sm:$0xff]
        %v4884 = vld [vmem:[%s3 + $0x80] sm:$0xff]
        %v4885 = vld [vmem:[%s3 + $0x88] sm:$0xff]
        %v4886 = vld [vmem:[%s3 + $0x90] sm:$0xff]
        %v4887 = vld [vmem:[%s3 + $0x98] sm:$0xff]
        %v4888 = vld [vmem:[%s3 + $0xa0] sm:$0xff]
        %v4889 = vld [vmem:[%s3 + $0xa8] sm:$0xff]
        %v4890 = vld [vmem:[%s3 + $0xb0] sm:$0xff]
        %v4891 = vld [vmem:[%s3 + $0xb8] sm:$0xff]
        %v4893 = vsel %vm417, %v4852, 0
        %v4896 = vsel %vm417, %v4853, 0
        %v4899 = vsel %vm417, %v4854, 0
        %v4902 = vsel %vm417, %v4855, 0
        %v4905 = vsel %vm417, %v4856, 0
        %v4908 = vsel %vm417, %v4857, 0
        %v4911 = vsel %vm417, %v4858, 0
        %v4914 = vsel %vm417, %v4859, 0
        %v4917 = vsel %vm417, %v4860, 0
        %v4920 = vsel %vm417, %v4861, 0
        %v4923 = vsel %vm417, %v4862, 0
        %v4926 = vsel %vm417, %v4863, 0
        %v4929 = vsel %vm417, %v4864, 0
        %v4932 = vsel %vm417, %v4865, 0
        %v4935 = vsel %vm417, %v4866, 0
        %v4938 = vsel %vm417, %v4867, 0
        %v4941 = vsel %vm417, %v4868, 0
        %v4944 = vsel %vm417, %v4869, 0
        %v4947 = vsel %vm417, %v4870, 0
        %v4950 = vsel %vm417, %v4871, 0
        %v4953 = vsel %vm417, %v4872, 0
        %v4956 = vsel %vm417, %v4873, 0
        %v4959 = vsel %vm417, %v4874, 0
        %v4962 = vsel %vm417, %v4875, 0
        %v4965 = vsel %vm417, %v4876, 0
        %v4968 = vsel %vm417, %v4877, 0
        %v4971 = vsel %vm417, %v4878, 0
        %v4974 = vsel %vm417, %v4879, 0
        %v4977 = vsel %vm417, %v4880, 0
        %v4980 = vsel %vm417, %v4881, 0
        %v4983 = vsel %vm417, %v4882, 0
        %v4986 = vsel %vm417, %v4883, 0
        %4988 = vmatprep.subr.mxu0 0.0
        %4989 = vmatpush1.msra.mxu0 0.0
        %4990 = vmatprep.subr.mxu0 0.0
        %4991 = vmatpush1.msra.mxu0 0.0
        %4992 = vmatprep.subr.mxu0 0.0
        %4993 = vmatpush1.msra.mxu0 0.0
        %4994 = vmatprep.subr.mxu0 0.0
        %4995 = vmatpush1.msra.mxu0 0.0
        %4996 = vmatprep.subr.mxu0 0.0
        %4997 = vmatpush1.msra.mxu0 0.0
        %4998 = vmatprep.subr.mxu0 0.0
        %4999 = vmatpush1.msra.mxu0 0.0
        %5000 = vmatprep.subr.mxu0 0.0
        %5001 = vmatpush1.msra.mxu0 0.0
        %5002 = vmatprep.subr.mxu0 0.0
        %5003 = vmatpush1.msra.mxu0 0.0
        %5004 = vmatprep.subr.mxu0 0.0
        %5005 = vmatpush1.msra.mxu0 %v4891
        %5006 = vmatprep.subr.mxu0 0.0
        %5007 = vmatpush1.msra.mxu0 %v4890
        %5008 = vmatprep.subr.mxu0 0.0
        %5009 = vmatpush1.msra.mxu0 %v4889
        %5010 = vmatprep.subr.mxu0 0.0
        %5011 = vmatpush1.msra.mxu0 %v4888
        %5012 = vmatprep.subr.mxu0 0.0
        %5013 = vmatpush1.msra.mxu0 %v4887
        %5014 = vmatprep.subr.mxu0 0.0
        %5015 = vmatpush1.msra.mxu0 %v4886
        %5016 = vmatprep.subr.mxu0 0.0
        %5017 = vmatpush1.msra.mxu0 %v4885
        %5018 = vmatprep.subr.mxu0 0.0
        %5019 = vmatpush1.msra.mxu0 %v4884
        %5020 = vmatprep.subr.mxu0 0.0
        %5021 = vmatpush2.msra.mxu0 0.0
        %5022 = vmatprep.subr.mxu0 0.0
        %5023 = vmatpush2.msra.mxu0 0.0
        %5024 = vmatprep.subr.mxu0 0.0
        %5025 = vmatpush2.msra.mxu0 0.0
        %5026 = vmatprep.subr.mxu0 0.0
        %5027 = vmatpush2.msra.mxu0 0.0
        %5028 = vmatprep.subr.mxu0 0.0
        %5029 = vmatpush2.msra.mxu0 0.0
        %5030 = vmatprep.subr.mxu0 0.0
        %5031 = vmatpush2.msra.mxu0 0.0
        %5032 = vmatprep.subr.mxu0 0.0
        %5033 = vmatpush2.msra.mxu0 0.0
        %5034 = vmatprep.subr.mxu0 0.0
        %5035 = vmatpush2.msra.mxu0 0.0
        %5036 = vmatprep.subr.mxu0 0.0
        %5037 = vmatpush2.msra.mxu0 0.0
        %5038 = vmatprep.subr.mxu0 0.0
        %5039 = vmatpush2.msra.mxu0 0.0
        %5040 = vmatprep.subr.mxu0 0.0
        %5041 = vmatpush2.msra.mxu0 0.0
        %5042 = vmatprep.subr.mxu0 0.0
        %5043 = vmatpush2.msra.mxu0 0.0
        %5044 = vmatprep.subr.mxu0 0.0
        %5045 = vmatpush2.msra.mxu0 0.0
        %5046 = vmatprep.subr.mxu0 0.0
        %5047 = vmatpush2.msra.mxu0 0.0
        %5048 = vmatprep.subr.mxu0 0.0
        %5049 = vmatpush2.msra.mxu0 0.0
        %5050 = vmatprep.subr.mxu0 0.0
        %5051 = vmatpush2.msra.mxu0 0.0
        %5052 = vmatprep.mubr.f32.mxu0 0.0
        %5053 = vmatmul.mubr.f32.gmra.mxu0 %v4893
        %v5054 = vpop.f32.mrf.mxu0
        %v5055 = vadd.f32 0.0, %v5054
        %v5056 = vpop.f32.mrf.mxu0
        %5057 = vmatprep.mubr.f32.mxu0 0.0
        %5058 = vmatmul.mubr.f32.gmra.mxu0 %v4896
        %v5059 = vpop.f32.mrf.mxu0
        %v5060 = vadd.f32 0.0, %v5059
        %v5061 = vpop.f32.mrf.mxu0
        %5062 = vmatprep.mubr.f32.mxu0 0.0
        %5063 = vmatmul.mubr.f32.gmra.mxu0 %v4899
        %v5064 = vpop.f32.mrf.mxu0
        %v5065 = vadd.f32 0.0, %v5064
        %v5066 = vpop.f32.mrf.mxu0
        %5067 = vmatprep.mubr.f32.mxu0 0.0
        %5068 = vmatmul.mubr.f32.gmra.mxu0 %v4902
        %v5069 = vpop.f32.mrf.mxu0
        %v5070 = vadd.f32 0.0, %v5069
        %v5071 = vpop.f32.mrf.mxu0
        %5072 = vmatprep.mubr.f32.mxu0 0.0
        %5073 = vmatmul.mubr.f32.gmra.mxu0 %v4905
        %v5074 = vpop.f32.mrf.mxu0
        %v5075 = vadd.f32 0.0, %v5074
        %v5076 = vpop.f32.mrf.mxu0
        %5077 = vmatprep.mubr.f32.mxu0 0.0
        %5078 = vmatmul.mubr.f32.gmra.mxu0 %v4908
        %v5079 = vpop.f32.mrf.mxu0
        %v5080 = vadd.f32 0.0, %v5079
        %v5081 = vpop.f32.mrf.mxu0
        %5082 = vmatprep.mubr.f32.mxu0 0.0
        %5083 = vmatmul.mubr.f32.gmra.mxu0 %v4911
        %v5084 = vpop.f32.mrf.mxu0
        %v5085 = vadd.f32 0.0, %v5084
        %v5086 = vpop.f32.mrf.mxu0
        %5087 = vmatprep.mubr.f32.mxu0 0.0
        %5088 = vmatmul.mubr.f32.gmra.mxu0 %v4914
        %v5089 = vpop.f32.mrf.mxu0
        %v5090 = vadd.f32 0.0, %v5089
        %v5091 = vpop.f32.mrf.mxu0
        %5092 = vmatprep.mubr.f32.mxu0 0.0
        %5093 = vmatmul.mubr.f32.gmra.mxu0 %v4917
        %v5094 = vpop.f32.mrf.mxu0
        %v5095 = vadd.f32 0.0, %v5094
        %v5096 = vpop.f32.mrf.mxu0
        %5097 = vmatprep.mubr.f32.mxu0 0.0
        %5098 = vmatmul.mubr.f32.gmra.mxu0 %v4920
        %v5099 = vpop.f32.mrf.mxu0
        %v5100 = vadd.f32 0.0, %v5099
        %v5101 = vpop.f32.mrf.mxu0
        %5102 = vmatprep.mubr.f32.mxu0 0.0
        %5103 = vmatmul.mubr.f32.gmra.mxu0 %v4923
        %v5104 = vpop.f32.mrf.mxu0
        %v5105 = vadd.f32 0.0, %v5104
        %v5106 = vpop.f32.mrf.mxu0
        %5107 = vmatprep.mubr.f32.mxu0 0.0
        %5108 = vmatmul.mubr.f32.gmra.mxu0 %v4926
        %v5109 = vpop.f32.mrf.mxu0
        %v5110 = vadd.f32 0.0, %v5109
        %v5111 = vpop.f32.mrf.mxu0
        %5112 = vmatprep.mubr.f32.mxu0 0.0
        %5113 = vmatmul.mubr.f32.gmra.mxu0 %v4929
        %v5114 = vpop.f32.mrf.mxu0
        %v5115 = vadd.f32 0.0, %v5114
        %v5116 = vpop.f32.mrf.mxu0
        %5117 = vmatprep.mubr.f32.mxu0 0.0
        %5118 = vmatmul.mubr.f32.gmra.mxu0 %v4932
        %v5119 = vpop.f32.mrf.mxu0
        %v5120 = vadd.f32 0.0, %v5119
        %v5121 = vpop.f32.mrf.mxu0
        %5122 = vmatprep.mubr.f32.mxu0 0.0
        %5123 = vmatmul.mubr.f32.gmra.mxu0 %v4935
        %v5124 = vpop.f32.mrf.mxu0
        %v5125 = vadd.f32 0.0, %v5124
        %v5126 = vpop.f32.mrf.mxu0
        %5127 = vmatprep.mubr.f32.mxu0 0.0
        %5128 = vmatmul.mubr.f32.gmra.mxu0 %v4938
        %v5129 = vpop.f32.mrf.mxu0
        %v5130 = vadd.f32 0.0, %v5129
        %v5131 = vpop.f32.mrf.mxu0
        %5132 = vmatprep.mubr.f32.mxu0 0.0
        %5133 = vmatmul.mubr.f32.gmra.mxu0 %v4941
        %v5134 = vpop.f32.mrf.mxu0
        %v5135 = vadd.f32 0.0, %v5134
        %v5136 = vpop.f32.mrf.mxu0
        %5137 = vmatprep.mubr.f32.mxu0 0.0
        %5138 = vmatmul.mubr.f32.gmra.mxu0 %v4944
        %v5139 = vpop.f32.mrf.mxu0
        %v5140 = vadd.f32 0.0, %v5139
        %v5141 = vpop.f32.mrf.mxu0
        %5142 = vmatprep.mubr.f32.mxu0 0.0
        %5143 = vmatmul.mubr.f32.gmra.mxu0 %v4947
        %v5144 = vpop.f32.mrf.mxu0
        %v5145 = vadd.f32 0.0, %v5144
        %v5146 = vpop.f32.mrf.mxu0
        %5147 = vmatprep.mubr.f32.mxu0 0.0
        %5148 = vmatmul.mubr.f32.gmra.mxu0 %v4950
        %v5149 = vpop.f32.mrf.mxu0
        %v5150 = vadd.f32 0.0, %v5149
        %v5151 = vpop.f32.mrf.mxu0
        %5152 = vmatprep.mubr.f32.mxu0 0.0
        %5153 = vmatmul.mubr.f32.gmra.mxu0 %v4953
        %v5154 = vpop.f32.mrf.mxu0
        %v5155 = vadd.f32 0.0, %v5154
        %v5156 = vpop.f32.mrf.mxu0
        %5157 = vmatprep.mubr.f32.mxu0 0.0
        %5158 = vmatmul.mubr.f32.gmra.mxu0 %v4956
        %v5159 = vpop.f32.mrf.mxu0
        %v5160 = vadd.f32 0.0, %v5159
        %v5161 = vpop.f32.mrf.mxu0
        %5162 = vmatprep.mubr.f32.mxu0 0.0
        %5163 = vmatmul.mubr.f32.gmra.mxu0 %v4959
        %v5164 = vpop.f32.mrf.mxu0
        %v5165 = vadd.f32 0.0, %v5164
        %v5166 = vpop.f32.mrf.mxu0
        %5167 = vmatprep.mubr.f32.mxu0 0.0
        %5168 = vmatmul.mubr.f32.gmra.mxu0 %v4962
        %v5169 = vpop.f32.mrf.mxu0
        %v5170 = vadd.f32 0.0, %v5169
        %v5171 = vpop.f32.mrf.mxu0
        %5172 = vmatprep.mubr.f32.mxu0 0.0
        %5173 = vmatmul.mubr.f32.gmra.mxu0 %v4965
        %v5174 = vpop.f32.mrf.mxu0
        %v5175 = vadd.f32 0.0, %v5174
        %v5176 = vpop.f32.mrf.mxu0
        %5177 = vmatprep.mubr.f32.mxu0 0.0
        %5178 = vmatmul.mubr.f32.gmra.mxu0 %v4968
        %v5179 = vpop.f32.mrf.mxu0
        %v5180 = vadd.f32 0.0, %v5179
        %v5181 = vpop.f32.mrf.mxu0
        %5182 = vmatprep.mubr.f32.mxu0 0.0
        %5183 = vmatmul.mubr.f32.gmra.mxu0 %v4971
        %v5184 = vpop.f32.mrf.mxu0
        %v5185 = vadd.f32 0.0, %v5184
        %v5186 = vpop.f32.mrf.mxu0
        %5187 = vmatprep.mubr.f32.mxu0 0.0
        %5188 = vmatmul.mubr.f32.gmra.mxu0 %v4974
        %v5189 = vpop.f32.mrf.mxu0
        %v5190 = vadd.f32 0.0, %v5189
        %v5191 = vpop.f32.mrf.mxu0
        %5192 = vmatprep.mubr.f32.mxu0 0.0
        %5193 = vmatmul.mubr.f32.gmra.mxu0 %v4977
        %v5194 = vpop.f32.mrf.mxu0
        %v5195 = vadd.f32 0.0, %v5194
        %v5196 = vpop.f32.mrf.mxu0
        %5197 = vmatprep.mubr.f32.mxu0 0.0
        %5198 = vmatmul.mubr.f32.gmra.mxu0 %v4980
        %v5199 = vpop.f32.mrf.mxu0
        %v5200 = vadd.f32 0.0, %v5199
        %v5201 = vpop.f32.mrf.mxu0
        %5202 = vmatprep.mubr.f32.mxu0 0.0
        %5203 = vmatmul.mubr.f32.gmra.mxu0 %v4983
        %v5204 = vpop.f32.mrf.mxu0
        %v5205 = vadd.f32 0.0, %v5204
        %v5206 = vpop.f32.mrf.mxu0
        %5207 = vmatprep.mubr.f32.mxu0 0.0
        %5208 = vmatmul.mubr.f32.gmra.mxu0 %v4986
        %v5209 = vpop.f32.mrf.mxu0
        %v5210 = vadd.f32 0.0, %v5209
        %v5211 = vpop.f32.mrf.mxu0
        %5212 = vdwg.mxu0
        %v5213 = vadd.f32 %v4694, %v5055
        %v5214 = vadd.f32 %v4699, %v5060
        %v5215 = vadd.f32 %v4704, %v5065
        %v5216 = vadd.f32 %v4709, %v5070
        %v5217 = vadd.f32 %v4714, %v5075
        %v5218 = vadd.f32 %v4719, %v5080
        %v5219 = vadd.f32 %v4724, %v5085
        %v5220 = vadd.f32 %v4729, %v5090
        %v5221 = vadd.f32 %v4734, %v5095
        %v5222 = vadd.f32 %v4739, %v5100
        %v5223 = vadd.f32 %v4744, %v5105
        %v5224 = vadd.f32 %v4749, %v5110
        %v5225 = vadd.f32 %v4754, %v5115
        %v5226 = vadd.f32 %v4759, %v5120
        %v5227 = vadd.f32 %v4764, %v5125
        %v5228 = vadd.f32 %v4769, %v5130
        %v5229 = vadd.f32 %v4774, %v5135
        %v5230 = vadd.f32 %v4779, %v5140
        %v5231 = vadd.f32 %v4784, %v5145
        %v5232 = vadd.f32 %v4789, %v5150
        %v5233 = vadd.f32 %v4794, %v5155
        %v5234 = vadd.f32 %v4799, %v5160
        %v5235 = vadd.f32 %v4804, %v5165
        %v5236 = vadd.f32 %v4809, %v5170
        %v5237 = vadd.f32 %v4814, %v5175
        %v5238 = vadd.f32 %v4819, %v5180
        %v5239 = vadd.f32 %v4824, %v5185
        %v5240 = vadd.f32 %v4829, %v5190
        %v5241 = vadd.f32 %v4834, %v5195
        %v5242 = vadd.f32 %v4839, %v5200
        %v5243 = vadd.f32 %v4844, %v5205
        %v5244 = vadd.f32 %v4849, %v5210
        %v5245 = vld [vmem:[%s520] sm:$0xff]
        %v5246 = vld [vmem:[%s520 + $0x8] sm:$0xff]
        %v5247 = vld [vmem:[%s520 + $0x18] sm:$0xff]
        %v5248 = vld [vmem:[%s520 + $0x20] sm:$0xff]
        %v5249 = vld [vmem:[%s520 + $0x30] sm:$0xff]
        %v5250 = vld [vmem:[%s520 + $0x38] sm:$0xff]
        %v5251 = vld [vmem:[%s520 + $0x48] sm:$0xff]
        %v5252 = vld [vmem:[%s520 + $0x50] sm:$0xff]
        %v5253 = vld [vmem:[%s520 + $0x60] sm:$0xff]
        %v5254 = vld [vmem:[%s520 + $0x68] sm:$0xff]
        %v5255 = vld [vmem:[%s520 + $0x78] sm:$0xff]
        %v5256 = vld [vmem:[%s520 + $0x80] sm:$0xff]
        %v5257 = vld [vmem:[%s520 + $0x90] sm:$0xff]
        %v5258 = vld [vmem:[%s520 + $0x98] sm:$0xff]
        %v5259 = vld [vmem:[%s520 + $0xa8] sm:$0xff]
        %v5260 = vld [vmem:[%s520 + $0xb0] sm:$0xff]
        %v5261 = vld [vmem:[%s520 + $0xc0] sm:$0xff]
        %v5262 = vld [vmem:[%s520 + $0xc8] sm:$0xff]
        %v5263 = vld [vmem:[%s520 + $0xd8] sm:$0xff]
        %v5264 = vld [vmem:[%s520 + $0xe0] sm:$0xff]
        %v5265 = vld [vmem:[%s520 + $0xf0] sm:$0xff]
        %v5266 = vld [vmem:[%s520 + $0xf8] sm:$0xff]
        %v5267 = vld [vmem:[%s520 + $0x108] sm:$0xff]
        %v5268 = vld [vmem:[%s520 + $0x110] sm:$0xff]
        %v5269 = vld [vmem:[%s520 + $0x120] sm:$0xff]
        %v5270 = vld [vmem:[%s520 + $0x128] sm:$0xff]
        %v5271 = vld [vmem:[%s520 + $0x138] sm:$0xff]
        %v5272 = vld [vmem:[%s520 + $0x140] sm:$0xff]
        %v5273 = vld [vmem:[%s520 + $0x150] sm:$0xff]
        %v5274 = vld [vmem:[%s520 + $0x158] sm:$0xff]
        %v5275 = vld [vmem:[%s520 + $0x168] sm:$0xff]
        %v5276 = vld [vmem:[%s520 + $0x170] sm:$0xff]
        %v5277 = vld [vmem:[%s3 + $0xc0] sm:$0xff]
        %v5278 = vld [vmem:[%s3 + $0xc8] sm:$0xff]
        %v5279 = vld [vmem:[%s3 + $0xd0] sm:$0xff]
        %v5280 = vld [vmem:[%s3 + $0xd8] sm:$0xff]
        %v5281 = vld [vmem:[%s3 + $0xe0] sm:$0xff]
        %v5282 = vld [vmem:[%s3 + $0xe8] sm:$0xff]
        %v5283 = vld [vmem:[%s3 + $0xf0] sm:$0xff]
        %v5284 = vld [vmem:[%s3 + $0xf8] sm:$0xff]
        %v5286 = vsel %vm417, %v5245, 0
        %v5289 = vsel %vm417, %v5246, 0
        %v5292 = vsel %vm417, %v5247, 0
        %v5295 = vsel %vm417, %v5248, 0
        %v5298 = vsel %vm417, %v5249, 0
        %v5301 = vsel %vm417, %v5250, 0
        %v5304 = vsel %vm417, %v5251, 0
        %v5307 = vsel %vm417, %v5252, 0
        %v5310 = vsel %vm417, %v5253, 0
        %v5313 = vsel %vm417, %v5254, 0
        %v5316 = vsel %vm417, %v5255, 0
        %v5319 = vsel %vm417, %v5256, 0
        %v5322 = vsel %vm417, %v5257, 0
        %v5325 = vsel %vm417, %v5258, 0
        %v5328 = vsel %vm417, %v5259, 0
        %v5331 = vsel %vm417, %v5260, 0
        %v5334 = vsel %vm417, %v5261, 0
        %v5337 = vsel %vm417, %v5262, 0
        %v5340 = vsel %vm417, %v5263, 0
        %v5343 = vsel %vm417, %v5264, 0
        %v5346 = vsel %vm417, %v5265, 0
        %v5349 = vsel %vm417, %v5266, 0
        %v5352 = vsel %vm417, %v5267, 0
        %v5355 = vsel %vm417, %v5268, 0
        %v5358 = vsel %vm417, %v5269, 0
        %v5361 = vsel %vm417, %v5270, 0
        %v5364 = vsel %vm417, %v5271, 0
        %v5367 = vsel %vm417, %v5272, 0
        %v5370 = vsel %vm417, %v5273, 0
        %v5373 = vsel %vm417, %v5274, 0
        %v5376 = vsel %vm417, %v5275, 0
        %v5379 = vsel %vm417, %v5276, 0
        %5381 = vmatprep.subr.mxu0 0.0
        %5382 = vmatpush1.msra.mxu0 0.0
        %5383 = vmatprep.subr.mxu0 0.0
        %5384 = vmatpush1.msra.mxu0 0.0
        %5385 = vmatprep.subr.mxu0 0.0
        %5386 = vmatpush1.msra.mxu0 0.0
        %5387 = vmatprep.subr.mxu0 0.0
        %5388 = vmatpush1.msra.mxu0 0.0
        %5389 = vmatprep.subr.mxu0 0.0
        %5390 = vmatpush1.msra.mxu0 0.0
        %5391 = vmatprep.subr.mxu0 0.0
        %5392 = vmatpush1.msra.mxu0 0.0
        %5393 = vmatprep.subr.mxu0 0.0
        %5394 = vmatpush1.msra.mxu0 0.0
        %5395 = vmatprep.subr.mxu0 0.0
        %5396 = vmatpush1.msra.mxu0 0.0
        %5397 = vmatprep.subr.mxu0 0.0
        %5398 = vmatpush1.msra.mxu0 %v5284
        %5399 = vmatprep.subr.mxu0 0.0
        %5400 = vmatpush1.msra.mxu0 %v5283
        %5401 = vmatprep.subr.mxu0 0.0
        %5402 = vmatpush1.msra.mxu0 %v5282
        %5403 = vmatprep.subr.mxu0 0.0
        %5404 = vmatpush1.msra.mxu0 %v5281
        %5405 = vmatprep.subr.mxu0 0.0
        %5406 = vmatpush1.msra.mxu0 %v5280
        %5407 = vmatprep.subr.mxu0 0.0
        %5408 = vmatpush1.msra.mxu0 %v5279
        %5409 = vmatprep.subr.mxu0 0.0
        %5410 = vmatpush1.msra.mxu0 %v5278
        %5411 = vmatprep.subr.mxu0 0.0
        %5412 = vmatpush1.msra.mxu0 %v5277
        %5413 = vmatprep.subr.mxu0 0.0
        %5414 = vmatpush2.msra.mxu0 0.0
        %5415 = vmatprep.subr.mxu0 0.0
        %5416 = vmatpush2.msra.mxu0 0.0
        %5417 = vmatprep.subr.mxu0 0.0
        %5418 = vmatpush2.msra.mxu0 0.0
        %5419 = vmatprep.subr.mxu0 0.0
        %5420 = vmatpush2.msra.mxu0 0.0
        %5421 = vmatprep.subr.mxu0 0.0
        %5422 = vmatpush2.msra.mxu0 0.0
        %5423 = vmatprep.subr.mxu0 0.0
        %5424 = vmatpush2.msra.mxu0 0.0
        %5425 = vmatprep.subr.mxu0 0.0
        %5426 = vmatpush2.msra.mxu0 0.0
        %5427 = vmatprep.subr.mxu0 0.0
        %5428 = vmatpush2.msra.mxu0 0.0
        %5429 = vmatprep.subr.mxu0 0.0
        %5430 = vmatpush2.msra.mxu0 0.0
        %5431 = vmatprep.subr.mxu0 0.0
        %5432 = vmatpush2.msra.mxu0 0.0
        %5433 = vmatprep.subr.mxu0 0.0
        %5434 = vmatpush2.msra.mxu0 0.0
        %5435 = vmatprep.subr.mxu0 0.0
        %5436 = vmatpush2.msra.mxu0 0.0
        %5437 = vmatprep.subr.mxu0 0.0
        %5438 = vmatpush2.msra.mxu0 0.0
        %5439 = vmatprep.subr.mxu0 0.0
        %5440 = vmatpush2.msra.mxu0 0.0
        %5441 = vmatprep.subr.mxu0 0.0
        %5442 = vmatpush2.msra.mxu0 0.0
        %5443 = vmatprep.subr.mxu0 0.0
        %5444 = vmatpush2.msra.mxu0 0.0
        %5445 = vmatprep.mubr.f32.mxu0 0.0
        %5446 = vmatmul.mubr.f32.gmra.mxu0 %v5286
        %v5447 = vpop.f32.mrf.mxu0
        %v5448 = vadd.f32 0.0, %v5447
        %v5449 = vpop.f32.mrf.mxu0
        %5450 = vmatprep.mubr.f32.mxu0 0.0
        %5451 = vmatmul.mubr.f32.gmra.mxu0 %v5289
        %v5452 = vpop.f32.mrf.mxu0
        %v5453 = vadd.f32 0.0, %v5452
        %v5454 = vpop.f32.mrf.mxu0
        %5455 = vmatprep.mubr.f32.mxu0 0.0
        %5456 = vmatmul.mubr.f32.gmra.mxu0 %v5292
        %v5457 = vpop.f32.mrf.mxu0
        %v5458 = vadd.f32 0.0, %v5457
        %v5459 = vpop.f32.mrf.mxu0
        %5460 = vmatprep.mubr.f32.mxu0 0.0
        %5461 = vmatmul.mubr.f32.gmra.mxu0 %v5295
        %v5462 = vpop.f32.mrf.mxu0
        %v5463 = vadd.f32 0.0, %v5462
        %v5464 = vpop.f32.mrf.mxu0
        %5465 = vmatprep.mubr.f32.mxu0 0.0
        %5466 = vmatmul.mubr.f32.gmra.mxu0 %v5298
        %v5467 = vpop.f32.mrf.mxu0
        %v5468 = vadd.f32 0.0, %v5467
        %v5469 = vpop.f32.mrf.mxu0
        %5470 = vmatprep.mubr.f32.mxu0 0.0
        %5471 = vmatmul.mubr.f32.gmra.mxu0 %v5301
        %v5472 = vpop.f32.mrf.mxu0
        %v5473 = vadd.f32 0.0, %v5472
        %v5474 = vpop.f32.mrf.mxu0
        %5475 = vmatprep.mubr.f32.mxu0 0.0
        %5476 = vmatmul.mubr.f32.gmra.mxu0 %v5304
        %v5477 = vpop.f32.mrf.mxu0
        %v5478 = vadd.f32 0.0, %v5477
        %v5479 = vpop.f32.mrf.mxu0
        %5480 = vmatprep.mubr.f32.mxu0 0.0
        %5481 = vmatmul.mubr.f32.gmra.mxu0 %v5307
        %v5482 = vpop.f32.mrf.mxu0
        %v5483 = vadd.f32 0.0, %v5482
        %v5484 = vpop.f32.mrf.mxu0
        %5485 = vmatprep.mubr.f32.mxu0 0.0
        %5486 = vmatmul.mubr.f32.gmra.mxu0 %v5310
        %v5487 = vpop.f32.mrf.mxu0
        %v5488 = vadd.f32 0.0, %v5487
        %v5489 = vpop.f32.mrf.mxu0
        %5490 = vmatprep.mubr.f32.mxu0 0.0
        %5491 = vmatmul.mubr.f32.gmra.mxu0 %v5313
        %v5492 = vpop.f32.mrf.mxu0
        %v5493 = vadd.f32 0.0, %v5492
        %v5494 = vpop.f32.mrf.mxu0
        %5495 = vmatprep.mubr.f32.mxu0 0.0
        %5496 = vmatmul.mubr.f32.gmra.mxu0 %v5316
        %v5497 = vpop.f32.mrf.mxu0
        %v5498 = vadd.f32 0.0, %v5497
        %v5499 = vpop.f32.mrf.mxu0
        %5500 = vmatprep.mubr.f32.mxu0 0.0
        %5501 = vmatmul.mubr.f32.gmra.mxu0 %v5319
        %v5502 = vpop.f32.mrf.mxu0
        %v5503 = vadd.f32 0.0, %v5502
        %v5504 = vpop.f32.mrf.mxu0
        %5505 = vmatprep.mubr.f32.mxu0 0.0
        %5506 = vmatmul.mubr.f32.gmra.mxu0 %v5322
        %v5507 = vpop.f32.mrf.mxu0
        %v5508 = vadd.f32 0.0, %v5507
        %v5509 = vpop.f32.mrf.mxu0
        %5510 = vmatprep.mubr.f32.mxu0 0.0
        %5511 = vmatmul.mubr.f32.gmra.mxu0 %v5325
        %v5512 = vpop.f32.mrf.mxu0
        %v5513 = vadd.f32 0.0, %v5512
        %v5514 = vpop.f32.mrf.mxu0
        %5515 = vmatprep.mubr.f32.mxu0 0.0
        %5516 = vmatmul.mubr.f32.gmra.mxu0 %v5328
        %v5517 = vpop.f32.mrf.mxu0
        %v5518 = vadd.f32 0.0, %v5517
        %v5519 = vpop.f32.mrf.mxu0
        %5520 = vmatprep.mubr.f32.mxu0 0.0
        %5521 = vmatmul.mubr.f32.gmra.mxu0 %v5331
        %v5522 = vpop.f32.mrf.mxu0
        %v5523 = vadd.f32 0.0, %v5522
        %v5524 = vpop.f32.mrf.mxu0
        %5525 = vmatprep.mubr.f32.mxu0 0.0
        %5526 = vmatmul.mubr.f32.gmra.mxu0 %v5334
        %v5527 = vpop.f32.mrf.mxu0
        %v5528 = vadd.f32 0.0, %v5527
        %v5529 = vpop.f32.mrf.mxu0
        %5530 = vmatprep.mubr.f32.mxu0 0.0
        %5531 = vmatmul.mubr.f32.gmra.mxu0 %v5337
        %v5532 = vpop.f32.mrf.mxu0
        %v5533 = vadd.f32 0.0, %v5532
        %v5534 = vpop.f32.mrf.mxu0
        %5535 = vmatprep.mubr.f32.mxu0 0.0
        %5536 = vmatmul.mubr.f32.gmra.mxu0 %v5340
        %v5537 = vpop.f32.mrf.mxu0
        %v5538 = vadd.f32 0.0, %v5537
        %v5539 = vpop.f32.mrf.mxu0
        %5540 = vmatprep.mubr.f32.mxu0 0.0
        %5541 = vmatmul.mubr.f32.gmra.mxu0 %v5343
        %v5542 = vpop.f32.mrf.mxu0
        %v5543 = vadd.f32 0.0, %v5542
        %v5544 = vpop.f32.mrf.mxu0
        %5545 = vmatprep.mubr.f32.mxu0 0.0
        %5546 = vmatmul.mubr.f32.gmra.mxu0 %v5346
        %v5547 = vpop.f32.mrf.mxu0
        %v5548 = vadd.f32 0.0, %v5547
        %v5549 = vpop.f32.mrf.mxu0
        %5550 = vmatprep.mubr.f32.mxu0 0.0
        %5551 = vmatmul.mubr.f32.gmra.mxu0 %v5349
        %v5552 = vpop.f32.mrf.mxu0
        %v5553 = vadd.f32 0.0, %v5552
        %v5554 = vpop.f32.mrf.mxu0
        %5555 = vmatprep.mubr.f32.mxu0 0.0
        %5556 = vmatmul.mubr.f32.gmra.mxu0 %v5352
        %v5557 = vpop.f32.mrf.mxu0
        %v5558 = vadd.f32 0.0, %v5557
        %v5559 = vpop.f32.mrf.mxu0
        %5560 = vmatprep.mubr.f32.mxu0 0.0
        %5561 = vmatmul.mubr.f32.gmra.mxu0 %v5355
        %v5562 = vpop.f32.mrf.mxu0
        %v5563 = vadd.f32 0.0, %v5562
        %v5564 = vpop.f32.mrf.mxu0
        %5565 = vmatprep.mubr.f32.mxu0 0.0
        %5566 = vmatmul.mubr.f32.gmra.mxu0 %v5358
        %v5567 = vpop.f32.mrf.mxu0
        %v5568 = vadd.f32 0.0, %v5567
        %v5569 = vpop.f32.mrf.mxu0
        %5570 = vmatprep.mubr.f32.mxu0 0.0
        %5571 = vmatmul.mubr.f32.gmra.mxu0 %v5361
        %v5572 = vpop.f32.mrf.mxu0
        %v5573 = vadd.f32 0.0, %v5572
        %v5574 = vpop.f32.mrf.mxu0
        %5575 = vmatprep.mubr.f32.mxu0 0.0
        %5576 = vmatmul.mubr.f32.gmra.mxu0 %v5364
        %v5577 = vpop.f32.mrf.mxu0
        %v5578 = vadd.f32 0.0, %v5577
        %v5579 = vpop.f32.mrf.mxu0
        %5580 = vmatprep.mubr.f32.mxu0 0.0
        %5581 = vmatmul.mubr.f32.gmra.mxu0 %v5367
        %v5582 = vpop.f32.mrf.mxu0
        %v5583 = vadd.f32 0.0, %v5582
        %v5584 = vpop.f32.mrf.mxu0
        %5585 = vmatprep.mubr.f32.mxu0 0.0
        %5586 = vmatmul.mubr.f32.gmra.mxu0 %v5370
        %v5587 = vpop.f32.mrf.mxu0
        %v5588 = vadd.f32 0.0, %v5587
        %v5589 = vpop.f32.mrf.mxu0
        %5590 = vmatprep.mubr.f32.mxu0 0.0
        %5591 = vmatmul.mubr.f32.gmra.mxu0 %v5373
        %v5592 = vpop.f32.mrf.mxu0
        %v5593 = vadd.f32 0.0, %v5592
        %v5594 = vpop.f32.mrf.mxu0
        %5595 = vmatprep.mubr.f32.mxu0 0.0
        %5596 = vmatmul.mubr.f32.gmra.mxu0 %v5376
        %v5597 = vpop.f32.mrf.mxu0
        %v5598 = vadd.f32 0.0, %v5597
        %v5599 = vpop.f32.mrf.mxu0
        %5600 = vmatprep.mubr.f32.mxu0 0.0
        %5601 = vmatmul.mubr.f32.gmra.mxu0 %v5379
        %v5602 = vpop.f32.mrf.mxu0
        %v5603 = vadd.f32 0.0, %v5602
        %v5604 = vpop.f32.mrf.mxu0
        %5605 = vdwg.mxu0
        %v5606 = vadd.f32 %v5213, %v5448
        %v5607 = vadd.f32 %v5214, %v5453
        %v5608 = vadd.f32 %v5215, %v5458
        %v5609 = vadd.f32 %v5216, %v5463
        %v5610 = vadd.f32 %v5217, %v5468
        %v5611 = vadd.f32 %v5218, %v5473
        %v5612 = vadd.f32 %v5219, %v5478
        %v5613 = vadd.f32 %v5220, %v5483
        %v5614 = vadd.f32 %v5221, %v5488
        %v5615 = vadd.f32 %v5222, %v5493
        %v5616 = vadd.f32 %v5223, %v5498
        %v5617 = vadd.f32 %v5224, %v5503
        %v5618 = vadd.f32 %v5225, %v5508
        %v5619 = vadd.f32 %v5226, %v5513
        %v5620 = vadd.f32 %v5227, %v5518
        %v5621 = vadd.f32 %v5228, %v5523
        %v5622 = vadd.f32 %v5229, %v5528
        %v5623 = vadd.f32 %v5230, %v5533
        %v5624 = vadd.f32 %v5231, %v5538
        %v5625 = vadd.f32 %v5232, %v5543
        %v5626 = vadd.f32 %v5233, %v5548
        %v5627 = vadd.f32 %v5234, %v5553
        %v5628 = vadd.f32 %v5235, %v5558
        %v5629 = vadd.f32 %v5236, %v5563
        %v5630 = vadd.f32 %v5237, %v5568
        %v5631 = vadd.f32 %v5238, %v5573
        %v5632 = vadd.f32 %v5239, %v5578
        %v5633 = vadd.f32 %v5240, %v5583
        %v5634 = vadd.f32 %v5241, %v5588
        %v5635 = vadd.f32 %v5242, %v5593
        %v5636 = vadd.f32 %v5243, %v5598
        %v5637 = vadd.f32 %v5244, %v5603
        %v5638 = vld [vmem:[%s520 + $0x1] sm:$0xff]
        %v5639 = vld [vmem:[%s520 + $0x9] sm:$0xff]
        %v5640 = vld [vmem:[%s520 + $0x19] sm:$0xff]
        %v5641 = vld [vmem:[%s520 + $0x21] sm:$0xff]
        %v5642 = vld [vmem:[%s520 + $0x31] sm:$0xff]
        %v5643 = vld [vmem:[%s520 + $0x39] sm:$0xff]
        %v5644 = vld [vmem:[%s520 + $0x49] sm:$0xff]
        %v5645 = vld [vmem:[%s520 + $0x51] sm:$0xff]
        %v5646 = vld [vmem:[%s520 + $0x61] sm:$0xff]
        %v5647 = vld [vmem:[%s520 + $0x69] sm:$0xff]
        %v5648 = vld [vmem:[%s520 + $0x79] sm:$0xff]
        %v5649 = vld [vmem:[%s520 + $0x81] sm:$0xff]
        %v5650 = vld [vmem:[%s520 + $0x91] sm:$0xff]
        %v5651 = vld [vmem:[%s520 + $0x99] sm:$0xff]
        %v5652 = vld [vmem:[%s520 + $0xa9] sm:$0xff]
        %v5653 = vld [vmem:[%s520 + $0xb1] sm:$0xff]
        %v5654 = vld [vmem:[%s520 + $0xc1] sm:$0xff]
        %v5655 = vld [vmem:[%s520 + $0xc9] sm:$0xff]
        %v5656 = vld [vmem:[%s520 + $0xd9] sm:$0xff]
        %v5657 = vld [vmem:[%s520 + $0xe1] sm:$0xff]
        %v5658 = vld [vmem:[%s520 + $0xf1] sm:$0xff]
        %v5659 = vld [vmem:[%s520 + $0xf9] sm:$0xff]
        %v5660 = vld [vmem:[%s520 + $0x109] sm:$0xff]
        %v5661 = vld [vmem:[%s520 + $0x111] sm:$0xff]
        %v5662 = vld [vmem:[%s520 + $0x121] sm:$0xff]
        %v5663 = vld [vmem:[%s520 + $0x129] sm:$0xff]
        %v5664 = vld [vmem:[%s520 + $0x139] sm:$0xff]
        %v5665 = vld [vmem:[%s520 + $0x141] sm:$0xff]
        %v5666 = vld [vmem:[%s520 + $0x151] sm:$0xff]
        %v5667 = vld [vmem:[%s520 + $0x159] sm:$0xff]
        %v5668 = vld [vmem:[%s520 + $0x169] sm:$0xff]
        %v5669 = vld [vmem:[%s520 + $0x171] sm:$0xff]
        %v5670 = vld [vmem:[%s3 + $0x100] sm:$0xff]
        %v5671 = vld [vmem:[%s3 + $0x108] sm:$0xff]
        %v5672 = vld [vmem:[%s3 + $0x110] sm:$0xff]
        %v5673 = vld [vmem:[%s3 + $0x118] sm:$0xff]
        %v5674 = vld [vmem:[%s3 + $0x120] sm:$0xff]
        %v5675 = vld [vmem:[%s3 + $0x128] sm:$0xff]
        %v5676 = vld [vmem:[%s3 + $0x130] sm:$0xff]
        %v5677 = vld [vmem:[%s3 + $0x138] sm:$0xff]
        %v5679 = vsel %vm417, %v5638, 0
        %v5682 = vsel %vm417, %v5639, 0
        %v5685 = vsel %vm417, %v5640, 0
        %v5688 = vsel %vm417, %v5641, 0
        %v5691 = vsel %vm417, %v5642, 0
        %v5694 = vsel %vm417, %v5643, 0
        %v5697 = vsel %vm417, %v5644, 0
        %v5700 = vsel %vm417, %v5645, 0
        %v5703 = vsel %vm417, %v5646, 0
        %v5706 = vsel %vm417, %v5647, 0
        %v5709 = vsel %vm417, %v5648, 0
        %v5712 = vsel %vm417, %v5649, 0
        %v5715 = vsel %vm417, %v5650, 0
        %v5718 = vsel %vm417, %v5651, 0
        %v5721 = vsel %vm417, %v5652, 0
        %v5724 = vsel %vm417, %v5653, 0
        %v5727 = vsel %vm417, %v5654, 0
        %v5730 = vsel %vm417, %v5655, 0
        %v5733 = vsel %vm417, %v5656, 0
        %v5736 = vsel %vm417, %v5657, 0
        %v5739 = vsel %vm417, %v5658, 0
        %v5742 = vsel %vm417, %v5659, 0
        %v5745 = vsel %vm417, %v5660, 0
        %v5748 = vsel %vm417, %v5661, 0
        %v5751 = vsel %vm417, %v5662, 0
        %v5754 = vsel %vm417, %v5663, 0
        %v5757 = vsel %vm417, %v5664, 0
        %v5760 = vsel %vm417, %v5665, 0
        %v5763 = vsel %vm417, %v5666, 0
        %v5766 = vsel %vm417, %v5667, 0
        %v5769 = vsel %vm417, %v5668, 0
        %v5772 = vsel %vm417, %v5669, 0
        %5774 = vmatprep.subr.mxu0 0.0
        %5775 = vmatpush1.msra.mxu0 0.0
        %5776 = vmatprep.subr.mxu0 0.0
        %5777 = vmatpush1.msra.mxu0 0.0
        %5778 = vmatprep.subr.mxu0 0.0
        %5779 = vmatpush1.msra.mxu0 0.0
        %5780 = vmatprep.subr.mxu0 0.0
        %5781 = vmatpush1.msra.mxu0 0.0
        %5782 = vmatprep.subr.mxu0 0.0
        %5783 = vmatpush1.msra.mxu0 0.0
        %5784 = vmatprep.subr.mxu0 0.0
        %5785 = vmatpush1.msra.mxu0 0.0
        %5786 = vmatprep.subr.mxu0 0.0
        %5787 = vmatpush1.msra.mxu0 0.0
        %5788 = vmatprep.subr.mxu0 0.0
        %5789 = vmatpush1.msra.mxu0 0.0
        %5790 = vmatprep.subr.mxu0 0.0
        %5791 = vmatpush1.msra.mxu0 %v5677
        %5792 = vmatprep.subr.mxu0 0.0
        %5793 = vmatpush1.msra.mxu0 %v5676
        %5794 = vmatprep.subr.mxu0 0.0
        %5795 = vmatpush1.msra.mxu0 %v5675
        %5796 = vmatprep.subr.mxu0 0.0
        %5797 = vmatpush1.msra.mxu0 %v5674
        %5798 = vmatprep.subr.mxu0 0.0
        %5799 = vmatpush1.msra.mxu0 %v5673
        %5800 = vmatprep.subr.mxu0 0.0
        %5801 = vmatpush1.msra.mxu0 %v5672
        %5802 = vmatprep.subr.mxu0 0.0
        %5803 = vmatpush1.msra.mxu0 %v5671
        %5804 = vmatprep.subr.mxu0 0.0
        %5805 = vmatpush1.msra.mxu0 %v5670
        %5806 = vmatprep.subr.mxu0 0.0
        %5807 = vmatpush2.msra.mxu0 0.0
        %5808 = vmatprep.subr.mxu0 0.0
        %5809 = vmatpush2.msra.mxu0 0.0
        %5810 = vmatprep.subr.mxu0 0.0
        %5811 = vmatpush2.msra.mxu0 0.0
        %5812 = vmatprep.subr.mxu0 0.0
        %5813 = vmatpush2.msra.mxu0 0.0
        %5814 = vmatprep.subr.mxu0 0.0
        %5815 = vmatpush2.msra.mxu0 0.0
        %5816 = vmatprep.subr.mxu0 0.0
        %5817 = vmatpush2.msra.mxu0 0.0
        %5818 = vmatprep.subr.mxu0 0.0
        %5819 = vmatpush2.msra.mxu0 0.0
        %5820 = vmatprep.subr.mxu0 0.0
        %5821 = vmatpush2.msra.mxu0 0.0
        %5822 = vmatprep.subr.mxu0 0.0
        %5823 = vmatpush2.msra.mxu0 0.0
        %5824 = vmatprep.subr.mxu0 0.0
        %5825 = vmatpush2.msra.mxu0 0.0
        %5826 = vmatprep.subr.mxu0 0.0
        %5827 = vmatpush2.msra.mxu0 0.0
        %5828 = vmatprep.subr.mxu0 0.0
        %5829 = vmatpush2.msra.mxu0 0.0
        %5830 = vmatprep.subr.mxu0 0.0
        %5831 = vmatpush2.msra.mxu0 0.0
        %5832 = vmatprep.subr.mxu0 0.0
        %5833 = vmatpush2.msra.mxu0 0.0
        %5834 = vmatprep.subr.mxu0 0.0
        %5835 = vmatpush2.msra.mxu0 0.0
        %5836 = vmatprep.subr.mxu0 0.0
        %5837 = vmatpush2.msra.mxu0 0.0
        %5838 = vmatprep.mubr.f32.mxu0 0.0
        %5839 = vmatmul.mubr.f32.gmra.mxu0 %v5679
        %v5840 = vpop.f32.mrf.mxu0
        %v5841 = vadd.f32 0.0, %v5840
        %v5842 = vpop.f32.mrf.mxu0
        %5843 = vmatprep.mubr.f32.mxu0 0.0
        %5844 = vmatmul.mubr.f32.gmra.mxu0 %v5682
        %v5845 = vpop.f32.mrf.mxu0
        %v5846 = vadd.f32 0.0, %v5845
        %v5847 = vpop.f32.mrf.mxu0
        %5848 = vmatprep.mubr.f32.mxu0 0.0
        %5849 = vmatmul.mubr.f32.gmra.mxu0 %v5685
        %v5850 = vpop.f32.mrf.mxu0
        %v5851 = vadd.f32 0.0, %v5850
        %v5852 = vpop.f32.mrf.mxu0
        %5853 = vmatprep.mubr.f32.mxu0 0.0
        %5854 = vmatmul.mubr.f32.gmra.mxu0 %v5688
        %v5855 = vpop.f32.mrf.mxu0
        %v5856 = vadd.f32 0.0, %v5855
        %v5857 = vpop.f32.mrf.mxu0
        %5858 = vmatprep.mubr.f32.mxu0 0.0
        %5859 = vmatmul.mubr.f32.gmra.mxu0 %v5691
        %v5860 = vpop.f32.mrf.mxu0
        %v5861 = vadd.f32 0.0, %v5860
        %v5862 = vpop.f32.mrf.mxu0
        %5863 = vmatprep.mubr.f32.mxu0 0.0
        %5864 = vmatmul.mubr.f32.gmra.mxu0 %v5694
        %v5865 = vpop.f32.mrf.mxu0
        %v5866 = vadd.f32 0.0, %v5865
        %v5867 = vpop.f32.mrf.mxu0
        %5868 = vmatprep.mubr.f32.mxu0 0.0
        %5869 = vmatmul.mubr.f32.gmra.mxu0 %v5697
        %v5870 = vpop.f32.mrf.mxu0
        %v5871 = vadd.f32 0.0, %v5870
        %v5872 = vpop.f32.mrf.mxu0
        %5873 = vmatprep.mubr.f32.mxu0 0.0
        %5874 = vmatmul.mubr.f32.gmra.mxu0 %v5700
        %v5875 = vpop.f32.mrf.mxu0
        %v5876 = vadd.f32 0.0, %v5875
        %v5877 = vpop.f32.mrf.mxu0
        %5878 = vmatprep.mubr.f32.mxu0 0.0
        %5879 = vmatmul.mubr.f32.gmra.mxu0 %v5703
        %v5880 = vpop.f32.mrf.mxu0
        %v5881 = vadd.f32 0.0, %v5880
        %v5882 = vpop.f32.mrf.mxu0
        %5883 = vmatprep.mubr.f32.mxu0 0.0
        %5884 = vmatmul.mubr.f32.gmra.mxu0 %v5706
        %v5885 = vpop.f32.mrf.mxu0
        %v5886 = vadd.f32 0.0, %v5885
        %v5887 = vpop.f32.mrf.mxu0
        %5888 = vmatprep.mubr.f32.mxu0 0.0
        %5889 = vmatmul.mubr.f32.gmra.mxu0 %v5709
        %v5890 = vpop.f32.mrf.mxu0
        %v5891 = vadd.f32 0.0, %v5890
        %v5892 = vpop.f32.mrf.mxu0
        %5893 = vmatprep.mubr.f32.mxu0 0.0
        %5894 = vmatmul.mubr.f32.gmra.mxu0 %v5712
        %v5895 = vpop.f32.mrf.mxu0
        %v5896 = vadd.f32 0.0, %v5895
        %v5897 = vpop.f32.mrf.mxu0
        %5898 = vmatprep.mubr.f32.mxu0 0.0
        %5899 = vmatmul.mubr.f32.gmra.mxu0 %v5715
        %v5900 = vpop.f32.mrf.mxu0
        %v5901 = vadd.f32 0.0, %v5900
        %v5902 = vpop.f32.mrf.mxu0
        %5903 = vmatprep.mubr.f32.mxu0 0.0
        %5904 = vmatmul.mubr.f32.gmra.mxu0 %v5718
        %v5905 = vpop.f32.mrf.mxu0
        %v5906 = vadd.f32 0.0, %v5905
        %v5907 = vpop.f32.mrf.mxu0
        %5908 = vmatprep.mubr.f32.mxu0 0.0
        %5909 = vmatmul.mubr.f32.gmra.mxu0 %v5721
        %v5910 = vpop.f32.mrf.mxu0
        %v5911 = vadd.f32 0.0, %v5910
        %v5912 = vpop.f32.mrf.mxu0
        %5913 = vmatprep.mubr.f32.mxu0 0.0
        %5914 = vmatmul.mubr.f32.gmra.mxu0 %v5724
        %v5915 = vpop.f32.mrf.mxu0
        %v5916 = vadd.f32 0.0, %v5915
        %v5917 = vpop.f32.mrf.mxu0
        %5918 = vmatprep.mubr.f32.mxu0 0.0
        %5919 = vmatmul.mubr.f32.gmra.mxu0 %v5727
        %v5920 = vpop.f32.mrf.mxu0
        %v5921 = vadd.f32 0.0, %v5920
        %v5922 = vpop.f32.mrf.mxu0
        %5923 = vmatprep.mubr.f32.mxu0 0.0
        %5924 = vmatmul.mubr.f32.gmra.mxu0 %v5730
        %v5925 = vpop.f32.mrf.mxu0
        %v5926 = vadd.f32 0.0, %v5925
        %v5927 = vpop.f32.mrf.mxu0
        %5928 = vmatprep.mubr.f32.mxu0 0.0
        %5929 = vmatmul.mubr.f32.gmra.mxu0 %v5733
        %v5930 = vpop.f32.mrf.mxu0
        %v5931 = vadd.f32 0.0, %v5930
        %v5932 = vpop.f32.mrf.mxu0
        %5933 = vmatprep.mubr.f32.mxu0 0.0
        %5934 = vmatmul.mubr.f32.gmra.mxu0 %v5736
        %v5935 = vpop.f32.mrf.mxu0
        %v5936 = vadd.f32 0.0, %v5935
        %v5937 = vpop.f32.mrf.mxu0
        %5938 = vmatprep.mubr.f32.mxu0 0.0
        %5939 = vmatmul.mubr.f32.gmra.mxu0 %v5739
        %v5940 = vpop.f32.mrf.mxu0
        %v5941 = vadd.f32 0.0, %v5940
        %v5942 = vpop.f32.mrf.mxu0
        %5943 = vmatprep.mubr.f32.mxu0 0.0
        %5944 = vmatmul.mubr.f32.gmra.mxu0 %v5742
        %v5945 = vpop.f32.mrf.mxu0
        %v5946 = vadd.f32 0.0, %v5945
        %v5947 = vpop.f32.mrf.mxu0
        %5948 = vmatprep.mubr.f32.mxu0 0.0
        %5949 = vmatmul.mubr.f32.gmra.mxu0 %v5745
        %v5950 = vpop.f32.mrf.mxu0
        %v5951 = vadd.f32 0.0, %v5950
        %v5952 = vpop.f32.mrf.mxu0
        %5953 = vmatprep.mubr.f32.mxu0 0.0
        %5954 = vmatmul.mubr.f32.gmra.mxu0 %v5748
        %v5955 = vpop.f32.mrf.mxu0
        %v5956 = vadd.f32 0.0, %v5955
        %v5957 = vpop.f32.mrf.mxu0
        %5958 = vmatprep.mubr.f32.mxu0 0.0
        %5959 = vmatmul.mubr.f32.gmra.mxu0 %v5751
        %v5960 = vpop.f32.mrf.mxu0
        %v5961 = vadd.f32 0.0, %v5960
        %v5962 = vpop.f32.mrf.mxu0
        %5963 = vmatprep.mubr.f32.mxu0 0.0
        %5964 = vmatmul.mubr.f32.gmra.mxu0 %v5754
        %v5965 = vpop.f32.mrf.mxu0
        %v5966 = vadd.f32 0.0, %v5965
        %v5967 = vpop.f32.mrf.mxu0
        %5968 = vmatprep.mubr.f32.mxu0 0.0
        %5969 = vmatmul.mubr.f32.gmra.mxu0 %v5757
        %v5970 = vpop.f32.mrf.mxu0
        %v5971 = vadd.f32 0.0, %v5970
        %v5972 = vpop.f32.mrf.mxu0
        %5973 = vmatprep.mubr.f32.mxu0 0.0
        %5974 = vmatmul.mubr.f32.gmra.mxu0 %v5760
        %v5975 = vpop.f32.mrf.mxu0
        %v5976 = vadd.f32 0.0, %v5975
        %v5977 = vpop.f32.mrf.mxu0
        %5978 = vmatprep.mubr.f32.mxu0 0.0
        %5979 = vmatmul.mubr.f32.gmra.mxu0 %v5763
        %v5980 = vpop.f32.mrf.mxu0
        %v5981 = vadd.f32 0.0, %v5980
        %v5982 = vpop.f32.mrf.mxu0
        %5983 = vmatprep.mubr.f32.mxu0 0.0
        %5984 = vmatmul.mubr.f32.gmra.mxu0 %v5766
        %v5985 = vpop.f32.mrf.mxu0
        %v5986 = vadd.f32 0.0, %v5985
        %v5987 = vpop.f32.mrf.mxu0
        %5988 = vmatprep.mubr.f32.mxu0 0.0
        %5989 = vmatmul.mubr.f32.gmra.mxu0 %v5769
        %v5990 = vpop.f32.mrf.mxu0
        %v5991 = vadd.f32 0.0, %v5990
        %v5992 = vpop.f32.mrf.mxu0
        %5993 = vmatprep.mubr.f32.mxu0 0.0
        %5994 = vmatmul.mubr.f32.gmra.mxu0 %v5772
        %v5995 = vpop.f32.mrf.mxu0
        %v5996 = vadd.f32 0.0, %v5995
        %v5997 = vpop.f32.mrf.mxu0
        %5998 = vdwg.mxu0
        %v5999 = vadd.f32 %v5606, %v5841
        %v6000 = vadd.f32 %v5607, %v5846
        %v6001 = vadd.f32 %v5608, %v5851
        %v6002 = vadd.f32 %v5609, %v5856
        %v6003 = vadd.f32 %v5610, %v5861
        %v6004 = vadd.f32 %v5611, %v5866
        %v6005 = vadd.f32 %v5612, %v5871
        %v6006 = vadd.f32 %v5613, %v5876
        %v6007 = vadd.f32 %v5614, %v5881
        %v6008 = vadd.f32 %v5615, %v5886
        %v6009 = vadd.f32 %v5616, %v5891
        %v6010 = vadd.f32 %v5617, %v5896
        %v6011 = vadd.f32 %v5618, %v5901
        %v6012 = vadd.f32 %v5619, %v5906
        %v6013 = vadd.f32 %v5620, %v5911
        %v6014 = vadd.f32 %v5621, %v5916
        %v6015 = vadd.f32 %v5622, %v5921
        %v6016 = vadd.f32 %v5623, %v5926
        %v6017 = vadd.f32 %v5624, %v5931
        %v6018 = vadd.f32 %v5625, %v5936
        %v6019 = vadd.f32 %v5626, %v5941
        %v6020 = vadd.f32 %v5627, %v5946
        %v6021 = vadd.f32 %v5628, %v5951
        %v6022 = vadd.f32 %v5629, %v5956
        %v6023 = vadd.f32 %v5630, %v5961
        %v6024 = vadd.f32 %v5631, %v5966
        %v6025 = vadd.f32 %v5632, %v5971
        %v6026 = vadd.f32 %v5633, %v5976
        %v6027 = vadd.f32 %v5634, %v5981
        %v6028 = vadd.f32 %v5635, %v5986
        %v6029 = vadd.f32 %v5636, %v5991
        %v6030 = vadd.f32 %v5637, %v5996
        %v6031 = vld [vmem:[%s520 + $0x2] sm:$0xff]
        %v6032 = vld [vmem:[%s520 + $0xa] sm:$0xff]
        %v6033 = vld [vmem:[%s520 + $0x1a] sm:$0xff]
        %v6034 = vld [vmem:[%s520 + $0x22] sm:$0xff]
        %v6035 = vld [vmem:[%s520 + $0x32] sm:$0xff]
        %v6036 = vld [vmem:[%s520 + $0x3a] sm:$0xff]
        %v6037 = vld [vmem:[%s520 + $0x4a] sm:$0xff]
        %v6038 = vld [vmem:[%s520 + $0x52] sm:$0xff]
        %v6039 = vld [vmem:[%s520 + $0x62] sm:$0xff]
        %v6040 = vld [vmem:[%s520 + $0x6a] sm:$0xff]
        %v6041 = vld [vmem:[%s520 + $0x7a] sm:$0xff]
        %v6042 = vld [vmem:[%s520 + $0x82] sm:$0xff]
        %v6043 = vld [vmem:[%s520 + $0x92] sm:$0xff]
        %v6044 = vld [vmem:[%s520 + $0x9a] sm:$0xff]
        %v6045 = vld [vmem:[%s520 + $0xaa] sm:$0xff]
        %v6046 = vld [vmem:[%s520 + $0xb2] sm:$0xff]
        %v6047 = vld [vmem:[%s520 + $0xc2] sm:$0xff]
        %v6048 = vld [vmem:[%s520 + $0xca] sm:$0xff]
        %v6049 = vld [vmem:[%s520 + $0xda] sm:$0xff]
        %v6050 = vld [vmem:[%s520 + $0xe2] sm:$0xff]
        %v6051 = vld [vmem:[%s520 + $0xf2] sm:$0xff]
        %v6052 = vld [vmem:[%s520 + $0xfa] sm:$0xff]
        %v6053 = vld [vmem:[%s520 + $0x10a] sm:$0xff]
        %v6054 = vld [vmem:[%s520 + $0x112] sm:$0xff]
        %v6055 = vld [vmem:[%s520 + $0x122] sm:$0xff]
        %v6056 = vld [vmem:[%s520 + $0x12a] sm:$0xff]
        %v6057 = vld [vmem:[%s520 + $0x13a] sm:$0xff]
        %v6058 = vld [vmem:[%s520 + $0x142] sm:$0xff]
        %v6059 = vld [vmem:[%s520 + $0x152] sm:$0xff]
        %v6060 = vld [vmem:[%s520 + $0x15a] sm:$0xff]
        %v6061 = vld [vmem:[%s520 + $0x16a] sm:$0xff]
        %v6062 = vld [vmem:[%s520 + $0x172] sm:$0xff]
        %v6063 = vld [vmem:[%s3 + $0x140] sm:$0xff]
        %v6064 = vld [vmem:[%s3 + $0x148] sm:$0xff]
        %v6065 = vld [vmem:[%s3 + $0x150] sm:$0xff]
        %v6066 = vld [vmem:[%s3 + $0x158] sm:$0xff]
        %v6067 = vld [vmem:[%s3 + $0x160] sm:$0xff]
        %v6068 = vld [vmem:[%s3 + $0x168] sm:$0xff]
        %v6069 = vld [vmem:[%s3 + $0x170] sm:$0xff]
        %v6070 = vld [vmem:[%s3 + $0x178] sm:$0xff]
        %v6072 = vsel %vm417, %v6031, 0
        %v6075 = vsel %vm417, %v6032, 0
        %v6078 = vsel %vm417, %v6033, 0
        %v6081 = vsel %vm417, %v6034, 0
        %v6084 = vsel %vm417, %v6035, 0
        %v6087 = vsel %vm417, %v6036, 0
        %v6090 = vsel %vm417, %v6037, 0
        %v6093 = vsel %vm417, %v6038, 0
        %v6096 = vsel %vm417, %v6039, 0
        %v6099 = vsel %vm417, %v6040, 0
        %v6102 = vsel %vm417, %v6041, 0
        %v6105 = vsel %vm417, %v6042, 0
        %v6108 = vsel %vm417, %v6043, 0
        %v6111 = vsel %vm417, %v6044, 0
        %v6114 = vsel %vm417, %v6045, 0
        %v6117 = vsel %vm417, %v6046, 0
        %v6120 = vsel %vm417, %v6047, 0
        %v6123 = vsel %vm417, %v6048, 0
        %v6126 = vsel %vm417, %v6049, 0
        %v6129 = vsel %vm417, %v6050, 0
        %v6132 = vsel %vm417, %v6051, 0
        %v6135 = vsel %vm417, %v6052, 0
        %v6138 = vsel %vm417, %v6053, 0
        %v6141 = vsel %vm417, %v6054, 0
        %v6144 = vsel %vm417, %v6055, 0
        %v6147 = vsel %vm417, %v6056, 0
        %v6150 = vsel %vm417, %v6057, 0
        %v6153 = vsel %vm417, %v6058, 0
        %v6156 = vsel %vm417, %v6059, 0
        %v6159 = vsel %vm417, %v6060, 0
        %v6162 = vsel %vm417, %v6061, 0
        %v6165 = vsel %vm417, %v6062, 0
        %6167 = vmatprep.subr.mxu0 0.0
        %6168 = vmatpush1.msra.mxu0 0.0
        %6169 = vmatprep.subr.mxu0 0.0
        %6170 = vmatpush1.msra.mxu0 0.0
        %6171 = vmatprep.subr.mxu0 0.0
        %6172 = vmatpush1.msra.mxu0 0.0
        %6173 = vmatprep.subr.mxu0 0.0
        %6174 = vmatpush1.msra.mxu0 0.0
        %6175 = vmatprep.subr.mxu0 0.0
        %6176 = vmatpush1.msra.mxu0 0.0
        %6177 = vmatprep.subr.mxu0 0.0
        %6178 = vmatpush1.msra.mxu0 0.0
        %6179 = vmatprep.subr.mxu0 0.0
        %6180 = vmatpush1.msra.mxu0 0.0
        %6181 = vmatprep.subr.mxu0 0.0
        %6182 = vmatpush1.msra.mxu0 0.0
        %6183 = vmatprep.subr.mxu0 0.0
        %6184 = vmatpush1.msra.mxu0 %v6070
        %6185 = vmatprep.subr.mxu0 0.0
        %6186 = vmatpush1.msra.mxu0 %v6069
        %6187 = vmatprep.subr.mxu0 0.0
        %6188 = vmatpush1.msra.mxu0 %v6068
        %6189 = vmatprep.subr.mxu0 0.0
        %6190 = vmatpush1.msra.mxu0 %v6067
        %6191 = vmatprep.subr.mxu0 0.0
        %6192 = vmatpush1.msra.mxu0 %v6066
        %6193 = vmatprep.subr.mxu0 0.0
        %6194 = vmatpush1.msra.mxu0 %v6065
        %6195 = vmatprep.subr.mxu0 0.0
        %6196 = vmatpush1.msra.mxu0 %v6064
        %6197 = vmatprep.subr.mxu0 0.0
        %6198 = vmatpush1.msra.mxu0 %v6063
        %6199 = vmatprep.subr.mxu0 0.0
        %6200 = vmatpush2.msra.mxu0 0.0
        %6201 = vmatprep.subr.mxu0 0.0
        %6202 = vmatpush2.msra.mxu0 0.0
        %6203 = vmatprep.subr.mxu0 0.0
        %6204 = vmatpush2.msra.mxu0 0.0
        %6205 = vmatprep.subr.mxu0 0.0
        %6206 = vmatpush2.msra.mxu0 0.0
        %6207 = vmatprep.subr.mxu0 0.0
        %6208 = vmatpush2.msra.mxu0 0.0
        %6209 = vmatprep.subr.mxu0 0.0
        %6210 = vmatpush2.msra.mxu0 0.0
        %6211 = vmatprep.subr.mxu0 0.0
        %6212 = vmatpush2.msra.mxu0 0.0
        %6213 = vmatprep.subr.mxu0 0.0
        %6214 = vmatpush2.msra.mxu0 0.0
        %6215 = vmatprep.subr.mxu0 0.0
        %6216 = vmatpush2.msra.mxu0 0.0
        %6217 = vmatprep.subr.mxu0 0.0
        %6218 = vmatpush2.msra.mxu0 0.0
        %6219 = vmatprep.subr.mxu0 0.0
        %6220 = vmatpush2.msra.mxu0 0.0
        %6221 = vmatprep.subr.mxu0 0.0
        %6222 = vmatpush2.msra.mxu0 0.0
        %6223 = vmatprep.subr.mxu0 0.0
        %6224 = vmatpush2.msra.mxu0 0.0
        %6225 = vmatprep.subr.mxu0 0.0
        %6226 = vmatpush2.msra.mxu0 0.0
        %6227 = vmatprep.subr.mxu0 0.0
        %6228 = vmatpush2.msra.mxu0 0.0
        %6229 = vmatprep.subr.mxu0 0.0
        %6230 = vmatpush2.msra.mxu0 0.0
        %6231 = vmatprep.mubr.f32.mxu0 0.0
        %6232 = vmatmul.mubr.f32.gmra.mxu0 %v6072
        %v6233 = vpop.f32.mrf.mxu0
        %v6234 = vadd.f32 0.0, %v6233
        %v6235 = vpop.f32.mrf.mxu0
        %6236 = vmatprep.mubr.f32.mxu0 0.0
        %6237 = vmatmul.mubr.f32.gmra.mxu0 %v6075
        %v6238 = vpop.f32.mrf.mxu0
        %v6239 = vadd.f32 0.0, %v6238
        %v6240 = vpop.f32.mrf.mxu0
        %6241 = vmatprep.mubr.f32.mxu0 0.0
        %6242 = vmatmul.mubr.f32.gmra.mxu0 %v6078
        %v6243 = vpop.f32.mrf.mxu0
        %v6244 = vadd.f32 0.0, %v6243
        %v6245 = vpop.f32.mrf.mxu0
        %6246 = vmatprep.mubr.f32.mxu0 0.0
        %6247 = vmatmul.mubr.f32.gmra.mxu0 %v6081
        %v6248 = vpop.f32.mrf.mxu0
        %v6249 = vadd.f32 0.0, %v6248
        %v6250 = vpop.f32.mrf.mxu0
        %6251 = vmatprep.mubr.f32.mxu0 0.0
        %6252 = vmatmul.mubr.f32.gmra.mxu0 %v6084
        %v6253 = vpop.f32.mrf.mxu0
        %v6254 = vadd.f32 0.0, %v6253
        %v6255 = vpop.f32.mrf.mxu0
        %6256 = vmatprep.mubr.f32.mxu0 0.0
        %6257 = vmatmul.mubr.f32.gmra.mxu0 %v6087
        %v6258 = vpop.f32.mrf.mxu0
        %v6259 = vadd.f32 0.0, %v6258
        %v6260 = vpop.f32.mrf.mxu0
        %6261 = vmatprep.mubr.f32.mxu0 0.0
        %6262 = vmatmul.mubr.f32.gmra.mxu0 %v6090
        %v6263 = vpop.f32.mrf.mxu0
        %v6264 = vadd.f32 0.0, %v6263
        %v6265 = vpop.f32.mrf.mxu0
        %6266 = vmatprep.mubr.f32.mxu0 0.0
        %6267 = vmatmul.mubr.f32.gmra.mxu0 %v6093
        %v6268 = vpop.f32.mrf.mxu0
        %v6269 = vadd.f32 0.0, %v6268
        %v6270 = vpop.f32.mrf.mxu0
        %6271 = vmatprep.mubr.f32.mxu0 0.0
        %6272 = vmatmul.mubr.f32.gmra.mxu0 %v6096
        %v6273 = vpop.f32.mrf.mxu0
        %v6274 = vadd.f32 0.0, %v6273
        %v6275 = vpop.f32.mrf.mxu0
        %6276 = vmatprep.mubr.f32.mxu0 0.0
        %6277 = vmatmul.mubr.f32.gmra.mxu0 %v6099
        %v6278 = vpop.f32.mrf.mxu0
        %v6279 = vadd.f32 0.0, %v6278
        %v6280 = vpop.f32.mrf.mxu0
        %6281 = vmatprep.mubr.f32.mxu0 0.0
        %6282 = vmatmul.mubr.f32.gmra.mxu0 %v6102
        %v6283 = vpop.f32.mrf.mxu0
        %v6284 = vadd.f32 0.0, %v6283
        %v6285 = vpop.f32.mrf.mxu0
        %6286 = vmatprep.mubr.f32.mxu0 0.0
        %6287 = vmatmul.mubr.f32.gmra.mxu0 %v6105
        %v6288 = vpop.f32.mrf.mxu0
        %v6289 = vadd.f32 0.0, %v6288
        %v6290 = vpop.f32.mrf.mxu0
        %6291 = vmatprep.mubr.f32.mxu0 0.0
        %6292 = vmatmul.mubr.f32.gmra.mxu0 %v6108
        %v6293 = vpop.f32.mrf.mxu0
        %v6294 = vadd.f32 0.0, %v6293
        %v6295 = vpop.f32.mrf.mxu0
        %6296 = vmatprep.mubr.f32.mxu0 0.0
        %6297 = vmatmul.mubr.f32.gmra.mxu0 %v6111
        %v6298 = vpop.f32.mrf.mxu0
        %v6299 = vadd.f32 0.0, %v6298
        %v6300 = vpop.f32.mrf.mxu0
        %6301 = vmatprep.mubr.f32.mxu0 0.0
        %6302 = vmatmul.mubr.f32.gmra.mxu0 %v6114
        %v6303 = vpop.f32.mrf.mxu0
        %v6304 = vadd.f32 0.0, %v6303
        %v6305 = vpop.f32.mrf.mxu0
        %6306 = vmatprep.mubr.f32.mxu0 0.0
        %6307 = vmatmul.mubr.f32.gmra.mxu0 %v6117
        %v6308 = vpop.f32.mrf.mxu0
        %v6309 = vadd.f32 0.0, %v6308
        %v6310 = vpop.f32.mrf.mxu0
        %6311 = vmatprep.mubr.f32.mxu0 0.0
        %6312 = vmatmul.mubr.f32.gmra.mxu0 %v6120
        %v6313 = vpop.f32.mrf.mxu0
        %v6314 = vadd.f32 0.0, %v6313
        %v6315 = vpop.f32.mrf.mxu0
        %6316 = vmatprep.mubr.f32.mxu0 0.0
        %6317 = vmatmul.mubr.f32.gmra.mxu0 %v6123
        %v6318 = vpop.f32.mrf.mxu0
        %v6319 = vadd.f32 0.0, %v6318
        %v6320 = vpop.f32.mrf.mxu0
        %6321 = vmatprep.mubr.f32.mxu0 0.0
        %6322 = vmatmul.mubr.f32.gmra.mxu0 %v6126
        %v6323 = vpop.f32.mrf.mxu0
        %v6324 = vadd.f32 0.0, %v6323
        %v6325 = vpop.f32.mrf.mxu0
        %6326 = vmatprep.mubr.f32.mxu0 0.0
        %6327 = vmatmul.mubr.f32.gmra.mxu0 %v6129
        %v6328 = vpop.f32.mrf.mxu0
        %v6329 = vadd.f32 0.0, %v6328
        %v6330 = vpop.f32.mrf.mxu0
        %6331 = vmatprep.mubr.f32.mxu0 0.0
        %6332 = vmatmul.mubr.f32.gmra.mxu0 %v6132
        %v6333 = vpop.f32.mrf.mxu0
        %v6334 = vadd.f32 0.0, %v6333
        %v6335 = vpop.f32.mrf.mxu0
        %6336 = vmatprep.mubr.f32.mxu0 0.0
        %6337 = vmatmul.mubr.f32.gmra.mxu0 %v6135
        %v6338 = vpop.f32.mrf.mxu0
        %v6339 = vadd.f32 0.0, %v6338
        %v6340 = vpop.f32.mrf.mxu0
        %6341 = vmatprep.mubr.f32.mxu0 0.0
        %6342 = vmatmul.mubr.f32.gmra.mxu0 %v6138
        %v6343 = vpop.f32.mrf.mxu0
        %v6344 = vadd.f32 0.0, %v6343
        %v6345 = vpop.f32.mrf.mxu0
        %6346 = vmatprep.mubr.f32.mxu0 0.0
        %6347 = vmatmul.mubr.f32.gmra.mxu0 %v6141
        %v6348 = vpop.f32.mrf.mxu0
        %v6349 = vadd.f32 0.0, %v6348
        %v6350 = vpop.f32.mrf.mxu0
        %6351 = vmatprep.mubr.f32.mxu0 0.0
        %6352 = vmatmul.mubr.f32.gmra.mxu0 %v6144
        %v6353 = vpop.f32.mrf.mxu0
        %v6354 = vadd.f32 0.0, %v6353
        %v6355 = vpop.f32.mrf.mxu0
        %6356 = vmatprep.mubr.f32.mxu0 0.0
        %6357 = vmatmul.mubr.f32.gmra.mxu0 %v6147
        %v6358 = vpop.f32.mrf.mxu0
        %v6359 = vadd.f32 0.0, %v6358
        %v6360 = vpop.f32.mrf.mxu0
        %6361 = vmatprep.mubr.f32.mxu0 0.0
        %6362 = vmatmul.mubr.f32.gmra.mxu0 %v6150
        %v6363 = vpop.f32.mrf.mxu0
        %v6364 = vadd.f32 0.0, %v6363
        %v6365 = vpop.f32.mrf.mxu0
        %6366 = vmatprep.mubr.f32.mxu0 0.0
        %6367 = vmatmul.mubr.f32.gmra.mxu0 %v6153
        %v6368 = vpop.f32.mrf.mxu0
        %v6369 = vadd.f32 0.0, %v6368
        %v6370 = vpop.f32.mrf.mxu0
        %6371 = vmatprep.mubr.f32.mxu0 0.0
        %6372 = vmatmul.mubr.f32.gmra.mxu0 %v6156
        %v6373 = vpop.f32.mrf.mxu0
        %v6374 = vadd.f32 0.0, %v6373
        %v6375 = vpop.f32.mrf.mxu0
        %6376 = vmatprep.mubr.f32.mxu0 0.0
        %6377 = vmatmul.mubr.f32.gmra.mxu0 %v6159
        %v6378 = vpop.f32.mrf.mxu0
        %v6379 = vadd.f32 0.0, %v6378
        %v6380 = vpop.f32.mrf.mxu0
        %6381 = vmatprep.mubr.f32.mxu0 0.0
        %6382 = vmatmul.mubr.f32.gmra.mxu0 %v6162
        %v6383 = vpop.f32.mrf.mxu0
        %v6384 = vadd.f32 0.0, %v6383
        %v6385 = vpop.f32.mrf.mxu0
        %6386 = vmatprep.mubr.f32.mxu0 0.0
        %6387 = vmatmul.mubr.f32.gmra.mxu0 %v6165
        %v6388 = vpop.f32.mrf.mxu0
        %v6389 = vadd.f32 0.0, %v6388
        %v6390 = vpop.f32.mrf.mxu0
        %6391 = vdwg.mxu0
        %v6392 = vadd.f32 %v5999, %v6234
        %v6393 = vadd.f32 %v6000, %v6239
        %v6394 = vadd.f32 %v6001, %v6244
        %v6395 = vadd.f32 %v6002, %v6249
        %v6396 = vadd.f32 %v6003, %v6254
        %v6397 = vadd.f32 %v6004, %v6259
        %v6398 = vadd.f32 %v6005, %v6264
        %v6399 = vadd.f32 %v6006, %v6269
        %v6400 = vadd.f32 %v6007, %v6274
        %v6401 = vadd.f32 %v6008, %v6279
        %v6402 = vadd.f32 %v6009, %v6284
        %v6403 = vadd.f32 %v6010, %v6289
        %v6404 = vadd.f32 %v6011, %v6294
        %v6405 = vadd.f32 %v6012, %v6299
        %v6406 = vadd.f32 %v6013, %v6304
        %v6407 = vadd.f32 %v6014, %v6309
        %v6408 = vadd.f32 %v6015, %v6314
        %v6409 = vadd.f32 %v6016, %v6319
        %v6410 = vadd.f32 %v6017, %v6324
        %v6411 = vadd.f32 %v6018, %v6329
        %v6412 = vadd.f32 %v6019, %v6334
        %v6413 = vadd.f32 %v6020, %v6339
        %v6414 = vadd.f32 %v6021, %v6344
        %v6415 = vadd.f32 %v6022, %v6349
        %v6416 = vadd.f32 %v6023, %v6354
        %v6417 = vadd.f32 %v6024, %v6359
        %v6418 = vadd.f32 %v6025, %v6364
        %v6419 = vadd.f32 %v6026, %v6369
        %v6420 = vadd.f32 %v6027, %v6374
        %v6421 = vadd.f32 %v6028, %v6379
        %v6422 = vadd.f32 %v6029, %v6384
        %v6423 = vadd.f32 %v6030, %v6389
        %v6424 = vld [vmem:[%s2847] sm:$0xff]
        %v6425 = vld [vmem:[%s2847 + $0x8] sm:$0xff]
        %v6426 = vld [vmem:[%s2847 + $0x18] sm:$0xff]
        %v6427 = vld [vmem:[%s2847 + $0x20] sm:$0xff]
        %v6428 = vld [vmem:[%s2847 + $0x30] sm:$0xff]
        %v6429 = vld [vmem:[%s2847 + $0x38] sm:$0xff]
        %v6430 = vld [vmem:[%s2847 + $0x48] sm:$0xff]
        %v6431 = vld [vmem:[%s2847 + $0x50] sm:$0xff]
        %v6432 = vld [vmem:[%s2847 + $0x60] sm:$0xff]
        %v6433 = vld [vmem:[%s2847 + $0x68] sm:$0xff]
        %v6434 = vld [vmem:[%s2847 + $0x78] sm:$0xff]
        %v6435 = vld [vmem:[%s2847 + $0x80] sm:$0xff]
        %v6436 = vld [vmem:[%s2847 + $0x90] sm:$0xff]
        %v6437 = vld [vmem:[%s2847 + $0x98] sm:$0xff]
        %v6438 = vld [vmem:[%s2847 + $0xa8] sm:$0xff]
        %v6439 = vld [vmem:[%s2847 + $0xb0] sm:$0xff]
        %v6440 = vld [vmem:[%s2847 + $0xc0] sm:$0xff]
        %v6441 = vld [vmem:[%s2847 + $0xc8] sm:$0xff]
        %v6442 = vld [vmem:[%s2847 + $0xd8] sm:$0xff]
        %v6443 = vld [vmem:[%s2847 + $0xe0] sm:$0xff]
        %v6444 = vld [vmem:[%s2847 + $0xf0] sm:$0xff]
        %v6445 = vld [vmem:[%s2847 + $0xf8] sm:$0xff]
        %v6446 = vld [vmem:[%s2847 + $0x108] sm:$0xff]
        %v6447 = vld [vmem:[%s2847 + $0x110] sm:$0xff]
        %v6448 = vld [vmem:[%s2847 + $0x120] sm:$0xff]
        %v6449 = vld [vmem:[%s2847 + $0x128] sm:$0xff]
        %v6450 = vld [vmem:[%s2847 + $0x138] sm:$0xff]
        %v6451 = vld [vmem:[%s2847 + $0x140] sm:$0xff]
        %v6452 = vld [vmem:[%s2847 + $0x150] sm:$0xff]
        %v6453 = vld [vmem:[%s2847 + $0x158] sm:$0xff]
        %v6454 = vld [vmem:[%s2847 + $0x168] sm:$0xff]
        %v6455 = vld [vmem:[%s2847 + $0x170] sm:$0xff]
        %v6456 = vld [vmem:[%s3 + $0x180] sm:$0xff]
        %v6457 = vld [vmem:[%s3 + $0x188] sm:$0xff]
        %v6458 = vld [vmem:[%s3 + $0x190] sm:$0xff]
        %v6459 = vld [vmem:[%s3 + $0x198] sm:$0xff]
        %v6460 = vld [vmem:[%s3 + $0x1a0] sm:$0xff]
        %v6461 = vld [vmem:[%s3 + $0x1a8] sm:$0xff]
        %v6462 = vld [vmem:[%s3 + $0x1b0] sm:$0xff]
        %v6463 = vld [vmem:[%s3 + $0x1b8] sm:$0xff]
        %v6465 = vsel %vm417, %v6424, 0
        %v6468 = vsel %vm417, %v6425, 0
        %v6471 = vsel %vm417, %v6426, 0
        %v6474 = vsel %vm417, %v6427, 0
        %v6477 = vsel %vm417, %v6428, 0
        %v6480 = vsel %vm417, %v6429, 0
        %v6483 = vsel %vm417, %v6430, 0
        %v6486 = vsel %vm417, %v6431, 0
        %v6489 = vsel %vm417, %v6432, 0
        %v6492 = vsel %vm417, %v6433, 0
        %v6495 = vsel %vm417, %v6434, 0
        %v6498 = vsel %vm417, %v6435, 0
        %v6501 = vsel %vm417, %v6436, 0
        %v6504 = vsel %vm417, %v6437, 0
        %v6507 = vsel %vm417, %v6438, 0
        %v6510 = vsel %vm417, %v6439, 0
        %v6513 = vsel %vm417, %v6440, 0
        %v6516 = vsel %vm417, %v6441, 0
        %v6519 = vsel %vm417, %v6442, 0
        %v6522 = vsel %vm417, %v6443, 0
        %v6525 = vsel %vm417, %v6444, 0
        %v6528 = vsel %vm417, %v6445, 0
        %v6531 = vsel %vm417, %v6446, 0
        %v6534 = vsel %vm417, %v6447, 0
        %v6537 = vsel %vm417, %v6448, 0
        %v6540 = vsel %vm417, %v6449, 0
        %v6543 = vsel %vm417, %v6450, 0
        %v6546 = vsel %vm417, %v6451, 0
        %v6549 = vsel %vm417, %v6452, 0
        %v6552 = vsel %vm417, %v6453, 0
        %v6555 = vsel %vm417, %v6454, 0
        %v6558 = vsel %vm417, %v6455, 0
        %6560 = vmatprep.subr.mxu0 0.0
        %6561 = vmatpush1.msra.mxu0 0.0
        %6562 = vmatprep.subr.mxu0 0.0
        %6563 = vmatpush1.msra.mxu0 0.0
        %6564 = vmatprep.subr.mxu0 0.0
        %6565 = vmatpush1.msra.mxu0 0.0
        %6566 = vmatprep.subr.mxu0 0.0
        %6567 = vmatpush1.msra.mxu0 0.0
        %6568 = vmatprep.subr.mxu0 0.0
        %6569 = vmatpush1.msra.mxu0 0.0
        %6570 = vmatprep.subr.mxu0 0.0
        %6571 = vmatpush1.msra.mxu0 0.0
        %6572 = vmatprep.subr.mxu0 0.0
        %6573 = vmatpush1.msra.mxu0 0.0
        %6574 = vmatprep.subr.mxu0 0.0
        %6575 = vmatpush1.msra.mxu0 0.0
        %6576 = vmatprep.subr.mxu0 0.0
        %6577 = vmatpush1.msra.mxu0 %v6463
        %6578 = vmatprep.subr.mxu0 0.0
        %6579 = vmatpush1.msra.mxu0 %v6462
        %6580 = vmatprep.subr.mxu0 0.0
        %6581 = vmatpush1.msra.mxu0 %v6461
        %6582 = vmatprep.subr.mxu0 0.0
        %6583 = vmatpush1.msra.mxu0 %v6460
        %6584 = vmatprep.subr.mxu0 0.0
        %6585 = vmatpush1.msra.mxu0 %v6459
        %6586 = vmatprep.subr.mxu0 0.0
        %6587 = vmatpush1.msra.mxu0 %v6458
        %6588 = vmatprep.subr.mxu0 0.0
        %6589 = vmatpush1.msra.mxu0 %v6457
        %6590 = vmatprep.subr.mxu0 0.0
        %6591 = vmatpush1.msra.mxu0 %v6456
        %6592 = vmatprep.subr.mxu0 0.0
        %6593 = vmatpush2.msra.mxu0 0.0
        %6594 = vmatprep.subr.mxu0 0.0
        %6595 = vmatpush2.msra.mxu0 0.0
        %6596 = vmatprep.subr.mxu0 0.0
        %6597 = vmatpush2.msra.mxu0 0.0
        %6598 = vmatprep.subr.mxu0 0.0
        %6599 = vmatpush2.msra.mxu0 0.0
        %6600 = vmatprep.subr.mxu0 0.0
        %6601 = vmatpush2.msra.mxu0 0.0
        %6602 = vmatprep.subr.mxu0 0.0
        %6603 = vmatpush2.msra.mxu0 0.0
        %6604 = vmatprep.subr.mxu0 0.0
        %6605 = vmatpush2.msra.mxu0 0.0
        %6606 = vmatprep.subr.mxu0 0.0
        %6607 = vmatpush2.msra.mxu0 0.0
        %6608 = vmatprep.subr.mxu0 0.0
        %6609 = vmatpush2.msra.mxu0 0.0
        %6610 = vmatprep.subr.mxu0 0.0
        %6611 = vmatpush2.msra.mxu0 0.0
        %6612 = vmatprep.subr.mxu0 0.0
        %6613 = vmatpush2.msra.mxu0 0.0
        %6614 = vmatprep.subr.mxu0 0.0
        %6615 = vmatpush2.msra.mxu0 0.0
        %6616 = vmatprep.subr.mxu0 0.0
        %6617 = vmatpush2.msra.mxu0 0.0
        %6618 = vmatprep.subr.mxu0 0.0
        %6619 = vmatpush2.msra.mxu0 0.0
        %6620 = vmatprep.subr.mxu0 0.0
        %6621 = vmatpush2.msra.mxu0 0.0
        %6622 = vmatprep.subr.mxu0 0.0
        %6623 = vmatpush2.msra.mxu0 0.0
        %6624 = vmatprep.mubr.f32.mxu0 0.0
        %6625 = vmatmul.mubr.f32.gmra.mxu0 %v6465
        %v6626 = vpop.f32.mrf.mxu0
        %v6627 = vadd.f32 0.0, %v6626
        %v6628 = vpop.f32.mrf.mxu0
        %6629 = vmatprep.mubr.f32.mxu0 0.0
        %6630 = vmatmul.mubr.f32.gmra.mxu0 %v6468
        %v6631 = vpop.f32.mrf.mxu0
        %v6632 = vadd.f32 0.0, %v6631
        %v6633 = vpop.f32.mrf.mxu0
        %6634 = vmatprep.mubr.f32.mxu0 0.0
        %6635 = vmatmul.mubr.f32.gmra.mxu0 %v6471
        %v6636 = vpop.f32.mrf.mxu0
        %v6637 = vadd.f32 0.0, %v6636
        %v6638 = vpop.f32.mrf.mxu0
        %6639 = vmatprep.mubr.f32.mxu0 0.0
        %6640 = vmatmul.mubr.f32.gmra.mxu0 %v6474
        %v6641 = vpop.f32.mrf.mxu0
        %v6642 = vadd.f32 0.0, %v6641
        %v6643 = vpop.f32.mrf.mxu0
        %6644 = vmatprep.mubr.f32.mxu0 0.0
        %6645 = vmatmul.mubr.f32.gmra.mxu0 %v6477
        %v6646 = vpop.f32.mrf.mxu0
        %v6647 = vadd.f32 0.0, %v6646
        %v6648 = vpop.f32.mrf.mxu0
        %6649 = vmatprep.mubr.f32.mxu0 0.0
        %6650 = vmatmul.mubr.f32.gmra.mxu0 %v6480
        %v6651 = vpop.f32.mrf.mxu0
        %v6652 = vadd.f32 0.0, %v6651
        %v6653 = vpop.f32.mrf.mxu0
        %6654 = vmatprep.mubr.f32.mxu0 0.0
        %6655 = vmatmul.mubr.f32.gmra.mxu0 %v6483
        %v6656 = vpop.f32.mrf.mxu0
        %v6657 = vadd.f32 0.0, %v6656
        %v6658 = vpop.f32.mrf.mxu0
        %6659 = vmatprep.mubr.f32.mxu0 0.0
        %6660 = vmatmul.mubr.f32.gmra.mxu0 %v6486
        %v6661 = vpop.f32.mrf.mxu0
        %v6662 = vadd.f32 0.0, %v6661
        %v6663 = vpop.f32.mrf.mxu0
        %6664 = vmatprep.mubr.f32.mxu0 0.0
        %6665 = vmatmul.mubr.f32.gmra.mxu0 %v6489
        %v6666 = vpop.f32.mrf.mxu0
        %v6667 = vadd.f32 0.0, %v6666
        %v6668 = vpop.f32.mrf.mxu0
        %6669 = vmatprep.mubr.f32.mxu0 0.0
        %6670 = vmatmul.mubr.f32.gmra.mxu0 %v6492
        %v6671 = vpop.f32.mrf.mxu0
        %v6672 = vadd.f32 0.0, %v6671
        %v6673 = vpop.f32.mrf.mxu0
        %6674 = vmatprep.mubr.f32.mxu0 0.0
        %6675 = vmatmul.mubr.f32.gmra.mxu0 %v6495
        %v6676 = vpop.f32.mrf.mxu0
        %v6677 = vadd.f32 0.0, %v6676
        %v6678 = vpop.f32.mrf.mxu0
        %6679 = vmatprep.mubr.f32.mxu0 0.0
        %6680 = vmatmul.mubr.f32.gmra.mxu0 %v6498
        %v6681 = vpop.f32.mrf.mxu0
        %v6682 = vadd.f32 0.0, %v6681
        %v6683 = vpop.f32.mrf.mxu0
        %6684 = vmatprep.mubr.f32.mxu0 0.0
        %6685 = vmatmul.mubr.f32.gmra.mxu0 %v6501
        %v6686 = vpop.f32.mrf.mxu0
        %v6687 = vadd.f32 0.0, %v6686
        %v6688 = vpop.f32.mrf.mxu0
        %6689 = vmatprep.mubr.f32.mxu0 0.0
        %6690 = vmatmul.mubr.f32.gmra.mxu0 %v6504
        %v6691 = vpop.f32.mrf.mxu0
        %v6692 = vadd.f32 0.0, %v6691
        %v6693 = vpop.f32.mrf.mxu0
        %6694 = vmatprep.mubr.f32.mxu0 0.0
        %6695 = vmatmul.mubr.f32.gmra.mxu0 %v6507
        %v6696 = vpop.f32.mrf.mxu0
        %v6697 = vadd.f32 0.0, %v6696
        %v6698 = vpop.f32.mrf.mxu0
        %6699 = vmatprep.mubr.f32.mxu0 0.0
        %6700 = vmatmul.mubr.f32.gmra.mxu0 %v6510
        %v6701 = vpop.f32.mrf.mxu0
        %v6702 = vadd.f32 0.0, %v6701
        %v6703 = vpop.f32.mrf.mxu0
        %6704 = vmatprep.mubr.f32.mxu0 0.0
        %6705 = vmatmul.mubr.f32.gmra.mxu0 %v6513
        %v6706 = vpop.f32.mrf.mxu0
        %v6707 = vadd.f32 0.0, %v6706
        %v6708 = vpop.f32.mrf.mxu0
        %6709 = vmatprep.mubr.f32.mxu0 0.0
        %6710 = vmatmul.mubr.f32.gmra.mxu0 %v6516
        %v6711 = vpop.f32.mrf.mxu0
        %v6712 = vadd.f32 0.0, %v6711
        %v6713 = vpop.f32.mrf.mxu0
        %6714 = vmatprep.mubr.f32.mxu0 0.0
        %6715 = vmatmul.mubr.f32.gmra.mxu0 %v6519
        %v6716 = vpop.f32.mrf.mxu0
        %v6717 = vadd.f32 0.0, %v6716
        %v6718 = vpop.f32.mrf.mxu0
        %6719 = vmatprep.mubr.f32.mxu0 0.0
        %6720 = vmatmul.mubr.f32.gmra.mxu0 %v6522
        %v6721 = vpop.f32.mrf.mxu0
        %v6722 = vadd.f32 0.0, %v6721
        %v6723 = vpop.f32.mrf.mxu0
        %6724 = vmatprep.mubr.f32.mxu0 0.0
        %6725 = vmatmul.mubr.f32.gmra.mxu0 %v6525
        %v6726 = vpop.f32.mrf.mxu0
        %v6727 = vadd.f32 0.0, %v6726
        %v6728 = vpop.f32.mrf.mxu0
        %6729 = vmatprep.mubr.f32.mxu0 0.0
        %6730 = vmatmul.mubr.f32.gmra.mxu0 %v6528
        %v6731 = vpop.f32.mrf.mxu0
        %v6732 = vadd.f32 0.0, %v6731
        %v6733 = vpop.f32.mrf.mxu0
        %6734 = vmatprep.mubr.f32.mxu0 0.0
        %6735 = vmatmul.mubr.f32.gmra.mxu0 %v6531
        %v6736 = vpop.f32.mrf.mxu0
        %v6737 = vadd.f32 0.0, %v6736
        %v6738 = vpop.f32.mrf.mxu0
        %6739 = vmatprep.mubr.f32.mxu0 0.0
        %6740 = vmatmul.mubr.f32.gmra.mxu0 %v6534
        %v6741 = vpop.f32.mrf.mxu0
        %v6742 = vadd.f32 0.0, %v6741
        %v6743 = vpop.f32.mrf.mxu0
        %6744 = vmatprep.mubr.f32.mxu0 0.0
        %6745 = vmatmul.mubr.f32.gmra.mxu0 %v6537
        %v6746 = vpop.f32.mrf.mxu0
        %v6747 = vadd.f32 0.0, %v6746
        %v6748 = vpop.f32.mrf.mxu0
        %6749 = vmatprep.mubr.f32.mxu0 0.0
        %6750 = vmatmul.mubr.f32.gmra.mxu0 %v6540
        %v6751 = vpop.f32.mrf.mxu0
        %v6752 = vadd.f32 0.0, %v6751
        %v6753 = vpop.f32.mrf.mxu0
        %6754 = vmatprep.mubr.f32.mxu0 0.0
        %6755 = vmatmul.mubr.f32.gmra.mxu0 %v6543
        %v6756 = vpop.f32.mrf.mxu0
        %v6757 = vadd.f32 0.0, %v6756
        %v6758 = vpop.f32.mrf.mxu0
        %6759 = vmatprep.mubr.f32.mxu0 0.0
        %6760 = vmatmul.mubr.f32.gmra.mxu0 %v6546
        %v6761 = vpop.f32.mrf.mxu0
        %v6762 = vadd.f32 0.0, %v6761
        %v6763 = vpop.f32.mrf.mxu0
        %6764 = vmatprep.mubr.f32.mxu0 0.0
        %6765 = vmatmul.mubr.f32.gmra.mxu0 %v6549
        %v6766 = vpop.f32.mrf.mxu0
        %v6767 = vadd.f32 0.0, %v6766
        %v6768 = vpop.f32.mrf.mxu0
        %6769 = vmatprep.mubr.f32.mxu0 0.0
        %6770 = vmatmul.mubr.f32.gmra.mxu0 %v6552
        %v6771 = vpop.f32.mrf.mxu0
        %v6772 = vadd.f32 0.0, %v6771
        %v6773 = vpop.f32.mrf.mxu0
        %6774 = vmatprep.mubr.f32.mxu0 0.0
        %6775 = vmatmul.mubr.f32.gmra.mxu0 %v6555
        %v6776 = vpop.f32.mrf.mxu0
        %v6777 = vadd.f32 0.0, %v6776
        %v6778 = vpop.f32.mrf.mxu0
        %6779 = vmatprep.mubr.f32.mxu0 0.0
        %6780 = vmatmul.mubr.f32.gmra.mxu0 %v6558
        %v6781 = vpop.f32.mrf.mxu0
        %v6782 = vadd.f32 0.0, %v6781
        %v6783 = vpop.f32.mrf.mxu0
        %6784 = vdwg.mxu0
        %v6785 = vadd.f32 %v6392, %v6627
        %v6786 = vadd.f32 %v6393, %v6632
        %v6787 = vadd.f32 %v6394, %v6637
        %v6788 = vadd.f32 %v6395, %v6642
        %v6789 = vadd.f32 %v6396, %v6647
        %v6790 = vadd.f32 %v6397, %v6652
        %v6791 = vadd.f32 %v6398, %v6657
        %v6792 = vadd.f32 %v6399, %v6662
        %v6793 = vadd.f32 %v6400, %v6667
        %v6794 = vadd.f32 %v6401, %v6672
        %v6795 = vadd.f32 %v6402, %v6677
        %v6796 = vadd.f32 %v6403, %v6682
        %v6797 = vadd.f32 %v6404, %v6687
        %v6798 = vadd.f32 %v6405, %v6692
        %v6799 = vadd.f32 %v6406, %v6697
        %v6800 = vadd.f32 %v6407, %v6702
        %v6801 = vadd.f32 %v6408, %v6707
        %v6802 = vadd.f32 %v6409, %v6712
        %v6803 = vadd.f32 %v6410, %v6717
        %v6804 = vadd.f32 %v6411, %v6722
        %v6805 = vadd.f32 %v6412, %v6727
        %v6806 = vadd.f32 %v6413, %v6732
        %v6807 = vadd.f32 %v6414, %v6737
        %v6808 = vadd.f32 %v6415, %v6742
        %v6809 = vadd.f32 %v6416, %v6747
        %v6810 = vadd.f32 %v6417, %v6752
        %v6811 = vadd.f32 %v6418, %v6757
        %v6812 = vadd.f32 %v6419, %v6762
        %v6813 = vadd.f32 %v6420, %v6767
        %v6814 = vadd.f32 %v6421, %v6772
        %v6815 = vadd.f32 %v6422, %v6777
        %v6816 = vadd.f32 %v6423, %v6782
        %v6817 = vld [vmem:[%s2847 + $0x1] sm:$0xff]
        %v6818 = vld [vmem:[%s2847 + $0x9] sm:$0xff]
        %v6819 = vld [vmem:[%s2847 + $0x19] sm:$0xff]
        %v6820 = vld [vmem:[%s2847 + $0x21] sm:$0xff]
        %v6821 = vld [vmem:[%s2847 + $0x31] sm:$0xff]
        %v6822 = vld [vmem:[%s2847 + $0x39] sm:$0xff]
        %v6823 = vld [vmem:[%s2847 + $0x49] sm:$0xff]
        %v6824 = vld [vmem:[%s2847 + $0x51] sm:$0xff]
        %v6825 = vld [vmem:[%s2847 + $0x61] sm:$0xff]
        %v6826 = vld [vmem:[%s2847 + $0x69] sm:$0xff]
        %v6827 = vld [vmem:[%s2847 + $0x79] sm:$0xff]
        %v6828 = vld [vmem:[%s2847 + $0x81] sm:$0xff]
        %v6829 = vld [vmem:[%s2847 + $0x91] sm:$0xff]
        %v6830 = vld [vmem:[%s2847 + $0x99] sm:$0xff]
        %v6831 = vld [vmem:[%s2847 + $0xa9] sm:$0xff]
        %v6832 = vld [vmem:[%s2847 + $0xb1] sm:$0xff]
        %v6833 = vld [vmem:[%s2847 + $0xc1] sm:$0xff]
        %v6834 = vld [vmem:[%s2847 + $0xc9] sm:$0xff]
        %v6835 = vld [vmem:[%s2847 + $0xd9] sm:$0xff]
        %v6836 = vld [vmem:[%s2847 + $0xe1] sm:$0xff]
        %v6837 = vld [vmem:[%s2847 + $0xf1] sm:$0xff]
        %v6838 = vld [vmem:[%s2847 + $0xf9] sm:$0xff]
        %v6839 = vld [vmem:[%s2847 + $0x109] sm:$0xff]
        %v6840 = vld [vmem:[%s2847 + $0x111] sm:$0xff]
        %v6841 = vld [vmem:[%s2847 + $0x121] sm:$0xff]
        %v6842 = vld [vmem:[%s2847 + $0x129] sm:$0xff]
        %v6843 = vld [vmem:[%s2847 + $0x139] sm:$0xff]
        %v6844 = vld [vmem:[%s2847 + $0x141] sm:$0xff]
        %v6845 = vld [vmem:[%s2847 + $0x151] sm:$0xff]
        %v6846 = vld [vmem:[%s2847 + $0x159] sm:$0xff]
        %v6847 = vld [vmem:[%s2847 + $0x169] sm:$0xff]
        %v6848 = vld [vmem:[%s2847 + $0x171] sm:$0xff]
        %v6849 = vld [vmem:[%s3 + $0x1c0] sm:$0xff]
        %v6850 = vld [vmem:[%s3 + $0x1c8] sm:$0xff]
        %v6851 = vld [vmem:[%s3 + $0x1d0] sm:$0xff]
        %v6852 = vld [vmem:[%s3 + $0x1d8] sm:$0xff]
        %v6853 = vld [vmem:[%s3 + $0x1e0] sm:$0xff]
        %v6854 = vld [vmem:[%s3 + $0x1e8] sm:$0xff]
        %v6855 = vld [vmem:[%s3 + $0x1f0] sm:$0xff]
        %v6856 = vld [vmem:[%s3 + $0x1f8] sm:$0xff]
        %v6858 = vsel %vm417, %v6817, 0
        %v6861 = vsel %vm417, %v6818, 0
        %v6864 = vsel %vm417, %v6819, 0
        %v6867 = vsel %vm417, %v6820, 0
        %v6870 = vsel %vm417, %v6821, 0
        %v6873 = vsel %vm417, %v6822, 0
        %v6876 = vsel %vm417, %v6823, 0
        %v6879 = vsel %vm417, %v6824, 0
        %v6882 = vsel %vm417, %v6825, 0
        %v6885 = vsel %vm417, %v6826, 0
        %v6888 = vsel %vm417, %v6827, 0
        %v6891 = vsel %vm417, %v6828, 0
        %v6894 = vsel %vm417, %v6829, 0
        %v6897 = vsel %vm417, %v6830, 0
        %v6900 = vsel %vm417, %v6831, 0
        %v6903 = vsel %vm417, %v6832, 0
        %v6906 = vsel %vm417, %v6833, 0
        %v6909 = vsel %vm417, %v6834, 0
        %v6912 = vsel %vm417, %v6835, 0
        %v6915 = vsel %vm417, %v6836, 0
        %v6918 = vsel %vm417, %v6837, 0
        %v6921 = vsel %vm417, %v6838, 0
        %v6924 = vsel %vm417, %v6839, 0
        %v6927 = vsel %vm417, %v6840, 0
        %v6930 = vsel %vm417, %v6841, 0
        %v6933 = vsel %vm417, %v6842, 0
        %v6936 = vsel %vm417, %v6843, 0
        %v6939 = vsel %vm417, %v6844, 0
        %v6942 = vsel %vm417, %v6845, 0
        %v6945 = vsel %vm417, %v6846, 0
        %v6948 = vsel %vm417, %v6847, 0
        %v6951 = vsel %vm417, %v6848, 0
        %6953 = vmatprep.subr.mxu0 0.0
        %6954 = vmatpush1.msra.mxu0 0.0
        %6955 = vmatprep.subr.mxu0 0.0
        %6956 = vmatpush1.msra.mxu0 0.0
        %6957 = vmatprep.subr.mxu0 0.0
        %6958 = vmatpush1.msra.mxu0 0.0
        %6959 = vmatprep.subr.mxu0 0.0
        %6960 = vmatpush1.msra.mxu0 0.0
        %6961 = vmatprep.subr.mxu0 0.0
        %6962 = vmatpush1.msra.mxu0 0.0
        %6963 = vmatprep.subr.mxu0 0.0
        %6964 = vmatpush1.msra.mxu0 0.0
        %6965 = vmatprep.subr.mxu0 0.0
        %6966 = vmatpush1.msra.mxu0 0.0
        %6967 = vmatprep.subr.mxu0 0.0
        %6968 = vmatpush1.msra.mxu0 0.0
        %6969 = vmatprep.subr.mxu0 0.0
        %6970 = vmatpush1.msra.mxu0 %v6856
        %6971 = vmatprep.subr.mxu0 0.0
        %6972 = vmatpush1.msra.mxu0 %v6855
        %6973 = vmatprep.subr.mxu0 0.0
        %6974 = vmatpush1.msra.mxu0 %v6854
        %6975 = vmatprep.subr.mxu0 0.0
        %6976 = vmatpush1.msra.mxu0 %v6853
        %6977 = vmatprep.subr.mxu0 0.0
        %6978 = vmatpush1.msra.mxu0 %v6852
        %6979 = vmatprep.subr.mxu0 0.0
        %6980 = vmatpush1.msra.mxu0 %v6851
        %6981 = vmatprep.subr.mxu0 0.0
        %6982 = vmatpush1.msra.mxu0 %v6850
        %6983 = vmatprep.subr.mxu0 0.0
        %6984 = vmatpush1.msra.mxu0 %v6849
        %6985 = vmatprep.subr.mxu0 0.0
        %6986 = vmatpush2.msra.mxu0 0.0
        %6987 = vmatprep.subr.mxu0 0.0
        %6988 = vmatpush2.msra.mxu0 0.0
        %6989 = vmatprep.subr.mxu0 0.0
        %6990 = vmatpush2.msra.mxu0 0.0
        %6991 = vmatprep.subr.mxu0 0.0
        %6992 = vmatpush2.msra.mxu0 0.0
        %6993 = vmatprep.subr.mxu0 0.0
        %6994 = vmatpush2.msra.mxu0 0.0
        %6995 = vmatprep.subr.mxu0 0.0
        %6996 = vmatpush2.msra.mxu0 0.0
        %6997 = vmatprep.subr.mxu0 0.0
        %6998 = vmatpush2.msra.mxu0 0.0
        %6999 = vmatprep.subr.mxu0 0.0
        %7000 = vmatpush2.msra.mxu0 0.0
        %7001 = vmatprep.subr.mxu0 0.0
        %7002 = vmatpush2.msra.mxu0 0.0
        %7003 = vmatprep.subr.mxu0 0.0
        %7004 = vmatpush2.msra.mxu0 0.0
        %7005 = vmatprep.subr.mxu0 0.0
        %7006 = vmatpush2.msra.mxu0 0.0
        %7007 = vmatprep.subr.mxu0 0.0
        %7008 = vmatpush2.msra.mxu0 0.0
        %7009 = vmatprep.subr.mxu0 0.0
        %7010 = vmatpush2.msra.mxu0 0.0
        %7011 = vmatprep.subr.mxu0 0.0
        %7012 = vmatpush2.msra.mxu0 0.0
        %7013 = vmatprep.subr.mxu0 0.0
        %7014 = vmatpush2.msra.mxu0 0.0
        %7015 = vmatprep.subr.mxu0 0.0
        %7016 = vmatpush2.msra.mxu0 0.0
        %7017 = vmatprep.mubr.f32.mxu0 0.0
        %7018 = vmatmul.mubr.f32.gmra.mxu0 %v6858
        %v7019 = vpop.f32.mrf.mxu0
        %v7020 = vadd.f32 0.0, %v7019
        %v7021 = vpop.f32.mrf.mxu0
        %7022 = vmatprep.mubr.f32.mxu0 0.0
        %7023 = vmatmul.mubr.f32.gmra.mxu0 %v6861
        %v7024 = vpop.f32.mrf.mxu0
        %v7025 = vadd.f32 0.0, %v7024
        %v7026 = vpop.f32.mrf.mxu0
        %7027 = vmatprep.mubr.f32.mxu0 0.0
        %7028 = vmatmul.mubr.f32.gmra.mxu0 %v6864
        %v7029 = vpop.f32.mrf.mxu0
        %v7030 = vadd.f32 0.0, %v7029
        %v7031 = vpop.f32.mrf.mxu0
        %7032 = vmatprep.mubr.f32.mxu0 0.0
        %7033 = vmatmul.mubr.f32.gmra.mxu0 %v6867
        %v7034 = vpop.f32.mrf.mxu0
        %v7035 = vadd.f32 0.0, %v7034
        %v7036 = vpop.f32.mrf.mxu0
        %7037 = vmatprep.mubr.f32.mxu0 0.0
        %7038 = vmatmul.mubr.f32.gmra.mxu0 %v6870
        %v7039 = vpop.f32.mrf.mxu0
        %v7040 = vadd.f32 0.0, %v7039
        %v7041 = vpop.f32.mrf.mxu0
        %7042 = vmatprep.mubr.f32.mxu0 0.0
        %7043 = vmatmul.mubr.f32.gmra.mxu0 %v6873
        %v7044 = vpop.f32.mrf.mxu0
        %v7045 = vadd.f32 0.0, %v7044
        %v7046 = vpop.f32.mrf.mxu0
        %7047 = vmatprep.mubr.f32.mxu0 0.0
        %7048 = vmatmul.mubr.f32.gmra.mxu0 %v6876
        %v7049 = vpop.f32.mrf.mxu0
        %v7050 = vadd.f32 0.0, %v7049
        %v7051 = vpop.f32.mrf.mxu0
        %7052 = vmatprep.mubr.f32.mxu0 0.0
        %7053 = vmatmul.mubr.f32.gmra.mxu0 %v6879
        %v7054 = vpop.f32.mrf.mxu0
        %v7055 = vadd.f32 0.0, %v7054
        %v7056 = vpop.f32.mrf.mxu0
        %7057 = vmatprep.mubr.f32.mxu0 0.0
        %7058 = vmatmul.mubr.f32.gmra.mxu0 %v6882
        %v7059 = vpop.f32.mrf.mxu0
        %v7060 = vadd.f32 0.0, %v7059
        %v7061 = vpop.f32.mrf.mxu0
        %7062 = vmatprep.mubr.f32.mxu0 0.0
        %7063 = vmatmul.mubr.f32.gmra.mxu0 %v6885
        %v7064 = vpop.f32.mrf.mxu0
        %v7065 = vadd.f32 0.0, %v7064
        %v7066 = vpop.f32.mrf.mxu0
        %7067 = vmatprep.mubr.f32.mxu0 0.0
        %7068 = vmatmul.mubr.f32.gmra.mxu0 %v6888
        %v7069 = vpop.f32.mrf.mxu0
        %v7070 = vadd.f32 0.0, %v7069
        %v7071 = vpop.f32.mrf.mxu0
        %7072 = vmatprep.mubr.f32.mxu0 0.0
        %7073 = vmatmul.mubr.f32.gmra.mxu0 %v6891
        %v7074 = vpop.f32.mrf.mxu0
        %v7075 = vadd.f32 0.0, %v7074
        %v7076 = vpop.f32.mrf.mxu0
        %7077 = vmatprep.mubr.f32.mxu0 0.0
        %7078 = vmatmul.mubr.f32.gmra.mxu0 %v6894
        %v7079 = vpop.f32.mrf.mxu0
        %v7080 = vadd.f32 0.0, %v7079
        %v7081 = vpop.f32.mrf.mxu0
        %7082 = vmatprep.mubr.f32.mxu0 0.0
        %7083 = vmatmul.mubr.f32.gmra.mxu0 %v6897
        %v7084 = vpop.f32.mrf.mxu0
        %v7085 = vadd.f32 0.0, %v7084
        %v7086 = vpop.f32.mrf.mxu0
        %7087 = vmatprep.mubr.f32.mxu0 0.0
        %7088 = vmatmul.mubr.f32.gmra.mxu0 %v6900
        %v7089 = vpop.f32.mrf.mxu0
        %v7090 = vadd.f32 0.0, %v7089
        %v7091 = vpop.f32.mrf.mxu0
        %7092 = vmatprep.mubr.f32.mxu0 0.0
        %7093 = vmatmul.mubr.f32.gmra.mxu0 %v6903
        %v7094 = vpop.f32.mrf.mxu0
        %v7095 = vadd.f32 0.0, %v7094
        %v7096 = vpop.f32.mrf.mxu0
        %7097 = vmatprep.mubr.f32.mxu0 0.0
        %7098 = vmatmul.mubr.f32.gmra.mxu0 %v6906
        %v7099 = vpop.f32.mrf.mxu0
        %v7100 = vadd.f32 0.0, %v7099
        %v7101 = vpop.f32.mrf.mxu0
        %7102 = vmatprep.mubr.f32.mxu0 0.0
        %7103 = vmatmul.mubr.f32.gmra.mxu0 %v6909
        %v7104 = vpop.f32.mrf.mxu0
        %v7105 = vadd.f32 0.0, %v7104
        %v7106 = vpop.f32.mrf.mxu0
        %7107 = vmatprep.mubr.f32.mxu0 0.0
        %7108 = vmatmul.mubr.f32.gmra.mxu0 %v6912
        %v7109 = vpop.f32.mrf.mxu0
        %v7110 = vadd.f32 0.0, %v7109
        %v7111 = vpop.f32.mrf.mxu0
        %7112 = vmatprep.mubr.f32.mxu0 0.0
        %7113 = vmatmul.mubr.f32.gmra.mxu0 %v6915
        %v7114 = vpop.f32.mrf.mxu0
        %v7115 = vadd.f32 0.0, %v7114
        %v7116 = vpop.f32.mrf.mxu0
        %7117 = vmatprep.mubr.f32.mxu0 0.0
        %7118 = vmatmul.mubr.f32.gmra.mxu0 %v6918
        %v7119 = vpop.f32.mrf.mxu0
        %v7120 = vadd.f32 0.0, %v7119
        %v7121 = vpop.f32.mrf.mxu0
        %7122 = vmatprep.mubr.f32.mxu0 0.0
        %7123 = vmatmul.mubr.f32.gmra.mxu0 %v6921
        %v7124 = vpop.f32.mrf.mxu0
        %v7125 = vadd.f32 0.0, %v7124
        %v7126 = vpop.f32.mrf.mxu0
        %7127 = vmatprep.mubr.f32.mxu0 0.0
        %7128 = vmatmul.mubr.f32.gmra.mxu0 %v6924
        %v7129 = vpop.f32.mrf.mxu0
        %v7130 = vadd.f32 0.0, %v7129
        %v7131 = vpop.f32.mrf.mxu0
        %7132 = vmatprep.mubr.f32.mxu0 0.0
        %7133 = vmatmul.mubr.f32.gmra.mxu0 %v6927
        %v7134 = vpop.f32.mrf.mxu0
        %v7135 = vadd.f32 0.0, %v7134
        %v7136 = vpop.f32.mrf.mxu0
        %7137 = vmatprep.mubr.f32.mxu0 0.0
        %7138 = vmatmul.mubr.f32.gmra.mxu0 %v6930
        %v7139 = vpop.f32.mrf.mxu0
        %v7140 = vadd.f32 0.0, %v7139
        %v7141 = vpop.f32.mrf.mxu0
        %7142 = vmatprep.mubr.f32.mxu0 0.0
        %7143 = vmatmul.mubr.f32.gmra.mxu0 %v6933
        %v7144 = vpop.f32.mrf.mxu0
        %v7145 = vadd.f32 0.0, %v7144
        %v7146 = vpop.f32.mrf.mxu0
        %7147 = vmatprep.mubr.f32.mxu0 0.0
        %7148 = vmatmul.mubr.f32.gmra.mxu0 %v6936
        %v7149 = vpop.f32.mrf.mxu0
        %v7150 = vadd.f32 0.0, %v7149
        %v7151 = vpop.f32.mrf.mxu0
        %7152 = vmatprep.mubr.f32.mxu0 0.0
        %7153 = vmatmul.mubr.f32.gmra.mxu0 %v6939
        %v7154 = vpop.f32.mrf.mxu0
        %v7155 = vadd.f32 0.0, %v7154
        %v7156 = vpop.f32.mrf.mxu0
        %7157 = vmatprep.mubr.f32.mxu0 0.0
        %7158 = vmatmul.mubr.f32.gmra.mxu0 %v6942
        %v7159 = vpop.f32.mrf.mxu0
        %v7160 = vadd.f32 0.0, %v7159
        %v7161 = vpop.f32.mrf.mxu0
        %7162 = vmatprep.mubr.f32.mxu0 0.0
        %7163 = vmatmul.mubr.f32.gmra.mxu0 %v6945
        %v7164 = vpop.f32.mrf.mxu0
        %v7165 = vadd.f32 0.0, %v7164
        %v7166 = vpop.f32.mrf.mxu0
        %7167 = vmatprep.mubr.f32.mxu0 0.0
        %7168 = vmatmul.mubr.f32.gmra.mxu0 %v6948
        %v7169 = vpop.f32.mrf.mxu0
        %v7170 = vadd.f32 0.0, %v7169
        %v7171 = vpop.f32.mrf.mxu0
        %7172 = vmatprep.mubr.f32.mxu0 0.0
        %7173 = vmatmul.mubr.f32.gmra.mxu0 %v6951
        %v7174 = vpop.f32.mrf.mxu0
        %v7175 = vadd.f32 0.0, %v7174
        %v7176 = vpop.f32.mrf.mxu0
        %7177 = vdwg.mxu0
        %v7178 = vadd.f32 %v6785, %v7020
        %v7179 = vadd.f32 %v6786, %v7025
        %v7180 = vadd.f32 %v6787, %v7030
        %v7181 = vadd.f32 %v6788, %v7035
        %v7182 = vadd.f32 %v6789, %v7040
        %v7183 = vadd.f32 %v6790, %v7045
        %v7184 = vadd.f32 %v6791, %v7050
        %v7185 = vadd.f32 %v6792, %v7055
        %v7186 = vadd.f32 %v6793, %v7060
        %v7187 = vadd.f32 %v6794, %v7065
        %v7188 = vadd.f32 %v6795, %v7070
        %v7189 = vadd.f32 %v6796, %v7075
        %v7190 = vadd.f32 %v6797, %v7080
        %v7191 = vadd.f32 %v6798, %v7085
        %v7192 = vadd.f32 %v6799, %v7090
        %v7193 = vadd.f32 %v6800, %v7095
        %v7194 = vadd.f32 %v6801, %v7100
        %v7195 = vadd.f32 %v6802, %v7105
        %v7196 = vadd.f32 %v6803, %v7110
        %v7197 = vadd.f32 %v6804, %v7115
        %v7198 = vadd.f32 %v6805, %v7120
        %v7199 = vadd.f32 %v6806, %v7125
        %v7200 = vadd.f32 %v6807, %v7130
        %v7201 = vadd.f32 %v6808, %v7135
        %v7202 = vadd.f32 %v6809, %v7140
        %v7203 = vadd.f32 %v6810, %v7145
        %v7204 = vadd.f32 %v6811, %v7150
        %v7205 = vadd.f32 %v6812, %v7155
        %v7206 = vadd.f32 %v6813, %v7160
        %v7207 = vadd.f32 %v6814, %v7165
        %v7208 = vadd.f32 %v6815, %v7170
        %v7209 = vadd.f32 %v6816, %v7175
        %v7210 = vld [vmem:[%s2847 + $0x2] sm:$0xff]
        %v7211 = vld [vmem:[%s2847 + $0xa] sm:$0xff]
        %v7212 = vld [vmem:[%s2847 + $0x1a] sm:$0xff]
        %v7213 = vld [vmem:[%s2847 + $0x22] sm:$0xff]
        %v7214 = vld [vmem:[%s2847 + $0x32] sm:$0xff]
        %v7215 = vld [vmem:[%s2847 + $0x3a] sm:$0xff]
        %v7216 = vld [vmem:[%s2847 + $0x4a] sm:$0xff]
        %v7217 = vld [vmem:[%s2847 + $0x52] sm:$0xff]
        %v7218 = vld [vmem:[%s2847 + $0x62] sm:$0xff]
        %v7219 = vld [vmem:[%s2847 + $0x6a] sm:$0xff]
        %v7220 = vld [vmem:[%s2847 + $0x7a] sm:$0xff]
        %v7221 = vld [vmem:[%s2847 + $0x82] sm:$0xff]
        %v7222 = vld [vmem:[%s2847 + $0x92] sm:$0xff]
        %v7223 = vld [vmem:[%s2847 + $0x9a] sm:$0xff]
        %v7224 = vld [vmem:[%s2847 + $0xaa] sm:$0xff]
        %v7225 = vld [vmem:[%s2847 + $0xb2] sm:$0xff]
        %v7226 = vld [vmem:[%s2847 + $0xc2] sm:$0xff]
        %v7227 = vld [vmem:[%s2847 + $0xca] sm:$0xff]
        %v7228 = vld [vmem:[%s2847 + $0xda] sm:$0xff]
        %v7229 = vld [vmem:[%s2847 + $0xe2] sm:$0xff]
        %v7230 = vld [vmem:[%s2847 + $0xf2] sm:$0xff]
        %v7231 = vld [vmem:[%s2847 + $0xfa] sm:$0xff]
        %v7232 = vld [vmem:[%s2847 + $0x10a] sm:$0xff]
        %v7233 = vld [vmem:[%s2847 + $0x112] sm:$0xff]
        %v7234 = vld [vmem:[%s2847 + $0x122] sm:$0xff]
        %v7235 = vld [vmem:[%s2847 + $0x12a] sm:$0xff]
        %v7236 = vld [vmem:[%s2847 + $0x13a] sm:$0xff]
        %v7237 = vld [vmem:[%s2847 + $0x142] sm:$0xff]
        %v7238 = vld [vmem:[%s2847 + $0x152] sm:$0xff]
        %v7239 = vld [vmem:[%s2847 + $0x15a] sm:$0xff]
        %v7240 = vld [vmem:[%s2847 + $0x16a] sm:$0xff]
        %v7241 = vld [vmem:[%s2847 + $0x172] sm:$0xff]
        %v7242 = vld [vmem:[%s3 + $0x200] sm:$0xff]
        %v7243 = vld [vmem:[%s3 + $0x208] sm:$0xff]
        %v7244 = vld [vmem:[%s3 + $0x210] sm:$0xff]
        %v7245 = vld [vmem:[%s3 + $0x218] sm:$0xff]
        %v7246 = vld [vmem:[%s3 + $0x220] sm:$0xff]
        %v7247 = vld [vmem:[%s3 + $0x228] sm:$0xff]
        %v7248 = vld [vmem:[%s3 + $0x230] sm:$0xff]
        %v7249 = vld [vmem:[%s3 + $0x238] sm:$0xff]
        %v7251 = vsel %vm417, %v7210, 0
        %v7254 = vsel %vm417, %v7211, 0
        %v7257 = vsel %vm417, %v7212, 0
        %v7260 = vsel %vm417, %v7213, 0
        %v7263 = vsel %vm417, %v7214, 0
        %v7266 = vsel %vm417, %v7215, 0
        %v7269 = vsel %vm417, %v7216, 0
        %v7272 = vsel %vm417, %v7217, 0
        %v7275 = vsel %vm417, %v7218, 0
        %v7278 = vsel %vm417, %v7219, 0
        %v7281 = vsel %vm417, %v7220, 0
        %v7284 = vsel %vm417, %v7221, 0
        %v7287 = vsel %vm417, %v7222, 0
        %v7290 = vsel %vm417, %v7223, 0
        %v7293 = vsel %vm417, %v7224, 0
        %v7296 = vsel %vm417, %v7225, 0
        %v7299 = vsel %vm417, %v7226, 0
        %v7302 = vsel %vm417, %v7227, 0
        %v7305 = vsel %vm417, %v7228, 0
        %v7308 = vsel %vm417, %v7229, 0
        %v7311 = vsel %vm417, %v7230, 0
        %v7314 = vsel %vm417, %v7231, 0
        %v7317 = vsel %vm417, %v7232, 0
        %v7320 = vsel %vm417, %v7233, 0
        %v7323 = vsel %vm417, %v7234, 0
        %v7326 = vsel %vm417, %v7235, 0
        %v7329 = vsel %vm417, %v7236, 0
        %v7332 = vsel %vm417, %v7237, 0
        %v7335 = vsel %vm417, %v7238, 0
        %v7338 = vsel %vm417, %v7239, 0
        %v7341 = vsel %vm417, %v7240, 0
        %v7344 = vsel %vm417, %v7241, 0
        %7346 = vmatprep.subr.mxu0 0.0
        %7347 = vmatpush1.msra.mxu0 0.0
        %7348 = vmatprep.subr.mxu0 0.0
        %7349 = vmatpush1.msra.mxu0 0.0
        %7350 = vmatprep.subr.mxu0 0.0
        %7351 = vmatpush1.msra.mxu0 0.0
        %7352 = vmatprep.subr.mxu0 0.0
        %7353 = vmatpush1.msra.mxu0 0.0
        %7354 = vmatprep.subr.mxu0 0.0
        %7355 = vmatpush1.msra.mxu0 0.0
        %7356 = vmatprep.subr.mxu0 0.0
        %7357 = vmatpush1.msra.mxu0 0.0
        %7358 = vmatprep.subr.mxu0 0.0
        %7359 = vmatpush1.msra.mxu0 0.0
        %7360 = vmatprep.subr.mxu0 0.0
        %7361 = vmatpush1.msra.mxu0 0.0
        %7362 = vmatprep.subr.mxu0 0.0
        %7363 = vmatpush1.msra.mxu0 %v7249
        %7364 = vmatprep.subr.mxu0 0.0
        %7365 = vmatpush1.msra.mxu0 %v7248
        %7366 = vmatprep.subr.mxu0 0.0
        %7367 = vmatpush1.msra.mxu0 %v7247
        %7368 = vmatprep.subr.mxu0 0.0
        %7369 = vmatpush1.msra.mxu0 %v7246
        %7370 = vmatprep.subr.mxu0 0.0
        %7371 = vmatpush1.msra.mxu0 %v7245
        %7372 = vmatprep.subr.mxu0 0.0
        %7373 = vmatpush1.msra.mxu0 %v7244
        %7374 = vmatprep.subr.mxu0 0.0
        %7375 = vmatpush1.msra.mxu0 %v7243
        %7376 = vmatprep.subr.mxu0 0.0
        %7377 = vmatpush1.msra.mxu0 %v7242
        %7378 = vmatprep.subr.mxu0 0.0
        %7379 = vmatpush2.msra.mxu0 0.0
        %7380 = vmatprep.subr.mxu0 0.0
        %7381 = vmatpush2.msra.mxu0 0.0
        %7382 = vmatprep.subr.mxu0 0.0
        %7383 = vmatpush2.msra.mxu0 0.0
        %7384 = vmatprep.subr.mxu0 0.0
        %7385 = vmatpush2.msra.mxu0 0.0
        %7386 = vmatprep.subr.mxu0 0.0
        %7387 = vmatpush2.msra.mxu0 0.0
        %7388 = vmatprep.subr.mxu0 0.0
        %7389 = vmatpush2.msra.mxu0 0.0
        %7390 = vmatprep.subr.mxu0 0.0
        %7391 = vmatpush2.msra.mxu0 0.0
        %7392 = vmatprep.subr.mxu0 0.0
        %7393 = vmatpush2.msra.mxu0 0.0
        %7394 = vmatprep.subr.mxu0 0.0
        %7395 = vmatpush2.msra.mxu0 0.0
        %7396 = vmatprep.subr.mxu0 0.0
        %7397 = vmatpush2.msra.mxu0 0.0
        %7398 = vmatprep.subr.mxu0 0.0
        %7399 = vmatpush2.msra.mxu0 0.0
        %7400 = vmatprep.subr.mxu0 0.0
        %7401 = vmatpush2.msra.mxu0 0.0
        %7402 = vmatprep.subr.mxu0 0.0
        %7403 = vmatpush2.msra.mxu0 0.0
        %7404 = vmatprep.subr.mxu0 0.0
        %7405 = vmatpush2.msra.mxu0 0.0
        %7406 = vmatprep.subr.mxu0 0.0
        %7407 = vmatpush2.msra.mxu0 0.0
        %7408 = vmatprep.subr.mxu0 0.0
        %7409 = vmatpush2.msra.mxu0 0.0
        %7410 = vmatprep.mubr.f32.mxu0 0.0
        %7411 = vmatmul.mubr.f32.gmra.mxu0 %v7251
        %v7412 = vpop.f32.mrf.mxu0
        %v7413 = vadd.f32 0.0, %v7412
        %v7414 = vpop.f32.mrf.mxu0
        %7415 = vmatprep.mubr.f32.mxu0 0.0
        %7416 = vmatmul.mubr.f32.gmra.mxu0 %v7254
        %v7417 = vpop.f32.mrf.mxu0
        %v7418 = vadd.f32 0.0, %v7417
        %v7419 = vpop.f32.mrf.mxu0
        %7420 = vmatprep.mubr.f32.mxu0 0.0
        %7421 = vmatmul.mubr.f32.gmra.mxu0 %v7257
        %v7422 = vpop.f32.mrf.mxu0
        %v7423 = vadd.f32 0.0, %v7422
        %v7424 = vpop.f32.mrf.mxu0
        %7425 = vmatprep.mubr.f32.mxu0 0.0
        %7426 = vmatmul.mubr.f32.gmra.mxu0 %v7260
        %v7427 = vpop.f32.mrf.mxu0
        %v7428 = vadd.f32 0.0, %v7427
        %v7429 = vpop.f32.mrf.mxu0
        %7430 = vmatprep.mubr.f32.mxu0 0.0
        %7431 = vmatmul.mubr.f32.gmra.mxu0 %v7263
        %v7432 = vpop.f32.mrf.mxu0
        %v7433 = vadd.f32 0.0, %v7432
        %v7434 = vpop.f32.mrf.mxu0
        %7435 = vmatprep.mubr.f32.mxu0 0.0
        %7436 = vmatmul.mubr.f32.gmra.mxu0 %v7266
        %v7437 = vpop.f32.mrf.mxu0
        %v7438 = vadd.f32 0.0, %v7437
        %v7439 = vpop.f32.mrf.mxu0
        %7440 = vmatprep.mubr.f32.mxu0 0.0
        %7441 = vmatmul.mubr.f32.gmra.mxu0 %v7269
        %v7442 = vpop.f32.mrf.mxu0
        %v7443 = vadd.f32 0.0, %v7442
        %v7444 = vpop.f32.mrf.mxu0
        %7445 = vmatprep.mubr.f32.mxu0 0.0
        %7446 = vmatmul.mubr.f32.gmra.mxu0 %v7272
        %v7447 = vpop.f32.mrf.mxu0
        %v7448 = vadd.f32 0.0, %v7447
        %v7449 = vpop.f32.mrf.mxu0
        %7450 = vmatprep.mubr.f32.mxu0 0.0
        %7451 = vmatmul.mubr.f32.gmra.mxu0 %v7275
        %v7452 = vpop.f32.mrf.mxu0
        %v7453 = vadd.f32 0.0, %v7452
        %v7454 = vpop.f32.mrf.mxu0
        %7455 = vmatprep.mubr.f32.mxu0 0.0
        %7456 = vmatmul.mubr.f32.gmra.mxu0 %v7278
        %v7457 = vpop.f32.mrf.mxu0
        %v7458 = vadd.f32 0.0, %v7457
        %v7459 = vpop.f32.mrf.mxu0
        %7460 = vmatprep.mubr.f32.mxu0 0.0
        %7461 = vmatmul.mubr.f32.gmra.mxu0 %v7281
        %v7462 = vpop.f32.mrf.mxu0
        %v7463 = vadd.f32 0.0, %v7462
        %v7464 = vpop.f32.mrf.mxu0
        %7465 = vmatprep.mubr.f32.mxu0 0.0
        %7466 = vmatmul.mubr.f32.gmra.mxu0 %v7284
        %v7467 = vpop.f32.mrf.mxu0
        %v7468 = vadd.f32 0.0, %v7467
        %v7469 = vpop.f32.mrf.mxu0
        %7470 = vmatprep.mubr.f32.mxu0 0.0
        %7471 = vmatmul.mubr.f32.gmra.mxu0 %v7287
        %v7472 = vpop.f32.mrf.mxu0
        %v7473 = vadd.f32 0.0, %v7472
        %v7474 = vpop.f32.mrf.mxu0
        %7475 = vmatprep.mubr.f32.mxu0 0.0
        %7476 = vmatmul.mubr.f32.gmra.mxu0 %v7290
        %v7477 = vpop.f32.mrf.mxu0
        %v7478 = vadd.f32 0.0, %v7477
        %v7479 = vpop.f32.mrf.mxu0
        %7480 = vmatprep.mubr.f32.mxu0 0.0
        %7481 = vmatmul.mubr.f32.gmra.mxu0 %v7293
        %v7482 = vpop.f32.mrf.mxu0
        %v7483 = vadd.f32 0.0, %v7482
        %v7484 = vpop.f32.mrf.mxu0
        %7485 = vmatprep.mubr.f32.mxu0 0.0
        %7486 = vmatmul.mubr.f32.gmra.mxu0 %v7296
        %v7487 = vpop.f32.mrf.mxu0
        %v7488 = vadd.f32 0.0, %v7487
        %v7489 = vpop.f32.mrf.mxu0
        %7490 = vmatprep.mubr.f32.mxu0 0.0
        %7491 = vmatmul.mubr.f32.gmra.mxu0 %v7299
        %v7492 = vpop.f32.mrf.mxu0
        %v7493 = vadd.f32 0.0, %v7492
        %v7494 = vpop.f32.mrf.mxu0
        %7495 = vmatprep.mubr.f32.mxu0 0.0
        %7496 = vmatmul.mubr.f32.gmra.mxu0 %v7302
        %v7497 = vpop.f32.mrf.mxu0
        %v7498 = vadd.f32 0.0, %v7497
        %v7499 = vpop.f32.mrf.mxu0
        %7500 = vmatprep.mubr.f32.mxu0 0.0
        %7501 = vmatmul.mubr.f32.gmra.mxu0 %v7305
        %v7502 = vpop.f32.mrf.mxu0
        %v7503 = vadd.f32 0.0, %v7502
        %v7504 = vpop.f32.mrf.mxu0
        %7505 = vmatprep.mubr.f32.mxu0 0.0
        %7506 = vmatmul.mubr.f32.gmra.mxu0 %v7308
        %v7507 = vpop.f32.mrf.mxu0
        %v7508 = vadd.f32 0.0, %v7507
        %v7509 = vpop.f32.mrf.mxu0
        %7510 = vmatprep.mubr.f32.mxu0 0.0
        %7511 = vmatmul.mubr.f32.gmra.mxu0 %v7311
        %v7512 = vpop.f32.mrf.mxu0
        %v7513 = vadd.f32 0.0, %v7512
        %v7514 = vpop.f32.mrf.mxu0
        %7515 = vmatprep.mubr.f32.mxu0 0.0
        %7516 = vmatmul.mubr.f32.gmra.mxu0 %v7314
        %v7517 = vpop.f32.mrf.mxu0
        %v7518 = vadd.f32 0.0, %v7517
        %v7519 = vpop.f32.mrf.mxu0
        %7520 = vmatprep.mubr.f32.mxu0 0.0
        %7521 = vmatmul.mubr.f32.gmra.mxu0 %v7317
        %v7522 = vpop.f32.mrf.mxu0
        %v7523 = vadd.f32 0.0, %v7522
        %v7524 = vpop.f32.mrf.mxu0
        %7525 = vmatprep.mubr.f32.mxu0 0.0
        %7526 = vmatmul.mubr.f32.gmra.mxu0 %v7320
        %v7527 = vpop.f32.mrf.mxu0
        %v7528 = vadd.f32 0.0, %v7527
        %v7529 = vpop.f32.mrf.mxu0
        %7530 = vmatprep.mubr.f32.mxu0 0.0
        %7531 = vmatmul.mubr.f32.gmra.mxu0 %v7323
        %v7532 = vpop.f32.mrf.mxu0
        %v7533 = vadd.f32 0.0, %v7532
        %v7534 = vpop.f32.mrf.mxu0
        %7535 = vmatprep.mubr.f32.mxu0 0.0
        %7536 = vmatmul.mubr.f32.gmra.mxu0 %v7326
        %v7537 = vpop.f32.mrf.mxu0
        %v7538 = vadd.f32 0.0, %v7537
        %v7539 = vpop.f32.mrf.mxu0
        %7540 = vmatprep.mubr.f32.mxu0 0.0
        %7541 = vmatmul.mubr.f32.gmra.mxu0 %v7329
        %v7542 = vpop.f32.mrf.mxu0
        %v7543 = vadd.f32 0.0, %v7542
        %v7544 = vpop.f32.mrf.mxu0
        %7545 = vmatprep.mubr.f32.mxu0 0.0
        %7546 = vmatmul.mubr.f32.gmra.mxu0 %v7332
        %v7547 = vpop.f32.mrf.mxu0
        %v7548 = vadd.f32 0.0, %v7547
        %v7549 = vpop.f32.mrf.mxu0
        %7550 = vmatprep.mubr.f32.mxu0 0.0
        %7551 = vmatmul.mubr.f32.gmra.mxu0 %v7335
        %v7552 = vpop.f32.mrf.mxu0
        %v7553 = vadd.f32 0.0, %v7552
        %v7554 = vpop.f32.mrf.mxu0
        %7555 = vmatprep.mubr.f32.mxu0 0.0
        %7556 = vmatmul.mubr.f32.gmra.mxu0 %v7338
        %v7557 = vpop.f32.mrf.mxu0
        %v7558 = vadd.f32 0.0, %v7557
        %v7559 = vpop.f32.mrf.mxu0
        %7560 = vmatprep.mubr.f32.mxu0 0.0
        %7561 = vmatmul.mubr.f32.gmra.mxu0 %v7341
        %v7562 = vpop.f32.mrf.mxu0
        %v7563 = vadd.f32 0.0, %v7562
        %v7564 = vpop.f32.mrf.mxu0
        %7565 = vmatprep.mubr.f32.mxu0 0.0
        %7566 = vmatmul.mubr.f32.gmra.mxu0 %v7344
        %v7567 = vpop.f32.mrf.mxu0
        %v7568 = vadd.f32 0.0, %v7567
        %v7569 = vpop.f32.mrf.mxu0
        %7570 = vdwg.mxu0
        %v7571 = vadd.f32 %v7178, %v7413
        %v7572 = vadd.f32 %v7179, %v7418
        %v7573 = vadd.f32 %v7180, %v7423
        %v7574 = vadd.f32 %v7181, %v7428
        %v7575 = vadd.f32 %v7182, %v7433
        %v7576 = vadd.f32 %v7183, %v7438
        %v7577 = vadd.f32 %v7184, %v7443
        %v7578 = vadd.f32 %v7185, %v7448
        %v7579 = vadd.f32 %v7186, %v7453
        %v7580 = vadd.f32 %v7187, %v7458
        %v7581 = vadd.f32 %v7188, %v7463
        %v7582 = vadd.f32 %v7189, %v7468
        %v7583 = vadd.f32 %v7190, %v7473
        %v7584 = vadd.f32 %v7191, %v7478
        %v7585 = vadd.f32 %v7192, %v7483
        %v7586 = vadd.f32 %v7193, %v7488
        %v7587 = vadd.f32 %v7194, %v7493
        %v7588 = vadd.f32 %v7195, %v7498
        %v7589 = vadd.f32 %v7196, %v7503
        %v7590 = vadd.f32 %v7197, %v7508
        %v7591 = vadd.f32 %v7198, %v7513
        %v7592 = vadd.f32 %v7199, %v7518
        %v7593 = vadd.f32 %v7200, %v7523
        %v7594 = vadd.f32 %v7201, %v7528
        %v7595 = vadd.f32 %v7202, %v7533
        %v7596 = vadd.f32 %v7203, %v7538
        %v7597 = vadd.f32 %v7204, %v7543
        %v7598 = vadd.f32 %v7205, %v7548
        %v7599 = vadd.f32 %v7206, %v7553
        %v7600 = vadd.f32 %v7207, %v7558
        %v7601 = vadd.f32 %v7208, %v7563
        %v7602 = vadd.f32 %v7209, %v7568
        %v7603 = vld [vmem:[%s4] sm:$0x1]
        %v7605 = vlaneseq
        %v7606 = vshrl.u32 %v7605, 7
        %v7607 = vsub.s32 0, %v7606
        %v7608 = vrot.slane %v7603, %v7607
        %v7610 = vadd.f32 %v7571, %v7608
        %v7611 = vadd.f32 %v7572, %v7608
        %v7612 = vadd.f32 %v7573, %v7608
        %v7613 = vadd.f32 %v7574, %v7608
        %v7614 = vadd.f32 %v7575, %v7608
        %v7615 = vadd.f32 %v7576, %v7608
        %v7616 = vadd.f32 %v7577, %v7608
        %v7617 = vadd.f32 %v7578, %v7608
        %v7618 = vadd.f32 %v7579, %v7608
        %v7619 = vadd.f32 %v7580, %v7608
        %v7620 = vadd.f32 %v7581, %v7608
        %v7621 = vadd.f32 %v7582, %v7608
        %v7622 = vadd.f32 %v7583, %v7608
        %v7623 = vadd.f32 %v7584, %v7608
        %v7624 = vadd.f32 %v7585, %v7608
        %v7625 = vadd.f32 %v7586, %v7608
        %v7626 = vadd.f32 %v7587, %v7608
        %v7627 = vadd.f32 %v7588, %v7608
        %v7628 = vadd.f32 %v7589, %v7608
        %v7629 = vadd.f32 %v7590, %v7608
        %v7630 = vadd.f32 %v7591, %v7608
        %v7631 = vadd.f32 %v7592, %v7608
        %v7632 = vadd.f32 %v7593, %v7608
        %v7633 = vadd.f32 %v7594, %v7608
        %v7634 = vadd.f32 %v7595, %v7608
        %v7635 = vadd.f32 %v7596, %v7608
        %v7636 = vadd.f32 %v7597, %v7608
        %v7637 = vadd.f32 %v7598, %v7608
        %v7638 = vadd.f32 %v7599, %v7608
        %v7639 = vadd.f32 %v7600, %v7608
        %v7640 = vadd.f32 %v7601, %v7608
        %v7641 = vadd.f32 %v7602, %v7608
        %v7642 = vmax.f32 %v7610, 0.0
        %v7643 = vmax.f32 %v7611, 0.0
        %v7644 = vmax.f32 %v7612, 0.0
        %v7645 = vmax.f32 %v7613, 0.0
        %v7646 = vmax.f32 %v7614, 0.0
        %v7647 = vmax.f32 %v7615, 0.0
        %v7648 = vmax.f32 %v7616, 0.0
        %v7649 = vmax.f32 %v7617, 0.0
        %v7650 = vmax.f32 %v7618, 0.0
        %v7651 = vmax.f32 %v7619, 0.0
        %v7652 = vmax.f32 %v7620, 0.0
        %v7653 = vmax.f32 %v7621, 0.0
        %v7654 = vmax.f32 %v7622, 0.0
        %v7655 = vmax.f32 %v7623, 0.0
        %v7656 = vmax.f32 %v7624, 0.0
        %v7657 = vmax.f32 %v7625, 0.0
        %v7658 = vmax.f32 %v7626, 0.0
        %v7659 = vmax.f32 %v7627, 0.0
        %v7660 = vmax.f32 %v7628, 0.0
        %v7661 = vmax.f32 %v7629, 0.0
        %v7662 = vmax.f32 %v7630, 0.0
        %v7663 = vmax.f32 %v7631, 0.0
        %v7664 = vmax.f32 %v7632, 0.0
        %v7665 = vmax.f32 %v7633, 0.0
        %v7666 = vmax.f32 %v7634, 0.0
        %v7667 = vmax.f32 %v7635, 0.0
        %v7668 = vmax.f32 %v7636, 0.0
        %v7669 = vmax.f32 %v7637, 0.0
        %v7670 = vmax.f32 %v7638, 0.0
        %v7671 = vmax.f32 %v7639, 0.0
        %v7672 = vmax.f32 %v7640, 0.0
        %v7673 = vmax.f32 %v7641, 0.0
        %v7674 = vmax.f32 %v7642, %v7644
        %v7675 = vmax.f32 %v7643, %v7645
        %v7676 = vmax.f32 %v7646, %v7648
        %v7677 = vmax.f32 %v7647, %v7649
        %v7678 = vmax.f32 %v7650, %v7652
        %v7679 = vmax.f32 %v7651, %v7653
        %v7680 = vmax.f32 %v7654, %v7656
        %v7681 = vmax.f32 %v7655, %v7657
        %v7682 = vmax.f32 %v7658, %v7660
        %v7683 = vmax.f32 %v7659, %v7661
        %v7684 = vmax.f32 %v7662, %v7664
        %v7685 = vmax.f32 %v7663, %v7665
        %v7686 = vmax.f32 %v7666, %v7668
        %v7687 = vmax.f32 %v7667, %v7669
        %v7688 = vmax.f32 %v7670, %v7672
        %v7689 = vmax.f32 %v7671, %v7673
        %v7706 = vcombine.high %v7674, %v7674
        %v7708 = vunpack.c.l.s4 1983009808
        %v7709 = vunpack.c.0.s8 %v7708
        %v7710 = vlaneseq
        %v7711 = vshrl.u32 %v7710, 7
        %v7712 = vsub.s32 %v7709, %v7711
        %v7713 = vrot.slane %v7674, %v7712
        %v7715 = vunpack.c.l.s4 1983009808
        %v7716 = vunpack.c.0.s8 %v7715
        %v7717 = vlaneseq
        %v7718 = vshrl.u32 %v7717, 7
        %v7719 = vsub.s32 %v7716, %v7718
        %v7720 = vrot.slane %v7706, %v7719
        %v7721 = vcombine.high %v7713, %v7713
        %v7722 = vcombine.high %v7720, %v7720
        %v7723 = vcombine.high %v7675, %v7675
        %v7725 = vunpack.c.l.s4 1983009808
        %v7726 = vunpack.c.0.s8 %v7725
        %v7727 = vlaneseq
        %v7728 = vshrl.u32 %v7727, 7
        %v7729 = vsub.s32 %v7726, %v7728
        %v7730 = vrot.slane %v7675, %v7729
        %v7732 = vunpack.c.l.s4 1983009808
        %v7733 = vunpack.c.0.s8 %v7732
        %v7734 = vlaneseq
        %v7735 = vshrl.u32 %v7734, 7
        %v7736 = vsub.s32 %v7733, %v7735
        %v7737 = vrot.slane %v7723, %v7736
        %v7738 = vcombine.high %v7730, %v7730
        %v7739 = vcombine.high %v7737, %v7737
        %v7740 = vcombine.high %v7676, %v7676
        %v7742 = vunpack.c.l.s4 1983009808
        %v7743 = vunpack.c.0.s8 %v7742
        %v7744 = vlaneseq
        %v7745 = vshrl.u32 %v7744, 7
        %v7746 = vsub.s32 %v7743, %v7745
        %v7747 = vrot.slane %v7676, %v7746
        %v7749 = vunpack.c.l.s4 1983009808
        %v7750 = vunpack.c.0.s8 %v7749
        %v7751 = vlaneseq
        %v7752 = vshrl.u32 %v7751, 7
        %v7753 = vsub.s32 %v7750, %v7752
        %v7754 = vrot.slane %v7740, %v7753
        %v7755 = vcombine.high %v7747, %v7747
        %v7756 = vcombine.high %v7754, %v7754
        %v7757 = vcombine.high %v7677, %v7677
        %v7759 = vunpack.c.l.s4 1983009808
        %v7760 = vunpack.c.0.s8 %v7759
        %v7761 = vlaneseq
        %v7762 = vshrl.u32 %v7761, 7
        %v7763 = vsub.s32 %v7760, %v7762
        %v7764 = vrot.slane %v7677, %v7763
        %v7766 = vunpack.c.l.s4 1983009808
        %v7767 = vunpack.c.0.s8 %v7766
        %v7768 = vlaneseq
        %v7769 = vshrl.u32 %v7768, 7
        %v7770 = vsub.s32 %v7767, %v7769
        %v7771 = vrot.slane %v7757, %v7770
        %v7772 = vcombine.high %v7764, %v7764
        %v7773 = vcombine.high %v7771, %v7771
        %v7774 = vcombine.high %v7678, %v7678
        %v7776 = vunpack.c.l.s4 1983009808
        %v7777 = vunpack.c.0.s8 %v7776
        %v7778 = vlaneseq
        %v7779 = vshrl.u32 %v7778, 7
        %v7780 = vsub.s32 %v7777, %v7779
        %v7781 = vrot.slane %v7678, %v7780
        %v7783 = vunpack.c.l.s4 1983009808
        %v7784 = vunpack.c.0.s8 %v7783
        %v7785 = vlaneseq
        %v7786 = vshrl.u32 %v7785, 7
        %v7787 = vsub.s32 %v7784, %v7786
        %v7788 = vrot.slane %v7774, %v7787
        %v7789 = vcombine.high %v7781, %v7781
        %v7790 = vcombine.high %v7788, %v7788
        %v7791 = vcombine.high %v7679, %v7679
        %v7793 = vunpack.c.l.s4 1983009808
        %v7794 = vunpack.c.0.s8 %v7793
        %v7795 = vlaneseq
        %v7796 = vshrl.u32 %v7795, 7
        %v7797 = vsub.s32 %v7794, %v7796
        %v7798 = vrot.slane %v7679, %v7797
        %v7800 = vunpack.c.l.s4 1983009808
        %v7801 = vunpack.c.0.s8 %v7800
        %v7802 = vlaneseq
        %v7803 = vshrl.u32 %v7802, 7
        %v7804 = vsub.s32 %v7801, %v7803
        %v7805 = vrot.slane %v7791, %v7804
        %v7806 = vcombine.high %v7798, %v7798
        %v7807 = vcombine.high %v7805, %v7805
        %v7808 = vcombine.high %v7680, %v7680
        %v7810 = vunpack.c.l.s4 1983009808
        %v7811 = vunpack.c.0.s8 %v7810
        %v7812 = vlaneseq
        %v7813 = vshrl.u32 %v7812, 7
        %v7814 = vsub.s32 %v7811, %v7813
        %v7815 = vrot.slane %v7680, %v7814
        %v7817 = vunpack.c.l.s4 1983009808
        %v7818 = vunpack.c.0.s8 %v7817
        %v7819 = vlaneseq
        %v7820 = vshrl.u32 %v7819, 7
        %v7821 = vsub.s32 %v7818, %v7820
        %v7822 = vrot.slane %v7808, %v7821
        %v7823 = vcombine.high %v7815, %v7815
        %v7824 = vcombine.high %v7822, %v7822
        %v7825 = vcombine.high %v7681, %v7681
        %v7827 = vunpack.c.l.s4 1983009808
        %v7828 = vunpack.c.0.s8 %v7827
        %v7829 = vlaneseq
        %v7830 = vshrl.u32 %v7829, 7
        %v7831 = vsub.s32 %v7828, %v7830
        %v7832 = vrot.slane %v7681, %v7831
        %v7834 = vunpack.c.l.s4 1983009808
        %v7835 = vunpack.c.0.s8 %v7834
        %v7836 = vlaneseq
        %v7837 = vshrl.u32 %v7836, 7
        %v7838 = vsub.s32 %v7835, %v7837
        %v7839 = vrot.slane %v7825, %v7838
        %v7840 = vcombine.high %v7832, %v7832
        %v7841 = vcombine.high %v7839, %v7839
        %v7842 = vcombine.high %v7682, %v7682
        %v7844 = vunpack.c.l.s4 1983009808
        %v7845 = vunpack.c.0.s8 %v7844
        %v7846 = vlaneseq
        %v7847 = vshrl.u32 %v7846, 7
        %v7848 = vsub.s32 %v7845, %v7847
        %v7849 = vrot.slane %v7682, %v7848
        %v7851 = vunpack.c.l.s4 1983009808
        %v7852 = vunpack.c.0.s8 %v7851
        %v7853 = vlaneseq
        %v7854 = vshrl.u32 %v7853, 7
        %v7855 = vsub.s32 %v7852, %v7854
        %v7856 = vrot.slane %v7842, %v7855
        %v7857 = vcombine.high %v7849, %v7849
        %v7858 = vcombine.high %v7856, %v7856
        %v7859 = vcombine.high %v7683, %v7683
        %v7861 = vunpack.c.l.s4 1983009808
        %v7862 = vunpack.c.0.s8 %v7861
        %v7863 = vlaneseq
        %v7864 = vshrl.u32 %v7863, 7
        %v7865 = vsub.s32 %v7862, %v7864
        %v7866 = vrot.slane %v7683, %v7865
        %v7868 = vunpack.c.l.s4 1983009808
        %v7869 = vunpack.c.0.s8 %v7868
        %v7870 = vlaneseq
        %v7871 = vshrl.u32 %v7870, 7
        %v7872 = vsub.s32 %v7869, %v7871
        %v7873 = vrot.slane %v7859, %v7872
        %v7874 = vcombine.high %v7866, %v7866
        %v7875 = vcombine.high %v7873, %v7873
        %v7876 = vcombine.high %v7684, %v7684
        %v7878 = vunpack.c.l.s4 1983009808
        %v7879 = vunpack.c.0.s8 %v7878
        %v7880 = vlaneseq
        %v7881 = vshrl.u32 %v7880, 7
        %v7882 = vsub.s32 %v7879, %v7881
        %v7883 = vrot.slane %v7684, %v7882
        %v7885 = vunpack.c.l.s4 1983009808
        %v7886 = vunpack.c.0.s8 %v7885
        %v7887 = vlaneseq
        %v7888 = vshrl.u32 %v7887, 7
        %v7889 = vsub.s32 %v7886, %v7888
        %v7890 = vrot.slane %v7876, %v7889
        %v7891 = vcombine.high %v7883, %v7883
        %v7892 = vcombine.high %v7890, %v7890
        %v7893 = vcombine.high %v7685, %v7685
        %v7895 = vunpack.c.l.s4 1983009808
        %v7896 = vunpack.c.0.s8 %v7895
        %v7897 = vlaneseq
        %v7898 = vshrl.u32 %v7897, 7
        %v7899 = vsub.s32 %v7896, %v7898
        %v7900 = vrot.slane %v7685, %v7899
        %v7902 = vunpack.c.l.s4 1983009808
        %v7903 = vunpack.c.0.s8 %v7902
        %v7904 = vlaneseq
        %v7905 = vshrl.u32 %v7904, 7
        %v7906 = vsub.s32 %v7903, %v7905
        %v7907 = vrot.slane %v7893, %v7906
        %v7908 = vcombine.high %v7900, %v7900
        %v7909 = vcombine.high %v7907, %v7907
        %v7910 = vcombine.high %v7686, %v7686
        %v7912 = vunpack.c.l.s4 1983009808
        %v7913 = vunpack.c.0.s8 %v7912
        %v7914 = vlaneseq
        %v7915 = vshrl.u32 %v7914, 7
        %v7916 = vsub.s32 %v7913, %v7915
        %v7917 = vrot.slane %v7686, %v7916
        %v7919 = vunpack.c.l.s4 1983009808
        %v7920 = vunpack.c.0.s8 %v7919
        %v7921 = vlaneseq
        %v7922 = vshrl.u32 %v7921, 7
        %v7923 = vsub.s32 %v7920, %v7922
        %v7924 = vrot.slane %v7910, %v7923
        %v7925 = vcombine.high %v7917, %v7917
        %v7926 = vcombine.high %v7924, %v7924
        %v7927 = vcombine.high %v7687, %v7687
        %v7929 = vunpack.c.l.s4 1983009808
        %v7930 = vunpack.c.0.s8 %v7929
        %v7931 = vlaneseq
        %v7932 = vshrl.u32 %v7931, 7
        %v7933 = vsub.s32 %v7930, %v7932
        %v7934 = vrot.slane %v7687, %v7933
        %v7936 = vunpack.c.l.s4 1983009808
        %v7937 = vunpack.c.0.s8 %v7936
        %v7938 = vlaneseq
        %v7939 = vshrl.u32 %v7938, 7
        %v7940 = vsub.s32 %v7937, %v7939
        %v7941 = vrot.slane %v7927, %v7940
        %v7942 = vcombine.high %v7934, %v7934
        %v7943 = vcombine.high %v7941, %v7941
        %v7944 = vcombine.high %v7688, %v7688
        %v7946 = vunpack.c.l.s4 1983009808
        %v7947 = vunpack.c.0.s8 %v7946
        %v7948 = vlaneseq
        %v7949 = vshrl.u32 %v7948, 7
        %v7950 = vsub.s32 %v7947, %v7949
        %v7951 = vrot.slane %v7688, %v7950
        %v7953 = vunpack.c.l.s4 1983009808
        %v7954 = vunpack.c.0.s8 %v7953
        %v7955 = vlaneseq
        %v7956 = vshrl.u32 %v7955, 7
        %v7957 = vsub.s32 %v7954, %v7956
        %v7958 = vrot.slane %v7944, %v7957
        %v7959 = vcombine.high %v7951, %v7951
        %v7960 = vcombine.high %v7958, %v7958
        %v7961 = vcombine.high %v7689, %v7689
        %v7963 = vunpack.c.l.s4 1983009808
        %v7964 = vunpack.c.0.s8 %v7963
        %v7965 = vlaneseq
        %v7966 = vshrl.u32 %v7965, 7
        %v7967 = vsub.s32 %v7964, %v7966
        %v7968 = vrot.slane %v7689, %v7967
        %v7970 = vunpack.c.l.s4 1983009808
        %v7971 = vunpack.c.0.s8 %v7970
        %v7972 = vlaneseq
        %v7973 = vshrl.u32 %v7972, 7
        %v7974 = vsub.s32 %v7971, %v7973
        %v7975 = vrot.slane %v7961, %v7974
        %v7976 = vcombine.high %v7968, %v7968
        %v7977 = vcombine.high %v7975, %v7975
        %v8042 = vrot.slane %v7713, 7
        %v8043 = vrot.slane %v8042, 2
        %v8044 = vrot.slane %v7721, 7
        %v8045 = vrot.slane %v8044, 2
        %v8046 = vrot.slane %v7720, 7
        %v8047 = vrot.slane %v8046, 2
        %v8048 = vrot.slane %v7722, 7
        %v8049 = vrot.slane %v8048, 2
        %v8050 = vrot.slane %v7730, 7
        %v8051 = vrot.slane %v8050, 2
        %v8052 = vrot.slane %v7738, 7
        %v8053 = vrot.slane %v8052, 2
        %v8054 = vrot.slane %v7737, 7
        %v8055 = vrot.slane %v8054, 2
        %v8056 = vrot.slane %v7739, 7
        %v8057 = vrot.slane %v8056, 2
        %v8058 = vrot.slane %v7747, 7
        %v8059 = vrot.slane %v8058, 2
        %v8060 = vrot.slane %v7755, 7
        %v8061 = vrot.slane %v8060, 2
        %v8062 = vrot.slane %v7754, 7
        %v8063 = vrot.slane %v8062, 2
        %v8064 = vrot.slane %v7756, 7
        %v8065 = vrot.slane %v8064, 2
        %v8066 = vrot.slane %v7764, 7
        %v8067 = vrot.slane %v8066, 2
        %v8068 = vrot.slane %v7772, 7
        %v8069 = vrot.slane %v8068, 2
        %v8070 = vrot.slane %v7771, 7
        %v8071 = vrot.slane %v8070, 2
        %v8072 = vrot.slane %v7773, 7
        %v8073 = vrot.slane %v8072, 2
        %v8074 = vrot.slane %v7781, 7
        %v8075 = vrot.slane %v8074, 2
        %v8076 = vrot.slane %v7789, 7
        %v8077 = vrot.slane %v8076, 2
        %v8078 = vrot.slane %v7788, 7
        %v8079 = vrot.slane %v8078, 2
        %v8080 = vrot.slane %v7790, 7
        %v8081 = vrot.slane %v8080, 2
        %v8082 = vrot.slane %v7798, 7
        %v8083 = vrot.slane %v8082, 2
        %v8084 = vrot.slane %v7806, 7
        %v8085 = vrot.slane %v8084, 2
        %v8086 = vrot.slane %v7805, 7
        %v8087 = vrot.slane %v8086, 2
        %v8088 = vrot.slane %v7807, 7
        %v8089 = vrot.slane %v8088, 2
        %v8090 = vrot.slane %v7815, 7
        %v8091 = vrot.slane %v8090, 2
        %v8092 = vrot.slane %v7823, 7
        %v8093 = vrot.slane %v8092, 2
        %v8094 = vrot.slane %v7822, 7
        %v8095 = vrot.slane %v8094, 2
        %v8096 = vrot.slane %v7824, 7
        %v8097 = vrot.slane %v8096, 2
        %v8098 = vrot.slane %v7832, 7
        %v8099 = vrot.slane %v8098, 2
        %v8100 = vrot.slane %v7840, 7
        %v8101 = vrot.slane %v8100, 2
        %v8102 = vrot.slane %v7839, 7
        %v8103 = vrot.slane %v8102, 2
        %v8104 = vrot.slane %v7841, 7
        %v8105 = vrot.slane %v8104, 2
        %v8106 = vrot.slane %v7849, 7
        %v8107 = vrot.slane %v8106, 2
        %v8108 = vrot.slane %v7857, 7
        %v8109 = vrot.slane %v8108, 2
        %v8110 = vrot.slane %v7856, 7
        %v8111 = vrot.slane %v8110, 2
        %v8112 = vrot.slane %v7858, 7
        %v8113 = vrot.slane %v8112, 2
        %v8114 = vrot.slane %v7866, 7
        %v8115 = vrot.slane %v8114, 2
        %v8116 = vrot.slane %v7874, 7
        %v8117 = vrot.slane %v8116, 2
        %v8118 = vrot.slane %v7873, 7
        %v8119 = vrot.slane %v8118, 2
        %v8120 = vrot.slane %v7875, 7
        %v8121 = vrot.slane %v8120, 2
        %v8122 = vrot.slane %v7883, 7
        %v8123 = vrot.slane %v8122, 2
        %v8124 = vrot.slane %v7891, 7
        %v8125 = vrot.slane %v8124, 2
        %v8126 = vrot.slane %v7890, 7
        %v8127 = vrot.slane %v8126, 2
        %v8128 = vrot.slane %v7892, 7
        %v8129 = vrot.slane %v8128, 2
        %v8130 = vrot.slane %v7900, 7
        %v8131 = vrot.slane %v8130, 2
        %v8132 = vrot.slane %v7908, 7
        %v8133 = vrot.slane %v8132, 2
        %v8134 = vrot.slane %v7907, 7
        %v8135 = vrot.slane %v8134, 2
        %v8136 = vrot.slane %v7909, 7
        %v8137 = vrot.slane %v8136, 2
        %v8138 = vrot.slane %v7917, 7
        %v8139 = vrot.slane %v8138, 2
        %v8140 = vrot.slane %v7925, 7
        %v8141 = vrot.slane %v8140, 2
        %v8142 = vrot.slane %v7924, 7
        %v8143 = vrot.slane %v8142, 2
        %v8144 = vrot.slane %v7926, 7
        %v8145 = vrot.slane %v8144, 2
        %v8146 = vrot.slane %v7934, 7
        %v8147 = vrot.slane %v8146, 2
        %v8148 = vrot.slane %v7942, 7
        %v8149 = vrot.slane %v8148, 2
        %v8150 = vrot.slane %v7941, 7
        %v8151 = vrot.slane %v8150, 2
        %v8152 = vrot.slane %v7943, 7
        %v8153 = vrot.slane %v8152, 2
        %v8154 = vrot.slane %v7951, 7
        %v8155 = vrot.slane %v8154, 2
        %v8156 = vrot.slane %v7959, 7
        %v8157 = vrot.slane %v8156, 2
        %v8158 = vrot.slane %v7958, 7
        %v8159 = vrot.slane %v8158, 2
        %v8160 = vrot.slane %v7960, 7
        %v8161 = vrot.slane %v8160, 2
        %v8162 = vrot.slane %v7968, 7
        %v8163 = vrot.slane %v8162, 2
        %v8164 = vrot.slane %v7976, 7
        %v8165 = vrot.slane %v8164, 2
        %v8166 = vrot.slane %v7975, 7
        %v8167 = vrot.slane %v8166, 2
        %v8168 = vrot.slane %v7977, 7
        %v8169 = vrot.slane %v8168, 2
        %v8234 = vmax.f32 %v7713, %v8043
        %v8235 = vmax.f32 %v7721, %v8045
        %v8236 = vmax.f32 %v7720, %v8047
        %v8237 = vmax.f32 %v7722, %v8049
        %v8238 = vmax.f32 %v7730, %v8051
        %v8239 = vmax.f32 %v7738, %v8053
        %v8240 = vmax.f32 %v7737, %v8055
        %v8241 = vmax.f32 %v7739, %v8057
        %v8242 = vmax.f32 %v7747, %v8059
        %v8243 = vmax.f32 %v7755, %v8061
        %v8244 = vmax.f32 %v7754, %v8063
        %v8245 = vmax.f32 %v7756, %v8065
        %v8246 = vmax.f32 %v7764, %v8067
        %v8247 = vmax.f32 %v7772, %v8069
        %v8248 = vmax.f32 %v7771, %v8071
        %v8249 = vmax.f32 %v7773, %v8073
        %v8250 = vmax.f32 %v7781, %v8075
        %v8251 = vmax.f32 %v7789, %v8077
        %v8252 = vmax.f32 %v7788, %v8079
        %v8253 = vmax.f32 %v7790, %v8081
        %v8254 = vmax.f32 %v7798, %v8083
        %v8255 = vmax.f32 %v7806, %v8085
        %v8256 = vmax.f32 %v7805, %v8087
        %v8257 = vmax.f32 %v7807, %v8089
        %v8258 = vmax.f32 %v7815, %v8091
        %v8259 = vmax.f32 %v7823, %v8093
        %v8260 = vmax.f32 %v7822, %v8095
        %v8261 = vmax.f32 %v7824, %v8097
        %v8262 = vmax.f32 %v7832, %v8099
        %v8263 = vmax.f32 %v7840, %v8101
        %v8264 = vmax.f32 %v7839, %v8103
        %v8265 = vmax.f32 %v7841, %v8105
        %v8266 = vmax.f32 %v7849, %v8107
        %v8267 = vmax.f32 %v7857, %v8109
        %v8268 = vmax.f32 %v7856, %v8111
        %v8269 = vmax.f32 %v7858, %v8113
        %v8270 = vmax.f32 %v7866, %v8115
        %v8271 = vmax.f32 %v7874, %v8117
        %v8272 = vmax.f32 %v7873, %v8119
        %v8273 = vmax.f32 %v7875, %v8121
        %v8274 = vmax.f32 %v7883, %v8123
        %v8275 = vmax.f32 %v7891, %v8125
        %v8276 = vmax.f32 %v7890, %v8127
        %v8277 = vmax.f32 %v7892, %v8129
        %v8278 = vmax.f32 %v7900, %v8131
        %v8279 = vmax.f32 %v7908, %v8133
        %v8280 = vmax.f32 %v7907, %v8135
        %v8281 = vmax.f32 %v7909, %v8137
        %v8282 = vmax.f32 %v7917, %v8139
        %v8283 = vmax.f32 %v7925, %v8141
        %v8284 = vmax.f32 %v7924, %v8143
        %v8285 = vmax.f32 %v7926, %v8145
        %v8286 = vmax.f32 %v7934, %v8147
        %v8287 = vmax.f32 %v7942, %v8149
        %v8288 = vmax.f32 %v7941, %v8151
        %v8289 = vmax.f32 %v7943, %v8153
        %v8290 = vmax.f32 %v7951, %v8155
        %v8291 = vmax.f32 %v7959, %v8157
        %v8292 = vmax.f32 %v7958, %v8159
        %v8293 = vmax.f32 %v7960, %v8161
        %v8294 = vmax.f32 %v7968, %v8163
        %v8295 = vmax.f32 %v7976, %v8165
        %v8296 = vmax.f32 %v7975, %v8167
        %v8297 = vmax.f32 %v7977, %v8169
        %v8362 = vlaneseq
        %v8363 = vshrl.u32 %v8362, 7
        %v8364 = vsub.s32 0, %v8363
        %v8365 = vrot.slane %v8234, %v8364
        %v8366 = vlaneseq
        %v8367 = vshrl.u32 %v8366, 7
        %v8368 = vsub.s32 0, %v8367
        %v8369 = vrot.slane %v8235, %v8368
        %v8370 = vlaneseq
        %v8371 = vshrl.u32 %v8370, 7
        %v8372 = vsub.s32 0, %v8371
        %v8373 = vrot.slane %v8236, %v8372
        %v8374 = vlaneseq
        %v8375 = vshrl.u32 %v8374, 7
        %v8376 = vsub.s32 0, %v8375
        %v8377 = vrot.slane %v8237, %v8376
        %v8378 = vlaneseq
        %v8379 = vshrl.u32 %v8378, 7
        %v8380 = vsub.s32 0, %v8379
        %v8381 = vrot.slane %v8238, %v8380
        %v8382 = vlaneseq
        %v8383 = vshrl.u32 %v8382, 7
        %v8384 = vsub.s32 0, %v8383
        %v8385 = vrot.slane %v8239, %v8384
        %v8386 = vlaneseq
        %v8387 = vshrl.u32 %v8386, 7
        %v8388 = vsub.s32 0, %v8387
        %v8389 = vrot.slane %v8240, %v8388
        %v8390 = vlaneseq
        %v8391 = vshrl.u32 %v8390, 7
        %v8392 = vsub.s32 0, %v8391
        %v8393 = vrot.slane %v8241, %v8392
        %v8394 = vlaneseq
        %v8395 = vshrl.u32 %v8394, 7
        %v8396 = vsub.s32 0, %v8395
        %v8397 = vrot.slane %v8242, %v8396
        %v8398 = vlaneseq
        %v8399 = vshrl.u32 %v8398, 7
        %v8400 = vsub.s32 0, %v8399
        %v8401 = vrot.slane %v8243, %v8400
        %v8402 = vlaneseq
        %v8403 = vshrl.u32 %v8402, 7
        %v8404 = vsub.s32 0, %v8403
        %v8405 = vrot.slane %v8244, %v8404
        %v8406 = vlaneseq
        %v8407 = vshrl.u32 %v8406, 7
        %v8408 = vsub.s32 0, %v8407
        %v8409 = vrot.slane %v8245, %v8408
        %v8410 = vlaneseq
        %v8411 = vshrl.u32 %v8410, 7
        %v8412 = vsub.s32 0, %v8411
        %v8413 = vrot.slane %v8246, %v8412
        %v8414 = vlaneseq
        %v8415 = vshrl.u32 %v8414, 7
        %v8416 = vsub.s32 0, %v8415
        %v8417 = vrot.slane %v8247, %v8416
        %v8418 = vlaneseq
        %v8419 = vshrl.u32 %v8418, 7
        %v8420 = vsub.s32 0, %v8419
        %v8421 = vrot.slane %v8248, %v8420
        %v8422 = vlaneseq
        %v8423 = vshrl.u32 %v8422, 7
        %v8424 = vsub.s32 0, %v8423
        %v8425 = vrot.slane %v8249, %v8424
        %v8426 = vlaneseq
        %v8427 = vshrl.u32 %v8426, 7
        %v8428 = vsub.s32 0, %v8427
        %v8429 = vrot.slane %v8250, %v8428
        %v8430 = vlaneseq
        %v8431 = vshrl.u32 %v8430, 7
        %v8432 = vsub.s32 0, %v8431
        %v8433 = vrot.slane %v8251, %v8432
        %v8434 = vlaneseq
        %v8435 = vshrl.u32 %v8434, 7
        %v8436 = vsub.s32 0, %v8435
        %v8437 = vrot.slane %v8252, %v8436
        %v8438 = vlaneseq
        %v8439 = vshrl.u32 %v8438, 7
        %v8440 = vsub.s32 0, %v8439
        %v8441 = vrot.slane %v8253, %v8440
        %v8442 = vlaneseq
        %v8443 = vshrl.u32 %v8442, 7
        %v8444 = vsub.s32 0, %v8443
        %v8445 = vrot.slane %v8254, %v8444
        %v8446 = vlaneseq
        %v8447 = vshrl.u32 %v8446, 7
        %v8448 = vsub.s32 0, %v8447
        %v8449 = vrot.slane %v8255, %v8448
        %v8450 = vlaneseq
        %v8451 = vshrl.u32 %v8450, 7
        %v8452 = vsub.s32 0, %v8451
        %v8453 = vrot.slane %v8256, %v8452
        %v8454 = vlaneseq
        %v8455 = vshrl.u32 %v8454, 7
        %v8456 = vsub.s32 0, %v8455
        %v8457 = vrot.slane %v8257, %v8456
        %v8458 = vlaneseq
        %v8459 = vshrl.u32 %v8458, 7
        %v8460 = vsub.s32 0, %v8459
        %v8461 = vrot.slane %v8258, %v8460
        %v8462 = vlaneseq
        %v8463 = vshrl.u32 %v8462, 7
        %v8464 = vsub.s32 0, %v8463
        %v8465 = vrot.slane %v8259, %v8464
        %v8466 = vlaneseq
        %v8467 = vshrl.u32 %v8466, 7
        %v8468 = vsub.s32 0, %v8467
        %v8469 = vrot.slane %v8260, %v8468
        %v8470 = vlaneseq
        %v8471 = vshrl.u32 %v8470, 7
        %v8472 = vsub.s32 0, %v8471
        %v8473 = vrot.slane %v8261, %v8472
        %v8474 = vlaneseq
        %v8475 = vshrl.u32 %v8474, 7
        %v8476 = vsub.s32 0, %v8475
        %v8477 = vrot.slane %v8262, %v8476
        %v8478 = vlaneseq
        %v8479 = vshrl.u32 %v8478, 7
        %v8480 = vsub.s32 0, %v8479
        %v8481 = vrot.slane %v8263, %v8480
        %v8482 = vlaneseq
        %v8483 = vshrl.u32 %v8482, 7
        %v8484 = vsub.s32 0, %v8483
        %v8485 = vrot.slane %v8264, %v8484
        %v8486 = vlaneseq
        %v8487 = vshrl.u32 %v8486, 7
        %v8488 = vsub.s32 0, %v8487
        %v8489 = vrot.slane %v8265, %v8488
        %v8490 = vlaneseq
        %v8491 = vshrl.u32 %v8490, 7
        %v8492 = vsub.s32 0, %v8491
        %v8493 = vrot.slane %v8266, %v8492
        %v8494 = vlaneseq
        %v8495 = vshrl.u32 %v8494, 7
        %v8496 = vsub.s32 0, %v8495
        %v8497 = vrot.slane %v8267, %v8496
        %v8498 = vlaneseq
        %v8499 = vshrl.u32 %v8498, 7
        %v8500 = vsub.s32 0, %v8499
        %v8501 = vrot.slane %v8268, %v8500
        %v8502 = vlaneseq
        %v8503 = vshrl.u32 %v8502, 7
        %v8504 = vsub.s32 0, %v8503
        %v8505 = vrot.slane %v8269, %v8504
        %v8506 = vlaneseq
        %v8507 = vshrl.u32 %v8506, 7
        %v8508 = vsub.s32 0, %v8507
        %v8509 = vrot.slane %v8270, %v8508
        %v8510 = vlaneseq
        %v8511 = vshrl.u32 %v8510, 7
        %v8512 = vsub.s32 0, %v8511
        %v8513 = vrot.slane %v8271, %v8512
        %v8514 = vlaneseq
        %v8515 = vshrl.u32 %v8514, 7
        %v8516 = vsub.s32 0, %v8515
        %v8517 = vrot.slane %v8272, %v8516
        %v8518 = vlaneseq
        %v8519 = vshrl.u32 %v8518, 7
        %v8520 = vsub.s32 0, %v8519
        %v8521 = vrot.slane %v8273, %v8520
        %v8522 = vlaneseq
        %v8523 = vshrl.u32 %v8522, 7
        %v8524 = vsub.s32 0, %v8523
        %v8525 = vrot.slane %v8274, %v8524
        %v8526 = vlaneseq
        %v8527 = vshrl.u32 %v8526, 7
        %v8528 = vsub.s32 0, %v8527
        %v8529 = vrot.slane %v8275, %v8528
        %v8530 = vlaneseq
        %v8531 = vshrl.u32 %v8530, 7
        %v8532 = vsub.s32 0, %v8531
        %v8533 = vrot.slane %v8276, %v8532
        %v8534 = vlaneseq
        %v8535 = vshrl.u32 %v8534, 7
        %v8536 = vsub.s32 0, %v8535
        %v8537 = vrot.slane %v8277, %v8536
        %v8538 = vlaneseq
        %v8539 = vshrl.u32 %v8538, 7
        %v8540 = vsub.s32 0, %v8539
        %v8541 = vrot.slane %v8278, %v8540
        %v8542 = vlaneseq
        %v8543 = vshrl.u32 %v8542, 7
        %v8544 = vsub.s32 0, %v8543
        %v8545 = vrot.slane %v8279, %v8544
        %v8546 = vlaneseq
        %v8547 = vshrl.u32 %v8546, 7
        %v8548 = vsub.s32 0, %v8547
        %v8549 = vrot.slane %v8280, %v8548
        %v8550 = vlaneseq
        %v8551 = vshrl.u32 %v8550, 7
        %v8552 = vsub.s32 0, %v8551
        %v8553 = vrot.slane %v8281, %v8552
        %v8554 = vlaneseq
        %v8555 = vshrl.u32 %v8554, 7
        %v8556 = vsub.s32 0, %v8555
        %v8557 = vrot.slane %v8282, %v8556
        %v8558 = vlaneseq
        %v8559 = vshrl.u32 %v8558, 7
        %v8560 = vsub.s32 0, %v8559
        %v8561 = vrot.slane %v8283, %v8560
        %v8562 = vlaneseq
        %v8563 = vshrl.u32 %v8562, 7
        %v8564 = vsub.s32 0, %v8563
        %v8565 = vrot.slane %v8284, %v8564
        %v8566 = vlaneseq
        %v8567 = vshrl.u32 %v8566, 7
        %v8568 = vsub.s32 0, %v8567
        %v8569 = vrot.slane %v8285, %v8568
        %v8570 = vlaneseq
        %v8571 = vshrl.u32 %v8570, 7
        %v8572 = vsub.s32 0, %v8571
        %v8573 = vrot.slane %v8286, %v8572
        %v8574 = vlaneseq
        %v8575 = vshrl.u32 %v8574, 7
        %v8576 = vsub.s32 0, %v8575
        %v8577 = vrot.slane %v8287, %v8576
        %v8578 = vlaneseq
        %v8579 = vshrl.u32 %v8578, 7
        %v8580 = vsub.s32 0, %v8579
        %v8581 = vrot.slane %v8288, %v8580
        %v8582 = vlaneseq
        %v8583 = vshrl.u32 %v8582, 7
        %v8584 = vsub.s32 0, %v8583
        %v8585 = vrot.slane %v8289, %v8584
        %v8586 = vlaneseq
        %v8587 = vshrl.u32 %v8586, 7
        %v8588 = vsub.s32 0, %v8587
        %v8589 = vrot.slane %v8290, %v8588
        %v8590 = vlaneseq
        %v8591 = vshrl.u32 %v8590, 7
        %v8592 = vsub.s32 0, %v8591
        %v8593 = vrot.slane %v8291, %v8592
        %v8594 = vlaneseq
        %v8595 = vshrl.u32 %v8594, 7
        %v8596 = vsub.s32 0, %v8595
        %v8597 = vrot.slane %v8292, %v8596
        %v8598 = vlaneseq
        %v8599 = vshrl.u32 %v8598, 7
        %v8600 = vsub.s32 0, %v8599
        %v8601 = vrot.slane %v8293, %v8600
        %v8602 = vlaneseq
        %v8603 = vshrl.u32 %v8602, 7
        %v8604 = vsub.s32 0, %v8603
        %v8605 = vrot.slane %v8294, %v8604
        %v8606 = vlaneseq
        %v8607 = vshrl.u32 %v8606, 7
        %v8608 = vsub.s32 0, %v8607
        %v8609 = vrot.slane %v8295, %v8608
        %v8610 = vlaneseq
        %v8611 = vshrl.u32 %v8610, 7
        %v8612 = vsub.s32 0, %v8611
        %v8613 = vrot.slane %v8296, %v8612
        %v8614 = vlaneseq
        %v8615 = vshrl.u32 %v8614, 7
        %v8616 = vsub.s32 0, %v8615
        %v8617 = vrot.slane %v8297, %v8616
        %vm8618 = vcmask 1041409
        %v8619 = vsel %vm8618, %v8369, %v8365
        %vm8620 = vcmask 1042434
        %v8621 = vsel %vm8620, %v8373, %v8619
        %vm8622 = vcmask 1043459
        %v8623 = vsel %vm8622, %v8377, %v8621
        %vm8624 = vcmask 1044484
        %v8625 = vsel %vm8624, %v8381, %v8623
        %vm8626 = vcmask 1045509
        %v8627 = vsel %vm8626, %v8385, %v8625
        %vm8628 = vcmask 1046534
        %v8629 = vsel %vm8628, %v8389, %v8627
        %vm8630 = vcmask 1047559
        %v8631 = vsel %vm8630, %v8393, %v8629
        %v8632 = vsel %vm8618, %v8401, %v8397
        %v8633 = vsel %vm8620, %v8405, %v8632
        %v8634 = vsel %vm8622, %v8409, %v8633
        %v8635 = vsel %vm8624, %v8413, %v8634
        %v8636 = vsel %vm8626, %v8417, %v8635
        %v8637 = vsel %vm8628, %v8421, %v8636
        %v8638 = vsel %vm8630, %v8425, %v8637
        %v8639 = vsel %vm8618, %v8433, %v8429
        %v8640 = vsel %vm8620, %v8437, %v8639
        %v8641 = vsel %vm8622, %v8441, %v8640
        %v8642 = vsel %vm8624, %v8445, %v8641
        %v8643 = vsel %vm8626, %v8449, %v8642
        %v8644 = vsel %vm8628, %v8453, %v8643
        %v8645 = vsel %vm8630, %v8457, %v8644
        %v8646 = vsel %vm8618, %v8465, %v8461
        %v8647 = vsel %vm8620, %v8469, %v8646
        %v8648 = vsel %vm8622, %v8473, %v8647
        %v8649 = vsel %vm8624, %v8477, %v8648
        %v8650 = vsel %vm8626, %v8481, %v8649
        %v8651 = vsel %vm8628, %v8485, %v8650
        %v8652 = vsel %vm8630, %v8489, %v8651
        %v8653 = vsel %vm8618, %v8497, %v8493
        %v8654 = vsel %vm8620, %v8501, %v8653
        %v8655 = vsel %vm8622, %v8505, %v8654
        %v8656 = vsel %vm8624, %v8509, %v8655
        %v8657 = vsel %vm8626, %v8513, %v8656
        %v8658 = vsel %vm8628, %v8517, %v8657
        %v8659 = vsel %vm8630, %v8521, %v8658
        %v8660 = vsel %vm8618, %v8529, %v8525
        %v8661 = vsel %vm8620, %v8533, %v8660
        %v8662 = vsel %vm8622, %v8537, %v8661
        %v8663 = vsel %vm8624, %v8541, %v8662
        %v8664 = vsel %vm8626, %v8545, %v8663
        %v8665 = vsel %vm8628, %v8549, %v8664
        %v8666 = vsel %vm8630, %v8553, %v8665
        %v8667 = vsel %vm8618, %v8561, %v8557
        %v8668 = vsel %vm8620, %v8565, %v8667
        %v8669 = vsel %vm8622, %v8569, %v8668
        %v8670 = vsel %vm8624, %v8573, %v8669
        %v8671 = vsel %vm8626, %v8577, %v8670
        %v8672 = vsel %vm8628, %v8581, %v8671
        %v8673 = vsel %vm8630, %v8585, %v8672
        %v8674 = vsel %vm8618, %v8593, %v8589
        %v8675 = vsel %vm8620, %v8597, %v8674
        %v8676 = vsel %vm8622, %v8601, %v8675
        %v8677 = vsel %vm8624, %v8605, %v8676
        %v8678 = vsel %vm8626, %v8609, %v8677
        %v8679 = vsel %vm8628, %v8613, %v8678
        %v8680 = vsel %vm8630, %v8617, %v8679
        %s8689 = scalar_lea.vmem [#allocation3], 16
        %8690 = vst.msk [vmem:[%s8689 + $0x1] sm:$0xff] %vm417, %v8631
        %8691 = vst.msk [vmem:[%s8689 + $0x11] sm:$0xff] %vm417, %v8638
        %8692 = vst.msk [vmem:[%s8689 + $0x21] sm:$0xff] %vm417, %v8645
        %8693 = vst.msk [vmem:[%s8689 + $0x31] sm:$0xff] %vm417, %v8652
        %8694 = vst.msk [vmem:[%s8689 + $0x41] sm:$0xff] %vm417, %v8659
        %8695 = vst.msk [vmem:[%s8689 + $0x51] sm:$0xff] %vm417, %v8666
        %8696 = vst.msk [vmem:[%s8689 + $0x61] sm:$0xff] %vm417, %v8673
        %8697 = vst.msk [vmem:[%s8689 + $0x71] sm:$0xff] %vm417, %v8680
        %v8698 = vld [vmem:[#allocation3] sm:$0xff]
        %v8699 = vld [vmem:[#allocation3 + $0x10] sm:$0xff]
        %v8700 = vld [vmem:[#allocation3 + $0x20] sm:$0xff]
        %v8701 = vld [vmem:[#allocation3 + $0x30] sm:$0xff]
        %v8702 = vld [vmem:[#allocation3 + $0x40] sm:$0xff]
        %v8703 = vld [vmem:[#allocation3 + $0x50] sm:$0xff]
        %v8704 = vld [vmem:[#allocation3 + $0x60] sm:$0xff]
        %v8705 = vld [vmem:[#allocation3 + $0x70] sm:$0xff]
        %v8706 = vld [vmem:[#allocation4] sm:$0xff]
        %v8707 = vld [vmem:[#allocation4 + $0x8] sm:$0xff]
        %v8708 = vld [vmem:[#allocation4 + $0x10] sm:$0xff]
        %v8709 = vld [vmem:[#allocation4 + $0x18] sm:$0xff]
        %v8710 = vld [vmem:[#allocation4 + $0x20] sm:$0xff]
        %v8711 = vld [vmem:[#allocation4 + $0x28] sm:$0xff]
        %v8712 = vld [vmem:[#allocation4 + $0x30] sm:$0xff]
        %v8713 = vld [vmem:[#allocation4 + $0x38] sm:$0xff]
        %v8714 = vld [vmem:[#allocation3 + $0x1] sm:$0xff]
        %v8715 = vld [vmem:[#allocation3 + $0x11] sm:$0xff]
        %v8716 = vld [vmem:[#allocation3 + $0x21] sm:$0xff]
        %v8717 = vld [vmem:[#allocation3 + $0x31] sm:$0xff]
        %v8718 = vld [vmem:[#allocation3 + $0x41] sm:$0xff]
        %v8719 = vld [vmem:[#allocation3 + $0x51] sm:$0xff]
        %v8720 = vld [vmem:[#allocation3 + $0x61] sm:$0xff]
        %v8721 = vld [vmem:[#allocation3 + $0x71] sm:$0xff]
        %v8722 = vld [vmem:[#allocation4 + $0x40] sm:$0xff]
        %v8723 = vld [vmem:[#allocation4 + $0x48] sm:$0xff]
        %v8724 = vld [vmem:[#allocation4 + $0x50] sm:$0xff]
        %v8725 = vld [vmem:[#allocation4 + $0x58] sm:$0xff]
        %v8726 = vld [vmem:[#allocation4 + $0x60] sm:$0xff]
        %v8727 = vld [vmem:[#allocation4 + $0x68] sm:$0xff]
        %v8728 = vld [vmem:[#allocation4 + $0x70] sm:$0xff]
        %v8729 = vld [vmem:[#allocation4 + $0x78] sm:$0xff]
        %v8731 = vsel %vm417, %v8714, 0
        %v8734 = vsel %vm417, %v8715, 0
        %v8737 = vsel %vm417, %v8716, 0
        %v8740 = vsel %vm417, %v8717, 0
        %v8743 = vsel %vm417, %v8718, 0
        %v8746 = vsel %vm417, %v8719, 0
        %v8749 = vsel %vm417, %v8720, 0
        %v8752 = vsel %vm417, %v8721, 0
        %8754 = vmatprep.subr.mxu0 0.0
        %8755 = vmatpush1.msra.mxu0 0.0
        %8756 = vmatprep.subr.mxu0 0.0
        %8757 = vmatpush1.msra.mxu0 0.0
        %8758 = vmatprep.subr.mxu0 0.0
        %8759 = vmatpush1.msra.mxu0 0.0
        %8760 = vmatprep.subr.mxu0 0.0
        %8761 = vmatpush1.msra.mxu0 0.0
        %8762 = vmatprep.subr.mxu0 0.0
        %8763 = vmatpush1.msra.mxu0 0.0
        %8764 = vmatprep.subr.mxu0 0.0
        %8765 = vmatpush1.msra.mxu0 0.0
        %8766 = vmatprep.subr.mxu0 0.0
        %8767 = vmatpush1.msra.mxu0 0.0
        %8768 = vmatprep.subr.mxu0 0.0
        %8769 = vmatpush1.msra.mxu0 0.0
        %8770 = vmatprep.subr.mxu0 0.0
        %8771 = vmatpush1.msra.mxu0 %v8729
        %8772 = vmatprep.subr.mxu0 0.0
        %8773 = vmatpush1.msra.mxu0 %v8728
        %8774 = vmatprep.subr.mxu0 0.0
        %8775 = vmatpush1.msra.mxu0 %v8727
        %8776 = vmatprep.subr.mxu0 0.0
        %8777 = vmatpush1.msra.mxu0 %v8726
        %8778 = vmatprep.subr.mxu0 0.0
        %8779 = vmatpush1.msra.mxu0 %v8725
        %8780 = vmatprep.subr.mxu0 0.0
        %8781 = vmatpush1.msra.mxu0 %v8724
        %8782 = vmatprep.subr.mxu0 0.0
        %8783 = vmatpush1.msra.mxu0 %v8723
        %8784 = vmatprep.subr.mxu0 0.0
        %8785 = vmatpush1.msra.mxu0 %v8722
        %8786 = vmatprep.subr.mxu0 0.0
        %8787 = vmatpush2.msra.mxu0 0.0
        %8788 = vmatprep.subr.mxu0 0.0
        %8789 = vmatpush2.msra.mxu0 0.0
        %8790 = vmatprep.subr.mxu0 0.0
        %8791 = vmatpush2.msra.mxu0 0.0
        %8792 = vmatprep.subr.mxu0 0.0
        %8793 = vmatpush2.msra.mxu0 0.0
        %8794 = vmatprep.subr.mxu0 0.0
        %8795 = vmatpush2.msra.mxu0 0.0
        %8796 = vmatprep.subr.mxu0 0.0
        %8797 = vmatpush2.msra.mxu0 0.0
        %8798 = vmatprep.subr.mxu0 0.0
        %8799 = vmatpush2.msra.mxu0 0.0
        %8800 = vmatprep.subr.mxu0 0.0
        %8801 = vmatpush2.msra.mxu0 0.0
        %8802 = vmatprep.subr.mxu0 0.0
        %8803 = vmatpush2.msra.mxu0 0.0
        %8804 = vmatprep.subr.mxu0 0.0
        %8805 = vmatpush2.msra.mxu0 0.0
        %8806 = vmatprep.subr.mxu0 0.0
        %8807 = vmatpush2.msra.mxu0 0.0
        %8808 = vmatprep.subr.mxu0 0.0
        %8809 = vmatpush2.msra.mxu0 0.0
        %8810 = vmatprep.subr.mxu0 0.0
        %8811 = vmatpush2.msra.mxu0 0.0
        %8812 = vmatprep.subr.mxu0 0.0
        %8813 = vmatpush2.msra.mxu0 0.0
        %8814 = vmatprep.subr.mxu0 0.0
        %8815 = vmatpush2.msra.mxu0 0.0
        %8816 = vmatprep.subr.mxu0 0.0
        %8817 = vmatpush2.msra.mxu0 0.0
        %8818 = vmatprep.mubr.f32.mxu0 0.0
        %8819 = vmatmul.mubr.f32.gmra.mxu0 %v8731
        %v8820 = vpop.f32.mrf.mxu0
        %v8821 = vadd.f32 0.0, %v8820
        %v8822 = vpop.f32.mrf.mxu0
        %8823 = vmatprep.mubr.f32.mxu0 0.0
        %8824 = vmatmul.mubr.f32.gmra.mxu0 %v8734
        %v8825 = vpop.f32.mrf.mxu0
        %v8826 = vadd.f32 0.0, %v8825
        %v8827 = vpop.f32.mrf.mxu0
        %8828 = vmatprep.mubr.f32.mxu0 0.0
        %8829 = vmatmul.mubr.f32.gmra.mxu0 %v8737
        %v8830 = vpop.f32.mrf.mxu0
        %v8831 = vadd.f32 0.0, %v8830
        %v8832 = vpop.f32.mrf.mxu0
        %8833 = vmatprep.mubr.f32.mxu0 0.0
        %8834 = vmatmul.mubr.f32.gmra.mxu0 %v8740
        %v8835 = vpop.f32.mrf.mxu0
        %v8836 = vadd.f32 0.0, %v8835
        %v8837 = vpop.f32.mrf.mxu0
        %8838 = vmatprep.mubr.f32.mxu0 0.0
        %8839 = vmatmul.mubr.f32.gmra.mxu0 %v8743
        %v8840 = vpop.f32.mrf.mxu0
        %v8841 = vadd.f32 0.0, %v8840
        %v8842 = vpop.f32.mrf.mxu0
        %8843 = vmatprep.mubr.f32.mxu0 0.0
        %8844 = vmatmul.mubr.f32.gmra.mxu0 %v8746
        %v8845 = vpop.f32.mrf.mxu0
        %v8846 = vadd.f32 0.0, %v8845
        %v8847 = vpop.f32.mrf.mxu0
        %8848 = vmatprep.mubr.f32.mxu0 0.0
        %8849 = vmatmul.mubr.f32.gmra.mxu0 %v8749
        %v8850 = vpop.f32.mrf.mxu0
        %v8851 = vadd.f32 0.0, %v8850
        %v8852 = vpop.f32.mrf.mxu0
        %8853 = vmatprep.mubr.f32.mxu0 0.0
        %8854 = vmatmul.mubr.f32.gmra.mxu0 %v8752
        %v8855 = vpop.f32.mrf.mxu0
        %v8856 = vadd.f32 0.0, %v8855
        %v8857 = vpop.f32.mrf.mxu0
        %8858 = vdwg.mxu0
        %v8860 = vsel %vm417, %v8698, 0
        %v8863 = vsel %vm417, %v8699, 0
        %v8866 = vsel %vm417, %v8700, 0
        %v8869 = vsel %vm417, %v8701, 0
        %v8872 = vsel %vm417, %v8702, 0
        %v8875 = vsel %vm417, %v8703, 0
        %v8878 = vsel %vm417, %v8704, 0
        %v8881 = vsel %vm417, %v8705, 0
        %8883 = vmatprep.subr.mxu0 0.0
        %8884 = vmatpush1.msra.mxu0 0.0
        %8885 = vmatprep.subr.mxu0 0.0
        %8886 = vmatpush1.msra.mxu0 0.0
        %8887 = vmatprep.subr.mxu0 0.0
        %8888 = vmatpush1.msra.mxu0 0.0
        %8889 = vmatprep.subr.mxu0 0.0
        %8890 = vmatpush1.msra.mxu0 0.0
        %8891 = vmatprep.subr.mxu0 0.0
        %8892 = vmatpush1.msra.mxu0 0.0
        %8893 = vmatprep.subr.mxu0 0.0
        %8894 = vmatpush1.msra.mxu0 0.0
        %8895 = vmatprep.subr.mxu0 0.0
        %8896 = vmatpush1.msra.mxu0 0.0
        %8897 = vmatprep.subr.mxu0 0.0
        %8898 = vmatpush1.msra.mxu0 0.0
        %8899 = vmatprep.subr.mxu0 0.0
        %8900 = vmatpush1.msra.mxu0 %v8713
        %8901 = vmatprep.subr.mxu0 0.0
        %8902 = vmatpush1.msra.mxu0 %v8712
        %8903 = vmatprep.subr.mxu0 0.0
        %8904 = vmatpush1.msra.mxu0 %v8711
        %8905 = vmatprep.subr.mxu0 0.0
        %8906 = vmatpush1.msra.mxu0 %v8710
        %8907 = vmatprep.subr.mxu0 0.0
        %8908 = vmatpush1.msra.mxu0 %v8709
        %8909 = vmatprep.subr.mxu0 0.0
        %8910 = vmatpush1.msra.mxu0 %v8708
        %8911 = vmatprep.subr.mxu0 0.0
        %8912 = vmatpush1.msra.mxu0 %v8707
        %8913 = vmatprep.subr.mxu0 0.0
        %8914 = vmatpush1.msra.mxu0 %v8706
        %8915 = vmatprep.subr.mxu0 0.0
        %8916 = vmatpush2.msra.mxu0 0.0
        %8917 = vmatprep.subr.mxu0 0.0
        %8918 = vmatpush2.msra.mxu0 0.0
        %8919 = vmatprep.subr.mxu0 0.0
        %8920 = vmatpush2.msra.mxu0 0.0
        %8921 = vmatprep.subr.mxu0 0.0
        %8922 = vmatpush2.msra.mxu0 0.0
        %8923 = vmatprep.subr.mxu0 0.0
        %8924 = vmatpush2.msra.mxu0 0.0
        %8925 = vmatprep.subr.mxu0 0.0
        %8926 = vmatpush2.msra.mxu0 0.0
        %8927 = vmatprep.subr.mxu0 0.0
        %8928 = vmatpush2.msra.mxu0 0.0
        %8929 = vmatprep.subr.mxu0 0.0
        %8930 = vmatpush2.msra.mxu0 0.0
        %8931 = vmatprep.subr.mxu0 0.0
        %8932 = vmatpush2.msra.mxu0 0.0
        %8933 = vmatprep.subr.mxu0 0.0
        %8934 = vmatpush2.msra.mxu0 0.0
        %8935 = vmatprep.subr.mxu0 0.0
        %8936 = vmatpush2.msra.mxu0 0.0
        %8937 = vmatprep.subr.mxu0 0.0
        %8938 = vmatpush2.msra.mxu0 0.0
        %8939 = vmatprep.subr.mxu0 0.0
        %8940 = vmatpush2.msra.mxu0 0.0
        %8941 = vmatprep.subr.mxu0 0.0
        %8942 = vmatpush2.msra.mxu0 0.0
        %8943 = vmatprep.subr.mxu0 0.0
        %8944 = vmatpush2.msra.mxu0 0.0
        %8945 = vmatprep.subr.mxu0 0.0
        %8946 = vmatpush2.msra.mxu0 0.0
        %8947 = vmatprep.mubr.f32.mxu0 0.0
        %8948 = vmatmul.mubr.f32.gmra.mxu0 %v8860
        %v8949 = vpop.f32.mrf.mxu0
        %v8950 = vadd.f32 %v8821, %v8949
        %v8951 = vpop.f32.mrf.mxu0
        %8952 = vmatprep.mubr.f32.mxu0 0.0
        %8953 = vmatmul.mubr.f32.gmra.mxu0 %v8863
        %v8954 = vpop.f32.mrf.mxu0
        %v8955 = vadd.f32 %v8826, %v8954
        %v8956 = vpop.f32.mrf.mxu0
        %8957 = vmatprep.mubr.f32.mxu0 0.0
        %8958 = vmatmul.mubr.f32.gmra.mxu0 %v8866
        %v8959 = vpop.f32.mrf.mxu0
        %v8960 = vadd.f32 %v8831, %v8959
        %v8961 = vpop.f32.mrf.mxu0
        %8962 = vmatprep.mubr.f32.mxu0 0.0
        %8963 = vmatmul.mubr.f32.gmra.mxu0 %v8869
        %v8964 = vpop.f32.mrf.mxu0
        %v8965 = vadd.f32 %v8836, %v8964
        %v8966 = vpop.f32.mrf.mxu0
        %8967 = vmatprep.mubr.f32.mxu0 0.0
        %8968 = vmatmul.mubr.f32.gmra.mxu0 %v8872
        %v8969 = vpop.f32.mrf.mxu0
        %v8970 = vadd.f32 %v8841, %v8969
        %v8971 = vpop.f32.mrf.mxu0
        %8972 = vmatprep.mubr.f32.mxu0 0.0
        %8973 = vmatmul.mubr.f32.gmra.mxu0 %v8875
        %v8974 = vpop.f32.mrf.mxu0
        %v8975 = vadd.f32 %v8846, %v8974
        %v8976 = vpop.f32.mrf.mxu0
        %8977 = vmatprep.mubr.f32.mxu0 0.0
        %8978 = vmatmul.mubr.f32.gmra.mxu0 %v8878
        %v8979 = vpop.f32.mrf.mxu0
        %v8980 = vadd.f32 %v8851, %v8979
        %v8981 = vpop.f32.mrf.mxu0
        %8982 = vmatprep.mubr.f32.mxu0 0.0
        %8983 = vmatmul.mubr.f32.gmra.mxu0 %v8881
        %v8984 = vpop.f32.mrf.mxu0
        %v8985 = vadd.f32 %v8856, %v8984
        %v8986 = vpop.f32.mrf.mxu0
        %8987 = vdwg.mxu0
        %v8988 = vld [vmem:[#allocation3 + $0x2] sm:$0xff]
        %v8989 = vld [vmem:[#allocation3 + $0x12] sm:$0xff]
        %v8990 = vld [vmem:[#allocation3 + $0x22] sm:$0xff]
        %v8991 = vld [vmem:[#allocation3 + $0x32] sm:$0xff]
        %v8992 = vld [vmem:[#allocation3 + $0x42] sm:$0xff]
        %v8993 = vld [vmem:[#allocation3 + $0x52] sm:$0xff]
        %v8994 = vld [vmem:[#allocation3 + $0x62] sm:$0xff]
        %v8995 = vld [vmem:[#allocation3 + $0x72] sm:$0xff]
        %v8996 = vld [vmem:[#allocation4 + $0x80] sm:$0xff]
        %v8997 = vld [vmem:[#allocation4 + $0x88] sm:$0xff]
        %v8998 = vld [vmem:[#allocation4 + $0x90] sm:$0xff]
        %v8999 = vld [vmem:[#allocation4 + $0x98] sm:$0xff]
        %v9000 = vld [vmem:[#allocation4 + $0xa0] sm:$0xff]
        %v9001 = vld [vmem:[#allocation4 + $0xa8] sm:$0xff]
        %v9002 = vld [vmem:[#allocation4 + $0xb0] sm:$0xff]
        %v9003 = vld [vmem:[#allocation4 + $0xb8] sm:$0xff]
        %v9005 = vsel %vm417, %v8988, 0
        %v9008 = vsel %vm417, %v8989, 0
        %v9011 = vsel %vm417, %v8990, 0
        %v9014 = vsel %vm417, %v8991, 0
        %v9017 = vsel %vm417, %v8992, 0
        %v9020 = vsel %vm417, %v8993, 0
        %v9023 = vsel %vm417, %v8994, 0
        %v9026 = vsel %vm417, %v8995, 0
        %9028 = vmatprep.subr.mxu0 0.0
        %9029 = vmatpush1.msra.mxu0 0.0
        %9030 = vmatprep.subr.mxu0 0.0
        %9031 = vmatpush1.msra.mxu0 0.0
        %9032 = vmatprep.subr.mxu0 0.0
        %9033 = vmatpush1.msra.mxu0 0.0
        %9034 = vmatprep.subr.mxu0 0.0
        %9035 = vmatpush1.msra.mxu0 0.0
        %9036 = vmatprep.subr.mxu0 0.0
        %9037 = vmatpush1.msra.mxu0 0.0
        %9038 = vmatprep.subr.mxu0 0.0
        %9039 = vmatpush1.msra.mxu0 0.0
        %9040 = vmatprep.subr.mxu0 0.0
        %9041 = vmatpush1.msra.mxu0 0.0
        %9042 = vmatprep.subr.mxu0 0.0
        %9043 = vmatpush1.msra.mxu0 0.0
        %9044 = vmatprep.subr.mxu0 0.0
        %9045 = vmatpush1.msra.mxu0 %v9003
        %9046 = vmatprep.subr.mxu0 0.0
        %9047 = vmatpush1.msra.mxu0 %v9002
        %9048 = vmatprep.subr.mxu0 0.0
        %9049 = vmatpush1.msra.mxu0 %v9001
        %9050 = vmatprep.subr.mxu0 0.0
        %9051 = vmatpush1.msra.mxu0 %v9000
        %9052 = vmatprep.subr.mxu0 0.0
        %9053 = vmatpush1.msra.mxu0 %v8999
        %9054 = vmatprep.subr.mxu0 0.0
        %9055 = vmatpush1.msra.mxu0 %v8998
        %9056 = vmatprep.subr.mxu0 0.0
        %9057 = vmatpush1.msra.mxu0 %v8997
        %9058 = vmatprep.subr.mxu0 0.0
        %9059 = vmatpush1.msra.mxu0 %v8996
        %9060 = vmatprep.subr.mxu0 0.0
        %9061 = vmatpush2.msra.mxu0 0.0
        %9062 = vmatprep.subr.mxu0 0.0
        %9063 = vmatpush2.msra.mxu0 0.0
        %9064 = vmatprep.subr.mxu0 0.0
        %9065 = vmatpush2.msra.mxu0 0.0
        %9066 = vmatprep.subr.mxu0 0.0
        %9067 = vmatpush2.msra.mxu0 0.0
        %9068 = vmatprep.subr.mxu0 0.0
        %9069 = vmatpush2.msra.mxu0 0.0
        %9070 = vmatprep.subr.mxu0 0.0
        %9071 = vmatpush2.msra.mxu0 0.0
        %9072 = vmatprep.subr.mxu0 0.0
        %9073 = vmatpush2.msra.mxu0 0.0
        %9074 = vmatprep.subr.mxu0 0.0
        %9075 = vmatpush2.msra.mxu0 0.0
        %9076 = vmatprep.subr.mxu0 0.0
        %9077 = vmatpush2.msra.mxu0 0.0
        %9078 = vmatprep.subr.mxu0 0.0
        %9079 = vmatpush2.msra.mxu0 0.0
        %9080 = vmatprep.subr.mxu0 0.0
        %9081 = vmatpush2.msra.mxu0 0.0
        %9082 = vmatprep.subr.mxu0 0.0
        %9083 = vmatpush2.msra.mxu0 0.0
        %9084 = vmatprep.subr.mxu0 0.0
        %9085 = vmatpush2.msra.mxu0 0.0
        %9086 = vmatprep.subr.mxu0 0.0
        %9087 = vmatpush2.msra.mxu0 0.0
        %9088 = vmatprep.subr.mxu0 0.0
        %9089 = vmatpush2.msra.mxu0 0.0
        %9090 = vmatprep.subr.mxu0 0.0
        %9091 = vmatpush2.msra.mxu0 0.0
        %9092 = vmatprep.mubr.f32.mxu0 0.0
        %9093 = vmatmul.mubr.f32.gmra.mxu0 %v9005
        %v9094 = vpop.f32.mrf.mxu0
        %v9095 = vadd.f32 0.0, %v9094
        %v9096 = vpop.f32.mrf.mxu0
        %9097 = vmatprep.mubr.f32.mxu0 0.0
        %9098 = vmatmul.mubr.f32.gmra.mxu0 %v9008
        %v9099 = vpop.f32.mrf.mxu0
        %v9100 = vadd.f32 0.0, %v9099
        %v9101 = vpop.f32.mrf.mxu0
        %9102 = vmatprep.mubr.f32.mxu0 0.0
        %9103 = vmatmul.mubr.f32.gmra.mxu0 %v9011
        %v9104 = vpop.f32.mrf.mxu0
        %v9105 = vadd.f32 0.0, %v9104
        %v9106 = vpop.f32.mrf.mxu0
        %9107 = vmatprep.mubr.f32.mxu0 0.0
        %9108 = vmatmul.mubr.f32.gmra.mxu0 %v9014
        %v9109 = vpop.f32.mrf.mxu0
        %v9110 = vadd.f32 0.0, %v9109
        %v9111 = vpop.f32.mrf.mxu0
        %9112 = vmatprep.mubr.f32.mxu0 0.0
        %9113 = vmatmul.mubr.f32.gmra.mxu0 %v9017
        %v9114 = vpop.f32.mrf.mxu0
        %v9115 = vadd.f32 0.0, %v9114
        %v9116 = vpop.f32.mrf.mxu0
        %9117 = vmatprep.mubr.f32.mxu0 0.0
        %9118 = vmatmul.mubr.f32.gmra.mxu0 %v9020
        %v9119 = vpop.f32.mrf.mxu0
        %v9120 = vadd.f32 0.0, %v9119
        %v9121 = vpop.f32.mrf.mxu0
        %9122 = vmatprep.mubr.f32.mxu0 0.0
        %9123 = vmatmul.mubr.f32.gmra.mxu0 %v9023
        %v9124 = vpop.f32.mrf.mxu0
        %v9125 = vadd.f32 0.0, %v9124
        %v9126 = vpop.f32.mrf.mxu0
        %9127 = vmatprep.mubr.f32.mxu0 0.0
        %9128 = vmatmul.mubr.f32.gmra.mxu0 %v9026
        %v9129 = vpop.f32.mrf.mxu0
        %v9130 = vadd.f32 0.0, %v9129
        %v9131 = vpop.f32.mrf.mxu0
        %9132 = vdwg.mxu0
        %v9133 = vadd.f32 %v8950, %v9095
        %v9134 = vadd.f32 %v8955, %v9100
        %v9135 = vadd.f32 %v8960, %v9105
        %v9136 = vadd.f32 %v8965, %v9110
        %v9137 = vadd.f32 %v8970, %v9115
        %v9138 = vadd.f32 %v8975, %v9120
        %v9139 = vadd.f32 %v8980, %v9125
        %v9140 = vadd.f32 %v8985, %v9130
        %v9141 = vld [vmem:[%s8689] sm:$0xff]
        %v9142 = vld [vmem:[%s8689 + $0x10] sm:$0xff]
        %v9143 = vld [vmem:[%s8689 + $0x20] sm:$0xff]
        %v9144 = vld [vmem:[%s8689 + $0x30] sm:$0xff]
        %v9145 = vld [vmem:[%s8689 + $0x40] sm:$0xff]
        %v9146 = vld [vmem:[%s8689 + $0x50] sm:$0xff]
        %v9147 = vld [vmem:[%s8689 + $0x60] sm:$0xff]
        %v9148 = vld [vmem:[%s8689 + $0x70] sm:$0xff]
        %v9149 = vld [vmem:[#allocation4 + $0xc0] sm:$0xff]
        %v9150 = vld [vmem:[#allocation4 + $0xc8] sm:$0xff]
        %v9151 = vld [vmem:[#allocation4 + $0xd0] sm:$0xff]
        %v9152 = vld [vmem:[#allocation4 + $0xd8] sm:$0xff]
        %v9153 = vld [vmem:[#allocation4 + $0xe0] sm:$0xff]
        %v9154 = vld [vmem:[#allocation4 + $0xe8] sm:$0xff]
        %v9155 = vld [vmem:[#allocation4 + $0xf0] sm:$0xff]
        %v9156 = vld [vmem:[#allocation4 + $0xf8] sm:$0xff]
        %v9158 = vsel %vm417, %v9141, 0
        %v9161 = vsel %vm417, %v9142, 0
        %v9164 = vsel %vm417, %v9143, 0
        %v9167 = vsel %vm417, %v9144, 0
        %v9170 = vsel %vm417, %v9145, 0
        %v9173 = vsel %vm417, %v9146, 0
        %v9176 = vsel %vm417, %v9147, 0
        %v9179 = vsel %vm417, %v9148, 0
        %9181 = vmatprep.subr.mxu0 0.0
        %9182 = vmatpush1.msra.mxu0 0.0
        %9183 = vmatprep.subr.mxu0 0.0
        %9184 = vmatpush1.msra.mxu0 0.0
        %9185 = vmatprep.subr.mxu0 0.0
        %9186 = vmatpush1.msra.mxu0 0.0
        %9187 = vmatprep.subr.mxu0 0.0
        %9188 = vmatpush1.msra.mxu0 0.0
        %9189 = vmatprep.subr.mxu0 0.0
        %9190 = vmatpush1.msra.mxu0 0.0
        %9191 = vmatprep.subr.mxu0 0.0
        %9192 = vmatpush1.msra.mxu0 0.0
        %9193 = vmatprep.subr.mxu0 0.0
        %9194 = vmatpush1.msra.mxu0 0.0
        %9195 = vmatprep.subr.mxu0 0.0
        %9196 = vmatpush1.msra.mxu0 0.0
        %9197 = vmatprep.subr.mxu0 0.0
        %9198 = vmatpush1.msra.mxu0 %v9156
        %9199 = vmatprep.subr.mxu0 0.0
        %9200 = vmatpush1.msra.mxu0 %v9155
        %9201 = vmatprep.subr.mxu0 0.0
        %9202 = vmatpush1.msra.mxu0 %v9154
        %9203 = vmatprep.subr.mxu0 0.0
        %9204 = vmatpush1.msra.mxu0 %v9153
        %9205 = vmatprep.subr.mxu0 0.0
        %9206 = vmatpush1.msra.mxu0 %v9152
        %9207 = vmatprep.subr.mxu0 0.0
        %9208 = vmatpush1.msra.mxu0 %v9151
        %9209 = vmatprep.subr.mxu0 0.0
        %9210 = vmatpush1.msra.mxu0 %v9150
        %9211 = vmatprep.subr.mxu0 0.0
        %9212 = vmatpush1.msra.mxu0 %v9149
        %9213 = vmatprep.subr.mxu0 0.0
        %9214 = vmatpush2.msra.mxu0 0.0
        %9215 = vmatprep.subr.mxu0 0.0
        %9216 = vmatpush2.msra.mxu0 0.0
        %9217 = vmatprep.subr.mxu0 0.0
        %9218 = vmatpush2.msra.mxu0 0.0
        %9219 = vmatprep.subr.mxu0 0.0
        %9220 = vmatpush2.msra.mxu0 0.0
        %9221 = vmatprep.subr.mxu0 0.0
        %9222 = vmatpush2.msra.mxu0 0.0
        %9223 = vmatprep.subr.mxu0 0.0
        %9224 = vmatpush2.msra.mxu0 0.0
        %9225 = vmatprep.subr.mxu0 0.0
        %9226 = vmatpush2.msra.mxu0 0.0
        %9227 = vmatprep.subr.mxu0 0.0
        %9228 = vmatpush2.msra.mxu0 0.0
        %9229 = vmatprep.subr.mxu0 0.0
        %9230 = vmatpush2.msra.mxu0 0.0
        %9231 = vmatprep.subr.mxu0 0.0
        %9232 = vmatpush2.msra.mxu0 0.0
        %9233 = vmatprep.subr.mxu0 0.0
        %9234 = vmatpush2.msra.mxu0 0.0
        %9235 = vmatprep.subr.mxu0 0.0
        %9236 = vmatpush2.msra.mxu0 0.0
        %9237 = vmatprep.subr.mxu0 0.0
        %9238 = vmatpush2.msra.mxu0 0.0
        %9239 = vmatprep.subr.mxu0 0.0
        %9240 = vmatpush2.msra.mxu0 0.0
        %9241 = vmatprep.subr.mxu0 0.0
        %9242 = vmatpush2.msra.mxu0 0.0
        %9243 = vmatprep.subr.mxu0 0.0
        %9244 = vmatpush2.msra.mxu0 0.0
        %9245 = vmatprep.mubr.f32.mxu0 0.0
        %9246 = vmatmul.mubr.f32.gmra.mxu0 %v9158
        %v9247 = vpop.f32.mrf.mxu0
        %v9248 = vadd.f32 0.0, %v9247
        %v9249 = vpop.f32.mrf.mxu0
        %9250 = vmatprep.mubr.f32.mxu0 0.0
        %9251 = vmatmul.mubr.f32.gmra.mxu0 %v9161
        %v9252 = vpop.f32.mrf.mxu0
        %v9253 = vadd.f32 0.0, %v9252
        %v9254 = vpop.f32.mrf.mxu0
        %9255 = vmatprep.mubr.f32.mxu0 0.0
        %9256 = vmatmul.mubr.f32.gmra.mxu0 %v9164
        %v9257 = vpop.f32.mrf.mxu0
        %v9258 = vadd.f32 0.0, %v9257
        %v9259 = vpop.f32.mrf.mxu0
        %9260 = vmatprep.mubr.f32.mxu0 0.0
        %9261 = vmatmul.mubr.f32.gmra.mxu0 %v9167
        %v9262 = vpop.f32.mrf.mxu0
        %v9263 = vadd.f32 0.0, %v9262
        %v9264 = vpop.f32.mrf.mxu0
        %9265 = vmatprep.mubr.f32.mxu0 0.0
        %9266 = vmatmul.mubr.f32.gmra.mxu0 %v9170
        %v9267 = vpop.f32.mrf.mxu0
        %v9268 = vadd.f32 0.0, %v9267
        %v9269 = vpop.f32.mrf.mxu0
        %9270 = vmatprep.mubr.f32.mxu0 0.0
        %9271 = vmatmul.mubr.f32.gmra.mxu0 %v9173
        %v9272 = vpop.f32.mrf.mxu0
        %v9273 = vadd.f32 0.0, %v9272
        %v9274 = vpop.f32.mrf.mxu0
        %9275 = vmatprep.mubr.f32.mxu0 0.0
        %9276 = vmatmul.mubr.f32.gmra.mxu0 %v9176
        %v9277 = vpop.f32.mrf.mxu0
        %v9278 = vadd.f32 0.0, %v9277
        %v9279 = vpop.f32.mrf.mxu0
        %9280 = vmatprep.mubr.f32.mxu0 0.0
        %9281 = vmatmul.mubr.f32.gmra.mxu0 %v9179
        %v9282 = vpop.f32.mrf.mxu0
        %v9283 = vadd.f32 0.0, %v9282
        %v9284 = vpop.f32.mrf.mxu0
        %9285 = vdwg.mxu0
        %v9286 = vadd.f32 %v9133, %v9248
        %v9287 = vadd.f32 %v9134, %v9253
        %v9288 = vadd.f32 %v9135, %v9258
        %v9289 = vadd.f32 %v9136, %v9263
        %v9290 = vadd.f32 %v9137, %v9268
        %v9291 = vadd.f32 %v9138, %v9273
        %v9292 = vadd.f32 %v9139, %v9278
        %v9293 = vadd.f32 %v9140, %v9283
        %v9294 = vld [vmem:[%s8689 + $0x1] sm:$0xff]
        %v9295 = vld [vmem:[%s8689 + $0x11] sm:$0xff]
        %v9296 = vld [vmem:[%s8689 + $0x21] sm:$0xff]
        %v9297 = vld [vmem:[%s8689 + $0x31] sm:$0xff]
        %v9298 = vld [vmem:[%s8689 + $0x41] sm:$0xff]
        %v9299 = vld [vmem:[%s8689 + $0x51] sm:$0xff]
        %v9300 = vld [vmem:[%s8689 + $0x61] sm:$0xff]
        %v9301 = vld [vmem:[%s8689 + $0x71] sm:$0xff]
        %v9302 = vld [vmem:[#allocation4 + $0x100] sm:$0xff]
        %v9303 = vld [vmem:[#allocation4 + $0x108] sm:$0xff]
        %v9304 = vld [vmem:[#allocation4 + $0x110] sm:$0xff]
        %v9305 = vld [vmem:[#allocation4 + $0x118] sm:$0xff]
        %v9306 = vld [vmem:[#allocation4 + $0x120] sm:$0xff]
        %v9307 = vld [vmem:[#allocation4 + $0x128] sm:$0xff]
        %v9308 = vld [vmem:[#allocation4 + $0x130] sm:$0xff]
        %v9309 = vld [vmem:[#allocation4 + $0x138] sm:$0xff]
        %v9311 = vsel %vm417, %v9294, 0
        %v9314 = vsel %vm417, %v9295, 0
        %v9317 = vsel %vm417, %v9296, 0
        %v9320 = vsel %vm417, %v9297, 0
        %v9323 = vsel %vm417, %v9298, 0
        %v9326 = vsel %vm417, %v9299, 0
        %v9329 = vsel %vm417, %v9300, 0
        %v9332 = vsel %vm417, %v9301, 0
        %9334 = vmatprep.subr.mxu0 0.0
        %9335 = vmatpush1.msra.mxu0 0.0
        %9336 = vmatprep.subr.mxu0 0.0
        %9337 = vmatpush1.msra.mxu0 0.0
        %9338 = vmatprep.subr.mxu0 0.0
        %9339 = vmatpush1.msra.mxu0 0.0
        %9340 = vmatprep.subr.mxu0 0.0
        %9341 = vmatpush1.msra.mxu0 0.0
        %9342 = vmatprep.subr.mxu0 0.0
        %9343 = vmatpush1.msra.mxu0 0.0
        %9344 = vmatprep.subr.mxu0 0.0
        %9345 = vmatpush1.msra.mxu0 0.0
        %9346 = vmatprep.subr.mxu0 0.0
        %9347 = vmatpush1.msra.mxu0 0.0
        %9348 = vmatprep.subr.mxu0 0.0
        %9349 = vmatpush1.msra.mxu0 0.0
        %9350 = vmatprep.subr.mxu0 0.0
        %9351 = vmatpush1.msra.mxu0 %v9309
        %9352 = vmatprep.subr.mxu0 0.0
        %9353 = vmatpush1.msra.mxu0 %v9308
        %9354 = vmatprep.subr.mxu0 0.0
        %9355 = vmatpush1.msra.mxu0 %v9307
        %9356 = vmatprep.subr.mxu0 0.0
        %9357 = vmatpush1.msra.mxu0 %v9306
        %9358 = vmatprep.subr.mxu0 0.0
        %9359 = vmatpush1.msra.mxu0 %v9305
        %9360 = vmatprep.subr.mxu0 0.0
        %9361 = vmatpush1.msra.mxu0 %v9304
        %9362 = vmatprep.subr.mxu0 0.0
        %9363 = vmatpush1.msra.mxu0 %v9303
        %9364 = vmatprep.subr.mxu0 0.0
        %9365 = vmatpush1.msra.mxu0 %v9302
        %9366 = vmatprep.subr.mxu0 0.0
        %9367 = vmatpush2.msra.mxu0 0.0
        %9368 = vmatprep.subr.mxu0 0.0
        %9369 = vmatpush2.msra.mxu0 0.0
        %9370 = vmatprep.subr.mxu0 0.0
        %9371 = vmatpush2.msra.mxu0 0.0
        %9372 = vmatprep.subr.mxu0 0.0
        %9373 = vmatpush2.msra.mxu0 0.0
        %9374 = vmatprep.subr.mxu0 0.0
        %9375 = vmatpush2.msra.mxu0 0.0
        %9376 = vmatprep.subr.mxu0 0.0
        %9377 = vmatpush2.msra.mxu0 0.0
        %9378 = vmatprep.subr.mxu0 0.0
        %9379 = vmatpush2.msra.mxu0 0.0
        %9380 = vmatprep.subr.mxu0 0.0
        %9381 = vmatpush2.msra.mxu0 0.0
        %9382 = vmatprep.subr.mxu0 0.0
        %9383 = vmatpush2.msra.mxu0 0.0
        %9384 = vmatprep.subr.mxu0 0.0
        %9385 = vmatpush2.msra.mxu0 0.0
        %9386 = vmatprep.subr.mxu0 0.0
        %9387 = vmatpush2.msra.mxu0 0.0
        %9388 = vmatprep.subr.mxu0 0.0
        %9389 = vmatpush2.msra.mxu0 0.0
        %9390 = vmatprep.subr.mxu0 0.0
        %9391 = vmatpush2.msra.mxu0 0.0
        %9392 = vmatprep.subr.mxu0 0.0
        %9393 = vmatpush2.msra.mxu0 0.0
        %9394 = vmatprep.subr.mxu0 0.0
        %9395 = vmatpush2.msra.mxu0 0.0
        %9396 = vmatprep.subr.mxu0 0.0
        %9397 = vmatpush2.msra.mxu0 0.0
        %9398 = vmatprep.mubr.f32.mxu0 0.0
        %9399 = vmatmul.mubr.f32.gmra.mxu0 %v9311
        %v9400 = vpop.f32.mrf.mxu0
        %v9401 = vadd.f32 0.0, %v9400
        %v9402 = vpop.f32.mrf.mxu0
        %9403 = vmatprep.mubr.f32.mxu0 0.0
        %9404 = vmatmul.mubr.f32.gmra.mxu0 %v9314
        %v9405 = vpop.f32.mrf.mxu0
        %v9406 = vadd.f32 0.0, %v9405
        %v9407 = vpop.f32.mrf.mxu0
        %9408 = vmatprep.mubr.f32.mxu0 0.0
        %9409 = vmatmul.mubr.f32.gmra.mxu0 %v9317
        %v9410 = vpop.f32.mrf.mxu0
        %v9411 = vadd.f32 0.0, %v9410
        %v9412 = vpop.f32.mrf.mxu0
        %9413 = vmatprep.mubr.f32.mxu0 0.0
        %9414 = vmatmul.mubr.f32.gmra.mxu0 %v9320
        %v9415 = vpop.f32.mrf.mxu0
        %v9416 = vadd.f32 0.0, %v9415
        %v9417 = vpop.f32.mrf.mxu0
        %9418 = vmatprep.mubr.f32.mxu0 0.0
        %9419 = vmatmul.mubr.f32.gmra.mxu0 %v9323
        %v9420 = vpop.f32.mrf.mxu0
        %v9421 = vadd.f32 0.0, %v9420
        %v9422 = vpop.f32.mrf.mxu0
        %9423 = vmatprep.mubr.f32.mxu0 0.0
        %9424 = vmatmul.mubr.f32.gmra.mxu0 %v9326
        %v9425 = vpop.f32.mrf.mxu0
        %v9426 = vadd.f32 0.0, %v9425
        %v9427 = vpop.f32.mrf.mxu0
        %9428 = vmatprep.mubr.f32.mxu0 0.0
        %9429 = vmatmul.mubr.f32.gmra.mxu0 %v9329
        %v9430 = vpop.f32.mrf.mxu0
        %v9431 = vadd.f32 0.0, %v9430
        %v9432 = vpop.f32.mrf.mxu0
        %9433 = vmatprep.mubr.f32.mxu0 0.0
        %9434 = vmatmul.mubr.f32.gmra.mxu0 %v9332
        %v9435 = vpop.f32.mrf.mxu0
        %v9436 = vadd.f32 0.0, %v9435
        %v9437 = vpop.f32.mrf.mxu0
        %9438 = vdwg.mxu0
        %v9439 = vadd.f32 %v9286, %v9401
        %v9440 = vadd.f32 %v9287, %v9406
        %v9441 = vadd.f32 %v9288, %v9411
        %v9442 = vadd.f32 %v9289, %v9416
        %v9443 = vadd.f32 %v9290, %v9421
        %v9444 = vadd.f32 %v9291, %v9426
        %v9445 = vadd.f32 %v9292, %v9431
        %v9446 = vadd.f32 %v9293, %v9436
        %v9447 = vld [vmem:[%s8689 + $0x2] sm:$0xff]
        %v9448 = vld [vmem:[%s8689 + $0x12] sm:$0xff]
        %v9449 = vld [vmem:[%s8689 + $0x22] sm:$0xff]
        %v9450 = vld [vmem:[%s8689 + $0x32] sm:$0xff]
        %v9451 = vld [vmem:[%s8689 + $0x42] sm:$0xff]
        %v9452 = vld [vmem:[%s8689 + $0x52] sm:$0xff]
        %v9453 = vld [vmem:[%s8689 + $0x62] sm:$0xff]
        %v9454 = vld [vmem:[%s8689 + $0x72] sm:$0xff]
        %v9455 = vld [vmem:[#allocation4 + $0x140] sm:$0xff]
        %v9456 = vld [vmem:[#allocation4 + $0x148] sm:$0xff]
        %v9457 = vld [vmem:[#allocation4 + $0x150] sm:$0xff]
        %v9458 = vld [vmem:[#allocation4 + $0x158] sm:$0xff]
        %v9459 = vld [vmem:[#allocation4 + $0x160] sm:$0xff]
        %v9460 = vld [vmem:[#allocation4 + $0x168] sm:$0xff]
        %v9461 = vld [vmem:[#allocation4 + $0x170] sm:$0xff]
        %v9462 = vld [vmem:[#allocation4 + $0x178] sm:$0xff]
        %v9464 = vsel %vm417, %v9447, 0
        %v9467 = vsel %vm417, %v9448, 0
        %v9470 = vsel %vm417, %v9449, 0
        %v9473 = vsel %vm417, %v9450, 0
        %v9476 = vsel %vm417, %v9451, 0
        %v9479 = vsel %vm417, %v9452, 0
        %v9482 = vsel %vm417, %v9453, 0
        %v9485 = vsel %vm417, %v9454, 0
        %9487 = vmatprep.subr.mxu0 0.0
        %9488 = vmatpush1.msra.mxu0 0.0
        %9489 = vmatprep.subr.mxu0 0.0
        %9490 = vmatpush1.msra.mxu0 0.0
        %9491 = vmatprep.subr.mxu0 0.0
        %9492 = vmatpush1.msra.mxu0 0.0
        %9493 = vmatprep.subr.mxu0 0.0
        %9494 = vmatpush1.msra.mxu0 0.0
        %9495 = vmatprep.subr.mxu0 0.0
        %9496 = vmatpush1.msra.mxu0 0.0
        %9497 = vmatprep.subr.mxu0 0.0
        %9498 = vmatpush1.msra.mxu0 0.0
        %9499 = vmatprep.subr.mxu0 0.0
        %9500 = vmatpush1.msra.mxu0 0.0
        %9501 = vmatprep.subr.mxu0 0.0
        %9502 = vmatpush1.msra.mxu0 0.0
        %9503 = vmatprep.subr.mxu0 0.0
        %9504 = vmatpush1.msra.mxu0 %v9462
        %9505 = vmatprep.subr.mxu0 0.0
        %9506 = vmatpush1.msra.mxu0 %v9461
        %9507 = vmatprep.subr.mxu0 0.0
        %9508 = vmatpush1.msra.mxu0 %v9460
        %9509 = vmatprep.subr.mxu0 0.0
        %9510 = vmatpush1.msra.mxu0 %v9459
        %9511 = vmatprep.subr.mxu0 0.0
        %9512 = vmatpush1.msra.mxu0 %v9458
        %9513 = vmatprep.subr.mxu0 0.0
        %9514 = vmatpush1.msra.mxu0 %v9457
        %9515 = vmatprep.subr.mxu0 0.0
        %9516 = vmatpush1.msra.mxu0 %v9456
        %9517 = vmatprep.subr.mxu0 0.0
        %9518 = vmatpush1.msra.mxu0 %v9455
        %9519 = vmatprep.subr.mxu0 0.0
        %9520 = vmatpush2.msra.mxu0 0.0
        %9521 = vmatprep.subr.mxu0 0.0
        %9522 = vmatpush2.msra.mxu0 0.0
        %9523 = vmatprep.subr.mxu0 0.0
        %9524 = vmatpush2.msra.mxu0 0.0
        %9525 = vmatprep.subr.mxu0 0.0
        %9526 = vmatpush2.msra.mxu0 0.0
        %9527 = vmatprep.subr.mxu0 0.0
        %9528 = vmatpush2.msra.mxu0 0.0
        %9529 = vmatprep.subr.mxu0 0.0
        %9530 = vmatpush2.msra.mxu0 0.0
        %9531 = vmatprep.subr.mxu0 0.0
        %9532 = vmatpush2.msra.mxu0 0.0
        %9533 = vmatprep.subr.mxu0 0.0
        %9534 = vmatpush2.msra.mxu0 0.0
        %9535 = vmatprep.subr.mxu0 0.0
        %9536 = vmatpush2.msra.mxu0 0.0
        %9537 = vmatprep.subr.mxu0 0.0
        %9538 = vmatpush2.msra.mxu0 0.0
        %9539 = vmatprep.subr.mxu0 0.0
        %9540 = vmatpush2.msra.mxu0 0.0
        %9541 = vmatprep.subr.mxu0 0.0
        %9542 = vmatpush2.msra.mxu0 0.0
        %9543 = vmatprep.subr.mxu0 0.0
        %9544 = vmatpush2.msra.mxu0 0.0
        %9545 = vmatprep.subr.mxu0 0.0
        %9546 = vmatpush2.msra.mxu0 0.0
        %9547 = vmatprep.subr.mxu0 0.0
        %9548 = vmatpush2.msra.mxu0 0.0
        %9549 = vmatprep.subr.mxu0 0.0
        %9550 = vmatpush2.msra.mxu0 0.0
        %9551 = vmatprep.mubr.f32.mxu0 0.0
        %9552 = vmatmul.mubr.f32.gmra.mxu0 %v9464
        %v9553 = vpop.f32.mrf.mxu0
        %v9554 = vadd.f32 0.0, %v9553
        %v9555 = vpop.f32.mrf.mxu0
        %9556 = vmatprep.mubr.f32.mxu0 0.0
        %9557 = vmatmul.mubr.f32.gmra.mxu0 %v9467
        %v9558 = vpop.f32.mrf.mxu0
        %v9559 = vadd.f32 0.0, %v9558
        %v9560 = vpop.f32.mrf.mxu0
        %9561 = vmatprep.mubr.f32.mxu0 0.0
        %9562 = vmatmul.mubr.f32.gmra.mxu0 %v9470
        %v9563 = vpop.f32.mrf.mxu0
        %v9564 = vadd.f32 0.0, %v9563
        %v9565 = vpop.f32.mrf.mxu0
        %9566 = vmatprep.mubr.f32.mxu0 0.0
        %9567 = vmatmul.mubr.f32.gmra.mxu0 %v9473
        %v9568 = vpop.f32.mrf.mxu0
        %v9569 = vadd.f32 0.0, %v9568
        %v9570 = vpop.f32.mrf.mxu0
        %9571 = vmatprep.mubr.f32.mxu0 0.0
        %9572 = vmatmul.mubr.f32.gmra.mxu0 %v9476
        %v9573 = vpop.f32.mrf.mxu0
        %v9574 = vadd.f32 0.0, %v9573
        %v9575 = vpop.f32.mrf.mxu0
        %9576 = vmatprep.mubr.f32.mxu0 0.0
        %9577 = vmatmul.mubr.f32.gmra.mxu0 %v9479
        %v9578 = vpop.f32.mrf.mxu0
        %v9579 = vadd.f32 0.0, %v9578
        %v9580 = vpop.f32.mrf.mxu0
        %9581 = vmatprep.mubr.f32.mxu0 0.0
        %9582 = vmatmul.mubr.f32.gmra.mxu0 %v9482
        %v9583 = vpop.f32.mrf.mxu0
        %v9584 = vadd.f32 0.0, %v9583
        %v9585 = vpop.f32.mrf.mxu0
        %9586 = vmatprep.mubr.f32.mxu0 0.0
        %9587 = vmatmul.mubr.f32.gmra.mxu0 %v9485
        %v9588 = vpop.f32.mrf.mxu0
        %v9589 = vadd.f32 0.0, %v9588
        %v9590 = vpop.f32.mrf.mxu0
        %9591 = vdwg.mxu0
        %v9592 = vadd.f32 %v9439, %v9554
        %v9593 = vadd.f32 %v9440, %v9559
        %v9594 = vadd.f32 %v9441, %v9564
        %v9595 = vadd.f32 %v9442, %v9569
        %v9596 = vadd.f32 %v9443, %v9574
        %v9597 = vadd.f32 %v9444, %v9579
        %v9598 = vadd.f32 %v9445, %v9584
        %v9599 = vadd.f32 %v9446, %v9589
        %s9600 = scalar_lea.vmem [#allocation3], 32
        %v9601 = vld [vmem:[%s9600] sm:$0xff]
        %v9602 = vld [vmem:[%s9600 + $0x10] sm:$0xff]
        %v9603 = vld [vmem:[%s9600 + $0x20] sm:$0xff]
        %v9604 = vld [vmem:[%s9600 + $0x30] sm:$0xff]
        %v9605 = vld [vmem:[%s9600 + $0x40] sm:$0xff]
        %v9606 = vld [vmem:[%s9600 + $0x50] sm:$0xff]
        %v9607 = vld [vmem:[%s9600 + $0x60] sm:$0xff]
        %v9608 = vld [vmem:[%s9600 + $0x70] sm:$0xff]
        %v9609 = vld [vmem:[#allocation4 + $0x180] sm:$0xff]
        %v9610 = vld [vmem:[#allocation4 + $0x188] sm:$0xff]
        %v9611 = vld [vmem:[#allocation4 + $0x190] sm:$0xff]
        %v9612 = vld [vmem:[#allocation4 + $0x198] sm:$0xff]
        %v9613 = vld [vmem:[#allocation4 + $0x1a0] sm:$0xff]
        %v9614 = vld [vmem:[#allocation4 + $0x1a8] sm:$0xff]
        %v9615 = vld [vmem:[#allocation4 + $0x1b0] sm:$0xff]
        %v9616 = vld [vmem:[#allocation4 + $0x1b8] sm:$0xff]
        %v9618 = vsel %vm417, %v9601, 0
        %v9621 = vsel %vm417, %v9602, 0
        %v9624 = vsel %vm417, %v9603, 0
        %v9627 = vsel %vm417, %v9604, 0
        %v9630 = vsel %vm417, %v9605, 0
        %v9633 = vsel %vm417, %v9606, 0
        %v9636 = vsel %vm417, %v9607, 0
        %v9639 = vsel %vm417, %v9608, 0
        %9641 = vmatprep.subr.mxu0 0.0
        %9642 = vmatpush1.msra.mxu0 0.0
        %9643 = vmatprep.subr.mxu0 0.0
        %9644 = vmatpush1.msra.mxu0 0.0
        %9645 = vmatprep.subr.mxu0 0.0
        %9646 = vmatpush1.msra.mxu0 0.0
        %9647 = vmatprep.subr.mxu0 0.0
        %9648 = vmatpush1.msra.mxu0 0.0
        %9649 = vmatprep.subr.mxu0 0.0
        %9650 = vmatpush1.msra.mxu0 0.0
        %9651 = vmatprep.subr.mxu0 0.0
        %9652 = vmatpush1.msra.mxu0 0.0
        %9653 = vmatprep.subr.mxu0 0.0
        %9654 = vmatpush1.msra.mxu0 0.0
        %9655 = vmatprep.subr.mxu0 0.0
        %9656 = vmatpush1.msra.mxu0 0.0
        %9657 = vmatprep.subr.mxu0 0.0
        %9658 = vmatpush1.msra.mxu0 %v9616
        %9659 = vmatprep.subr.mxu0 0.0
        %9660 = vmatpush1.msra.mxu0 %v9615
        %9661 = vmatprep.subr.mxu0 0.0
        %9662 = vmatpush1.msra.mxu0 %v9614
        %9663 = vmatprep.subr.mxu0 0.0
        %9664 = vmatpush1.msra.mxu0 %v9613
        %9665 = vmatprep.subr.mxu0 0.0
        %9666 = vmatpush1.msra.mxu0 %v9612
        %9667 = vmatprep.subr.mxu0 0.0
        %9668 = vmatpush1.msra.mxu0 %v9611
        %9669 = vmatprep.subr.mxu0 0.0
        %9670 = vmatpush1.msra.mxu0 %v9610
        %9671 = vmatprep.subr.mxu0 0.0
        %9672 = vmatpush1.msra.mxu0 %v9609
        %9673 = vmatprep.subr.mxu0 0.0
        %9674 = vmatpush2.msra.mxu0 0.0
        %9675 = vmatprep.subr.mxu0 0.0
        %9676 = vmatpush2.msra.mxu0 0.0
        %9677 = vmatprep.subr.mxu0 0.0
        %9678 = vmatpush2.msra.mxu0 0.0
        %9679 = vmatprep.subr.mxu0 0.0
        %9680 = vmatpush2.msra.mxu0 0.0
        %9681 = vmatprep.subr.mxu0 0.0
        %9682 = vmatpush2.msra.mxu0 0.0
        %9683 = vmatprep.subr.mxu0 0.0
        %9684 = vmatpush2.msra.mxu0 0.0
        %9685 = vmatprep.subr.mxu0 0.0
        %9686 = vmatpush2.msra.mxu0 0.0
        %9687 = vmatprep.subr.mxu0 0.0
        %9688 = vmatpush2.msra.mxu0 0.0
        %9689 = vmatprep.subr.mxu0 0.0
        %9690 = vmatpush2.msra.mxu0 0.0
        %9691 = vmatprep.subr.mxu0 0.0
        %9692 = vmatpush2.msra.mxu0 0.0
        %9693 = vmatprep.subr.mxu0 0.0
        %9694 = vmatpush2.msra.mxu0 0.0
        %9695 = vmatprep.subr.mxu0 0.0
        %9696 = vmatpush2.msra.mxu0 0.0
        %9697 = vmatprep.subr.mxu0 0.0
        %9698 = vmatpush2.msra.mxu0 0.0
        %9699 = vmatprep.subr.mxu0 0.0
        %9700 = vmatpush2.msra.mxu0 0.0
        %9701 = vmatprep.subr.mxu0 0.0
        %9702 = vmatpush2.msra.mxu0 0.0
        %9703 = vmatprep.subr.mxu0 0.0
        %9704 = vmatpush2.msra.mxu0 0.0
        %9705 = vmatprep.mubr.f32.mxu0 0.0
        %9706 = vmatmul.mubr.f32.gmra.mxu0 %v9618
        %v9707 = vpop.f32.mrf.mxu0
        %v9708 = vadd.f32 0.0, %v9707
        %v9709 = vpop.f32.mrf.mxu0
        %9710 = vmatprep.mubr.f32.mxu0 0.0
        %9711 = vmatmul.mubr.f32.gmra.mxu0 %v9621
        %v9712 = vpop.f32.mrf.mxu0
        %v9713 = vadd.f32 0.0, %v9712
        %v9714 = vpop.f32.mrf.mxu0
        %9715 = vmatprep.mubr.f32.mxu0 0.0
        %9716 = vmatmul.mubr.f32.gmra.mxu0 %v9624
        %v9717 = vpop.f32.mrf.mxu0
        %v9718 = vadd.f32 0.0, %v9717
        %v9719 = vpop.f32.mrf.mxu0
        %9720 = vmatprep.mubr.f32.mxu0 0.0
        %9721 = vmatmul.mubr.f32.gmra.mxu0 %v9627
        %v9722 = vpop.f32.mrf.mxu0
        %v9723 = vadd.f32 0.0, %v9722
        %v9724 = vpop.f32.mrf.mxu0
        %9725 = vmatprep.mubr.f32.mxu0 0.0
        %9726 = vmatmul.mubr.f32.gmra.mxu0 %v9630
        %v9727 = vpop.f32.mrf.mxu0
        %v9728 = vadd.f32 0.0, %v9727
        %v9729 = vpop.f32.mrf.mxu0
        %9730 = vmatprep.mubr.f32.mxu0 0.0
        %9731 = vmatmul.mubr.f32.gmra.mxu0 %v9633
        %v9732 = vpop.f32.mrf.mxu0
        %v9733 = vadd.f32 0.0, %v9732
        %v9734 = vpop.f32.mrf.mxu0
        %9735 = vmatprep.mubr.f32.mxu0 0.0
        %9736 = vmatmul.mubr.f32.gmra.mxu0 %v9636
        %v9737 = vpop.f32.mrf.mxu0
        %v9738 = vadd.f32 0.0, %v9737
        %v9739 = vpop.f32.mrf.mxu0
        %9740 = vmatprep.mubr.f32.mxu0 0.0
        %9741 = vmatmul.mubr.f32.gmra.mxu0 %v9639
        %v9742 = vpop.f32.mrf.mxu0
        %v9743 = vadd.f32 0.0, %v9742
        %v9744 = vpop.f32.mrf.mxu0
        %9745 = vdwg.mxu0
        %v9746 = vadd.f32 %v9592, %v9708
        %v9747 = vadd.f32 %v9593, %v9713
        %v9748 = vadd.f32 %v9594, %v9718
        %v9749 = vadd.f32 %v9595, %v9723
        %v9750 = vadd.f32 %v9596, %v9728
        %v9751 = vadd.f32 %v9597, %v9733
        %v9752 = vadd.f32 %v9598, %v9738
        %v9753 = vadd.f32 %v9599, %v9743
        %v9754 = vld [vmem:[%s9600 + $0x1] sm:$0xff]
        %v9755 = vld [vmem:[%s9600 + $0x11] sm:$0xff]
        %v9756 = vld [vmem:[%s9600 + $0x21] sm:$0xff]
        %v9757 = vld [vmem:[%s9600 + $0x31] sm:$0xff]
        %v9758 = vld [vmem:[%s9600 + $0x41] sm:$0xff]
        %v9759 = vld [vmem:[%s9600 + $0x51] sm:$0xff]
        %v9760 = vld [vmem:[%s9600 + $0x61] sm:$0xff]
        %v9761 = vld [vmem:[%s9600 + $0x71] sm:$0xff]
        %v9762 = vld [vmem:[#allocation4 + $0x1c0] sm:$0xff]
        %v9763 = vld [vmem:[#allocation4 + $0x1c8] sm:$0xff]
        %v9764 = vld [vmem:[#allocation4 + $0x1d0] sm:$0xff]
        %v9765 = vld [vmem:[#allocation4 + $0x1d8] sm:$0xff]
        %v9766 = vld [vmem:[#allocation4 + $0x1e0] sm:$0xff]
        %v9767 = vld [vmem:[#allocation4 + $0x1e8] sm:$0xff]
        %v9768 = vld [vmem:[#allocation4 + $0x1f0] sm:$0xff]
        %v9769 = vld [vmem:[#allocation4 + $0x1f8] sm:$0xff]
        %v9771 = vsel %vm417, %v9754, 0
        %v9774 = vsel %vm417, %v9755, 0
        %v9777 = vsel %vm417, %v9756, 0
        %v9780 = vsel %vm417, %v9757, 0
        %v9783 = vsel %vm417, %v9758, 0
        %v9786 = vsel %vm417, %v9759, 0
        %v9789 = vsel %vm417, %v9760, 0
        %v9792 = vsel %vm417, %v9761, 0
        %9794 = vmatprep.subr.mxu0 0.0
        %9795 = vmatpush1.msra.mxu0 0.0
        %9796 = vmatprep.subr.mxu0 0.0
        %9797 = vmatpush1.msra.mxu0 0.0
        %9798 = vmatprep.subr.mxu0 0.0
        %9799 = vmatpush1.msra.mxu0 0.0
        %9800 = vmatprep.subr.mxu0 0.0
        %9801 = vmatpush1.msra.mxu0 0.0
        %9802 = vmatprep.subr.mxu0 0.0
        %9803 = vmatpush1.msra.mxu0 0.0
        %9804 = vmatprep.subr.mxu0 0.0
        %9805 = vmatpush1.msra.mxu0 0.0
        %9806 = vmatprep.subr.mxu0 0.0
        %9807 = vmatpush1.msra.mxu0 0.0
        %9808 = vmatprep.subr.mxu0 0.0
        %9809 = vmatpush1.msra.mxu0 0.0
        %9810 = vmatprep.subr.mxu0 0.0
        %9811 = vmatpush1.msra.mxu0 %v9769
        %9812 = vmatprep.subr.mxu0 0.0
        %9813 = vmatpush1.msra.mxu0 %v9768
        %9814 = vmatprep.subr.mxu0 0.0
        %9815 = vmatpush1.msra.mxu0 %v9767
        %9816 = vmatprep.subr.mxu0 0.0
        %9817 = vmatpush1.msra.mxu0 %v9766
        %9818 = vmatprep.subr.mxu0 0.0
        %9819 = vmatpush1.msra.mxu0 %v9765
        %9820 = vmatprep.subr.mxu0 0.0
        %9821 = vmatpush1.msra.mxu0 %v9764
        %9822 = vmatprep.subr.mxu0 0.0
        %9823 = vmatpush1.msra.mxu0 %v9763
        %9824 = vmatprep.subr.mxu0 0.0
        %9825 = vmatpush1.msra.mxu0 %v9762
        %9826 = vmatprep.subr.mxu0 0.0
        %9827 = vmatpush2.msra.mxu0 0.0
        %9828 = vmatprep.subr.mxu0 0.0
        %9829 = vmatpush2.msra.mxu0 0.0
        %9830 = vmatprep.subr.mxu0 0.0
        %9831 = vmatpush2.msra.mxu0 0.0
        %9832 = vmatprep.subr.mxu0 0.0
        %9833 = vmatpush2.msra.mxu0 0.0
        %9834 = vmatprep.subr.mxu0 0.0
        %9835 = vmatpush2.msra.mxu0 0.0
        %9836 = vmatprep.subr.mxu0 0.0
        %9837 = vmatpush2.msra.mxu0 0.0
        %9838 = vmatprep.subr.mxu0 0.0
        %9839 = vmatpush2.msra.mxu0 0.0
        %9840 = vmatprep.subr.mxu0 0.0
        %9841 = vmatpush2.msra.mxu0 0.0
        %9842 = vmatprep.subr.mxu0 0.0
        %9843 = vmatpush2.msra.mxu0 0.0
        %9844 = vmatprep.subr.mxu0 0.0
        %9845 = vmatpush2.msra.mxu0 0.0
        %9846 = vmatprep.subr.mxu0 0.0
        %9847 = vmatpush2.msra.mxu0 0.0
        %9848 = vmatprep.subr.mxu0 0.0
        %9849 = vmatpush2.msra.mxu0 0.0
        %9850 = vmatprep.subr.mxu0 0.0
        %9851 = vmatpush2.msra.mxu0 0.0
        %9852 = vmatprep.subr.mxu0 0.0
        %9853 = vmatpush2.msra.mxu0 0.0
        %9854 = vmatprep.subr.mxu0 0.0
        %9855 = vmatpush2.msra.mxu0 0.0
        %9856 = vmatprep.subr.mxu0 0.0
        %9857 = vmatpush2.msra.mxu0 0.0
        %9858 = vmatprep.mubr.f32.mxu0 0.0
        %9859 = vmatmul.mubr.f32.gmra.mxu0 %v9771
        %v9860 = vpop.f32.mrf.mxu0
        %v9861 = vadd.f32 0.0, %v9860
        %v9862 = vpop.f32.mrf.mxu0
        %9863 = vmatprep.mubr.f32.mxu0 0.0
        %9864 = vmatmul.mubr.f32.gmra.mxu0 %v9774
        %v9865 = vpop.f32.mrf.mxu0
        %v9866 = vadd.f32 0.0, %v9865
        %v9867 = vpop.f32.mrf.mxu0
        %9868 = vmatprep.mubr.f32.mxu0 0.0
        %9869 = vmatmul.mubr.f32.gmra.mxu0 %v9777
        %v9870 = vpop.f32.mrf.mxu0
        %v9871 = vadd.f32 0.0, %v9870
        %v9872 = vpop.f32.mrf.mxu0
        %9873 = vmatprep.mubr.f32.mxu0 0.0
        %9874 = vmatmul.mubr.f32.gmra.mxu0 %v9780
        %v9875 = vpop.f32.mrf.mxu0
        %v9876 = vadd.f32 0.0, %v9875
        %v9877 = vpop.f32.mrf.mxu0
        %9878 = vmatprep.mubr.f32.mxu0 0.0
        %9879 = vmatmul.mubr.f32.gmra.mxu0 %v9783
        %v9880 = vpop.f32.mrf.mxu0
        %v9881 = vadd.f32 0.0, %v9880
        %v9882 = vpop.f32.mrf.mxu0
        %9883 = vmatprep.mubr.f32.mxu0 0.0
        %9884 = vmatmul.mubr.f32.gmra.mxu0 %v9786
        %v9885 = vpop.f32.mrf.mxu0
        %v9886 = vadd.f32 0.0, %v9885
        %v9887 = vpop.f32.mrf.mxu0
        %9888 = vmatprep.mubr.f32.mxu0 0.0
        %9889 = vmatmul.mubr.f32.gmra.mxu0 %v9789
        %v9890 = vpop.f32.mrf.mxu0
        %v9891 = vadd.f32 0.0, %v9890
        %v9892 = vpop.f32.mrf.mxu0
        %9893 = vmatprep.mubr.f32.mxu0 0.0
        %9894 = vmatmul.mubr.f32.gmra.mxu0 %v9792
        %v9895 = vpop.f32.mrf.mxu0
        %v9896 = vadd.f32 0.0, %v9895
        %v9897 = vpop.f32.mrf.mxu0
        %9898 = vdwg.mxu0
        %v9899 = vadd.f32 %v9746, %v9861
        %v9900 = vadd.f32 %v9747, %v9866
        %v9901 = vadd.f32 %v9748, %v9871
        %v9902 = vadd.f32 %v9749, %v9876
        %v9903 = vadd.f32 %v9750, %v9881
        %v9904 = vadd.f32 %v9751, %v9886
        %v9905 = vadd.f32 %v9752, %v9891
        %v9906 = vadd.f32 %v9753, %v9896
        %v9907 = vld [vmem:[%s9600 + $0x2] sm:$0xff]
        %v9908 = vld [vmem:[%s9600 + $0x12] sm:$0xff]
        %v9909 = vld [vmem:[%s9600 + $0x22] sm:$0xff]
        %v9910 = vld [vmem:[%s9600 + $0x32] sm:$0xff]
        %v9911 = vld [vmem:[%s9600 + $0x42] sm:$0xff]
        %v9912 = vld [vmem:[%s9600 + $0x52] sm:$0xff]
        %v9913 = vld [vmem:[%s9600 + $0x62] sm:$0xff]
        %v9914 = vld [vmem:[%s9600 + $0x72] sm:$0xff]
        %v9915 = vld [vmem:[#allocation4 + $0x200] sm:$0xff]
        %v9916 = vld [vmem:[#allocation4 + $0x208] sm:$0xff]
        %v9917 = vld [vmem:[#allocation4 + $0x210] sm:$0xff]
        %v9918 = vld [vmem:[#allocation4 + $0x218] sm:$0xff]
        %v9919 = vld [vmem:[#allocation4 + $0x220] sm:$0xff]
        %v9920 = vld [vmem:[#allocation4 + $0x228] sm:$0xff]
        %v9921 = vld [vmem:[#allocation4 + $0x230] sm:$0xff]
        %v9922 = vld [vmem:[#allocation4 + $0x238] sm:$0xff]
        %v9924 = vsel %vm417, %v9907, 0
        %v9927 = vsel %vm417, %v9908, 0
        %v9930 = vsel %vm417, %v9909, 0
        %v9933 = vsel %vm417, %v9910, 0
        %v9936 = vsel %vm417, %v9911, 0
        %v9939 = vsel %vm417, %v9912, 0
        %v9942 = vsel %vm417, %v9913, 0
        %v9945 = vsel %vm417, %v9914, 0
        %9947 = vmatprep.subr.mxu0 0.0
        %9948 = vmatpush1.msra.mxu0 0.0
        %9949 = vmatprep.subr.mxu0 0.0
        %9950 = vmatpush1.msra.mxu0 0.0
        %9951 = vmatprep.subr.mxu0 0.0
        %9952 = vmatpush1.msra.mxu0 0.0
        %9953 = vmatprep.subr.mxu0 0.0
        %9954 = vmatpush1.msra.mxu0 0.0
        %9955 = vmatprep.subr.mxu0 0.0
        %9956 = vmatpush1.msra.mxu0 0.0
        %9957 = vmatprep.subr.mxu0 0.0
        %9958 = vmatpush1.msra.mxu0 0.0
        %9959 = vmatprep.subr.mxu0 0.0
        %9960 = vmatpush1.msra.mxu0 0.0
        %9961 = vmatprep.subr.mxu0 0.0
        %9962 = vmatpush1.msra.mxu0 0.0
        %9963 = vmatprep.subr.mxu0 0.0
        %9964 = vmatpush1.msra.mxu0 %v9922
        %9965 = vmatprep.subr.mxu0 0.0
        %9966 = vmatpush1.msra.mxu0 %v9921
        %9967 = vmatprep.subr.mxu0 0.0
        %9968 = vmatpush1.msra.mxu0 %v9920
        %9969 = vmatprep.subr.mxu0 0.0
        %9970 = vmatpush1.msra.mxu0 %v9919
        %9971 = vmatprep.subr.mxu0 0.0
        %9972 = vmatpush1.msra.mxu0 %v9918
        %9973 = vmatprep.subr.mxu0 0.0
        %9974 = vmatpush1.msra.mxu0 %v9917
        %9975 = vmatprep.subr.mxu0 0.0
        %9976 = vmatpush1.msra.mxu0 %v9916
        %9977 = vmatprep.subr.mxu0 0.0
        %9978 = vmatpush1.msra.mxu0 %v9915
        %9979 = vmatprep.subr.mxu0 0.0
        %9980 = vmatpush2.msra.mxu0 0.0
        %9981 = vmatprep.subr.mxu0 0.0
        %9982 = vmatpush2.msra.mxu0 0.0
        %9983 = vmatprep.subr.mxu0 0.0
        %9984 = vmatpush2.msra.mxu0 0.0
        %9985 = vmatprep.subr.mxu0 0.0
        %9986 = vmatpush2.msra.mxu0 0.0
        %9987 = vmatprep.subr.mxu0 0.0
        %9988 = vmatpush2.msra.mxu0 0.0
        %9989 = vmatprep.subr.mxu0 0.0
        %9990 = vmatpush2.msra.mxu0 0.0
        %9991 = vmatprep.subr.mxu0 0.0
        %9992 = vmatpush2.msra.mxu0 0.0
        %9993 = vmatprep.subr.mxu0 0.0
        %9994 = vmatpush2.msra.mxu0 0.0
        %9995 = vmatprep.subr.mxu0 0.0
        %9996 = vmatpush2.msra.mxu0 0.0
        %9997 = vmatprep.subr.mxu0 0.0
        %9998 = vmatpush2.msra.mxu0 0.0
        %9999 = vmatprep.subr.mxu0 0.0
        %10000 = vmatpush2.msra.mxu0 0.0
        %10001 = vmatprep.subr.mxu0 0.0
        %10002 = vmatpush2.msra.mxu0 0.0
        %10003 = vmatprep.subr.mxu0 0.0
        %10004 = vmatpush2.msra.mxu0 0.0
        %10005 = vmatprep.subr.mxu0 0.0
        %10006 = vmatpush2.msra.mxu0 0.0
        %10007 = vmatprep.subr.mxu0 0.0
        %10008 = vmatpush2.msra.mxu0 0.0
        %10009 = vmatprep.subr.mxu0 0.0
        %10010 = vmatpush2.msra.mxu0 0.0
        %10011 = vmatprep.mubr.f32.mxu0 0.0
        %10012 = vmatmul.mubr.f32.gmra.mxu0 %v9924
        %v10013 = vpop.f32.mrf.mxu0
        %v10014 = vadd.f32 0.0, %v10013
        %v10015 = vpop.f32.mrf.mxu0
        %10016 = vmatprep.mubr.f32.mxu0 0.0
        %10017 = vmatmul.mubr.f32.gmra.mxu0 %v9927
        %v10018 = vpop.f32.mrf.mxu0
        %v10019 = vadd.f32 0.0, %v10018
        %v10020 = vpop.f32.mrf.mxu0
        %10021 = vmatprep.mubr.f32.mxu0 0.0
        %10022 = vmatmul.mubr.f32.gmra.mxu0 %v9930
        %v10023 = vpop.f32.mrf.mxu0
        %v10024 = vadd.f32 0.0, %v10023
        %v10025 = vpop.f32.mrf.mxu0
        %10026 = vmatprep.mubr.f32.mxu0 0.0
        %10027 = vmatmul.mubr.f32.gmra.mxu0 %v9933
        %v10028 = vpop.f32.mrf.mxu0
        %v10029 = vadd.f32 0.0, %v10028
        %v10030 = vpop.f32.mrf.mxu0
        %10031 = vmatprep.mubr.f32.mxu0 0.0
        %10032 = vmatmul.mubr.f32.gmra.mxu0 %v9936
        %v10033 = vpop.f32.mrf.mxu0
        %v10034 = vadd.f32 0.0, %v10033
        %v10035 = vpop.f32.mrf.mxu0
        %10036 = vmatprep.mubr.f32.mxu0 0.0
        %10037 = vmatmul.mubr.f32.gmra.mxu0 %v9939
        %v10038 = vpop.f32.mrf.mxu0
        %v10039 = vadd.f32 0.0, %v10038
        %v10040 = vpop.f32.mrf.mxu0
        %10041 = vmatprep.mubr.f32.mxu0 0.0
        %10042 = vmatmul.mubr.f32.gmra.mxu0 %v9942
        %v10043 = vpop.f32.mrf.mxu0
        %v10044 = vadd.f32 0.0, %v10043
        %v10045 = vpop.f32.mrf.mxu0
        %10046 = vmatprep.mubr.f32.mxu0 0.0
        %10047 = vmatmul.mubr.f32.gmra.mxu0 %v9945
        %v10048 = vpop.f32.mrf.mxu0
        %v10049 = vadd.f32 0.0, %v10048
        %v10050 = vpop.f32.mrf.mxu0
        %10051 = vdwg.mxu0
        %v10052 = vadd.f32 %v9899, %v10014
        %v10053 = vadd.f32 %v9900, %v10019
        %v10054 = vadd.f32 %v9901, %v10024
        %v10055 = vadd.f32 %v9902, %v10029
        %v10056 = vadd.f32 %v9903, %v10034
        %v10057 = vadd.f32 %v9904, %v10039
        %v10058 = vadd.f32 %v9905, %v10044
        %v10059 = vadd.f32 %v9906, %v10049
        %v10060 = vld [vmem:[%s6] sm:$0x1]
        %v10062 = vlaneseq
        %v10063 = vshrl.u32 %v10062, 7
        %v10064 = vsub.s32 0, %v10063
        %v10065 = vrot.slane %v10060, %v10064
        %v10067 = vadd.f32 %v10052, %v10065
        %v10068 = vadd.f32 %v10053, %v10065
        %v10069 = vadd.f32 %v10054, %v10065
        %v10070 = vadd.f32 %v10055, %v10065
        %v10071 = vadd.f32 %v10056, %v10065
        %v10072 = vadd.f32 %v10057, %v10065
        %v10073 = vadd.f32 %v10058, %v10065
        %v10074 = vadd.f32 %v10059, %v10065
        %v10075 = vmax.f32 %v10067, 0.0
        %v10076 = vmax.f32 %v10068, 0.0
        %v10077 = vmax.f32 %v10069, 0.0
        %v10078 = vmax.f32 %v10070, 0.0
        %v10079 = vmax.f32 %v10071, 0.0
        %v10080 = vmax.f32 %v10072, 0.0
        %v10081 = vmax.f32 %v10073, 0.0
        %v10082 = vmax.f32 %v10074, 0.0
        %10083 = vst.msk [vmem:[%s8689 + $0x1] sm:$0xff] %vm417, %v10075
        %10084 = vst.msk [vmem:[%s8689 + $0x11] sm:$0xff] %vm417, %v10076
        %10085 = vst.msk [vmem:[%s8689 + $0x21] sm:$0xff] %vm417, %v10077
        %10086 = vst.msk [vmem:[%s8689 + $0x31] sm:$0xff] %vm417, %v10078
        %10087 = vst.msk [vmem:[%s8689 + $0x41] sm:$0xff] %vm417, %v10079
        %10088 = vst.msk [vmem:[%s8689 + $0x51] sm:$0xff] %vm417, %v10080
        %10089 = vst.msk [vmem:[%s8689 + $0x61] sm:$0xff] %vm417, %v10081
        %10090 = vst.msk [vmem:[%s8689 + $0x71] sm:$0xff] %vm417, %v10082
        %v10091 = vld [vmem:[#allocation3] sm:$0xff]
        %v10092 = vld [vmem:[#allocation3 + $0x10] sm:$0xff]
        %v10093 = vld [vmem:[#allocation3 + $0x20] sm:$0xff]
        %v10094 = vld [vmem:[#allocation3 + $0x30] sm:$0xff]
        %v10095 = vld [vmem:[#allocation3 + $0x40] sm:$0xff]
        %v10096 = vld [vmem:[#allocation3 + $0x50] sm:$0xff]
        %v10097 = vld [vmem:[#allocation3 + $0x60] sm:$0xff]
        %v10098 = vld [vmem:[#allocation3 + $0x70] sm:$0xff]
        %v10099 = vld [vmem:[#allocation6] sm:$0xff]
        %v10100 = vld [vmem:[#allocation6 + $0x8] sm:$0xff]
        %v10101 = vld [vmem:[#allocation6 + $0x10] sm:$0xff]
        %v10102 = vld [vmem:[#allocation6 + $0x18] sm:$0xff]
        %v10103 = vld [vmem:[#allocation6 + $0x20] sm:$0xff]
        %v10104 = vld [vmem:[#allocation6 + $0x28] sm:$0xff]
        %v10105 = vld [vmem:[#allocation6 + $0x30] sm:$0xff]
        %v10106 = vld [vmem:[#allocation6 + $0x38] sm:$0xff]
        %v10107 = vld [vmem:[#allocation3 + $0x1] sm:$0xff]
        %v10108 = vld [vmem:[#allocation3 + $0x11] sm:$0xff]
        %v10109 = vld [vmem:[#allocation3 + $0x21] sm:$0xff]
        %v10110 = vld [vmem:[#allocation3 + $0x31] sm:$0xff]
        %v10111 = vld [vmem:[#allocation3 + $0x41] sm:$0xff]
        %v10112 = vld [vmem:[#allocation3 + $0x51] sm:$0xff]
        %v10113 = vld [vmem:[#allocation3 + $0x61] sm:$0xff]
        %v10114 = vld [vmem:[#allocation3 + $0x71] sm:$0xff]
        %v10115 = vld [vmem:[#allocation6 + $0x40] sm:$0xff]
        %v10116 = vld [vmem:[#allocation6 + $0x48] sm:$0xff]
        %v10117 = vld [vmem:[#allocation6 + $0x50] sm:$0xff]
        %v10118 = vld [vmem:[#allocation6 + $0x58] sm:$0xff]
        %v10119 = vld [vmem:[#allocation6 + $0x60] sm:$0xff]
        %v10120 = vld [vmem:[#allocation6 + $0x68] sm:$0xff]
        %v10121 = vld [vmem:[#allocation6 + $0x70] sm:$0xff]
        %v10122 = vld [vmem:[#allocation6 + $0x78] sm:$0xff]
        %v10124 = vsel %vm417, %v10107, 0
        %v10127 = vsel %vm417, %v10108, 0
        %v10130 = vsel %vm417, %v10109, 0
        %v10133 = vsel %vm417, %v10110, 0
        %v10136 = vsel %vm417, %v10111, 0
        %v10139 = vsel %vm417, %v10112, 0
        %v10142 = vsel %vm417, %v10113, 0
        %v10145 = vsel %vm417, %v10114, 0
        %10147 = vmatprep.subr.mxu0 0.0
        %10148 = vmatpush1.msra.mxu0 0.0
        %10149 = vmatprep.subr.mxu0 0.0
        %10150 = vmatpush1.msra.mxu0 0.0
        %10151 = vmatprep.subr.mxu0 0.0
        %10152 = vmatpush1.msra.mxu0 0.0
        %10153 = vmatprep.subr.mxu0 0.0
        %10154 = vmatpush1.msra.mxu0 0.0
        %10155 = vmatprep.subr.mxu0 0.0
        %10156 = vmatpush1.msra.mxu0 0.0
        %10157 = vmatprep.subr.mxu0 0.0
        %10158 = vmatpush1.msra.mxu0 0.0
        %10159 = vmatprep.subr.mxu0 0.0
        %10160 = vmatpush1.msra.mxu0 0.0
        %10161 = vmatprep.subr.mxu0 0.0
        %10162 = vmatpush1.msra.mxu0 0.0
        %10163 = vmatprep.subr.mxu0 0.0
        %10164 = vmatpush1.msra.mxu0 %v10122
        %10165 = vmatprep.subr.mxu0 0.0
        %10166 = vmatpush1.msra.mxu0 %v10121
        %10167 = vmatprep.subr.mxu0 0.0
        %10168 = vmatpush1.msra.mxu0 %v10120
        %10169 = vmatprep.subr.mxu0 0.0
        %10170 = vmatpush1.msra.mxu0 %v10119
        %10171 = vmatprep.subr.mxu0 0.0
        %10172 = vmatpush1.msra.mxu0 %v10118
        %10173 = vmatprep.subr.mxu0 0.0
        %10174 = vmatpush1.msra.mxu0 %v10117
        %10175 = vmatprep.subr.mxu0 0.0
        %10176 = vmatpush1.msra.mxu0 %v10116
        %10177 = vmatprep.subr.mxu0 0.0
        %10178 = vmatpush1.msra.mxu0 %v10115
        %10179 = vmatprep.subr.mxu0 0.0
        %10180 = vmatpush2.msra.mxu0 0.0
        %10181 = vmatprep.subr.mxu0 0.0
        %10182 = vmatpush2.msra.mxu0 0.0
        %10183 = vmatprep.subr.mxu0 0.0
        %10184 = vmatpush2.msra.mxu0 0.0
        %10185 = vmatprep.subr.mxu0 0.0
        %10186 = vmatpush2.msra.mxu0 0.0
        %10187 = vmatprep.subr.mxu0 0.0
        %10188 = vmatpush2.msra.mxu0 0.0
        %10189 = vmatprep.subr.mxu0 0.0
        %10190 = vmatpush2.msra.mxu0 0.0
        %10191 = vmatprep.subr.mxu0 0.0
        %10192 = vmatpush2.msra.mxu0 0.0
        %10193 = vmatprep.subr.mxu0 0.0
        %10194 = vmatpush2.msra.mxu0 0.0
        %10195 = vmatprep.subr.mxu0 0.0
        %10196 = vmatpush2.msra.mxu0 0.0
        %10197 = vmatprep.subr.mxu0 0.0
        %10198 = vmatpush2.msra.mxu0 0.0
        %10199 = vmatprep.subr.mxu0 0.0
        %10200 = vmatpush2.msra.mxu0 0.0
        %10201 = vmatprep.subr.mxu0 0.0
        %10202 = vmatpush2.msra.mxu0 0.0
        %10203 = vmatprep.subr.mxu0 0.0
        %10204 = vmatpush2.msra.mxu0 0.0
        %10205 = vmatprep.subr.mxu0 0.0
        %10206 = vmatpush2.msra.mxu0 0.0
        %10207 = vmatprep.subr.mxu0 0.0
        %10208 = vmatpush2.msra.mxu0 0.0
        %10209 = vmatprep.subr.mxu0 0.0
        %10210 = vmatpush2.msra.mxu0 0.0
        %10211 = vmatprep.mubr.f32.mxu0 0.0
        %10212 = vmatmul.mubr.f32.gmra.mxu0 %v10124
        %v10213 = vpop.f32.mrf.mxu0
        %v10214 = vadd.f32 0.0, %v10213
        %v10215 = vpop.f32.mrf.mxu0
        %10216 = vmatprep.mubr.f32.mxu0 0.0
        %10217 = vmatmul.mubr.f32.gmra.mxu0 %v10127
        %v10218 = vpop.f32.mrf.mxu0
        %v10219 = vadd.f32 0.0, %v10218
        %v10220 = vpop.f32.mrf.mxu0
        %10221 = vmatprep.mubr.f32.mxu0 0.0
        %10222 = vmatmul.mubr.f32.gmra.mxu0 %v10130
        %v10223 = vpop.f32.mrf.mxu0
        %v10224 = vadd.f32 0.0, %v10223
        %v10225 = vpop.f32.mrf.mxu0
        %10226 = vmatprep.mubr.f32.mxu0 0.0
        %10227 = vmatmul.mubr.f32.gmra.mxu0 %v10133
        %v10228 = vpop.f32.mrf.mxu0
        %v10229 = vadd.f32 0.0, %v10228
        %v10230 = vpop.f32.mrf.mxu0
        %10231 = vmatprep.mubr.f32.mxu0 0.0
        %10232 = vmatmul.mubr.f32.gmra.mxu0 %v10136
        %v10233 = vpop.f32.mrf.mxu0
        %v10234 = vadd.f32 0.0, %v10233
        %v10235 = vpop.f32.mrf.mxu0
        %10236 = vmatprep.mubr.f32.mxu0 0.0
        %10237 = vmatmul.mubr.f32.gmra.mxu0 %v10139
        %v10238 = vpop.f32.mrf.mxu0
        %v10239 = vadd.f32 0.0, %v10238
        %v10240 = vpop.f32.mrf.mxu0
        %10241 = vmatprep.mubr.f32.mxu0 0.0
        %10242 = vmatmul.mubr.f32.gmra.mxu0 %v10142
        %v10243 = vpop.f32.mrf.mxu0
        %v10244 = vadd.f32 0.0, %v10243
        %v10245 = vpop.f32.mrf.mxu0
        %10246 = vmatprep.mubr.f32.mxu0 0.0
        %10247 = vmatmul.mubr.f32.gmra.mxu0 %v10145
        %v10248 = vpop.f32.mrf.mxu0
        %v10249 = vadd.f32 0.0, %v10248
        %v10250 = vpop.f32.mrf.mxu0
        %10251 = vdwg.mxu0
        %v10253 = vsel %vm417, %v10091, 0
        %v10256 = vsel %vm417, %v10092, 0
        %v10259 = vsel %vm417, %v10093, 0
        %v10262 = vsel %vm417, %v10094, 0
        %v10265 = vsel %vm417, %v10095, 0
        %v10268 = vsel %vm417, %v10096, 0
        %v10271 = vsel %vm417, %v10097, 0
        %v10274 = vsel %vm417, %v10098, 0
        %10276 = vmatprep.subr.mxu0 0.0
        %10277 = vmatpush1.msra.mxu0 0.0
        %10278 = vmatprep.subr.mxu0 0.0
        %10279 = vmatpush1.msra.mxu0 0.0
        %10280 = vmatprep.subr.mxu0 0.0
        %10281 = vmatpush1.msra.mxu0 0.0
        %10282 = vmatprep.subr.mxu0 0.0
        %10283 = vmatpush1.msra.mxu0 0.0
        %10284 = vmatprep.subr.mxu0 0.0
        %10285 = vmatpush1.msra.mxu0 0.0
        %10286 = vmatprep.subr.mxu0 0.0
        %10287 = vmatpush1.msra.mxu0 0.0
        %10288 = vmatprep.subr.mxu0 0.0
        %10289 = vmatpush1.msra.mxu0 0.0
        %10290 = vmatprep.subr.mxu0 0.0
        %10291 = vmatpush1.msra.mxu0 0.0
        %10292 = vmatprep.subr.mxu0 0.0
        %10293 = vmatpush1.msra.mxu0 %v10106
        %10294 = vmatprep.subr.mxu0 0.0
        %10295 = vmatpush1.msra.mxu0 %v10105
        %10296 = vmatprep.subr.mxu0 0.0
        %10297 = vmatpush1.msra.mxu0 %v10104
        %10298 = vmatprep.subr.mxu0 0.0
        %10299 = vmatpush1.msra.mxu0 %v10103
        %10300 = vmatprep.subr.mxu0 0.0
        %10301 = vmatpush1.msra.mxu0 %v10102
        %10302 = vmatprep.subr.mxu0 0.0
        %10303 = vmatpush1.msra.mxu0 %v10101
        %10304 = vmatprep.subr.mxu0 0.0
        %10305 = vmatpush1.msra.mxu0 %v10100
        %10306 = vmatprep.subr.mxu0 0.0
        %10307 = vmatpush1.msra.mxu0 %v10099
        %10308 = vmatprep.subr.mxu0 0.0
        %10309 = vmatpush2.msra.mxu0 0.0
        %10310 = vmatprep.subr.mxu0 0.0
        %10311 = vmatpush2.msra.mxu0 0.0
        %10312 = vmatprep.subr.mxu0 0.0
        %10313 = vmatpush2.msra.mxu0 0.0
        %10314 = vmatprep.subr.mxu0 0.0
        %10315 = vmatpush2.msra.mxu0 0.0
        %10316 = vmatprep.subr.mxu0 0.0
        %10317 = vmatpush2.msra.mxu0 0.0
        %10318 = vmatprep.subr.mxu0 0.0
        %10319 = vmatpush2.msra.mxu0 0.0
        %10320 = vmatprep.subr.mxu0 0.0
        %10321 = vmatpush2.msra.mxu0 0.0
        %10322 = vmatprep.subr.mxu0 0.0
        %10323 = vmatpush2.msra.mxu0 0.0
        %10324 = vmatprep.subr.mxu0 0.0
        %10325 = vmatpush2.msra.mxu0 0.0
        %10326 = vmatprep.subr.mxu0 0.0
        %10327 = vmatpush2.msra.mxu0 0.0
        %10328 = vmatprep.subr.mxu0 0.0
        %10329 = vmatpush2.msra.mxu0 0.0
        %10330 = vmatprep.subr.mxu0 0.0
        %10331 = vmatpush2.msra.mxu0 0.0
        %10332 = vmatprep.subr.mxu0 0.0
        %10333 = vmatpush2.msra.mxu0 0.0
        %10334 = vmatprep.subr.mxu0 0.0
        %10335 = vmatpush2.msra.mxu0 0.0
        %10336 = vmatprep.subr.mxu0 0.0
        %10337 = vmatpush2.msra.mxu0 0.0
        %10338 = vmatprep.subr.mxu0 0.0
        %10339 = vmatpush2.msra.mxu0 0.0
        %10340 = vmatprep.mubr.f32.mxu0 0.0
        %10341 = vmatmul.mubr.f32.gmra.mxu0 %v10253
        %v10342 = vpop.f32.mrf.mxu0
        %v10343 = vadd.f32 %v10214, %v10342
        %v10344 = vpop.f32.mrf.mxu0
        %10345 = vmatprep.mubr.f32.mxu0 0.0
        %10346 = vmatmul.mubr.f32.gmra.mxu0 %v10256
        %v10347 = vpop.f32.mrf.mxu0
        %v10348 = vadd.f32 %v10219, %v10347
        %v10349 = vpop.f32.mrf.mxu0
        %10350 = vmatprep.mubr.f32.mxu0 0.0
        %10351 = vmatmul.mubr.f32.gmra.mxu0 %v10259
        %v10352 = vpop.f32.mrf.mxu0
        %v10353 = vadd.f32 %v10224, %v10352
        %v10354 = vpop.f32.mrf.mxu0
        %10355 = vmatprep.mubr.f32.mxu0 0.0
        %10356 = vmatmul.mubr.f32.gmra.mxu0 %v10262
        %v10357 = vpop.f32.mrf.mxu0
        %v10358 = vadd.f32 %v10229, %v10357
        %v10359 = vpop.f32.mrf.mxu0
        %10360 = vmatprep.mubr.f32.mxu0 0.0
        %10361 = vmatmul.mubr.f32.gmra.mxu0 %v10265
        %v10362 = vpop.f32.mrf.mxu0
        %v10363 = vadd.f32 %v10234, %v10362
        %v10364 = vpop.f32.mrf.mxu0
        %10365 = vmatprep.mubr.f32.mxu0 0.0
        %10366 = vmatmul.mubr.f32.gmra.mxu0 %v10268
        %v10367 = vpop.f32.mrf.mxu0
        %v10368 = vadd.f32 %v10239, %v10367
        %v10369 = vpop.f32.mrf.mxu0
        %10370 = vmatprep.mubr.f32.mxu0 0.0
        %10371 = vmatmul.mubr.f32.gmra.mxu0 %v10271
        %v10372 = vpop.f32.mrf.mxu0
        %v10373 = vadd.f32 %v10244, %v10372
        %v10374 = vpop.f32.mrf.mxu0
        %10375 = vmatprep.mubr.f32.mxu0 0.0
        %10376 = vmatmul.mubr.f32.gmra.mxu0 %v10274
        %v10377 = vpop.f32.mrf.mxu0
        %v10378 = vadd.f32 %v10249, %v10377
        %v10379 = vpop.f32.mrf.mxu0
        %10380 = vdwg.mxu0
        %v10381 = vld [vmem:[#allocation3 + $0x2] sm:$0xff]
        %v10382 = vld [vmem:[#allocation3 + $0x12] sm:$0xff]
        %v10383 = vld [vmem:[#allocation3 + $0x22] sm:$0xff]
        %v10384 = vld [vmem:[#allocation3 + $0x32] sm:$0xff]
        %v10385 = vld [vmem:[#allocation3 + $0x42] sm:$0xff]
        %v10386 = vld [vmem:[#allocation3 + $0x52] sm:$0xff]
        %v10387 = vld [vmem:[#allocation3 + $0x62] sm:$0xff]
        %v10388 = vld [vmem:[#allocation3 + $0x72] sm:$0xff]
        %v10389 = vld [vmem:[#allocation6 + $0x80] sm:$0xff]
        %v10390 = vld [vmem:[#allocation6 + $0x88] sm:$0xff]
        %v10391 = vld [vmem:[#allocation6 + $0x90] sm:$0xff]
        %v10392 = vld [vmem:[#allocation6 + $0x98] sm:$0xff]
        %v10393 = vld [vmem:[#allocation6 + $0xa0] sm:$0xff]
        %v10394 = vld [vmem:[#allocation6 + $0xa8] sm:$0xff]
        %v10395 = vld [vmem:[#allocation6 + $0xb0] sm:$0xff]
        %v10396 = vld [vmem:[#allocation6 + $0xb8] sm:$0xff]
        %v10398 = vsel %vm417, %v10381, 0
        %v10401 = vsel %vm417, %v10382, 0
        %v10404 = vsel %vm417, %v10383, 0
        %v10407 = vsel %vm417, %v10384, 0
        %v10410 = vsel %vm417, %v10385, 0
        %v10413 = vsel %vm417, %v10386, 0
        %v10416 = vsel %vm417, %v10387, 0
        %v10419 = vsel %vm417, %v10388, 0
        %10421 = vmatprep.subr.mxu0 0.0
        %10422 = vmatpush1.msra.mxu0 0.0
        %10423 = vmatprep.subr.mxu0 0.0
        %10424 = vmatpush1.msra.mxu0 0.0
        %10425 = vmatprep.subr.mxu0 0.0
        %10426 = vmatpush1.msra.mxu0 0.0
        %10427 = vmatprep.subr.mxu0 0.0
        %10428 = vmatpush1.msra.mxu0 0.0
        %10429 = vmatprep.subr.mxu0 0.0
        %10430 = vmatpush1.msra.mxu0 0.0
        %10431 = vmatprep.subr.mxu0 0.0
        %10432 = vmatpush1.msra.mxu0 0.0
        %10433 = vmatprep.subr.mxu0 0.0
        %10434 = vmatpush1.msra.mxu0 0.0
        %10435 = vmatprep.subr.mxu0 0.0
        %10436 = vmatpush1.msra.mxu0 0.0
        %10437 = vmatprep.subr.mxu0 0.0
        %10438 = vmatpush1.msra.mxu0 %v10396
        %10439 = vmatprep.subr.mxu0 0.0
        %10440 = vmatpush1.msra.mxu0 %v10395
        %10441 = vmatprep.subr.mxu0 0.0
        %10442 = vmatpush1.msra.mxu0 %v10394
        %10443 = vmatprep.subr.mxu0 0.0
        %10444 = vmatpush1.msra.mxu0 %v10393
        %10445 = vmatprep.subr.mxu0 0.0
        %10446 = vmatpush1.msra.mxu0 %v10392
        %10447 = vmatprep.subr.mxu0 0.0
        %10448 = vmatpush1.msra.mxu0 %v10391
        %10449 = vmatprep.subr.mxu0 0.0
        %10450 = vmatpush1.msra.mxu0 %v10390
        %10451 = vmatprep.subr.mxu0 0.0
        %10452 = vmatpush1.msra.mxu0 %v10389
        %10453 = vmatprep.subr.mxu0 0.0
        %10454 = vmatpush2.msra.mxu0 0.0
        %10455 = vmatprep.subr.mxu0 0.0
        %10456 = vmatpush2.msra.mxu0 0.0
        %10457 = vmatprep.subr.mxu0 0.0
        %10458 = vmatpush2.msra.mxu0 0.0
        %10459 = vmatprep.subr.mxu0 0.0
        %10460 = vmatpush2.msra.mxu0 0.0
        %10461 = vmatprep.subr.mxu0 0.0
        %10462 = vmatpush2.msra.mxu0 0.0
        %10463 = vmatprep.subr.mxu0 0.0
        %10464 = vmatpush2.msra.mxu0 0.0
        %10465 = vmatprep.subr.mxu0 0.0
        %10466 = vmatpush2.msra.mxu0 0.0
        %10467 = vmatprep.subr.mxu0 0.0
        %10468 = vmatpush2.msra.mxu0 0.0
        %10469 = vmatprep.subr.mxu0 0.0
        %10470 = vmatpush2.msra.mxu0 0.0
        %10471 = vmatprep.subr.mxu0 0.0
        %10472 = vmatpush2.msra.mxu0 0.0
        %10473 = vmatprep.subr.mxu0 0.0
        %10474 = vmatpush2.msra.mxu0 0.0
        %10475 = vmatprep.subr.mxu0 0.0
        %10476 = vmatpush2.msra.mxu0 0.0
        %10477 = vmatprep.subr.mxu0 0.0
        %10478 = vmatpush2.msra.mxu0 0.0
        %10479 = vmatprep.subr.mxu0 0.0
        %10480 = vmatpush2.msra.mxu0 0.0
        %10481 = vmatprep.subr.mxu0 0.0
        %10482 = vmatpush2.msra.mxu0 0.0
        %10483 = vmatprep.subr.mxu0 0.0
        %10484 = vmatpush2.msra.mxu0 0.0
        %10485 = vmatprep.mubr.f32.mxu0 0.0
        %10486 = vmatmul.mubr.f32.gmra.mxu0 %v10398
        %v10487 = vpop.f32.mrf.mxu0
        %v10488 = vadd.f32 0.0, %v10487
        %v10489 = vpop.f32.mrf.mxu0
        %10490 = vmatprep.mubr.f32.mxu0 0.0
        %10491 = vmatmul.mubr.f32.gmra.mxu0 %v10401
        %v10492 = vpop.f32.mrf.mxu0
        %v10493 = vadd.f32 0.0, %v10492
        %v10494 = vpop.f32.mrf.mxu0
        %10495 = vmatprep.mubr.f32.mxu0 0.0
        %10496 = vmatmul.mubr.f32.gmra.mxu0 %v10404
        %v10497 = vpop.f32.mrf.mxu0
        %v10498 = vadd.f32 0.0, %v10497
        %v10499 = vpop.f32.mrf.mxu0
        %10500 = vmatprep.mubr.f32.mxu0 0.0
        %10501 = vmatmul.mubr.f32.gmra.mxu0 %v10407
        %v10502 = vpop.f32.mrf.mxu0
        %v10503 = vadd.f32 0.0, %v10502
        %v10504 = vpop.f32.mrf.mxu0
        %10505 = vmatprep.mubr.f32.mxu0 0.0
        %10506 = vmatmul.mubr.f32.gmra.mxu0 %v10410
        %v10507 = vpop.f32.mrf.mxu0
        %v10508 = vadd.f32 0.0, %v10507
        %v10509 = vpop.f32.mrf.mxu0
        %10510 = vmatprep.mubr.f32.mxu0 0.0
        %10511 = vmatmul.mubr.f32.gmra.mxu0 %v10413
        %v10512 = vpop.f32.mrf.mxu0
        %v10513 = vadd.f32 0.0, %v10512
        %v10514 = vpop.f32.mrf.mxu0
        %10515 = vmatprep.mubr.f32.mxu0 0.0
        %10516 = vmatmul.mubr.f32.gmra.mxu0 %v10416
        %v10517 = vpop.f32.mrf.mxu0
        %v10518 = vadd.f32 0.0, %v10517
        %v10519 = vpop.f32.mrf.mxu0
        %10520 = vmatprep.mubr.f32.mxu0 0.0
        %10521 = vmatmul.mubr.f32.gmra.mxu0 %v10419
        %v10522 = vpop.f32.mrf.mxu0
        %v10523 = vadd.f32 0.0, %v10522
        %v10524 = vpop.f32.mrf.mxu0
        %10525 = vdwg.mxu0
        %v10526 = vadd.f32 %v10343, %v10488
        %v10527 = vadd.f32 %v10348, %v10493
        %v10528 = vadd.f32 %v10353, %v10498
        %v10529 = vadd.f32 %v10358, %v10503
        %v10530 = vadd.f32 %v10363, %v10508
        %v10531 = vadd.f32 %v10368, %v10513
        %v10532 = vadd.f32 %v10373, %v10518
        %v10533 = vadd.f32 %v10378, %v10523
        %v10534 = vld [vmem:[%s8689] sm:$0xff]
        %v10535 = vld [vmem:[%s8689 + $0x10] sm:$0xff]
        %v10536 = vld [vmem:[%s8689 + $0x20] sm:$0xff]
        %v10537 = vld [vmem:[%s8689 + $0x30] sm:$0xff]
        %v10538 = vld [vmem:[%s8689 + $0x40] sm:$0xff]
        %v10539 = vld [vmem:[%s8689 + $0x50] sm:$0xff]
        %v10540 = vld [vmem:[%s8689 + $0x60] sm:$0xff]
        %v10541 = vld [vmem:[%s8689 + $0x70] sm:$0xff]
        %v10542 = vld [vmem:[#allocation6 + $0xc0] sm:$0xff]
        %v10543 = vld [vmem:[#allocation6 + $0xc8] sm:$0xff]
        %v10544 = vld [vmem:[#allocation6 + $0xd0] sm:$0xff]
        %v10545 = vld [vmem:[#allocation6 + $0xd8] sm:$0xff]
        %v10546 = vld [vmem:[#allocation6 + $0xe0] sm:$0xff]
        %v10547 = vld [vmem:[#allocation6 + $0xe8] sm:$0xff]
        %v10548 = vld [vmem:[#allocation6 + $0xf0] sm:$0xff]
        %v10549 = vld [vmem:[#allocation6 + $0xf8] sm:$0xff]
        %v10551 = vsel %vm417, %v10534, 0
        %v10554 = vsel %vm417, %v10535, 0
        %v10557 = vsel %vm417, %v10536, 0
        %v10560 = vsel %vm417, %v10537, 0
        %v10563 = vsel %vm417, %v10538, 0
        %v10566 = vsel %vm417, %v10539, 0
        %v10569 = vsel %vm417, %v10540, 0
        %v10572 = vsel %vm417, %v10541, 0
        %10574 = vmatprep.subr.mxu0 0.0
        %10575 = vmatpush1.msra.mxu0 0.0
        %10576 = vmatprep.subr.mxu0 0.0
        %10577 = vmatpush1.msra.mxu0 0.0
        %10578 = vmatprep.subr.mxu0 0.0
        %10579 = vmatpush1.msra.mxu0 0.0
        %10580 = vmatprep.subr.mxu0 0.0
        %10581 = vmatpush1.msra.mxu0 0.0
        %10582 = vmatprep.subr.mxu0 0.0
        %10583 = vmatpush1.msra.mxu0 0.0
        %10584 = vmatprep.subr.mxu0 0.0
        %10585 = vmatpush1.msra.mxu0 0.0
        %10586 = vmatprep.subr.mxu0 0.0
        %10587 = vmatpush1.msra.mxu0 0.0
        %10588 = vmatprep.subr.mxu0 0.0
        %10589 = vmatpush1.msra.mxu0 0.0
        %10590 = vmatprep.subr.mxu0 0.0
        %10591 = vmatpush1.msra.mxu0 %v10549
        %10592 = vmatprep.subr.mxu0 0.0
        %10593 = vmatpush1.msra.mxu0 %v10548
        %10594 = vmatprep.subr.mxu0 0.0
        %10595 = vmatpush1.msra.mxu0 %v10547
        %10596 = vmatprep.subr.mxu0 0.0
        %10597 = vmatpush1.msra.mxu0 %v10546
        %10598 = vmatprep.subr.mxu0 0.0
        %10599 = vmatpush1.msra.mxu0 %v10545
        %10600 = vmatprep.subr.mxu0 0.0
        %10601 = vmatpush1.msra.mxu0 %v10544
        %10602 = vmatprep.subr.mxu0 0.0
        %10603 = vmatpush1.msra.mxu0 %v10543
        %10604 = vmatprep.subr.mxu0 0.0
        %10605 = vmatpush1.msra.mxu0 %v10542
        %10606 = vmatprep.subr.mxu0 0.0
        %10607 = vmatpush2.msra.mxu0 0.0
        %10608 = vmatprep.subr.mxu0 0.0
        %10609 = vmatpush2.msra.mxu0 0.0
        %10610 = vmatprep.subr.mxu0 0.0
        %10611 = vmatpush2.msra.mxu0 0.0
        %10612 = vmatprep.subr.mxu0 0.0
        %10613 = vmatpush2.msra.mxu0 0.0
        %10614 = vmatprep.subr.mxu0 0.0
        %10615 = vmatpush2.msra.mxu0 0.0
        %10616 = vmatprep.subr.mxu0 0.0
        %10617 = vmatpush2.msra.mxu0 0.0
        %10618 = vmatprep.subr.mxu0 0.0
        %10619 = vmatpush2.msra.mxu0 0.0
        %10620 = vmatprep.subr.mxu0 0.0
        %10621 = vmatpush2.msra.mxu0 0.0
        %10622 = vmatprep.subr.mxu0 0.0
        %10623 = vmatpush2.msra.mxu0 0.0
        %10624 = vmatprep.subr.mxu0 0.0
        %10625 = vmatpush2.msra.mxu0 0.0
        %10626 = vmatprep.subr.mxu0 0.0
        %10627 = vmatpush2.msra.mxu0 0.0
        %10628 = vmatprep.subr.mxu0 0.0
        %10629 = vmatpush2.msra.mxu0 0.0
        %10630 = vmatprep.subr.mxu0 0.0
        %10631 = vmatpush2.msra.mxu0 0.0
        %10632 = vmatprep.subr.mxu0 0.0
        %10633 = vmatpush2.msra.mxu0 0.0
        %10634 = vmatprep.subr.mxu0 0.0
        %10635 = vmatpush2.msra.mxu0 0.0
        %10636 = vmatprep.subr.mxu0 0.0
        %10637 = vmatpush2.msra.mxu0 0.0
        %10638 = vmatprep.mubr.f32.mxu0 0.0
        %10639 = vmatmul.mubr.f32.gmra.mxu0 %v10551
        %v10640 = vpop.f32.mrf.mxu0
        %v10641 = vadd.f32 0.0, %v10640
        %v10642 = vpop.f32.mrf.mxu0
        %10643 = vmatprep.mubr.f32.mxu0 0.0
        %10644 = vmatmul.mubr.f32.gmra.mxu0 %v10554
        %v10645 = vpop.f32.mrf.mxu0
        %v10646 = vadd.f32 0.0, %v10645
        %v10647 = vpop.f32.mrf.mxu0
        %10648 = vmatprep.mubr.f32.mxu0 0.0
        %10649 = vmatmul.mubr.f32.gmra.mxu0 %v10557
        %v10650 = vpop.f32.mrf.mxu0
        %v10651 = vadd.f32 0.0, %v10650
        %v10652 = vpop.f32.mrf.mxu0
        %10653 = vmatprep.mubr.f32.mxu0 0.0
        %10654 = vmatmul.mubr.f32.gmra.mxu0 %v10560
        %v10655 = vpop.f32.mrf.mxu0
        %v10656 = vadd.f32 0.0, %v10655
        %v10657 = vpop.f32.mrf.mxu0
        %10658 = vmatprep.mubr.f32.mxu0 0.0
        %10659 = vmatmul.mubr.f32.gmra.mxu0 %v10563
        %v10660 = vpop.f32.mrf.mxu0
        %v10661 = vadd.f32 0.0, %v10660
        %v10662 = vpop.f32.mrf.mxu0
        %10663 = vmatprep.mubr.f32.mxu0 0.0
        %10664 = vmatmul.mubr.f32.gmra.mxu0 %v10566
        %v10665 = vpop.f32.mrf.mxu0
        %v10666 = vadd.f32 0.0, %v10665
        %v10667 = vpop.f32.mrf.mxu0
        %10668 = vmatprep.mubr.f32.mxu0 0.0
        %10669 = vmatmul.mubr.f32.gmra.mxu0 %v10569
        %v10670 = vpop.f32.mrf.mxu0
        %v10671 = vadd.f32 0.0, %v10670
        %v10672 = vpop.f32.mrf.mxu0
        %10673 = vmatprep.mubr.f32.mxu0 0.0
        %10674 = vmatmul.mubr.f32.gmra.mxu0 %v10572
        %v10675 = vpop.f32.mrf.mxu0
        %v10676 = vadd.f32 0.0, %v10675
        %v10677 = vpop.f32.mrf.mxu0
        %10678 = vdwg.mxu0
        %v10679 = vadd.f32 %v10526, %v10641
        %v10680 = vadd.f32 %v10527, %v10646
        %v10681 = vadd.f32 %v10528, %v10651
        %v10682 = vadd.f32 %v10529, %v10656
        %v10683 = vadd.f32 %v10530, %v10661
        %v10684 = vadd.f32 %v10531, %v10666
        %v10685 = vadd.f32 %v10532, %v10671
        %v10686 = vadd.f32 %v10533, %v10676
        %v10687 = vld [vmem:[%s8689 + $0x1] sm:$0xff]
        %v10688 = vld [vmem:[%s8689 + $0x11] sm:$0xff]
        %v10689 = vld [vmem:[%s8689 + $0x21] sm:$0xff]
        %v10690 = vld [vmem:[%s8689 + $0x31] sm:$0xff]
        %v10691 = vld [vmem:[%s8689 + $0x41] sm:$0xff]
        %v10692 = vld [vmem:[%s8689 + $0x51] sm:$0xff]
        %v10693 = vld [vmem:[%s8689 + $0x61] sm:$0xff]
        %v10694 = vld [vmem:[%s8689 + $0x71] sm:$0xff]
        %v10695 = vld [vmem:[#allocation6 + $0x100] sm:$0xff]
        %v10696 = vld [vmem:[#allocation6 + $0x108] sm:$0xff]
        %v10697 = vld [vmem:[#allocation6 + $0x110] sm:$0xff]
        %v10698 = vld [vmem:[#allocation6 + $0x118] sm:$0xff]
        %v10699 = vld [vmem:[#allocation6 + $0x120] sm:$0xff]
        %v10700 = vld [vmem:[#allocation6 + $0x128] sm:$0xff]
        %v10701 = vld [vmem:[#allocation6 + $0x130] sm:$0xff]
        %v10702 = vld [vmem:[#allocation6 + $0x138] sm:$0xff]
        %v10704 = vsel %vm417, %v10687, 0
        %v10707 = vsel %vm417, %v10688, 0
        %v10710 = vsel %vm417, %v10689, 0
        %v10713 = vsel %vm417, %v10690, 0
        %v10716 = vsel %vm417, %v10691, 0
        %v10719 = vsel %vm417, %v10692, 0
        %v10722 = vsel %vm417, %v10693, 0
        %v10725 = vsel %vm417, %v10694, 0
        %10727 = vmatprep.subr.mxu0 0.0
        %10728 = vmatpush1.msra.mxu0 0.0
        %10729 = vmatprep.subr.mxu0 0.0
        %10730 = vmatpush1.msra.mxu0 0.0
        %10731 = vmatprep.subr.mxu0 0.0
        %10732 = vmatpush1.msra.mxu0 0.0
        %10733 = vmatprep.subr.mxu0 0.0
        %10734 = vmatpush1.msra.mxu0 0.0
        %10735 = vmatprep.subr.mxu0 0.0
        %10736 = vmatpush1.msra.mxu0 0.0
        %10737 = vmatprep.subr.mxu0 0.0
        %10738 = vmatpush1.msra.mxu0 0.0
        %10739 = vmatprep.subr.mxu0 0.0
        %10740 = vmatpush1.msra.mxu0 0.0
        %10741 = vmatprep.subr.mxu0 0.0
        %10742 = vmatpush1.msra.mxu0 0.0
        %10743 = vmatprep.subr.mxu0 0.0
        %10744 = vmatpush1.msra.mxu0 %v10702
        %10745 = vmatprep.subr.mxu0 0.0
        %10746 = vmatpush1.msra.mxu0 %v10701
        %10747 = vmatprep.subr.mxu0 0.0
        %10748 = vmatpush1.msra.mxu0 %v10700
        %10749 = vmatprep.subr.mxu0 0.0
        %10750 = vmatpush1.msra.mxu0 %v10699
        %10751 = vmatprep.subr.mxu0 0.0
        %10752 = vmatpush1.msra.mxu0 %v10698
        %10753 = vmatprep.subr.mxu0 0.0
        %10754 = vmatpush1.msra.mxu0 %v10697
        %10755 = vmatprep.subr.mxu0 0.0
        %10756 = vmatpush1.msra.mxu0 %v10696
        %10757 = vmatprep.subr.mxu0 0.0
        %10758 = vmatpush1.msra.mxu0 %v10695
        %10759 = vmatprep.subr.mxu0 0.0
        %10760 = vmatpush2.msra.mxu0 0.0
        %10761 = vmatprep.subr.mxu0 0.0
        %10762 = vmatpush2.msra.mxu0 0.0
        %10763 = vmatprep.subr.mxu0 0.0
        %10764 = vmatpush2.msra.mxu0 0.0
        %10765 = vmatprep.subr.mxu0 0.0
        %10766 = vmatpush2.msra.mxu0 0.0
        %10767 = vmatprep.subr.mxu0 0.0
        %10768 = vmatpush2.msra.mxu0 0.0
        %10769 = vmatprep.subr.mxu0 0.0
        %10770 = vmatpush2.msra.mxu0 0.0
        %10771 = vmatprep.subr.mxu0 0.0
        %10772 = vmatpush2.msra.mxu0 0.0
        %10773 = vmatprep.subr.mxu0 0.0
        %10774 = vmatpush2.msra.mxu0 0.0
        %10775 = vmatprep.subr.mxu0 0.0
        %10776 = vmatpush2.msra.mxu0 0.0
        %10777 = vmatprep.subr.mxu0 0.0
        %10778 = vmatpush2.msra.mxu0 0.0
        %10779 = vmatprep.subr.mxu0 0.0
        %10780 = vmatpush2.msra.mxu0 0.0
        %10781 = vmatprep.subr.mxu0 0.0
        %10782 = vmatpush2.msra.mxu0 0.0
        %10783 = vmatprep.subr.mxu0 0.0
        %10784 = vmatpush2.msra.mxu0 0.0
        %10785 = vmatprep.subr.mxu0 0.0
        %10786 = vmatpush2.msra.mxu0 0.0
        %10787 = vmatprep.subr.mxu0 0.0
        %10788 = vmatpush2.msra.mxu0 0.0
        %10789 = vmatprep.subr.mxu0 0.0
        %10790 = vmatpush2.msra.mxu0 0.0
        %10791 = vmatprep.mubr.f32.mxu0 0.0
        %10792 = vmatmul.mubr.f32.gmra.mxu0 %v10704
        %v10793 = vpop.f32.mrf.mxu0
        %v10794 = vadd.f32 0.0, %v10793
        %v10795 = vpop.f32.mrf.mxu0
        %10796 = vmatprep.mubr.f32.mxu0 0.0
        %10797 = vmatmul.mubr.f32.gmra.mxu0 %v10707
        %v10798 = vpop.f32.mrf.mxu0
        %v10799 = vadd.f32 0.0, %v10798
        %v10800 = vpop.f32.mrf.mxu0
        %10801 = vmatprep.mubr.f32.mxu0 0.0
        %10802 = vmatmul.mubr.f32.gmra.mxu0 %v10710
        %v10803 = vpop.f32.mrf.mxu0
        %v10804 = vadd.f32 0.0, %v10803
        %v10805 = vpop.f32.mrf.mxu0
        %10806 = vmatprep.mubr.f32.mxu0 0.0
        %10807 = vmatmul.mubr.f32.gmra.mxu0 %v10713
        %v10808 = vpop.f32.mrf.mxu0
        %v10809 = vadd.f32 0.0, %v10808
        %v10810 = vpop.f32.mrf.mxu0
        %10811 = vmatprep.mubr.f32.mxu0 0.0
        %10812 = vmatmul.mubr.f32.gmra.mxu0 %v10716
        %v10813 = vpop.f32.mrf.mxu0
        %v10814 = vadd.f32 0.0, %v10813
        %v10815 = vpop.f32.mrf.mxu0
        %10816 = vmatprep.mubr.f32.mxu0 0.0
        %10817 = vmatmul.mubr.f32.gmra.mxu0 %v10719
        %v10818 = vpop.f32.mrf.mxu0
        %v10819 = vadd.f32 0.0, %v10818
        %v10820 = vpop.f32.mrf.mxu0
        %10821 = vmatprep.mubr.f32.mxu0 0.0
        %10822 = vmatmul.mubr.f32.gmra.mxu0 %v10722
        %v10823 = vpop.f32.mrf.mxu0
        %v10824 = vadd.f32 0.0, %v10823
        %v10825 = vpop.f32.mrf.mxu0
        %10826 = vmatprep.mubr.f32.mxu0 0.0
        %10827 = vmatmul.mubr.f32.gmra.mxu0 %v10725
        %v10828 = vpop.f32.mrf.mxu0
        %v10829 = vadd.f32 0.0, %v10828
        %v10830 = vpop.f32.mrf.mxu0
        %10831 = vdwg.mxu0
        %v10832 = vadd.f32 %v10679, %v10794
        %v10833 = vadd.f32 %v10680, %v10799
        %v10834 = vadd.f32 %v10681, %v10804
        %v10835 = vadd.f32 %v10682, %v10809
        %v10836 = vadd.f32 %v10683, %v10814
        %v10837 = vadd.f32 %v10684, %v10819
        %v10838 = vadd.f32 %v10685, %v10824
        %v10839 = vadd.f32 %v10686, %v10829
        %v10840 = vld [vmem:[%s8689 + $0x2] sm:$0xff]
        %v10841 = vld [vmem:[%s8689 + $0x12] sm:$0xff]
        %v10842 = vld [vmem:[%s8689 + $0x22] sm:$0xff]
        %v10843 = vld [vmem:[%s8689 + $0x32] sm:$0xff]
        %v10844 = vld [vmem:[%s8689 + $0x42] sm:$0xff]
        %v10845 = vld [vmem:[%s8689 + $0x52] sm:$0xff]
        %v10846 = vld [vmem:[%s8689 + $0x62] sm:$0xff]
        %v10847 = vld [vmem:[%s8689 + $0x72] sm:$0xff]
        %v10848 = vld [vmem:[#allocation6 + $0x140] sm:$0xff]
        %v10849 = vld [vmem:[#allocation6 + $0x148] sm:$0xff]
        %v10850 = vld [vmem:[#allocation6 + $0x150] sm:$0xff]
        %v10851 = vld [vmem:[#allocation6 + $0x158] sm:$0xff]
        %v10852 = vld [vmem:[#allocation6 + $0x160] sm:$0xff]
        %v10853 = vld [vmem:[#allocation6 + $0x168] sm:$0xff]
        %v10854 = vld [vmem:[#allocation6 + $0x170] sm:$0xff]
        %v10855 = vld [vmem:[#allocation6 + $0x178] sm:$0xff]
        %v10857 = vsel %vm417, %v10840, 0
        %v10860 = vsel %vm417, %v10841, 0
        %v10863 = vsel %vm417, %v10842, 0
        %v10866 = vsel %vm417, %v10843, 0
        %v10869 = vsel %vm417, %v10844, 0
        %v10872 = vsel %vm417, %v10845, 0
        %v10875 = vsel %vm417, %v10846, 0
        %v10878 = vsel %vm417, %v10847, 0
        %10880 = vmatprep.subr.mxu0 0.0
        %10881 = vmatpush1.msra.mxu0 0.0
        %10882 = vmatprep.subr.mxu0 0.0
        %10883 = vmatpush1.msra.mxu0 0.0
        %10884 = vmatprep.subr.mxu0 0.0
        %10885 = vmatpush1.msra.mxu0 0.0
        %10886 = vmatprep.subr.mxu0 0.0
        %10887 = vmatpush1.msra.mxu0 0.0
        %10888 = vmatprep.subr.mxu0 0.0
        %10889 = vmatpush1.msra.mxu0 0.0
        %10890 = vmatprep.subr.mxu0 0.0
        %10891 = vmatpush1.msra.mxu0 0.0
        %10892 = vmatprep.subr.mxu0 0.0
        %10893 = vmatpush1.msra.mxu0 0.0
        %10894 = vmatprep.subr.mxu0 0.0
        %10895 = vmatpush1.msra.mxu0 0.0
        %10896 = vmatprep.subr.mxu0 0.0
        %10897 = vmatpush1.msra.mxu0 %v10855
        %10898 = vmatprep.subr.mxu0 0.0
        %10899 = vmatpush1.msra.mxu0 %v10854
        %10900 = vmatprep.subr.mxu0 0.0
        %10901 = vmatpush1.msra.mxu0 %v10853
        %10902 = vmatprep.subr.mxu0 0.0
        %10903 = vmatpush1.msra.mxu0 %v10852
        %10904 = vmatprep.subr.mxu0 0.0
        %10905 = vmatpush1.msra.mxu0 %v10851
        %10906 = vmatprep.subr.mxu0 0.0
        %10907 = vmatpush1.msra.mxu0 %v10850
        %10908 = vmatprep.subr.mxu0 0.0
        %10909 = vmatpush1.msra.mxu0 %v10849
        %10910 = vmatprep.subr.mxu0 0.0
        %10911 = vmatpush1.msra.mxu0 %v10848
        %10912 = vmatprep.subr.mxu0 0.0
        %10913 = vmatpush2.msra.mxu0 0.0
        %10914 = vmatprep.subr.mxu0 0.0
        %10915 = vmatpush2.msra.mxu0 0.0
        %10916 = vmatprep.subr.mxu0 0.0
        %10917 = vmatpush2.msra.mxu0 0.0
        %10918 = vmatprep.subr.mxu0 0.0
        %10919 = vmatpush2.msra.mxu0 0.0
        %10920 = vmatprep.subr.mxu0 0.0
        %10921 = vmatpush2.msra.mxu0 0.0
        %10922 = vmatprep.subr.mxu0 0.0
        %10923 = vmatpush2.msra.mxu0 0.0
        %10924 = vmatprep.subr.mxu0 0.0
        %10925 = vmatpush2.msra.mxu0 0.0
        %10926 = vmatprep.subr.mxu0 0.0
        %10927 = vmatpush2.msra.mxu0 0.0
        %10928 = vmatprep.subr.mxu0 0.0
        %10929 = vmatpush2.msra.mxu0 0.0
        %10930 = vmatprep.subr.mxu0 0.0
        %10931 = vmatpush2.msra.mxu0 0.0
        %10932 = vmatprep.subr.mxu0 0.0
        %10933 = vmatpush2.msra.mxu0 0.0
        %10934 = vmatprep.subr.mxu0 0.0
        %10935 = vmatpush2.msra.mxu0 0.0
        %10936 = vmatprep.subr.mxu0 0.0
        %10937 = vmatpush2.msra.mxu0 0.0
        %10938 = vmatprep.subr.mxu0 0.0
        %10939 = vmatpush2.msra.mxu0 0.0
        %10940 = vmatprep.subr.mxu0 0.0
        %10941 = vmatpush2.msra.mxu0 0.0
        %10942 = vmatprep.subr.mxu0 0.0
        %10943 = vmatpush2.msra.mxu0 0.0
        %10944 = vmatprep.mubr.f32.mxu0 0.0
        %10945 = vmatmul.mubr.f32.gmra.mxu0 %v10857
        %v10946 = vpop.f32.mrf.mxu0
        %v10947 = vadd.f32 0.0, %v10946
        %v10948 = vpop.f32.mrf.mxu0
        %10949 = vmatprep.mubr.f32.mxu0 0.0
        %10950 = vmatmul.mubr.f32.gmra.mxu0 %v10860
        %v10951 = vpop.f32.mrf.mxu0
        %v10952 = vadd.f32 0.0, %v10951
        %v10953 = vpop.f32.mrf.mxu0
        %10954 = vmatprep.mubr.f32.mxu0 0.0
        %10955 = vmatmul.mubr.f32.gmra.mxu0 %v10863
        %v10956 = vpop.f32.mrf.mxu0
        %v10957 = vadd.f32 0.0, %v10956
        %v10958 = vpop.f32.mrf.mxu0
        %10959 = vmatprep.mubr.f32.mxu0 0.0
        %10960 = vmatmul.mubr.f32.gmra.mxu0 %v10866
        %v10961 = vpop.f32.mrf.mxu0
        %v10962 = vadd.f32 0.0, %v10961
        %v10963 = vpop.f32.mrf.mxu0
        %10964 = vmatprep.mubr.f32.mxu0 0.0
        %10965 = vmatmul.mubr.f32.gmra.mxu0 %v10869
        %v10966 = vpop.f32.mrf.mxu0
        %v10967 = vadd.f32 0.0, %v10966
        %v10968 = vpop.f32.mrf.mxu0
        %10969 = vmatprep.mubr.f32.mxu0 0.0
        %10970 = vmatmul.mubr.f32.gmra.mxu0 %v10872
        %v10971 = vpop.f32.mrf.mxu0
        %v10972 = vadd.f32 0.0, %v10971
        %v10973 = vpop.f32.mrf.mxu0
        %10974 = vmatprep.mubr.f32.mxu0 0.0
        %10975 = vmatmul.mubr.f32.gmra.mxu0 %v10875
        %v10976 = vpop.f32.mrf.mxu0
        %v10977 = vadd.f32 0.0, %v10976
        %v10978 = vpop.f32.mrf.mxu0
        %10979 = vmatprep.mubr.f32.mxu0 0.0
        %10980 = vmatmul.mubr.f32.gmra.mxu0 %v10878
        %v10981 = vpop.f32.mrf.mxu0
        %v10982 = vadd.f32 0.0, %v10981
        %v10983 = vpop.f32.mrf.mxu0
        %10984 = vdwg.mxu0
        %v10985 = vadd.f32 %v10832, %v10947
        %v10986 = vadd.f32 %v10833, %v10952
        %v10987 = vadd.f32 %v10834, %v10957
        %v10988 = vadd.f32 %v10835, %v10962
        %v10989 = vadd.f32 %v10836, %v10967
        %v10990 = vadd.f32 %v10837, %v10972
        %v10991 = vadd.f32 %v10838, %v10977
        %v10992 = vadd.f32 %v10839, %v10982
        %v10993 = vld [vmem:[%s9600] sm:$0xff]
        %v10994 = vld [vmem:[%s9600 + $0x10] sm:$0xff]
        %v10995 = vld [vmem:[%s9600 + $0x20] sm:$0xff]
        %v10996 = vld [vmem:[%s9600 + $0x30] sm:$0xff]
        %v10997 = vld [vmem:[%s9600 + $0x40] sm:$0xff]
        %v10998 = vld [vmem:[%s9600 + $0x50] sm:$0xff]
        %v10999 = vld [vmem:[%s9600 + $0x60] sm:$0xff]
        %v11000 = vld [vmem:[%s9600 + $0x70] sm:$0xff]
        %v11001 = vld [vmem:[#allocation6 + $0x180] sm:$0xff]
        %v11002 = vld [vmem:[#allocation6 + $0x188] sm:$0xff]
        %v11003 = vld [vmem:[#allocation6 + $0x190] sm:$0xff]
        %v11004 = vld [vmem:[#allocation6 + $0x198] sm:$0xff]
        %v11005 = vld [vmem:[#allocation6 + $0x1a0] sm:$0xff]
        %v11006 = vld [vmem:[#allocation6 + $0x1a8] sm:$0xff]
        %v11007 = vld [vmem:[#allocation6 + $0x1b0] sm:$0xff]
        %v11008 = vld [vmem:[#allocation6 + $0x1b8] sm:$0xff]
        %v11010 = vsel %vm417, %v10993, 0
        %v11013 = vsel %vm417, %v10994, 0
        %v11016 = vsel %vm417, %v10995, 0
        %v11019 = vsel %vm417, %v10996, 0
        %v11022 = vsel %vm417, %v10997, 0
        %v11025 = vsel %vm417, %v10998, 0
        %v11028 = vsel %vm417, %v10999, 0
        %v11031 = vsel %vm417, %v11000, 0
        %11033 = vmatprep.subr.mxu0 0.0
        %11034 = vmatpush1.msra.mxu0 0.0
        %11035 = vmatprep.subr.mxu0 0.0
        %11036 = vmatpush1.msra.mxu0 0.0
        %11037 = vmatprep.subr.mxu0 0.0
        %11038 = vmatpush1.msra.mxu0 0.0
        %11039 = vmatprep.subr.mxu0 0.0
        %11040 = vmatpush1.msra.mxu0 0.0
        %11041 = vmatprep.subr.mxu0 0.0
        %11042 = vmatpush1.msra.mxu0 0.0
        %11043 = vmatprep.subr.mxu0 0.0
        %11044 = vmatpush1.msra.mxu0 0.0
        %11045 = vmatprep.subr.mxu0 0.0
        %11046 = vmatpush1.msra.mxu0 0.0
        %11047 = vmatprep.subr.mxu0 0.0
        %11048 = vmatpush1.msra.mxu0 0.0
        %11049 = vmatprep.subr.mxu0 0.0
        %11050 = vmatpush1.msra.mxu0 %v11008
        %11051 = vmatprep.subr.mxu0 0.0
        %11052 = vmatpush1.msra.mxu0 %v11007
        %11053 = vmatprep.subr.mxu0 0.0
        %11054 = vmatpush1.msra.mxu0 %v11006
        %11055 = vmatprep.subr.mxu0 0.0
        %11056 = vmatpush1.msra.mxu0 %v11005
        %11057 = vmatprep.subr.mxu0 0.0
        %11058 = vmatpush1.msra.mxu0 %v11004
        %11059 = vmatprep.subr.mxu0 0.0
        %11060 = vmatpush1.msra.mxu0 %v11003
        %11061 = vmatprep.subr.mxu0 0.0
        %11062 = vmatpush1.msra.mxu0 %v11002
        %11063 = vmatprep.subr.mxu0 0.0
        %11064 = vmatpush1.msra.mxu0 %v11001
        %11065 = vmatprep.subr.mxu0 0.0
        %11066 = vmatpush2.msra.mxu0 0.0
        %11067 = vmatprep.subr.mxu0 0.0
        %11068 = vmatpush2.msra.mxu0 0.0
        %11069 = vmatprep.subr.mxu0 0.0
        %11070 = vmatpush2.msra.mxu0 0.0
        %11071 = vmatprep.subr.mxu0 0.0
        %11072 = vmatpush2.msra.mxu0 0.0
        %11073 = vmatprep.subr.mxu0 0.0
        %11074 = vmatpush2.msra.mxu0 0.0
        %11075 = vmatprep.subr.mxu0 0.0
        %11076 = vmatpush2.msra.mxu0 0.0
        %11077 = vmatprep.subr.mxu0 0.0
        %11078 = vmatpush2.msra.mxu0 0.0
        %11079 = vmatprep.subr.mxu0 0.0
        %11080 = vmatpush2.msra.mxu0 0.0
        %11081 = vmatprep.subr.mxu0 0.0
        %11082 = vmatpush2.msra.mxu0 0.0
        %11083 = vmatprep.subr.mxu0 0.0
        %11084 = vmatpush2.msra.mxu0 0.0
        %11085 = vmatprep.subr.mxu0 0.0
        %11086 = vmatpush2.msra.mxu0 0.0
        %11087 = vmatprep.subr.mxu0 0.0
        %11088 = vmatpush2.msra.mxu0 0.0
        %11089 = vmatprep.subr.mxu0 0.0
        %11090 = vmatpush2.msra.mxu0 0.0
        %11091 = vmatprep.subr.mxu0 0.0
        %11092 = vmatpush2.msra.mxu0 0.0
        %11093 = vmatprep.subr.mxu0 0.0
        %11094 = vmatpush2.msra.mxu0 0.0
        %11095 = vmatprep.subr.mxu0 0.0
        %11096 = vmatpush2.msra.mxu0 0.0
        %11097 = vmatprep.mubr.f32.mxu0 0.0
        %11098 = vmatmul.mubr.f32.gmra.mxu0 %v11010
        %v11099 = vpop.f32.mrf.mxu0
        %v11100 = vadd.f32 0.0, %v11099
        %v11101 = vpop.f32.mrf.mxu0
        %11102 = vmatprep.mubr.f32.mxu0 0.0
        %11103 = vmatmul.mubr.f32.gmra.mxu0 %v11013
        %v11104 = vpop.f32.mrf.mxu0
        %v11105 = vadd.f32 0.0, %v11104
        %v11106 = vpop.f32.mrf.mxu0
        %11107 = vmatprep.mubr.f32.mxu0 0.0
        %11108 = vmatmul.mubr.f32.gmra.mxu0 %v11016
        %v11109 = vpop.f32.mrf.mxu0
        %v11110 = vadd.f32 0.0, %v11109
        %v11111 = vpop.f32.mrf.mxu0
        %11112 = vmatprep.mubr.f32.mxu0 0.0
        %11113 = vmatmul.mubr.f32.gmra.mxu0 %v11019
        %v11114 = vpop.f32.mrf.mxu0
        %v11115 = vadd.f32 0.0, %v11114
        %v11116 = vpop.f32.mrf.mxu0
        %11117 = vmatprep.mubr.f32.mxu0 0.0
        %11118 = vmatmul.mubr.f32.gmra.mxu0 %v11022
        %v11119 = vpop.f32.mrf.mxu0
        %v11120 = vadd.f32 0.0, %v11119
        %v11121 = vpop.f32.mrf.mxu0
        %11122 = vmatprep.mubr.f32.mxu0 0.0
        %11123 = vmatmul.mubr.f32.gmra.mxu0 %v11025
        %v11124 = vpop.f32.mrf.mxu0
        %v11125 = vadd.f32 0.0, %v11124
        %v11126 = vpop.f32.mrf.mxu0
        %11127 = vmatprep.mubr.f32.mxu0 0.0
        %11128 = vmatmul.mubr.f32.gmra.mxu0 %v11028
        %v11129 = vpop.f32.mrf.mxu0
        %v11130 = vadd.f32 0.0, %v11129
        %v11131 = vpop.f32.mrf.mxu0
        %11132 = vmatprep.mubr.f32.mxu0 0.0
        %11133 = vmatmul.mubr.f32.gmra.mxu0 %v11031
        %v11134 = vpop.f32.mrf.mxu0
        %v11135 = vadd.f32 0.0, %v11134
        %v11136 = vpop.f32.mrf.mxu0
        %11137 = vdwg.mxu0
        %v11138 = vadd.f32 %v10985, %v11100
        %v11139 = vadd.f32 %v10986, %v11105
        %v11140 = vadd.f32 %v10987, %v11110
        %v11141 = vadd.f32 %v10988, %v11115
        %v11142 = vadd.f32 %v10989, %v11120
        %v11143 = vadd.f32 %v10990, %v11125
        %v11144 = vadd.f32 %v10991, %v11130
        %v11145 = vadd.f32 %v10992, %v11135
        %v11146 = vld [vmem:[%s9600 + $0x1] sm:$0xff]
        %v11147 = vld [vmem:[%s9600 + $0x11] sm:$0xff]
        %v11148 = vld [vmem:[%s9600 + $0x21] sm:$0xff]
        %v11149 = vld [vmem:[%s9600 + $0x31] sm:$0xff]
        %v11150 = vld [vmem:[%s9600 + $0x41] sm:$0xff]
        %v11151 = vld [vmem:[%s9600 + $0x51] sm:$0xff]
        %v11152 = vld [vmem:[%s9600 + $0x61] sm:$0xff]
        %v11153 = vld [vmem:[%s9600 + $0x71] sm:$0xff]
        %v11154 = vld [vmem:[#allocation6 + $0x1c0] sm:$0xff]
        %v11155 = vld [vmem:[#allocation6 + $0x1c8] sm:$0xff]
        %v11156 = vld [vmem:[#allocation6 + $0x1d0] sm:$0xff]
        %v11157 = vld [vmem:[#allocation6 + $0x1d8] sm:$0xff]
        %v11158 = vld [vmem:[#allocation6 + $0x1e0] sm:$0xff]
        %v11159 = vld [vmem:[#allocation6 + $0x1e8] sm:$0xff]
        %v11160 = vld [vmem:[#allocation6 + $0x1f0] sm:$0xff]
        %v11161 = vld [vmem:[#allocation6 + $0x1f8] sm:$0xff]
        %v11163 = vsel %vm417, %v11146, 0
        %v11166 = vsel %vm417, %v11147, 0
        %v11169 = vsel %vm417, %v11148, 0
        %v11172 = vsel %vm417, %v11149, 0
        %v11175 = vsel %vm417, %v11150, 0
        %v11178 = vsel %vm417, %v11151, 0
        %v11181 = vsel %vm417, %v11152, 0
        %v11184 = vsel %vm417, %v11153, 0
        %11186 = vmatprep.subr.mxu0 0.0
        %11187 = vmatpush1.msra.mxu0 0.0
        %11188 = vmatprep.subr.mxu0 0.0
        %11189 = vmatpush1.msra.mxu0 0.0
        %11190 = vmatprep.subr.mxu0 0.0
        %11191 = vmatpush1.msra.mxu0 0.0
        %11192 = vmatprep.subr.mxu0 0.0
        %11193 = vmatpush1.msra.mxu0 0.0
        %11194 = vmatprep.subr.mxu0 0.0
        %11195 = vmatpush1.msra.mxu0 0.0
        %11196 = vmatprep.subr.mxu0 0.0
        %11197 = vmatpush1.msra.mxu0 0.0
        %11198 = vmatprep.subr.mxu0 0.0
        %11199 = vmatpush1.msra.mxu0 0.0
        %11200 = vmatprep.subr.mxu0 0.0
        %11201 = vmatpush1.msra.mxu0 0.0
        %11202 = vmatprep.subr.mxu0 0.0
        %11203 = vmatpush1.msra.mxu0 %v11161
        %11204 = vmatprep.subr.mxu0 0.0
        %11205 = vmatpush1.msra.mxu0 %v11160
        %11206 = vmatprep.subr.mxu0 0.0
        %11207 = vmatpush1.msra.mxu0 %v11159
        %11208 = vmatprep.subr.mxu0 0.0
        %11209 = vmatpush1.msra.mxu0 %v11158
        %11210 = vmatprep.subr.mxu0 0.0
        %11211 = vmatpush1.msra.mxu0 %v11157
        %11212 = vmatprep.subr.mxu0 0.0
        %11213 = vmatpush1.msra.mxu0 %v11156
        %11214 = vmatprep.subr.mxu0 0.0
        %11215 = vmatpush1.msra.mxu0 %v11155
        %11216 = vmatprep.subr.mxu0 0.0
        %11217 = vmatpush1.msra.mxu0 %v11154
        %11218 = vmatprep.subr.mxu0 0.0
        %11219 = vmatpush2.msra.mxu0 0.0
        %11220 = vmatprep.subr.mxu0 0.0
        %11221 = vmatpush2.msra.mxu0 0.0
        %11222 = vmatprep.subr.mxu0 0.0
        %11223 = vmatpush2.msra.mxu0 0.0
        %11224 = vmatprep.subr.mxu0 0.0
        %11225 = vmatpush2.msra.mxu0 0.0
        %11226 = vmatprep.subr.mxu0 0.0
        %11227 = vmatpush2.msra.mxu0 0.0
        %11228 = vmatprep.subr.mxu0 0.0
        %11229 = vmatpush2.msra.mxu0 0.0
        %11230 = vmatprep.subr.mxu0 0.0
        %11231 = vmatpush2.msra.mxu0 0.0
        %11232 = vmatprep.subr.mxu0 0.0
        %11233 = vmatpush2.msra.mxu0 0.0
        %11234 = vmatprep.subr.mxu0 0.0
        %11235 = vmatpush2.msra.mxu0 0.0
        %11236 = vmatprep.subr.mxu0 0.0
        %11237 = vmatpush2.msra.mxu0 0.0
        %11238 = vmatprep.subr.mxu0 0.0
        %11239 = vmatpush2.msra.mxu0 0.0
        %11240 = vmatprep.subr.mxu0 0.0
        %11241 = vmatpush2.msra.mxu0 0.0
        %11242 = vmatprep.subr.mxu0 0.0
        %11243 = vmatpush2.msra.mxu0 0.0
        %11244 = vmatprep.subr.mxu0 0.0
        %11245 = vmatpush2.msra.mxu0 0.0
        %11246 = vmatprep.subr.mxu0 0.0
        %11247 = vmatpush2.msra.mxu0 0.0
        %11248 = vmatprep.subr.mxu0 0.0
        %11249 = vmatpush2.msra.mxu0 0.0
        %11250 = vmatprep.mubr.f32.mxu0 0.0
        %11251 = vmatmul.mubr.f32.gmra.mxu0 %v11163
        %v11252 = vpop.f32.mrf.mxu0
        %v11253 = vadd.f32 0.0, %v11252
        %v11254 = vpop.f32.mrf.mxu0
        %11255 = vmatprep.mubr.f32.mxu0 0.0
        %11256 = vmatmul.mubr.f32.gmra.mxu0 %v11166
        %v11257 = vpop.f32.mrf.mxu0
        %v11258 = vadd.f32 0.0, %v11257
        %v11259 = vpop.f32.mrf.mxu0
        %11260 = vmatprep.mubr.f32.mxu0 0.0
        %11261 = vmatmul.mubr.f32.gmra.mxu0 %v11169
        %v11262 = vpop.f32.mrf.mxu0
        %v11263 = vadd.f32 0.0, %v11262
        %v11264 = vpop.f32.mrf.mxu0
        %11265 = vmatprep.mubr.f32.mxu0 0.0
        %11266 = vmatmul.mubr.f32.gmra.mxu0 %v11172
        %v11267 = vpop.f32.mrf.mxu0
        %v11268 = vadd.f32 0.0, %v11267
        %v11269 = vpop.f32.mrf.mxu0
        %11270 = vmatprep.mubr.f32.mxu0 0.0
        %11271 = vmatmul.mubr.f32.gmra.mxu0 %v11175
        %v11272 = vpop.f32.mrf.mxu0
        %v11273 = vadd.f32 0.0, %v11272
        %v11274 = vpop.f32.mrf.mxu0
        %11275 = vmatprep.mubr.f32.mxu0 0.0
        %11276 = vmatmul.mubr.f32.gmra.mxu0 %v11178
        %v11277 = vpop.f32.mrf.mxu0
        %v11278 = vadd.f32 0.0, %v11277
        %v11279 = vpop.f32.mrf.mxu0
        %11280 = vmatprep.mubr.f32.mxu0 0.0
        %11281 = vmatmul.mubr.f32.gmra.mxu0 %v11181
        %v11282 = vpop.f32.mrf.mxu0
        %v11283 = vadd.f32 0.0, %v11282
        %v11284 = vpop.f32.mrf.mxu0
        %11285 = vmatprep.mubr.f32.mxu0 0.0
        %11286 = vmatmul.mubr.f32.gmra.mxu0 %v11184
        %v11287 = vpop.f32.mrf.mxu0
        %v11288 = vadd.f32 0.0, %v11287
        %v11289 = vpop.f32.mrf.mxu0
        %11290 = vdwg.mxu0
        %v11291 = vadd.f32 %v11138, %v11253
        %v11292 = vadd.f32 %v11139, %v11258
        %v11293 = vadd.f32 %v11140, %v11263
        %v11294 = vadd.f32 %v11141, %v11268
        %v11295 = vadd.f32 %v11142, %v11273
        %v11296 = vadd.f32 %v11143, %v11278
        %v11297 = vadd.f32 %v11144, %v11283
        %v11298 = vadd.f32 %v11145, %v11288
        %v11299 = vld [vmem:[%s9600 + $0x2] sm:$0xff]
        %v11300 = vld [vmem:[%s9600 + $0x12] sm:$0xff]
        %v11301 = vld [vmem:[%s9600 + $0x22] sm:$0xff]
        %v11302 = vld [vmem:[%s9600 + $0x32] sm:$0xff]
        %v11303 = vld [vmem:[%s9600 + $0x42] sm:$0xff]
        %v11304 = vld [vmem:[%s9600 + $0x52] sm:$0xff]
        %v11305 = vld [vmem:[%s9600 + $0x62] sm:$0xff]
        %v11306 = vld [vmem:[%s9600 + $0x72] sm:$0xff]
        %v11307 = vld [vmem:[#allocation6 + $0x200] sm:$0xff]
        %v11308 = vld [vmem:[#allocation6 + $0x208] sm:$0xff]
        %v11309 = vld [vmem:[#allocation6 + $0x210] sm:$0xff]
        %v11310 = vld [vmem:[#allocation6 + $0x218] sm:$0xff]
        %v11311 = vld [vmem:[#allocation6 + $0x220] sm:$0xff]
        %v11312 = vld [vmem:[#allocation6 + $0x228] sm:$0xff]
        %v11313 = vld [vmem:[#allocation6 + $0x230] sm:$0xff]
        %v11314 = vld [vmem:[#allocation6 + $0x238] sm:$0xff]
        %v11316 = vsel %vm417, %v11299, 0
        %v11319 = vsel %vm417, %v11300, 0
        %v11322 = vsel %vm417, %v11301, 0
        %v11325 = vsel %vm417, %v11302, 0
        %v11328 = vsel %vm417, %v11303, 0
        %v11331 = vsel %vm417, %v11304, 0
        %v11334 = vsel %vm417, %v11305, 0
        %v11337 = vsel %vm417, %v11306, 0
        %11339 = vmatprep.subr.mxu0 0.0
        %11340 = vmatpush1.msra.mxu0 0.0
        %11341 = vmatprep.subr.mxu0 0.0
        %11342 = vmatpush1.msra.mxu0 0.0
        %11343 = vmatprep.subr.mxu0 0.0
        %11344 = vmatpush1.msra.mxu0 0.0
        %11345 = vmatprep.subr.mxu0 0.0
        %11346 = vmatpush1.msra.mxu0 0.0
        %11347 = vmatprep.subr.mxu0 0.0
        %11348 = vmatpush1.msra.mxu0 0.0
        %11349 = vmatprep.subr.mxu0 0.0
        %11350 = vmatpush1.msra.mxu0 0.0
        %11351 = vmatprep.subr.mxu0 0.0
        %11352 = vmatpush1.msra.mxu0 0.0
        %11353 = vmatprep.subr.mxu0 0.0
        %11354 = vmatpush1.msra.mxu0 0.0
        %11355 = vmatprep.subr.mxu0 0.0
        %11356 = vmatpush1.msra.mxu0 %v11314
        %11357 = vmatprep.subr.mxu0 0.0
        %11358 = vmatpush1.msra.mxu0 %v11313
        %11359 = vmatprep.subr.mxu0 0.0
        %11360 = vmatpush1.msra.mxu0 %v11312
        %11361 = vmatprep.subr.mxu0 0.0
        %11362 = vmatpush1.msra.mxu0 %v11311
        %11363 = vmatprep.subr.mxu0 0.0
        %11364 = vmatpush1.msra.mxu0 %v11310
        %11365 = vmatprep.subr.mxu0 0.0
        %11366 = vmatpush1.msra.mxu0 %v11309
        %11367 = vmatprep.subr.mxu0 0.0
        %11368 = vmatpush1.msra.mxu0 %v11308
        %11369 = vmatprep.subr.mxu0 0.0
        %11370 = vmatpush1.msra.mxu0 %v11307
        %11371 = vmatprep.subr.mxu0 0.0
        %11372 = vmatpush2.msra.mxu0 0.0
        %11373 = vmatprep.subr.mxu0 0.0
        %11374 = vmatpush2.msra.mxu0 0.0
        %11375 = vmatprep.subr.mxu0 0.0
        %11376 = vmatpush2.msra.mxu0 0.0
        %11377 = vmatprep.subr.mxu0 0.0
        %11378 = vmatpush2.msra.mxu0 0.0
        %11379 = vmatprep.subr.mxu0 0.0
        %11380 = vmatpush2.msra.mxu0 0.0
        %11381 = vmatprep.subr.mxu0 0.0
        %11382 = vmatpush2.msra.mxu0 0.0
        %11383 = vmatprep.subr.mxu0 0.0
        %11384 = vmatpush2.msra.mxu0 0.0
        %11385 = vmatprep.subr.mxu0 0.0
        %11386 = vmatpush2.msra.mxu0 0.0
        %11387 = vmatprep.subr.mxu0 0.0
        %11388 = vmatpush2.msra.mxu0 0.0
        %11389 = vmatprep.subr.mxu0 0.0
        %11390 = vmatpush2.msra.mxu0 0.0
        %11391 = vmatprep.subr.mxu0 0.0
        %11392 = vmatpush2.msra.mxu0 0.0
        %11393 = vmatprep.subr.mxu0 0.0
        %11394 = vmatpush2.msra.mxu0 0.0
        %11395 = vmatprep.subr.mxu0 0.0
        %11396 = vmatpush2.msra.mxu0 0.0
        %11397 = vmatprep.subr.mxu0 0.0
        %11398 = vmatpush2.msra.mxu0 0.0
        %11399 = vmatprep.subr.mxu0 0.0
        %11400 = vmatpush2.msra.mxu0 0.0
        %11401 = vmatprep.subr.mxu0 0.0
        %11402 = vmatpush2.msra.mxu0 0.0
        %11403 = vmatprep.mubr.f32.mxu0 0.0
        %11404 = vmatmul.mubr.f32.gmra.mxu0 %v11316
        %v11405 = vpop.f32.mrf.mxu0
        %v11406 = vadd.f32 0.0, %v11405
        %v11407 = vpop.f32.mrf.mxu0
        %11408 = vmatprep.mubr.f32.mxu0 0.0
        %11409 = vmatmul.mubr.f32.gmra.mxu0 %v11319
        %v11410 = vpop.f32.mrf.mxu0
        %v11411 = vadd.f32 0.0, %v11410
        %v11412 = vpop.f32.mrf.mxu0
        %11413 = vmatprep.mubr.f32.mxu0 0.0
        %11414 = vmatmul.mubr.f32.gmra.mxu0 %v11322
        %v11415 = vpop.f32.mrf.mxu0
        %v11416 = vadd.f32 0.0, %v11415
        %v11417 = vpop.f32.mrf.mxu0
        %11418 = vmatprep.mubr.f32.mxu0 0.0
        %11419 = vmatmul.mubr.f32.gmra.mxu0 %v11325
        %v11420 = vpop.f32.mrf.mxu0
        %v11421 = vadd.f32 0.0, %v11420
        %v11422 = vpop.f32.mrf.mxu0
        %11423 = vmatprep.mubr.f32.mxu0 0.0
        %11424 = vmatmul.mubr.f32.gmra.mxu0 %v11328
        %v11425 = vpop.f32.mrf.mxu0
        %v11426 = vadd.f32 0.0, %v11425
        %v11427 = vpop.f32.mrf.mxu0
        %11428 = vmatprep.mubr.f32.mxu0 0.0
        %11429 = vmatmul.mubr.f32.gmra.mxu0 %v11331
        %v11430 = vpop.f32.mrf.mxu0
        %v11431 = vadd.f32 0.0, %v11430
        %v11432 = vpop.f32.mrf.mxu0
        %11433 = vmatprep.mubr.f32.mxu0 0.0
        %11434 = vmatmul.mubr.f32.gmra.mxu0 %v11334
        %v11435 = vpop.f32.mrf.mxu0
        %v11436 = vadd.f32 0.0, %v11435
        %v11437 = vpop.f32.mrf.mxu0
        %11438 = vmatprep.mubr.f32.mxu0 0.0
        %11439 = vmatmul.mubr.f32.gmra.mxu0 %v11337
        %v11440 = vpop.f32.mrf.mxu0
        %v11441 = vadd.f32 0.0, %v11440
        %v11442 = vpop.f32.mrf.mxu0
        %11443 = vdwg.mxu0
        %v11444 = vadd.f32 %v11291, %v11406
        %v11445 = vadd.f32 %v11292, %v11411
        %v11446 = vadd.f32 %v11293, %v11416
        %v11447 = vadd.f32 %v11294, %v11421
        %v11448 = vadd.f32 %v11295, %v11426
        %v11449 = vadd.f32 %v11296, %v11431
        %v11450 = vadd.f32 %v11297, %v11436
        %v11451 = vadd.f32 %v11298, %v11441
        %v11452 = vld [vmem:[%s8] sm:$0x1]
        %v11454 = vlaneseq
        %v11455 = vshrl.u32 %v11454, 7
        %v11456 = vsub.s32 0, %v11455
        %v11457 = vrot.slane %v11452, %v11456
        %v11459 = vadd.f32 %v11444, %v11457
        %v11460 = vadd.f32 %v11445, %v11457
        %v11461 = vadd.f32 %v11446, %v11457
        %v11462 = vadd.f32 %v11447, %v11457
        %v11463 = vadd.f32 %v11448, %v11457
        %v11464 = vadd.f32 %v11449, %v11457
        %v11465 = vadd.f32 %v11450, %v11457
        %v11466 = vadd.f32 %v11451, %v11457
        %v11467 = vmax.f32 %v11459, 0.0
        %v11468 = vmax.f32 %v11460, 0.0
        %v11469 = vmax.f32 %v11461, 0.0
        %v11470 = vmax.f32 %v11462, 0.0
        %v11471 = vmax.f32 %v11463, 0.0
        %v11472 = vmax.f32 %v11464, 0.0
        %v11473 = vmax.f32 %v11465, 0.0
        %v11474 = vmax.f32 %v11466, 0.0
        %v11475 = vld [vmem:[%s9] sm:$0xff]
        %v11476 = vld [vmem:[%s9 + $0x8] sm:$0xff]
        %v11477 = vld [vmem:[%s9 + $0x10] sm:$0xff]
        %v11478 = vld [vmem:[%s9 + $0x18] sm:$0xff]
        %v11479 = vld [vmem:[%s9 + $0x20] sm:$0xff]
        %v11480 = vld [vmem:[%s9 + $0x28] sm:$0xff]
        %v11481 = vld [vmem:[%s9 + $0x30] sm:$0xff]
        %v11482 = vld [vmem:[%s9 + $0x38] sm:$0xff]
        %v11483 = vld [vmem:[%s10] sm:$0x1]
        %v11485 = vlaneseq
        %v11486 = vshrl.u32 %v11485, 7
        %v11487 = vsub.s32 0, %v11486
        %v11488 = vrot.slane %v11483, %v11487
        %v11491 = vsel %vm417, %v11467, 0
        %v11494 = vsel %vm417, %v11468, 0
        %v11497 = vsel %vm417, %v11469, 0
        %v11500 = vsel %vm417, %v11470, 0
        %v11503 = vsel %vm417, %v11471, 0
        %v11506 = vsel %vm417, %v11472, 0
        %v11509 = vsel %vm417, %v11473, 0
        %v11512 = vsel %vm417, %v11474, 0
        %11514 = vmatprep.subr.mxu0 0.0
        %11515 = vmatpush1.msra.mxu0 0.0
        %11516 = vmatprep.subr.mxu0 0.0
        %11517 = vmatpush1.msra.mxu0 0.0
        %11518 = vmatprep.subr.mxu0 0.0
        %11519 = vmatpush1.msra.mxu0 0.0
        %11520 = vmatprep.subr.mxu0 0.0
        %11521 = vmatpush1.msra.mxu0 0.0
        %11522 = vmatprep.subr.mxu0 0.0
        %11523 = vmatpush1.msra.mxu0 0.0
        %11524 = vmatprep.subr.mxu0 0.0
        %11525 = vmatpush1.msra.mxu0 0.0
        %11526 = vmatprep.subr.mxu0 0.0
        %11527 = vmatpush1.msra.mxu0 0.0
        %11528 = vmatprep.subr.mxu0 0.0
        %11529 = vmatpush1.msra.mxu0 0.0
        %11530 = vmatprep.subr.mxu0 0.0
        %11531 = vmatpush1.msra.mxu0 %v11482
        %11532 = vmatprep.subr.mxu0 0.0
        %11533 = vmatpush1.msra.mxu0 %v11481
        %11534 = vmatprep.subr.mxu0 0.0
        %11535 = vmatpush1.msra.mxu0 %v11480
        %11536 = vmatprep.subr.mxu0 0.0
        %11537 = vmatpush1.msra.mxu0 %v11479
        %11538 = vmatprep.subr.mxu0 0.0
        %11539 = vmatpush1.msra.mxu0 %v11478
        %11540 = vmatprep.subr.mxu0 0.0
        %11541 = vmatpush1.msra.mxu0 %v11477
        %11542 = vmatprep.subr.mxu0 0.0
        %11543 = vmatpush1.msra.mxu0 %v11476
        %11544 = vmatprep.subr.mxu0 0.0
        %11545 = vmatpush1.msra.mxu0 %v11475
        %11546 = vmatprep.subr.mxu0 0.0
        %11547 = vmatpush2.msra.mxu0 0.0
        %11548 = vmatprep.subr.mxu0 0.0
        %11549 = vmatpush2.msra.mxu0 0.0
        %11550 = vmatprep.subr.mxu0 0.0
        %11551 = vmatpush2.msra.mxu0 0.0
        %11552 = vmatprep.subr.mxu0 0.0
        %11553 = vmatpush2.msra.mxu0 0.0
        %11554 = vmatprep.subr.mxu0 0.0
        %11555 = vmatpush2.msra.mxu0 0.0
        %11556 = vmatprep.subr.mxu0 0.0
        %11557 = vmatpush2.msra.mxu0 0.0
        %11558 = vmatprep.subr.mxu0 0.0
        %11559 = vmatpush2.msra.mxu0 0.0
        %11560 = vmatprep.subr.mxu0 0.0
        %11561 = vmatpush2.msra.mxu0 0.0
        %11562 = vmatprep.subr.mxu0 0.0
        %11563 = vmatpush2.msra.mxu0 0.0
        %11564 = vmatprep.subr.mxu0 0.0
        %11565 = vmatpush2.msra.mxu0 0.0
        %11566 = vmatprep.subr.mxu0 0.0
        %11567 = vmatpush2.msra.mxu0 0.0
        %11568 = vmatprep.subr.mxu0 0.0
        %11569 = vmatpush2.msra.mxu0 0.0
        %11570 = vmatprep.subr.mxu0 0.0
        %11571 = vmatpush2.msra.mxu0 0.0
        %11572 = vmatprep.subr.mxu0 0.0
        %11573 = vmatpush2.msra.mxu0 0.0
        %11574 = vmatprep.subr.mxu0 0.0
        %11575 = vmatpush2.msra.mxu0 0.0
        %11576 = vmatprep.subr.mxu0 0.0
        %11577 = vmatpush2.msra.mxu0 0.0
        %11578 = vmatprep.mubr.f32.mxu0 0.0
        %11579 = vmatmul.mubr.f32.gmra.mxu0 %v11491
        %v11580 = vpop.f32.mrf.mxu0
        %v11581 = vadd.f32 %v11488, %v11580
        %v11582 = vpop.f32.mrf.mxu0
        %11583 = vmatprep.mubr.f32.mxu0 0.0
        %11584 = vmatmul.mubr.f32.gmra.mxu0 %v11494
        %v11585 = vpop.f32.mrf.mxu0
        %v11586 = vadd.f32 %v11488, %v11585
        %v11587 = vpop.f32.mrf.mxu0
        %11588 = vmatprep.mubr.f32.mxu0 0.0
        %11589 = vmatmul.mubr.f32.gmra.mxu0 %v11497
        %v11590 = vpop.f32.mrf.mxu0
        %v11591 = vadd.f32 %v11488, %v11590
        %v11592 = vpop.f32.mrf.mxu0
        %11593 = vmatprep.mubr.f32.mxu0 0.0
        %11594 = vmatmul.mubr.f32.gmra.mxu0 %v11500
        %v11595 = vpop.f32.mrf.mxu0
        %v11596 = vadd.f32 %v11488, %v11595
        %v11597 = vpop.f32.mrf.mxu0
        %11598 = vmatprep.mubr.f32.mxu0 0.0
        %11599 = vmatmul.mubr.f32.gmra.mxu0 %v11503
        %v11600 = vpop.f32.mrf.mxu0
        %v11601 = vadd.f32 %v11488, %v11600
        %v11602 = vpop.f32.mrf.mxu0
        %11603 = vmatprep.mubr.f32.mxu0 0.0
        %11604 = vmatmul.mubr.f32.gmra.mxu0 %v11506
        %v11605 = vpop.f32.mrf.mxu0
        %v11606 = vadd.f32 %v11488, %v11605
        %v11607 = vpop.f32.mrf.mxu0
        %11608 = vmatprep.mubr.f32.mxu0 0.0
        %11609 = vmatmul.mubr.f32.gmra.mxu0 %v11509
        %v11610 = vpop.f32.mrf.mxu0
        %v11611 = vadd.f32 %v11488, %v11610
        %v11612 = vpop.f32.mrf.mxu0
        %11613 = vmatprep.mubr.f32.mxu0 0.0
        %11614 = vmatmul.mubr.f32.gmra.mxu0 %v11512
        %v11615 = vpop.f32.mrf.mxu0
        %v11616 = vadd.f32 %v11488, %v11615
        %v11617 = vpop.f32.mrf.mxu0
        %11618 = vdwg.mxu0
        %11619 = vst [vmem:[%s416] sm:$0xff] %v11581
        %11620 = vst [vmem:[%s416 + $0x8] sm:$0xff] %v11586
        %11621 = vst [vmem:[%s416 + $0x10] sm:$0xff] %v11591
        %11622 = vst [vmem:[%s416 + $0x18] sm:$0xff] %v11596
        %11623 = vst [vmem:[%s416 + $0x20] sm:$0xff] %v11601
        %11624 = vst [vmem:[%s416 + $0x28] sm:$0xff] %v11606
        %11625 = vst [vmem:[%s416 + $0x30] sm:$0xff] %v11611
        %11626 = vst [vmem:[%s416 + $0x38] sm:$0xff] %v11616
        %p11627 = scmp.lt.s32.totalorder %s24, 1
        %s11628 = scalar_select %p11627, %s24, 1
        %s11629 = smul.addr %s11628, 8
        %s11630 = smul.addr %s11629, 8
        %s11631 = scalar_lea.vmem %s11, %s11630
        // Predicated region
        $region73: #{unet_forward.1} parent=63 // pred_check
          %p11632 = pneg %p278
        $region74: #{unet_forward.1} parent=63 // pred_check_branch
          %11634 = sbr.rel (%p11632) target = $region76
        $region75: #{unet_forward.1} parent=63 // pred_region
          _
        $region76: #{unet_forward.1} parent=63 // pred_fallthru
          _
      $region64: #{unet_forward.1} parent=5 // pred_fallthru
        _
      %p11635 = scmp.le.s32.totalorder 2, %s19
      // Predicated region
      $region77: #{unet_forward.1} parent=5 // pred_check
        %p11636 = pneg %p11635
      $region78: #{unet_forward.1} parent=5 // pred_check_branch
        %11638 = sbr.rel (%p11636) target = $region80
      $region79: #{unet_forward.1} parent=5 // pred_region
        %s11639 = ssub.s32 %s19, 2
        // Predicated region
        $region81: #{unet_forward.1} parent=79 // pred_check
          %p11640 = pneg %p284
        $region82: #{unet_forward.1} parent=79 // pred_check_branch
          %11642 = sbr.rel (%p11640) target = $region84
        $region83: #{unet_forward.1} parent=79 // pred_region
          %p11643 = scmp.lt.s32.totalorder %s25, 1
          %s11644 = scalar_select %p11643, %s25, 1
          %s11645 = smul.addr %s11644, 8
          %s11646 = smul.addr %s11645, 8
          %s11647 = scalar_lea.vmem %s11, %s11646
        $region84: #{unet_forward.1} parent=79 // pred_fallthru
          _
      $region80: #{unet_forward.1} parent=5 // pred_fallthru
        _
    $region6: #{unet_forward.1} parent=1 // loop_footer
      %s23 = sadd.s32 1, %s19
    $region7: #{unet_forward.1} parent=1 // loop_footer_branch
      %18 = sbr.rel target = $region3
    $region8: #{unet_forward.1} parent=1 // loop_exit
      _
    %11648 = vsyncpa [#allocation5], 1
    %s11649 = scalar_lea.sflag [#allocation5], 1
    %11650 = vsyncpa %s11649, 1
    %11651 = vsyncpa [#allocation7], 1

</llo_original>
